<compile_context>
chip_gen: v7x
topology: tpu7x:2x2x1
jax: 0.10.0
libtpu: 0.0.40
codegen_flags: <defaults>
</compile_context>

<pallas_src>
import functools
import math

import jax
import jax.numpy as jnp
from jax import lax
from jax.experimental import pallas as pl
from jax.experimental.pallas import tpu as pltpu


def _seq_transformer_first_kernel(
    x_ref, wqkv_ref, bqkv_ref, wo_ref, bo_ref,
    ln1w_ref, ln1b_ref, w1_ref, b1_ref, w2_ref, b2_ref,
    ln2w_ref, ln2b_ref, wfc_ref, bfc_ref,
    o_ref, *, num_layers, n_head, seq_len, block_b):
  # x_ref:    (S*TB, D)  seq-major slab: row s*TB + j is token s of batch
  #                      element (block*TB + j)
  # wqkv_ref: (L, D, 3D)   bqkv_ref: (L, 1, 3D)
  # wo_ref:   (L, D, D)    bo_ref:   (L, 1, D)
  # ln*_ref:  (L, 1, D)
  # w1_ref:   (L, D, F)    b1_ref:   (L, 1, F)
  # w2_ref:   (L, F, D)    b2_ref:   (L, 1, D)
  # wfc_ref:  (S, D, C)    bfc_ref:  (1, C)
  # o_ref:    (TB, C)
  S, TB = seq_len, block_b
  D = x_ref.shape[-1]
  H = n_head
  hd = D // H
  scale = 1.0 / math.sqrt(hd)
  eps = 1e-5  # PyTorch LayerNorm default.

  def layer_norm(v, w, b):
    # NOTE: padded (all-zero) batch rows hit var=0 -> rsqrt(eps) gives large
    # but FINITE values; those rows are sliced off in the wrapper, so this is
    # benign (keep in mind if eps is ever changed).
    mu = jnp.mean(v, axis=-1, keepdims=True)
    var = jnp.mean(jnp.square(v - mu), axis=-1, keepdims=True)
    return (v - mu) * lax.rsqrt(var + eps) * w + b

  h2 = x_ref[...]                                       # (S*TB, D)

  # Static unroll over layers (num_layers is a small compile-time constant).
  for l in range(num_layers):
    # ---- self-attention (post-LN encoder layer; dropout = identity) ----
    # QKV projection: one large-M 2-D matmul with a 2-D weight.
    qkv = jnp.dot(h2, wqkv_ref[l],
                  preferred_element_type=jnp.float32) + bqkv_ref[l]

    wo_l = wo_ref[l]                                    # (D, D)
    attn2 = jnp.zeros((S * TB, D), jnp.float32)
    for hh in range(H):
      lo = hh * hd
      q_s = [qkv[s * TB:(s + 1) * TB, lo:lo + hd] for s in range(S)]
      k_s = [qkv[s * TB:(s + 1) * TB, D + lo:D + lo + hd] for s in range(S)]
      v_s = [qkv[s * TB:(s + 1) * TB, 2 * D + lo:2 * D + lo + hd]
             for s in range(S)]

      ctx_s = []
      for qp in range(S):
        # Scores (TB, S): row-wise dots (VPU mul + lane reduce) instead of
        # per-batch-element 5x11 MXU calls.
        sc = jnp.concatenate(
            [jnp.sum(q_s[qp] * k_s[kp], axis=-1, keepdims=True)
             for kp in range(S)], axis=-1) * scale
        sc = sc - jnp.max(sc, axis=-1, keepdims=True)
        p = jnp.exp(sc)
        p = p * pl.reciprocal(jnp.sum(p, axis=-1, keepdims=True), approx=True)
        ctx = p[:, 0:1] * v_s[0]
        for kp in range(1, S):
          ctx = ctx + p[:, kp:kp + 1] * v_s[kp]
        ctx_s.append(ctx)                               # (TB, hd)
      ctx2 = jnp.concatenate(ctx_s, axis=0)             # (S*TB, hd) seq-major

      # Per-head output projection accumulated (no lane concat of heads).
      wo_h = wo_l if H == 1 else wo_l[lo:lo + hd, :]
      attn2 = attn2 + jnp.dot(ctx2, wo_h, preferred_element_type=jnp.float32)

    attn2 = attn2 + bo_ref[l]
    h2 = layer_norm(h2 + attn2, ln1w_ref[l], ln1b_ref[l])

    # ---- feed-forward (relu): two 2-D matmuls ----
    ff = jnp.dot(h2, w1_ref[l], preferred_element_type=jnp.float32) + b1_ref[l]
    ff = jnp.maximum(ff, 0.0)
    ff = jnp.dot(ff, w2_ref[l], preferred_element_type=jnp.float32) + b2_ref[l]
    h2 = layer_norm(h2 + ff, ln2w_ref[l], ln2b_ref[l])

  # ---- final fc on the flattened sequence:
  # out[j, c] = sum_s h[s, j, :] @ Wfc[s, :, c] + bfc[c]
  # S well-shaped (TB, D) @ (D, C) matmuls, no replication, no reshape.
  acc = jnp.dot(h2[0:TB, :], wfc_ref[0], preferred_element_type=jnp.float32)
  for s in range(1, S):
    acc = acc + jnp.dot(h2[s * TB:(s + 1) * TB, :], wfc_ref[s],
                        preferred_element_type=jnp.float32)
  o_ref[...] = acc + bfc_ref[...]                       # dense (TB, C) store


def seq_transformer_first_forward(x, params, *, n_head, num_layers,
                                  seq_len=5, block_b=None, max_block_b=1024):
  """x: (B, 6 + seq_len*D) -> (B, num_classes)."""
  B = x.shape[0]
  L, D, _ = params["wqkv"].shape
  assert L == num_layers
  S = seq_len
  C = params["wfc"].shape[-1]

  if block_b is None:
    # Target <=2 grid steps: both v7x TensorCores get work; on single-TC
    # v5e/v6e the extra step is well under a microsecond. Capped so the
    # activation slab stays tiny in VMEM even for large batches.
    block_b = min(max_block_b, max(8, (((B + 1) // 2) + 7) // 8 * 8))
  n_blocks = int(pl.cdiv(B, block_b))
  Bp = n_blocks * block_b

  # All layout plumbing in the wrapper: slice off the first 6 features, pad
  # the batch, and lay activations out as a seq-major 2-D slab per batch
  # block -> dense full-block DMAs and pure 2-D matmuls in the kernel.
  h = x[:, 6:6 + S * D].astype(jnp.float32)              # (B, S*D)
  if Bp != B:
    h = jnp.pad(h, ((0, Bp - B), (0, 0)))
  h2d = (h.reshape(n_blocks, block_b, S, D)
           .transpose(0, 2, 1, 3)                        # (block, s, j, D)
           .reshape(n_blocks * S * block_b, D))
  wfc3 = params["wfc"].reshape(S, D, C)                  # (S*D, C) -> (S, D, C)

  kernel = functools.partial(_seq_transformer_first_kernel,
                             num_layers=num_layers, n_head=n_head,
                             seq_len=S, block_b=block_b)

  const3 = lambda b: (0, 0, 0)
  full3 = lambda a: pl.BlockSpec(a.shape, const3)

  in_specs = [
      pl.BlockSpec((S * block_b, D), lambda b: (b, 0)),   # activation slab
      full3(params["wqkv"]), full3(params["bqkv"]),
      full3(params["wo"]), full3(params["bo"]),
      full3(params["ln1w"]), full3(params["ln1b"]),
      full3(params["w1"]), full3(params["b1"]),
      full3(params["w2"]), full3(params["b2"]),
      full3(params["ln2w"]), full3(params["ln2b"]),
      full3(wfc3),
      pl.BlockSpec(params["bfc"].shape, lambda b: (0, 0)),
  ]

  out = pl.pallas_call(
      kernel,
      out_shape=jax.ShapeDtypeStruct((Bp, C), jnp.float32),
      grid_spec=pltpu.PrefetchScalarGridSpec(
          num_scalar_prefetch=0,
          grid=(n_blocks,),
          in_specs=in_specs,
          out_specs=pl.BlockSpec((block_b, C), lambda b: (b, 0)),
      ),
      compiler_params=pltpu.CompilerParams(
          dimension_semantics=("parallel",),
          vmem_limit_bytes=32 * 1024 * 1024,
      ),
  )(h2d, params["wqkv"], params["bqkv"], params["wo"], params["bo"],
    params["ln1w"], params["ln1b"], params["w1"], params["b1"],
    params["w2"], params["b2"], params["ln2w"], params["ln2b"],
    wfc3, params["bfc"])

  return out[:B]


def init_params(key, *, d_embedding, dim_feedforward, num_layers, num_classes,
                seq_len=5):
  D, Fff, L, C, S = d_embedding, dim_feedforward, num_layers, num_classes, seq_len
  ks = jax.random.split(key, 10)

  def unif(k, shape, fan_in):
    bound = 1.0 / math.sqrt(fan_in)
    return jax.random.uniform(k, shape, jnp.float32, -bound, bound)

  return {
      # attention: q/k/v projections fused, stored as x @ W (pre-transposed)
      "wqkv": unif(ks[0], (L, D, 3 * D), D),
      "bqkv": unif(ks[1], (L, 1, 3 * D), D),
      "wo":   unif(ks[2], (L, D, D), D),
      "bo":   unif(ks[3], (L, 1, D), D),
      "ln1w": jnp.ones((L, 1, D), jnp.float32),
      "ln1b": jnp.zeros((L, 1, D), jnp.float32),
      # feed-forward
      "w1":   unif(ks[4], (L, D, Fff), D),
      "b1":   unif(ks[5], (L, 1, Fff), D),
      "w2":   unif(ks[6], (L, Fff, D), Fff),
      "b2":   unif(ks[7], (L, 1, D), Fff),
      "ln2w": jnp.ones((L, 1, D), jnp.float32),
      "ln2b": jnp.zeros((L, 1, D), jnp.float32),
      # final classifier (fc.weight.T layout)
      "wfc":  unif(ks[8], (S * D, C), S * D),
      "bfc":  unif(ks[9], (1, C), S * D),
  }


def reference_forward(x, params, *, n_head, seq_len=5):
  """Pure-JAX reference of SeqTransformer_first.forward (eval mode)."""
  B = x.shape[0]
  L, D, _ = params["wqkv"].shape
  S = seq_len
  H = n_head
  hd = D // H
  eps = 1e-5

  def layer_norm(v, w, b):
    mu = jnp.mean(v, axis=-1, keepdims=True)
    var = jnp.mean(jnp.square(v - mu), axis=-1, keepdims=True)
    return (v - mu) / jnp.sqrt(var + eps) * w + b

  h = x[:, 6:6 + S * D].reshape(B, S, D).astype(jnp.float32)
  for l in range(L):
    qkv = jnp.einsum("bsd,de->bse", h, params["wqkv"][l]) + params["bqkv"][l]
    q, k, v = qkv[..., :D], qkv[..., D:2 * D], qkv[..., 2 * D:]
    q = q.reshape(B, S, H, hd)
    k = k.reshape(B, S, H, hd)
    v = v.reshape(B, S, H, hd)
    s = jnp.einsum("bqhd,bkhd->bhqk", q, k) / math.sqrt(hd)
    p = jax.nn.softmax(s, axis=-1)
    a = jnp.einsum("bhqk,bkhd->bqhd", p, v).reshape(B, S, D)
    a = jnp.einsum("bsd,de->bse", a, params["wo"][l]) + params["bo"][l]
    h = layer_norm(h + a, params["ln1w"][l], params["ln1b"][l])
    f = jnp.einsum("bsd,df->bsf", h, params["w1"][l]) + params["b1"][l]
    f = jnp.maximum(f, 0.0)
    f = jnp.einsum("bsf,fd->bsd", f, params["w2"][l]) + params["b2"][l]
    h = layer_norm(h + f, params["ln2w"][l], params["ln2b"][l])
  flat = h.reshape(B, S * D)
  return flat @ params["wfc"] + params["bfc"][0]


if __name__ == "__main__":
  # Match kernel and reference matmul precision so the f32 check is tight.
  jax.config.update("jax_default_matmul_precision", "highest")

  # Small config consistent with the forward: d_embedding=11 (x[:,6:] views
  # to (B, 5, 11)), n_head must divide 11 -> 1, dropout irrelevant (eval).
  d_embedding, n_head, dim_feedforward, num_layers, num_classes = 11, 1, 32, 2, 3
  seq_len = 5
  B = 16

  key = jax.random.PRNGKey(0)
  k_params, k_x = jax.random.split(key)
  params = init_params(k_params, d_embedding=d_embedding,
                       dim_feedforward=dim_feedforward, num_layers=num_layers,
                       num_classes=num_classes, seq_len=seq_len)
  x = jax.random.normal(k_x, (B, 6 + seq_len * d_embedding), jnp.float32)  # (16, 61)

  out = seq_transformer_first_forward(x, params, n_head=n_head,
                                      num_layers=num_layers, seq_len=seq_len)
  out = jax.block_until_ready(out)

  ref = reference_forward(x, params, n_head=n_head, seq_len=seq_len)
  assert out.shape == (B, num_classes), out.shape
  max_err = float(jnp.max(jnp.abs(out - ref)))
  assert jnp.allclose(out, ref, atol=2e-3, rtol=2e-3), f"mismatch, max_err={max_err}"

  # TODO(synk): dropout is treated as identity (inference mode); the unused
  # `self.hidden` Linear from __init__ is not part of the forward and is omitted.
  print("KERNEL_OK")
</pallas_src>

<mosaic_0001>
module attributes {stable_mosaic.version = 11 : i64} {
  func.func @_seq_transformer_first_kernel(%arg0: i32, %arg1: memref<40x11xf32, #tpu.memory_space<vmem>>, %arg2: memref<2x11x33xf32, #tpu.memory_space<vmem>>, %arg3: memref<2x1x33xf32, #tpu.memory_space<vmem>>, %arg4: memref<2x11x11xf32, #tpu.memory_space<vmem>>, %arg5: memref<2x1x11xf32, #tpu.memory_space<vmem>>, %arg6: memref<2x1x11xf32, #tpu.memory_space<vmem>>, %arg7: memref<2x1x11xf32, #tpu.memory_space<vmem>>, %arg8: memref<2x11x32xf32, #tpu.memory_space<vmem>>, %arg9: memref<2x1x32xf32, #tpu.memory_space<vmem>>, %arg10: memref<2x32x11xf32, #tpu.memory_space<vmem>>, %arg11: memref<2x1x11xf32, #tpu.memory_space<vmem>>, %arg12: memref<2x1x11xf32, #tpu.memory_space<vmem>>, %arg13: memref<2x1x11xf32, #tpu.memory_space<vmem>>, %arg14: memref<5x11x3xf32, #tpu.memory_space<vmem>>, %arg15: memref<1x3xf32, #tpu.memory_space<vmem>>, %arg16: memref<8x3xf32, #tpu.memory_space<vmem>>) attributes {dimension_semantics = [#tpu.dimension_semantics<parallel>], iteration_bounds = array<i64: 2>, scalar_prefetch = 0 : i64, scratch_operands = 0 : i64, tpu.core_type = #tpu.core_type<tc>, window_params = [{transform_indices = @transform_0, window_bounds = array<i64: 40, 11>}, {pipeline_mode = #tpu.pipeline_mode<synchronous>, transform_indices = @transform_1, window_bounds = array<i64: 2, 11, 33>}, {pipeline_mode = #tpu.pipeline_mode<synchronous>, transform_indices = @transform_2, window_bounds = array<i64: 2, 1, 33>}, {pipeline_mode = #tpu.pipeline_mode<synchronous>, transform_indices = @transform_3, window_bounds = array<i64: 2, 11, 11>}, {pipeline_mode = #tpu.pipeline_mode<synchronous>, transform_indices = @transform_4, window_bounds = array<i64: 2, 1, 11>}, {pipeline_mode = #tpu.pipeline_mode<synchronous>, transform_indices = @transform_5, window_bounds = array<i64: 2, 1, 11>}, {pipeline_mode = #tpu.pipeline_mode<synchronous>, transform_indices = @transform_6, window_bounds = array<i64: 2, 1, 11>}, {pipeline_mode = #tpu.pipeline_mode<synchronous>, transform_indices = @transform_7, window_bounds = array<i64: 2, 11, 32>}, {pipeline_mode = #tpu.pipeline_mode<synchronous>, transform_indices = @transform_8, window_bounds = array<i64: 2, 1, 32>}, {pipeline_mode = #tpu.pipeline_mode<synchronous>, transform_indices = @transform_9, window_bounds = array<i64: 2, 32, 11>}, {pipeline_mode = #tpu.pipeline_mode<synchronous>, transform_indices = @transform_10, window_bounds = array<i64: 2, 1, 11>}, {pipeline_mode = #tpu.pipeline_mode<synchronous>, transform_indices = @transform_11, window_bounds = array<i64: 2, 1, 11>}, {pipeline_mode = #tpu.pipeline_mode<synchronous>, transform_indices = @transform_12, window_bounds = array<i64: 2, 1, 11>}, {pipeline_mode = #tpu.pipeline_mode<synchronous>, transform_indices = @transform_13, window_bounds = array<i64: 5, 11, 3>}, {pipeline_mode = #tpu.pipeline_mode<synchronous>, transform_indices = @transform_14, window_bounds = array<i64: 1, 3>}, {transform_indices = @transform_15, window_bounds = array<i64: 8, 3>}]} {
    %c0 = arith.constant 0 : index
    %c0_0 = arith.constant 0 : index
    %0 = vector.load %arg1[%c0, %c0_0] : memref<40x11xf32, #tpu.memory_space<vmem>>, vector<40x11xf32>
    %c0_1 = arith.constant 0 : index
    %c0_2 = arith.constant 0 : index
    %c0_3 = arith.constant 0 : index
    %1 = vector.load %arg2[%c0_1, %c0_2, %c0_3] : memref<2x11x33xf32, #tpu.memory_space<vmem>>, vector<1x11x33xf32>
    %2 = vector.shape_cast %1 : vector<1x11x33xf32> to vector<11x33xf32>
    %cst = arith.constant dense<0.000000e+00> : vector<40x33xf32>
    %3 = tpu.matmul %0, %2, %cst {dimension_numbers = #tpu.dot_dimension_numbers<[1], [0], [0], [1], [0, 0, 1, 1], [], []>, precision = #tpu.contract_precision<fp32>} : vector<40x11xf32>, vector<11x33xf32>, vector<40x33xf32> -> vector<40x33xf32>
    %c0_4 = arith.constant 0 : index
    %c0_5 = arith.constant 0 : index
    %c0_6 = arith.constant 0 : index
    %4 = vector.load %arg3[%c0_4, %c0_5, %c0_6] : memref<2x1x33xf32, #tpu.memory_space<vmem>>, vector<1x1x33xf32>
    %5 = vector.shape_cast %4 : vector<1x1x33xf32> to vector<1x33xf32>
    %6 = vector.broadcast %5 : vector<1x33xf32> to vector<40x33xf32>
    %7 = arith.addf %3, %6 : vector<40x33xf32>
    %c0_7 = arith.constant 0 : index
    %c0_8 = arith.constant 0 : index
    %c0_9 = arith.constant 0 : index
    %8 = vector.load %arg4[%c0_7, %c0_8, %c0_9] : memref<2x11x11xf32, #tpu.memory_space<vmem>>, vector<1x11x11xf32>
    %9 = vector.shape_cast %8 : vector<1x11x11xf32> to vector<11x11xf32>
    %cst_10 = arith.constant 0.000000e+00 : f32
    %10 = vector.broadcast %cst_10 : f32 to vector<40x11xf32>
    %11 = vector.extract_strided_slice %7 {offsets = [0, 0], sizes = [8, 11], strides = [1, 1]} : vector<40x33xf32> to vector<8x11xf32>
    %12 = vector.extract_strided_slice %7 {offsets = [8, 0], sizes = [8, 11], strides = [1, 1]} : vector<40x33xf32> to vector<8x11xf32>
    %13 = vector.extract_strided_slice %7 {offsets = [16, 0], sizes = [8, 11], strides = [1, 1]} : vector<40x33xf32> to vector<8x11xf32>
    %14 = vector.extract_strided_slice %7 {offsets = [24, 0], sizes = [8, 11], strides = [1, 1]} : vector<40x33xf32> to vector<8x11xf32>
    %15 = vector.extract_strided_slice %7 {offsets = [32, 0], sizes = [8, 11], strides = [1, 1]} : vector<40x33xf32> to vector<8x11xf32>
    %16 = vector.extract_strided_slice %7 {offsets = [0, 11], sizes = [8, 11], strides = [1, 1]} : vector<40x33xf32> to vector<8x11xf32>
    %17 = vector.extract_strided_slice %7 {offsets = [8, 11], sizes = [8, 11], strides = [1, 1]} : vector<40x33xf32> to vector<8x11xf32>
    %18 = vector.extract_strided_slice %7 {offsets = [16, 11], sizes = [8, 11], strides = [1, 1]} : vector<40x33xf32> to vector<8x11xf32>
    %19 = vector.extract_strided_slice %7 {offsets = [24, 11], sizes = [8, 11], strides = [1, 1]} : vector<40x33xf32> to vector<8x11xf32>
    %20 = vector.extract_strided_slice %7 {offsets = [32, 11], sizes = [8, 11], strides = [1, 1]} : vector<40x33xf32> to vector<8x11xf32>
    %21 = vector.extract_strided_slice %7 {offsets = [0, 22], sizes = [8, 11], strides = [1, 1]} : vector<40x33xf32> to vector<8x11xf32>
    %22 = vector.extract_strided_slice %7 {offsets = [8, 22], sizes = [8, 11], strides = [1, 1]} : vector<40x33xf32> to vector<8x11xf32>
    %23 = vector.extract_strided_slice %7 {offsets = [16, 22], sizes = [8, 11], strides = [1, 1]} : vector<40x33xf32> to vector<8x11xf32>
    %24 = vector.extract_strided_slice %7 {offsets = [24, 22], sizes = [8, 11], strides = [1, 1]} : vector<40x33xf32> to vector<8x11xf32>
    %25 = vector.extract_strided_slice %7 {offsets = [32, 22], sizes = [8, 11], strides = [1, 1]} : vector<40x33xf32> to vector<8x11xf32>
    %26 = arith.mulf %11, %16 : vector<8x11xf32>
    %cst_11 = arith.constant dense<0.000000e+00> : vector<8xf32>
    %27 = vector.multi_reduction <add>, %26, %cst_11 [1] : vector<8x11xf32> to vector<8xf32>
    %28 = vector.shape_cast %27 : vector<8xf32> to vector<8x1xf32>
    %29 = arith.mulf %11, %17 : vector<8x11xf32>
    %cst_12 = arith.constant dense<0.000000e+00> : vector<8xf32>
    %30 = vector.multi_reduction <add>, %29, %cst_12 [1] : vector<8x11xf32> to vector<8xf32>
    %31 = vector.shape_cast %30 : vector<8xf32> to vector<8x1xf32>
    %32 = arith.mulf %11, %18 : vector<8x11xf32>
    %cst_13 = arith.constant dense<0.000000e+00> : vector<8xf32>
    %33 = vector.multi_reduction <add>, %32, %cst_13 [1] : vector<8x11xf32> to vector<8xf32>
    %34 = vector.shape_cast %33 : vector<8xf32> to vector<8x1xf32>
    %35 = arith.mulf %11, %19 : vector<8x11xf32>
    %cst_14 = arith.constant dense<0.000000e+00> : vector<8xf32>
    %36 = vector.multi_reduction <add>, %35, %cst_14 [1] : vector<8x11xf32> to vector<8xf32>
    %37 = vector.shape_cast %36 : vector<8xf32> to vector<8x1xf32>
    %38 = arith.mulf %11, %20 : vector<8x11xf32>
    %cst_15 = arith.constant dense<0.000000e+00> : vector<8xf32>
    %39 = vector.multi_reduction <add>, %38, %cst_15 [1] : vector<8x11xf32> to vector<8xf32>
    %40 = vector.shape_cast %39 : vector<8xf32> to vector<8x1xf32>
    %41 = tpu.concatenate %28, %31, %34, %37, %40 in 1 : vector<8x1xf32>, vector<8x1xf32>, vector<8x1xf32>, vector<8x1xf32>, vector<8x1xf32> -> vector<8x5xf32>
    %cst_16 = arith.constant 0.301511347 : f32
    %42 = vector.broadcast %cst_16 : f32 to vector<8x5xf32>
    %43 = arith.mulf %41, %42 : vector<8x5xf32>
    %cst_17 = arith.constant dense<0xFF800000> : vector<8xf32>
    %44 = vector.multi_reduction <maximumf>, %43, %cst_17 [1] : vector<8x5xf32> to vector<8xf32>
    %45 = vector.shape_cast %44 : vector<8xf32> to vector<8x1xf32>
    %46 = vector.broadcast %45 : vector<8x1xf32> to vector<8x5xf32>
    %47 = arith.subf %43, %46 : vector<8x5xf32>
    %48 = math.exp %47 : vector<8x5xf32>
    %cst_18 = arith.constant dense<0.000000e+00> : vector<8xf32>
    %49 = vector.multi_reduction <add>, %48, %cst_18 [1] : vector<8x5xf32> to vector<8xf32>
    %50 = vector.shape_cast %49 : vector<8xf32> to vector<8x1xf32>
    %51 = tpu.reciprocal %50 {approx = true} : vector<8x1xf32> -> vector<8x1xf32>
    %52 = vector.broadcast %51 : vector<8x1xf32> to vector<8x5xf32>
    %53 = arith.mulf %48, %52 : vector<8x5xf32>
    %54 = vector.extract_strided_slice %53 {offsets = [0, 0], sizes = [8, 1], strides = [1, 1]} : vector<8x5xf32> to vector<8x1xf32>
    %55 = vector.broadcast %54 : vector<8x1xf32> to vector<8x11xf32>
    %56 = arith.mulf %55, %21 : vector<8x11xf32>
    %57 = vector.extract_strided_slice %53 {offsets = [0, 1], sizes = [8, 1], strides = [1, 1]} : vector<8x5xf32> to vector<8x1xf32>
    %58 = vector.broadcast %57 : vector<8x1xf32> to vector<8x11xf32>
    %59 = arith.mulf %58, %22 : vector<8x11xf32>
    %60 = arith.addf %56, %59 : vector<8x11xf32>
    %61 = vector.extract_strided_slice %53 {offsets = [0, 2], sizes = [8, 1], strides = [1, 1]} : vector<8x5xf32> to vector<8x1xf32>
    %62 = vector.broadcast %61 : vector<8x1xf32> to vector<8x11xf32>
    %63 = arith.mulf %62, %23 : vector<8x11xf32>
    %64 = arith.addf %60, %63 : vector<8x11xf32>
    %65 = vector.extract_strided_slice %53 {offsets = [0, 3], sizes = [8, 1], strides = [1, 1]} : vector<8x5xf32> to vector<8x1xf32>
    %66 = vector.broadcast %65 : vector<8x1xf32> to vector<8x11xf32>
    %67 = arith.mulf %66, %24 : vector<8x11xf32>
    %68 = arith.addf %64, %67 : vector<8x11xf32>
    %69 = vector.extract_strided_slice %53 {offsets = [0, 4], sizes = [8, 1], strides = [1, 1]} : vector<8x5xf32> to vector<8x1xf32>
    %70 = vector.broadcast %69 : vector<8x1xf32> to vector<8x11xf32>
    %71 = arith.mulf %70, %25 : vector<8x11xf32>
    %72 = arith.addf %68, %71 : vector<8x11xf32>
    %73 = arith.mulf %12, %16 : vector<8x11xf32>
    %cst_19 = arith.constant dense<0.000000e+00> : vector<8xf32>
    %74 = vector.multi_reduction <add>, %73, %cst_19 [1] : vector<8x11xf32> to vector<8xf32>
    %75 = vector.shape_cast %74 : vector<8xf32> to vector<8x1xf32>
    %76 = arith.mulf %12, %17 : vector<8x11xf32>
    %cst_20 = arith.constant dense<0.000000e+00> : vector<8xf32>
    %77 = vector.multi_reduction <add>, %76, %cst_20 [1] : vector<8x11xf32> to vector<8xf32>
    %78 = vector.shape_cast %77 : vector<8xf32> to vector<8x1xf32>
    %79 = arith.mulf %12, %18 : vector<8x11xf32>
    %cst_21 = arith.constant dense<0.000000e+00> : vector<8xf32>
    %80 = vector.multi_reduction <add>, %79, %cst_21 [1] : vector<8x11xf32> to vector<8xf32>
    %81 = vector.shape_cast %80 : vector<8xf32> to vector<8x1xf32>
    %82 = arith.mulf %12, %19 : vector<8x11xf32>
    %cst_22 = arith.constant dense<0.000000e+00> : vector<8xf32>
    %83 = vector.multi_reduction <add>, %82, %cst_22 [1] : vector<8x11xf32> to vector<8xf32>
    %84 = vector.shape_cast %83 : vector<8xf32> to vector<8x1xf32>
    %85 = arith.mulf %12, %20 : vector<8x11xf32>
    %cst_23 = arith.constant dense<0.000000e+00> : vector<8xf32>
    %86 = vector.multi_reduction <add>, %85, %cst_23 [1] : vector<8x11xf32> to vector<8xf32>
    %87 = vector.shape_cast %86 : vector<8xf32> to vector<8x1xf32>
    %88 = tpu.concatenate %75, %78, %81, %84, %87 in 1 : vector<8x1xf32>, vector<8x1xf32>, vector<8x1xf32>, vector<8x1xf32>, vector<8x1xf32> -> vector<8x5xf32>
    %cst_24 = arith.constant 0.301511347 : f32
    %89 = vector.broadcast %cst_24 : f32 to vector<8x5xf32>
    %90 = arith.mulf %88, %89 : vector<8x5xf32>
    %cst_25 = arith.constant dense<0xFF800000> : vector<8xf32>
    %91 = vector.multi_reduction <maximumf>, %90, %cst_25 [1] : vector<8x5xf32> to vector<8xf32>
    %92 = vector.shape_cast %91 : vector<8xf32> to vector<8x1xf32>
    %93 = vector.broadcast %92 : vector<8x1xf32> to vector<8x5xf32>
    %94 = arith.subf %90, %93 : vector<8x5xf32>
    %95 = math.exp %94 : vector<8x5xf32>
    %cst_26 = arith.constant dense<0.000000e+00> : vector<8xf32>
    %96 = vector.multi_reduction <add>, %95, %cst_26 [1] : vector<8x5xf32> to vector<8xf32>
    %97 = vector.shape_cast %96 : vector<8xf32> to vector<8x1xf32>
    %98 = tpu.reciprocal %97 {approx = true} : vector<8x1xf32> -> vector<8x1xf32>
    %99 = vector.broadcast %98 : vector<8x1xf32> to vector<8x5xf32>
    %100 = arith.mulf %95, %99 : vector<8x5xf32>
    %101 = vector.extract_strided_slice %100 {offsets = [0, 0], sizes = [8, 1], strides = [1, 1]} : vector<8x5xf32> to vector<8x1xf32>
    %102 = vector.broadcast %101 : vector<8x1xf32> to vector<8x11xf32>
    %103 = arith.mulf %102, %21 : vector<8x11xf32>
    %104 = vector.extract_strided_slice %100 {offsets = [0, 1], sizes = [8, 1], strides = [1, 1]} : vector<8x5xf32> to vector<8x1xf32>
    %105 = vector.broadcast %104 : vector<8x1xf32> to vector<8x11xf32>
    %106 = arith.mulf %105, %22 : vector<8x11xf32>
    %107 = arith.addf %103, %106 : vector<8x11xf32>
    %108 = vector.extract_strided_slice %100 {offsets = [0, 2], sizes = [8, 1], strides = [1, 1]} : vector<8x5xf32> to vector<8x1xf32>
    %109 = vector.broadcast %108 : vector<8x1xf32> to vector<8x11xf32>
    %110 = arith.mulf %109, %23 : vector<8x11xf32>
    %111 = arith.addf %107, %110 : vector<8x11xf32>
    %112 = vector.extract_strided_slice %100 {offsets = [0, 3], sizes = [8, 1], strides = [1, 1]} : vector<8x5xf32> to vector<8x1xf32>
    %113 = vector.broadcast %112 : vector<8x1xf32> to vector<8x11xf32>
    %114 = arith.mulf %113, %24 : vector<8x11xf32>
    %115 = arith.addf %111, %114 : vector<8x11xf32>
    %116 = vector.extract_strided_slice %100 {offsets = [0, 4], sizes = [8, 1], strides = [1, 1]} : vector<8x5xf32> to vector<8x1xf32>
    %117 = vector.broadcast %116 : vector<8x1xf32> to vector<8x11xf32>
    %118 = arith.mulf %117, %25 : vector<8x11xf32>
    %119 = arith.addf %115, %118 : vector<8x11xf32>
    %120 = arith.mulf %13, %16 : vector<8x11xf32>
    %cst_27 = arith.constant dense<0.000000e+00> : vector<8xf32>
    %121 = vector.multi_reduction <add>, %120, %cst_27 [1] : vector<8x11xf32> to vector<8xf32>
    %122 = vector.shape_cast %121 : vector<8xf32> to vector<8x1xf32>
    %123 = arith.mulf %13, %17 : vector<8x11xf32>
    %cst_28 = arith.constant dense<0.000000e+00> : vector<8xf32>
    %124 = vector.multi_reduction <add>, %123, %cst_28 [1] : vector<8x11xf32> to vector<8xf32>
    %125 = vector.shape_cast %124 : vector<8xf32> to vector<8x1xf32>
    %126 = arith.mulf %13, %18 : vector<8x11xf32>
    %cst_29 = arith.constant dense<0.000000e+00> : vector<8xf32>
    %127 = vector.multi_reduction <add>, %126, %cst_29 [1] : vector<8x11xf32> to vector<8xf32>
    %128 = vector.shape_cast %127 : vector<8xf32> to vector<8x1xf32>
    %129 = arith.mulf %13, %19 : vector<8x11xf32>
    %cst_30 = arith.constant dense<0.000000e+00> : vector<8xf32>
    %130 = vector.multi_reduction <add>, %129, %cst_30 [1] : vector<8x11xf32> to vector<8xf32>
    %131 = vector.shape_cast %130 : vector<8xf32> to vector<8x1xf32>
    %132 = arith.mulf %13, %20 : vector<8x11xf32>
    %cst_31 = arith.constant dense<0.000000e+00> : vector<8xf32>
    %133 = vector.multi_reduction <add>, %132, %cst_31 [1] : vector<8x11xf32> to vector<8xf32>
    %134 = vector.shape_cast %133 : vector<8xf32> to vector<8x1xf32>
    %135 = tpu.concatenate %122, %125, %128, %131, %134 in 1 : vector<8x1xf32>, vector<8x1xf32>, vector<8x1xf32>, vector<8x1xf32>, vector<8x1xf32> -> vector<8x5xf32>
    %cst_32 = arith.constant 0.301511347 : f32
    %136 = vector.broadcast %cst_32 : f32 to vector<8x5xf32>
    %137 = arith.mulf %135, %136 : vector<8x5xf32>
    %cst_33 = arith.constant dense<0xFF800000> : vector<8xf32>
    %138 = vector.multi_reduction <maximumf>, %137, %cst_33 [1] : vector<8x5xf32> to vector<8xf32>
    %139 = vector.shape_cast %138 : vector<8xf32> to vector<8x1xf32>
    %140 = vector.broadcast %139 : vector<8x1xf32> to vector<8x5xf32>
    %141 = arith.subf %137, %140 : vector<8x5xf32>
    %142 = math.exp %141 : vector<8x5xf32>
    %cst_34 = arith.constant dense<0.000000e+00> : vector<8xf32>
    %143 = vector.multi_reduction <add>, %142, %cst_34 [1] : vector<8x5xf32> to vector<8xf32>
    %144 = vector.shape_cast %143 : vector<8xf32> to vector<8x1xf32>
    %145 = tpu.reciprocal %144 {approx = true} : vector<8x1xf32> -> vector<8x1xf32>
    %146 = vector.broadcast %145 : vector<8x1xf32> to vector<8x5xf32>
    %147 = arith.mulf %142, %146 : vector<8x5xf32>
    %148 = vector.extract_strided_slice %147 {offsets = [0, 0], sizes = [8, 1], strides = [1, 1]} : vector<8x5xf32> to vector<8x1xf32>
    %149 = vector.broadcast %148 : vector<8x1xf32> to vector<8x11xf32>
    %150 = arith.mulf %149, %21 : vector<8x11xf32>
    %151 = vector.extract_strided_slice %147 {offsets = [0, 1], sizes = [8, 1], strides = [1, 1]} : vector<8x5xf32> to vector<8x1xf32>
    %152 = vector.broadcast %151 : vector<8x1xf32> to vector<8x11xf32>
    %153 = arith.mulf %152, %22 : vector<8x11xf32>
    %154 = arith.addf %150, %153 : vector<8x11xf32>
    %155 = vector.extract_strided_slice %147 {offsets = [0, 2], sizes = [8, 1], strides = [1, 1]} : vector<8x5xf32> to vector<8x1xf32>
    %156 = vector.broadcast %155 : vector<8x1xf32> to vector<8x11xf32>
    %157 = arith.mulf %156, %23 : vector<8x11xf32>
    %158 = arith.addf %154, %157 : vector<8x11xf32>
    %159 = vector.extract_strided_slice %147 {offsets = [0, 3], sizes = [8, 1], strides = [1, 1]} : vector<8x5xf32> to vector<8x1xf32>
    %160 = vector.broadcast %159 : vector<8x1xf32> to vector<8x11xf32>
    %161 = arith.mulf %160, %24 : vector<8x11xf32>
    %162 = arith.addf %158, %161 : vector<8x11xf32>
    %163 = vector.extract_strided_slice %147 {offsets = [0, 4], sizes = [8, 1], strides = [1, 1]} : vector<8x5xf32> to vector<8x1xf32>
    %164 = vector.broadcast %163 : vector<8x1xf32> to vector<8x11xf32>
    %165 = arith.mulf %164, %25 : vector<8x11xf32>
    %166 = arith.addf %162, %165 : vector<8x11xf32>
    %167 = arith.mulf %14, %16 : vector<8x11xf32>
    %cst_35 = arith.constant dense<0.000000e+00> : vector<8xf32>
    %168 = vector.multi_reduction <add>, %167, %cst_35 [1] : vector<8x11xf32> to vector<8xf32>
    %169 = vector.shape_cast %168 : vector<8xf32> to vector<8x1xf32>
    %170 = arith.mulf %14, %17 : vector<8x11xf32>
    %cst_36 = arith.constant dense<0.000000e+00> : vector<8xf32>
    %171 = vector.multi_reduction <add>, %170, %cst_36 [1] : vector<8x11xf32> to vector<8xf32>
    %172 = vector.shape_cast %171 : vector<8xf32> to vector<8x1xf32>
    %173 = arith.mulf %14, %18 : vector<8x11xf32>
    %cst_37 = arith.constant dense<0.000000e+00> : vector<8xf32>
    %174 = vector.multi_reduction <add>, %173, %cst_37 [1] : vector<8x11xf32> to vector<8xf32>
    %175 = vector.shape_cast %174 : vector<8xf32> to vector<8x1xf32>
    %176 = arith.mulf %14, %19 : vector<8x11xf32>
    %cst_38 = arith.constant dense<0.000000e+00> : vector<8xf32>
    %177 = vector.multi_reduction <add>, %176, %cst_38 [1] : vector<8x11xf32> to vector<8xf32>
    %178 = vector.shape_cast %177 : vector<8xf32> to vector<8x1xf32>
    %179 = arith.mulf %14, %20 : vector<8x11xf32>
    %cst_39 = arith.constant dense<0.000000e+00> : vector<8xf32>
    %180 = vector.multi_reduction <add>, %179, %cst_39 [1] : vector<8x11xf32> to vector<8xf32>
    %181 = vector.shape_cast %180 : vector<8xf32> to vector<8x1xf32>
    %182 = tpu.concatenate %169, %172, %175, %178, %181 in 1 : vector<8x1xf32>, vector<8x1xf32>, vector<8x1xf32>, vector<8x1xf32>, vector<8x1xf32> -> vector<8x5xf32>
    %cst_40 = arith.constant 0.301511347 : f32
    %183 = vector.broadcast %cst_40 : f32 to vector<8x5xf32>
    %184 = arith.mulf %182, %183 : vector<8x5xf32>
    %cst_41 = arith.constant dense<0xFF800000> : vector<8xf32>
    %185 = vector.multi_reduction <maximumf>, %184, %cst_41 [1] : vector<8x5xf32> to vector<8xf32>
    %186 = vector.shape_cast %185 : vector<8xf32> to vector<8x1xf32>
    %187 = vector.broadcast %186 : vector<8x1xf32> to vector<8x5xf32>
    %188 = arith.subf %184, %187 : vector<8x5xf32>
    %189 = math.exp %188 : vector<8x5xf32>
    %cst_42 = arith.constant dense<0.000000e+00> : vector<8xf32>
    %190 = vector.multi_reduction <add>, %189, %cst_42 [1] : vector<8x5xf32> to vector<8xf32>
    %191 = vector.shape_cast %190 : vector<8xf32> to vector<8x1xf32>
    %192 = tpu.reciprocal %191 {approx = true} : vector<8x1xf32> -> vector<8x1xf32>
    %193 = vector.broadcast %192 : vector<8x1xf32> to vector<8x5xf32>
    %194 = arith.mulf %189, %193 : vector<8x5xf32>
    %195 = vector.extract_strided_slice %194 {offsets = [0, 0], sizes = [8, 1], strides = [1, 1]} : vector<8x5xf32> to vector<8x1xf32>
    %196 = vector.broadcast %195 : vector<8x1xf32> to vector<8x11xf32>
    %197 = arith.mulf %196, %21 : vector<8x11xf32>
    %198 = vector.extract_strided_slice %194 {offsets = [0, 1], sizes = [8, 1], strides = [1, 1]} : vector<8x5xf32> to vector<8x1xf32>
    %199 = vector.broadcast %198 : vector<8x1xf32> to vector<8x11xf32>
    %200 = arith.mulf %199, %22 : vector<8x11xf32>
    %201 = arith.addf %197, %200 : vector<8x11xf32>
    %202 = vector.extract_strided_slice %194 {offsets = [0, 2], sizes = [8, 1], strides = [1, 1]} : vector<8x5xf32> to vector<8x1xf32>
    %203 = vector.broadcast %202 : vector<8x1xf32> to vector<8x11xf32>
    %204 = arith.mulf %203, %23 : vector<8x11xf32>
    %205 = arith.addf %201, %204 : vector<8x11xf32>
    %206 = vector.extract_strided_slice %194 {offsets = [0, 3], sizes = [8, 1], strides = [1, 1]} : vector<8x5xf32> to vector<8x1xf32>
    %207 = vector.broadcast %206 : vector<8x1xf32> to vector<8x11xf32>
    %208 = arith.mulf %207, %24 : vector<8x11xf32>
    %209 = arith.addf %205, %208 : vector<8x11xf32>
    %210 = vector.extract_strided_slice %194 {offsets = [0, 4], sizes = [8, 1], strides = [1, 1]} : vector<8x5xf32> to vector<8x1xf32>
    %211 = vector.broadcast %210 : vector<8x1xf32> to vector<8x11xf32>
    %212 = arith.mulf %211, %25 : vector<8x11xf32>
    %213 = arith.addf %209, %212 : vector<8x11xf32>
    %214 = arith.mulf %15, %16 : vector<8x11xf32>
    %cst_43 = arith.constant dense<0.000000e+00> : vector<8xf32>
    %215 = vector.multi_reduction <add>, %214, %cst_43 [1] : vector<8x11xf32> to vector<8xf32>
    %216 = vector.shape_cast %215 : vector<8xf32> to vector<8x1xf32>
    %217 = arith.mulf %15, %17 : vector<8x11xf32>
    %cst_44 = arith.constant dense<0.000000e+00> : vector<8xf32>
    %218 = vector.multi_reduction <add>, %217, %cst_44 [1] : vector<8x11xf32> to vector<8xf32>
    %219 = vector.shape_cast %218 : vector<8xf32> to vector<8x1xf32>
    %220 = arith.mulf %15, %18 : vector<8x11xf32>
    %cst_45 = arith.constant dense<0.000000e+00> : vector<8xf32>
    %221 = vector.multi_reduction <add>, %220, %cst_45 [1] : vector<8x11xf32> to vector<8xf32>
    %222 = vector.shape_cast %221 : vector<8xf32> to vector<8x1xf32>
    %223 = arith.mulf %15, %19 : vector<8x11xf32>
    %cst_46 = arith.constant dense<0.000000e+00> : vector<8xf32>
    %224 = vector.multi_reduction <add>, %223, %cst_46 [1] : vector<8x11xf32> to vector<8xf32>
    %225 = vector.shape_cast %224 : vector<8xf32> to vector<8x1xf32>
    %226 = arith.mulf %15, %20 : vector<8x11xf32>
    %cst_47 = arith.constant dense<0.000000e+00> : vector<8xf32>
    %227 = vector.multi_reduction <add>, %226, %cst_47 [1] : vector<8x11xf32> to vector<8xf32>
    %228 = vector.shape_cast %227 : vector<8xf32> to vector<8x1xf32>
    %229 = tpu.concatenate %216, %219, %222, %225, %228 in 1 : vector<8x1xf32>, vector<8x1xf32>, vector<8x1xf32>, vector<8x1xf32>, vector<8x1xf32> -> vector<8x5xf32>
    %cst_48 = arith.constant 0.301511347 : f32
    %230 = vector.broadcast %cst_48 : f32 to vector<8x5xf32>
    %231 = arith.mulf %229, %230 : vector<8x5xf32>
    %cst_49 = arith.constant dense<0xFF800000> : vector<8xf32>
    %232 = vector.multi_reduction <maximumf>, %231, %cst_49 [1] : vector<8x5xf32> to vector<8xf32>
    %233 = vector.shape_cast %232 : vector<8xf32> to vector<8x1xf32>
    %234 = vector.broadcast %233 : vector<8x1xf32> to vector<8x5xf32>
    %235 = arith.subf %231, %234 : vector<8x5xf32>
    %236 = math.exp %235 : vector<8x5xf32>
    %cst_50 = arith.constant dense<0.000000e+00> : vector<8xf32>
    %237 = vector.multi_reduction <add>, %236, %cst_50 [1] : vector<8x5xf32> to vector<8xf32>
    %238 = vector.shape_cast %237 : vector<8xf32> to vector<8x1xf32>
    %239 = tpu.reciprocal %238 {approx = true} : vector<8x1xf32> -> vector<8x1xf32>
    %240 = vector.broadcast %239 : vector<8x1xf32> to vector<8x5xf32>
    %241 = arith.mulf %236, %240 : vector<8x5xf32>
    %242 = vector.extract_strided_slice %241 {offsets = [0, 0], sizes = [8, 1], strides = [1, 1]} : vector<8x5xf32> to vector<8x1xf32>
    %243 = vector.broadcast %242 : vector<8x1xf32> to vector<8x11xf32>
    %244 = arith.mulf %243, %21 : vector<8x11xf32>
    %245 = vector.extract_strided_slice %241 {offsets = [0, 1], sizes = [8, 1], strides = [1, 1]} : vector<8x5xf32> to vector<8x1xf32>
    %246 = vector.broadcast %245 : vector<8x1xf32> to vector<8x11xf32>
    %247 = arith.mulf %246, %22 : vector<8x11xf32>
    %248 = arith.addf %244, %247 : vector<8x11xf32>
    %249 = vector.extract_strided_slice %241 {offsets = [0, 2], sizes = [8, 1], strides = [1, 1]} : vector<8x5xf32> to vector<8x1xf32>
    %250 = vector.broadcast %249 : vector<8x1xf32> to vector<8x11xf32>
    %251 = arith.mulf %250, %23 : vector<8x11xf32>
    %252 = arith.addf %248, %251 : vector<8x11xf32>
    %253 = vector.extract_strided_slice %241 {offsets = [0, 3], sizes = [8, 1], strides = [1, 1]} : vector<8x5xf32> to vector<8x1xf32>
    %254 = vector.broadcast %253 : vector<8x1xf32> to vector<8x11xf32>
    %255 = arith.mulf %254, %24 : vector<8x11xf32>
    %256 = arith.addf %252, %255 : vector<8x11xf32>
    %257 = vector.extract_strided_slice %241 {offsets = [0, 4], sizes = [8, 1], strides = [1, 1]} : vector<8x5xf32> to vector<8x1xf32>
    %258 = vector.broadcast %257 : vector<8x1xf32> to vector<8x11xf32>
    %259 = arith.mulf %258, %25 : vector<8x11xf32>
    %260 = arith.addf %256, %259 : vector<8x11xf32>
    %261 = tpu.concatenate %72, %119, %166, %213, %260 in 0 : vector<8x11xf32>, vector<8x11xf32>, vector<8x11xf32>, vector<8x11xf32>, vector<8x11xf32> -> vector<40x11xf32>
    %cst_51 = arith.constant dense<0.000000e+00> : vector<40x11xf32>
    %262 = tpu.matmul %261, %9, %cst_51 {dimension_numbers = #tpu.dot_dimension_numbers<[1], [0], [0], [1], [0, 0, 1, 1], [], []>, precision = #tpu.contract_precision<fp32>} : vector<40x11xf32>, vector<11x11xf32>, vector<40x11xf32> -> vector<40x11xf32>
    %263 = arith.addf %10, %262 : vector<40x11xf32>
    %c0_52 = arith.constant 0 : index
    %c0_53 = arith.constant 0 : index
    %c0_54 = arith.constant 0 : index
    %264 = vector.load %arg5[%c0_52, %c0_53, %c0_54] : memref<2x1x11xf32, #tpu.memory_space<vmem>>, vector<1x1x11xf32>
    %265 = vector.shape_cast %264 : vector<1x1x11xf32> to vector<1x11xf32>
    %266 = vector.broadcast %265 : vector<1x11xf32> to vector<40x11xf32>
    %267 = arith.addf %263, %266 : vector<40x11xf32>
    %268 = arith.addf %0, %267 : vector<40x11xf32>
    %c0_55 = arith.constant 0 : index
    %c0_56 = arith.constant 0 : index
    %c0_57 = arith.constant 0 : index
    %269 = vector.load %arg6[%c0_55, %c0_56, %c0_57] : memref<2x1x11xf32, #tpu.memory_space<vmem>>, vector<1x1x11xf32>
    %270 = vector.shape_cast %269 : vector<1x1x11xf32> to vector<1x11xf32>
    %c0_58 = arith.constant 0 : index
    %c0_59 = arith.constant 0 : index
    %c0_60 = arith.constant 0 : index
    %271 = vector.load %arg7[%c0_58, %c0_59, %c0_60] : memref<2x1x11xf32, #tpu.memory_space<vmem>>, vector<1x1x11xf32>
    %272 = vector.shape_cast %271 : vector<1x1x11xf32> to vector<1x11xf32>
    %cst_61 = arith.constant dense<0.000000e+00> : vector<40xf32>
    %273 = vector.multi_reduction <add>, %268, %cst_61 [1] : vector<40x11xf32> to vector<40xf32>
    %274 = vector.shape_cast %273 : vector<40xf32> to vector<40x1xf32>
    %cst_62 = arith.constant 1.100000e+01 : f32
    %275 = vector.broadcast %cst_62 : f32 to vector<40x1xf32>
    %276 = arith.divf %274, %275 : vector<40x1xf32>
    %277 = vector.broadcast %276 : vector<40x1xf32> to vector<40x11xf32>
    %278 = arith.subf %268, %277 : vector<40x11xf32>
    %279 = arith.mulf %278, %278 : vector<40x11xf32>
    %cst_63 = arith.constant dense<0.000000e+00> : vector<40xf32>
    %280 = vector.multi_reduction <add>, %279, %cst_63 [1] : vector<40x11xf32> to vector<40xf32>
    %281 = vector.shape_cast %280 : vector<40xf32> to vector<40x1xf32>
    %cst_64 = arith.constant 1.100000e+01 : f32
    %282 = vector.broadcast %cst_64 : f32 to vector<40x1xf32>
    %283 = arith.divf %281, %282 : vector<40x1xf32>
    %284 = vector.broadcast %276 : vector<40x1xf32> to vector<40x11xf32>
    %285 = arith.subf %268, %284 : vector<40x11xf32>
    %cst_65 = arith.constant 9.99999974E-6 : f32
    %286 = vector.broadcast %cst_65 : f32 to vector<40x1xf32>
    %287 = arith.addf %283, %286 : vector<40x1xf32>
    %288 = math.rsqrt %287 : vector<40x1xf32>
    %289 = vector.broadcast %288 : vector<40x1xf32> to vector<40x11xf32>
    %290 = arith.mulf %285, %289 : vector<40x11xf32>
    %291 = vector.broadcast %270 : vector<1x11xf32> to vector<40x11xf32>
    %292 = arith.mulf %290, %291 : vector<40x11xf32>
    %293 = vector.broadcast %272 : vector<1x11xf32> to vector<40x11xf32>
    %294 = arith.addf %292, %293 : vector<40x11xf32>
    %c0_66 = arith.constant 0 : index
    %c0_67 = arith.constant 0 : index
    %c0_68 = arith.constant 0 : index
    %295 = vector.load %arg8[%c0_66, %c0_67, %c0_68] : memref<2x11x32xf32, #tpu.memory_space<vmem>>, vector<1x11x32xf32>
    %296 = vector.shape_cast %295 : vector<1x11x32xf32> to vector<11x32xf32>
    %cst_69 = arith.constant dense<0.000000e+00> : vector<40x32xf32>
    %297 = tpu.matmul %294, %296, %cst_69 {dimension_numbers = #tpu.dot_dimension_numbers<[1], [0], [0], [1], [0, 0, 1, 1], [], []>, precision = #tpu.contract_precision<fp32>} : vector<40x11xf32>, vector<11x32xf32>, vector<40x32xf32> -> vector<40x32xf32>
    %c0_70 = arith.constant 0 : index
    %c0_71 = arith.constant 0 : index
    %c0_72 = arith.constant 0 : index
    %298 = vector.load %arg9[%c0_70, %c0_71, %c0_72] : memref<2x1x32xf32, #tpu.memory_space<vmem>>, vector<1x1x32xf32>
    %299 = vector.shape_cast %298 : vector<1x1x32xf32> to vector<1x32xf32>
    %300 = vector.broadcast %299 : vector<1x32xf32> to vector<40x32xf32>
    %301 = arith.addf %297, %300 : vector<40x32xf32>
    %cst_73 = arith.constant 0.000000e+00 : f32
    %302 = vector.broadcast %cst_73 : f32 to vector<40x32xf32>
    %303 = arith.maximumf %301, %302 : vector<40x32xf32>
    %c0_74 = arith.constant 0 : index
    %c0_75 = arith.constant 0 : index
    %c0_76 = arith.constant 0 : index
    %304 = vector.load %arg10[%c0_74, %c0_75, %c0_76] : memref<2x32x11xf32, #tpu.memory_space<vmem>>, vector<1x32x11xf32>
    %305 = vector.shape_cast %304 : vector<1x32x11xf32> to vector<32x11xf32>
    %cst_77 = arith.constant dense<0.000000e+00> : vector<40x11xf32>
    %306 = tpu.matmul %303, %305, %cst_77 {dimension_numbers = #tpu.dot_dimension_numbers<[1], [0], [0], [1], [0, 0, 1, 1], [], []>, precision = #tpu.contract_precision<fp32>} : vector<40x32xf32>, vector<32x11xf32>, vector<40x11xf32> -> vector<40x11xf32>
    %c0_78 = arith.constant 0 : index
    %c0_79 = arith.constant 0 : index
    %c0_80 = arith.constant 0 : index
    %307 = vector.load %arg11[%c0_78, %c0_79, %c0_80] : memref<2x1x11xf32, #tpu.memory_space<vmem>>, vector<1x1x11xf32>
    %308 = vector.shape_cast %307 : vector<1x1x11xf32> to vector<1x11xf32>
    %309 = vector.broadcast %308 : vector<1x11xf32> to vector<40x11xf32>
    %310 = arith.addf %306, %309 : vector<40x11xf32>
    %311 = arith.addf %294, %310 : vector<40x11xf32>
    %c0_81 = arith.constant 0 : index
    %c0_82 = arith.constant 0 : index
    %c0_83 = arith.constant 0 : index
    %312 = vector.load %arg12[%c0_81, %c0_82, %c0_83] : memref<2x1x11xf32, #tpu.memory_space<vmem>>, vector<1x1x11xf32>
    %313 = vector.shape_cast %312 : vector<1x1x11xf32> to vector<1x11xf32>
    %c0_84 = arith.constant 0 : index
    %c0_85 = arith.constant 0 : index
    %c0_86 = arith.constant 0 : index
    %314 = vector.load %arg13[%c0_84, %c0_85, %c0_86] : memref<2x1x11xf32, #tpu.memory_space<vmem>>, vector<1x1x11xf32>
    %315 = vector.shape_cast %314 : vector<1x1x11xf32> to vector<1x11xf32>
    %cst_87 = arith.constant dense<0.000000e+00> : vector<40xf32>
    %316 = vector.multi_reduction <add>, %311, %cst_87 [1] : vector<40x11xf32> to vector<40xf32>
    %317 = vector.shape_cast %316 : vector<40xf32> to vector<40x1xf32>
    %cst_88 = arith.constant 1.100000e+01 : f32
    %318 = vector.broadcast %cst_88 : f32 to vector<40x1xf32>
    %319 = arith.divf %317, %318 : vector<40x1xf32>
    %320 = vector.broadcast %319 : vector<40x1xf32> to vector<40x11xf32>
    %321 = arith.subf %311, %320 : vector<40x11xf32>
    %322 = arith.mulf %321, %321 : vector<40x11xf32>
    %cst_89 = arith.constant dense<0.000000e+00> : vector<40xf32>
    %323 = vector.multi_reduction <add>, %322, %cst_89 [1] : vector<40x11xf32> to vector<40xf32>
    %324 = vector.shape_cast %323 : vector<40xf32> to vector<40x1xf32>
    %cst_90 = arith.constant 1.100000e+01 : f32
    %325 = vector.broadcast %cst_90 : f32 to vector<40x1xf32>
    %326 = arith.divf %324, %325 : vector<40x1xf32>
    %327 = vector.broadcast %319 : vector<40x1xf32> to vector<40x11xf32>
    %328 = arith.subf %311, %327 : vector<40x11xf32>
    %cst_91 = arith.constant 9.99999974E-6 : f32
    %329 = vector.broadcast %cst_91 : f32 to vector<40x1xf32>
    %330 = arith.addf %326, %329 : vector<40x1xf32>
    %331 = math.rsqrt %330 : vector<40x1xf32>
    %332 = vector.broadcast %331 : vector<40x1xf32> to vector<40x11xf32>
    %333 = arith.mulf %328, %332 : vector<40x11xf32>
    %334 = vector.broadcast %313 : vector<1x11xf32> to vector<40x11xf32>
    %335 = arith.mulf %333, %334 : vector<40x11xf32>
    %336 = vector.broadcast %315 : vector<1x11xf32> to vector<40x11xf32>
    %337 = arith.addf %335, %336 : vector<40x11xf32>
    %c1 = arith.constant 1 : index
    %c0_92 = arith.constant 0 : index
    %c0_93 = arith.constant 0 : index
    %338 = vector.load %arg2[%c1, %c0_92, %c0_93] : memref<2x11x33xf32, #tpu.memory_space<vmem>>, vector<1x11x33xf32>
    %339 = vector.shape_cast %338 : vector<1x11x33xf32> to vector<11x33xf32>
    %cst_94 = arith.constant dense<0.000000e+00> : vector<40x33xf32>
    %340 = tpu.matmul %337, %339, %cst_94 {dimension_numbers = #tpu.dot_dimension_numbers<[1], [0], [0], [1], [0, 0, 1, 1], [], []>, precision = #tpu.contract_precision<fp32>} : vector<40x11xf32>, vector<11x33xf32>, vector<40x33xf32> -> vector<40x33xf32>
    %c1_95 = arith.constant 1 : index
    %c0_96 = arith.constant 0 : index
    %c0_97 = arith.constant 0 : index
    %341 = vector.load %arg3[%c1_95, %c0_96, %c0_97] : memref<2x1x33xf32, #tpu.memory_space<vmem>>, vector<1x1x33xf32>
    %342 = vector.shape_cast %341 : vector<1x1x33xf32> to vector<1x33xf32>
    %343 = vector.broadcast %342 : vector<1x33xf32> to vector<40x33xf32>
    %344 = arith.addf %340, %343 : vector<40x33xf32>
    %c1_98 = arith.constant 1 : index
    %c0_99 = arith.constant 0 : index
    %c0_100 = arith.constant 0 : index
    %345 = vector.load %arg4[%c1_98, %c0_99, %c0_100] : memref<2x11x11xf32, #tpu.memory_space<vmem>>, vector<1x11x11xf32>
    %346 = vector.shape_cast %345 : vector<1x11x11xf32> to vector<11x11xf32>
    %cst_101 = arith.constant 0.000000e+00 : f32
    %347 = vector.broadcast %cst_101 : f32 to vector<40x11xf32>
    %348 = vector.extract_strided_slice %344 {offsets = [0, 0], sizes = [8, 11], strides = [1, 1]} : vector<40x33xf32> to vector<8x11xf32>
    %349 = vector.extract_strided_slice %344 {offsets = [8, 0], sizes = [8, 11], strides = [1, 1]} : vector<40x33xf32> to vector<8x11xf32>
    %350 = vector.extract_strided_slice %344 {offsets = [16, 0], sizes = [8, 11], strides = [1, 1]} : vector<40x33xf32> to vector<8x11xf32>
    %351 = vector.extract_strided_slice %344 {offsets = [24, 0], sizes = [8, 11], strides = [1, 1]} : vector<40x33xf32> to vector<8x11xf32>
    %352 = vector.extract_strided_slice %344 {offsets = [32, 0], sizes = [8, 11], strides = [1, 1]} : vector<40x33xf32> to vector<8x11xf32>
    %353 = vector.extract_strided_slice %344 {offsets = [0, 11], sizes = [8, 11], strides = [1, 1]} : vector<40x33xf32> to vector<8x11xf32>
    %354 = vector.extract_strided_slice %344 {offsets = [8, 11], sizes = [8, 11], strides = [1, 1]} : vector<40x33xf32> to vector<8x11xf32>
    %355 = vector.extract_strided_slice %344 {offsets = [16, 11], sizes = [8, 11], strides = [1, 1]} : vector<40x33xf32> to vector<8x11xf32>
    %356 = vector.extract_strided_slice %344 {offsets = [24, 11], sizes = [8, 11], strides = [1, 1]} : vector<40x33xf32> to vector<8x11xf32>
    %357 = vector.extract_strided_slice %344 {offsets = [32, 11], sizes = [8, 11], strides = [1, 1]} : vector<40x33xf32> to vector<8x11xf32>
    %358 = vector.extract_strided_slice %344 {offsets = [0, 22], sizes = [8, 11], strides = [1, 1]} : vector<40x33xf32> to vector<8x11xf32>
    %359 = vector.extract_strided_slice %344 {offsets = [8, 22], sizes = [8, 11], strides = [1, 1]} : vector<40x33xf32> to vector<8x11xf32>
    %360 = vector.extract_strided_slice %344 {offsets = [16, 22], sizes = [8, 11], strides = [1, 1]} : vector<40x33xf32> to vector<8x11xf32>
    %361 = vector.extract_strided_slice %344 {offsets = [24, 22], sizes = [8, 11], strides = [1, 1]} : vector<40x33xf32> to vector<8x11xf32>
    %362 = vector.extract_strided_slice %344 {offsets = [32, 22], sizes = [8, 11], strides = [1, 1]} : vector<40x33xf32> to vector<8x11xf32>
    %363 = arith.mulf %348, %353 : vector<8x11xf32>
    %cst_102 = arith.constant dense<0.000000e+00> : vector<8xf32>
    %364 = vector.multi_reduction <add>, %363, %cst_102 [1] : vector<8x11xf32> to vector<8xf32>
    %365 = vector.shape_cast %364 : vector<8xf32> to vector<8x1xf32>
    %366 = arith.mulf %348, %354 : vector<8x11xf32>
    %cst_103 = arith.constant dense<0.000000e+00> : vector<8xf32>
    %367 = vector.multi_reduction <add>, %366, %cst_103 [1] : vector<8x11xf32> to vector<8xf32>
    %368 = vector.shape_cast %367 : vector<8xf32> to vector<8x1xf32>
    %369 = arith.mulf %348, %355 : vector<8x11xf32>
    %cst_104 = arith.constant dense<0.000000e+00> : vector<8xf32>
    %370 = vector.multi_reduction <add>, %369, %cst_104 [1] : vector<8x11xf32> to vector<8xf32>
    %371 = vector.shape_cast %370 : vector<8xf32> to vector<8x1xf32>
    %372 = arith.mulf %348, %356 : vector<8x11xf32>
    %cst_105 = arith.constant dense<0.000000e+00> : vector<8xf32>
    %373 = vector.multi_reduction <add>, %372, %cst_105 [1] : vector<8x11xf32> to vector<8xf32>
    %374 = vector.shape_cast %373 : vector<8xf32> to vector<8x1xf32>
    %375 = arith.mulf %348, %357 : vector<8x11xf32>
    %cst_106 = arith.constant dense<0.000000e+00> : vector<8xf32>
    %376 = vector.multi_reduction <add>, %375, %cst_106 [1] : vector<8x11xf32> to vector<8xf32>
    %377 = vector.shape_cast %376 : vector<8xf32> to vector<8x1xf32>
    %378 = tpu.concatenate %365, %368, %371, %374, %377 in 1 : vector<8x1xf32>, vector<8x1xf32>, vector<8x1xf32>, vector<8x1xf32>, vector<8x1xf32> -> vector<8x5xf32>
    %cst_107 = arith.constant 0.301511347 : f32
    %379 = vector.broadcast %cst_107 : f32 to vector<8x5xf32>
    %380 = arith.mulf %378, %379 : vector<8x5xf32>
    %cst_108 = arith.constant dense<0xFF800000> : vector<8xf32>
    %381 = vector.multi_reduction <maximumf>, %380, %cst_108 [1] : vector<8x5xf32> to vector<8xf32>
    %382 = vector.shape_cast %381 : vector<8xf32> to vector<8x1xf32>
    %383 = vector.broadcast %382 : vector<8x1xf32> to vector<8x5xf32>
    %384 = arith.subf %380, %383 : vector<8x5xf32>
    %385 = math.exp %384 : vector<8x5xf32>
    %cst_109 = arith.constant dense<0.000000e+00> : vector<8xf32>
    %386 = vector.multi_reduction <add>, %385, %cst_109 [1] : vector<8x5xf32> to vector<8xf32>
    %387 = vector.shape_cast %386 : vector<8xf32> to vector<8x1xf32>
    %388 = tpu.reciprocal %387 {approx = true} : vector<8x1xf32> -> vector<8x1xf32>
    %389 = vector.broadcast %388 : vector<8x1xf32> to vector<8x5xf32>
    %390 = arith.mulf %385, %389 : vector<8x5xf32>
    %391 = vector.extract_strided_slice %390 {offsets = [0, 0], sizes = [8, 1], strides = [1, 1]} : vector<8x5xf32> to vector<8x1xf32>
    %392 = vector.broadcast %391 : vector<8x1xf32> to vector<8x11xf32>
    %393 = arith.mulf %392, %358 : vector<8x11xf32>
    %394 = vector.extract_strided_slice %390 {offsets = [0, 1], sizes = [8, 1], strides = [1, 1]} : vector<8x5xf32> to vector<8x1xf32>
    %395 = vector.broadcast %394 : vector<8x1xf32> to vector<8x11xf32>
    %396 = arith.mulf %395, %359 : vector<8x11xf32>
    %397 = arith.addf %393, %396 : vector<8x11xf32>
    %398 = vector.extract_strided_slice %390 {offsets = [0, 2], sizes = [8, 1], strides = [1, 1]} : vector<8x5xf32> to vector<8x1xf32>
    %399 = vector.broadcast %398 : vector<8x1xf32> to vector<8x11xf32>
    %400 = arith.mulf %399, %360 : vector<8x11xf32>
    %401 = arith.addf %397, %400 : vector<8x11xf32>
    %402 = vector.extract_strided_slice %390 {offsets = [0, 3], sizes = [8, 1], strides = [1, 1]} : vector<8x5xf32> to vector<8x1xf32>
    %403 = vector.broadcast %402 : vector<8x1xf32> to vector<8x11xf32>
    %404 = arith.mulf %403, %361 : vector<8x11xf32>
    %405 = arith.addf %401, %404 : vector<8x11xf32>
    %406 = vector.extract_strided_slice %390 {offsets = [0, 4], sizes = [8, 1], strides = [1, 1]} : vector<8x5xf32> to vector<8x1xf32>
    %407 = vector.broadcast %406 : vector<8x1xf32> to vector<8x11xf32>
    %408 = arith.mulf %407, %362 : vector<8x11xf32>
    %409 = arith.addf %405, %408 : vector<8x11xf32>
    %410 = arith.mulf %349, %353 : vector<8x11xf32>
    %cst_110 = arith.constant dense<0.000000e+00> : vector<8xf32>
    %411 = vector.multi_reduction <add>, %410, %cst_110 [1] : vector<8x11xf32> to vector<8xf32>
    %412 = vector.shape_cast %411 : vector<8xf32> to vector<8x1xf32>
    %413 = arith.mulf %349, %354 : vector<8x11xf32>
    %cst_111 = arith.constant dense<0.000000e+00> : vector<8xf32>
    %414 = vector.multi_reduction <add>, %413, %cst_111 [1] : vector<8x11xf32> to vector<8xf32>
    %415 = vector.shape_cast %414 : vector<8xf32> to vector<8x1xf32>
    %416 = arith.mulf %349, %355 : vector<8x11xf32>
    %cst_112 = arith.constant dense<0.000000e+00> : vector<8xf32>
    %417 = vector.multi_reduction <add>, %416, %cst_112 [1] : vector<8x11xf32> to vector<8xf32>
    %418 = vector.shape_cast %417 : vector<8xf32> to vector<8x1xf32>
    %419 = arith.mulf %349, %356 : vector<8x11xf32>
    %cst_113 = arith.constant dense<0.000000e+00> : vector<8xf32>
    %420 = vector.multi_reduction <add>, %419, %cst_113 [1] : vector<8x11xf32> to vector<8xf32>
    %421 = vector.shape_cast %420 : vector<8xf32> to vector<8x1xf32>
    %422 = arith.mulf %349, %357 : vector<8x11xf32>
    %cst_114 = arith.constant dense<0.000000e+00> : vector<8xf32>
    %423 = vector.multi_reduction <add>, %422, %cst_114 [1] : vector<8x11xf32> to vector<8xf32>
    %424 = vector.shape_cast %423 : vector<8xf32> to vector<8x1xf32>
    %425 = tpu.concatenate %412, %415, %418, %421, %424 in 1 : vector<8x1xf32>, vector<8x1xf32>, vector<8x1xf32>, vector<8x1xf32>, vector<8x1xf32> -> vector<8x5xf32>
    %cst_115 = arith.constant 0.301511347 : f32
    %426 = vector.broadcast %cst_115 : f32 to vector<8x5xf32>
    %427 = arith.mulf %425, %426 : vector<8x5xf32>
    %cst_116 = arith.constant dense<0xFF800000> : vector<8xf32>
    %428 = vector.multi_reduction <maximumf>, %427, %cst_116 [1] : vector<8x5xf32> to vector<8xf32>
    %429 = vector.shape_cast %428 : vector<8xf32> to vector<8x1xf32>
    %430 = vector.broadcast %429 : vector<8x1xf32> to vector<8x5xf32>
    %431 = arith.subf %427, %430 : vector<8x5xf32>
    %432 = math.exp %431 : vector<8x5xf32>
    %cst_117 = arith.constant dense<0.000000e+00> : vector<8xf32>
    %433 = vector.multi_reduction <add>, %432, %cst_117 [1] : vector<8x5xf32> to vector<8xf32>
    %434 = vector.shape_cast %433 : vector<8xf32> to vector<8x1xf32>
    %435 = tpu.reciprocal %434 {approx = true} : vector<8x1xf32> -> vector<8x1xf32>
    %436 = vector.broadcast %435 : vector<8x1xf32> to vector<8x5xf32>
    %437 = arith.mulf %432, %436 : vector<8x5xf32>
    %438 = vector.extract_strided_slice %437 {offsets = [0, 0], sizes = [8, 1], strides = [1, 1]} : vector<8x5xf32> to vector<8x1xf32>
    %439 = vector.broadcast %438 : vector<8x1xf32> to vector<8x11xf32>
    %440 = arith.mulf %439, %358 : vector<8x11xf32>
    %441 = vector.extract_strided_slice %437 {offsets = [0, 1], sizes = [8, 1], strides = [1, 1]} : vector<8x5xf32> to vector<8x1xf32>
    %442 = vector.broadcast %441 : vector<8x1xf32> to vector<8x11xf32>
    %443 = arith.mulf %442, %359 : vector<8x11xf32>
    %444 = arith.addf %440, %443 : vector<8x11xf32>
    %445 = vector.extract_strided_slice %437 {offsets = [0, 2], sizes = [8, 1], strides = [1, 1]} : vector<8x5xf32> to vector<8x1xf32>
    %446 = vector.broadcast %445 : vector<8x1xf32> to vector<8x11xf32>
    %447 = arith.mulf %446, %360 : vector<8x11xf32>
    %448 = arith.addf %444, %447 : vector<8x11xf32>
    %449 = vector.extract_strided_slice %437 {offsets = [0, 3], sizes = [8, 1], strides = [1, 1]} : vector<8x5xf32> to vector<8x1xf32>
    %450 = vector.broadcast %449 : vector<8x1xf32> to vector<8x11xf32>
    %451 = arith.mulf %450, %361 : vector<8x11xf32>
    %452 = arith.addf %448, %451 : vector<8x11xf32>
    %453 = vector.extract_strided_slice %437 {offsets = [0, 4], sizes = [8, 1], strides = [1, 1]} : vector<8x5xf32> to vector<8x1xf32>
    %454 = vector.broadcast %453 : vector<8x1xf32> to vector<8x11xf32>
    %455 = arith.mulf %454, %362 : vector<8x11xf32>
    %456 = arith.addf %452, %455 : vector<8x11xf32>
    %457 = arith.mulf %350, %353 : vector<8x11xf32>
    %cst_118 = arith.constant dense<0.000000e+00> : vector<8xf32>
    %458 = vector.multi_reduction <add>, %457, %cst_118 [1] : vector<8x11xf32> to vector<8xf32>
    %459 = vector.shape_cast %458 : vector<8xf32> to vector<8x1xf32>
    %460 = arith.mulf %350, %354 : vector<8x11xf32>
    %cst_119 = arith.constant dense<0.000000e+00> : vector<8xf32>
    %461 = vector.multi_reduction <add>, %460, %cst_119 [1] : vector<8x11xf32> to vector<8xf32>
    %462 = vector.shape_cast %461 : vector<8xf32> to vector<8x1xf32>
    %463 = arith.mulf %350, %355 : vector<8x11xf32>
    %cst_120 = arith.constant dense<0.000000e+00> : vector<8xf32>
    %464 = vector.multi_reduction <add>, %463, %cst_120 [1] : vector<8x11xf32> to vector<8xf32>
    %465 = vector.shape_cast %464 : vector<8xf32> to vector<8x1xf32>
    %466 = arith.mulf %350, %356 : vector<8x11xf32>
    %cst_121 = arith.constant dense<0.000000e+00> : vector<8xf32>
    %467 = vector.multi_reduction <add>, %466, %cst_121 [1] : vector<8x11xf32> to vector<8xf32>
    %468 = vector.shape_cast %467 : vector<8xf32> to vector<8x1xf32>
    %469 = arith.mulf %350, %357 : vector<8x11xf32>
    %cst_122 = arith.constant dense<0.000000e+00> : vector<8xf32>
    %470 = vector.multi_reduction <add>, %469, %cst_122 [1] : vector<8x11xf32> to vector<8xf32>
    %471 = vector.shape_cast %470 : vector<8xf32> to vector<8x1xf32>
    %472 = tpu.concatenate %459, %462, %465, %468, %471 in 1 : vector<8x1xf32>, vector<8x1xf32>, vector<8x1xf32>, vector<8x1xf32>, vector<8x1xf32> -> vector<8x5xf32>
    %cst_123 = arith.constant 0.301511347 : f32
    %473 = vector.broadcast %cst_123 : f32 to vector<8x5xf32>
    %474 = arith.mulf %472, %473 : vector<8x5xf32>
    %cst_124 = arith.constant dense<0xFF800000> : vector<8xf32>
    %475 = vector.multi_reduction <maximumf>, %474, %cst_124 [1] : vector<8x5xf32> to vector<8xf32>
    %476 = vector.shape_cast %475 : vector<8xf32> to vector<8x1xf32>
    %477 = vector.broadcast %476 : vector<8x1xf32> to vector<8x5xf32>
    %478 = arith.subf %474, %477 : vector<8x5xf32>
    %479 = math.exp %478 : vector<8x5xf32>
    %cst_125 = arith.constant dense<0.000000e+00> : vector<8xf32>
    %480 = vector.multi_reduction <add>, %479, %cst_125 [1] : vector<8x5xf32> to vector<8xf32>
    %481 = vector.shape_cast %480 : vector<8xf32> to vector<8x1xf32>
    %482 = tpu.reciprocal %481 {approx = true} : vector<8x1xf32> -> vector<8x1xf32>
    %483 = vector.broadcast %482 : vector<8x1xf32> to vector<8x5xf32>
    %484 = arith.mulf %479, %483 : vector<8x5xf32>
    %485 = vector.extract_strided_slice %484 {offsets = [0, 0], sizes = [8, 1], strides = [1, 1]} : vector<8x5xf32> to vector<8x1xf32>
    %486 = vector.broadcast %485 : vector<8x1xf32> to vector<8x11xf32>
    %487 = arith.mulf %486, %358 : vector<8x11xf32>
    %488 = vector.extract_strided_slice %484 {offsets = [0, 1], sizes = [8, 1], strides = [1, 1]} : vector<8x5xf32> to vector<8x1xf32>
    %489 = vector.broadcast %488 : vector<8x1xf32> to vector<8x11xf32>
    %490 = arith.mulf %489, %359 : vector<8x11xf32>
    %491 = arith.addf %487, %490 : vector<8x11xf32>
    %492 = vector.extract_strided_slice %484 {offsets = [0, 2], sizes = [8, 1], strides = [1, 1]} : vector<8x5xf32> to vector<8x1xf32>
    %493 = vector.broadcast %492 : vector<8x1xf32> to vector<8x11xf32>
    %494 = arith.mulf %493, %360 : vector<8x11xf32>
    %495 = arith.addf %491, %494 : vector<8x11xf32>
    %496 = vector.extract_strided_slice %484 {offsets = [0, 3], sizes = [8, 1], strides = [1, 1]} : vector<8x5xf32> to vector<8x1xf32>
    %497 = vector.broadcast %496 : vector<8x1xf32> to vector<8x11xf32>
    %498 = arith.mulf %497, %361 : vector<8x11xf32>
    %499 = arith.addf %495, %498 : vector<8x11xf32>
    %500 = vector.extract_strided_slice %484 {offsets = [0, 4], sizes = [8, 1], strides = [1, 1]} : vector<8x5xf32> to vector<8x1xf32>
    %501 = vector.broadcast %500 : vector<8x1xf32> to vector<8x11xf32>
    %502 = arith.mulf %501, %362 : vector<8x11xf32>
    %503 = arith.addf %499, %502 : vector<8x11xf32>
    %504 = arith.mulf %351, %353 : vector<8x11xf32>
    %cst_126 = arith.constant dense<0.000000e+00> : vector<8xf32>
    %505 = vector.multi_reduction <add>, %504, %cst_126 [1] : vector<8x11xf32> to vector<8xf32>
    %506 = vector.shape_cast %505 : vector<8xf32> to vector<8x1xf32>
    %507 = arith.mulf %351, %354 : vector<8x11xf32>
    %cst_127 = arith.constant dense<0.000000e+00> : vector<8xf32>
    %508 = vector.multi_reduction <add>, %507, %cst_127 [1] : vector<8x11xf32> to vector<8xf32>
    %509 = vector.shape_cast %508 : vector<8xf32> to vector<8x1xf32>
    %510 = arith.mulf %351, %355 : vector<8x11xf32>
    %cst_128 = arith.constant dense<0.000000e+00> : vector<8xf32>
    %511 = vector.multi_reduction <add>, %510, %cst_128 [1] : vector<8x11xf32> to vector<8xf32>
    %512 = vector.shape_cast %511 : vector<8xf32> to vector<8x1xf32>
    %513 = arith.mulf %351, %356 : vector<8x11xf32>
    %cst_129 = arith.constant dense<0.000000e+00> : vector<8xf32>
    %514 = vector.multi_reduction <add>, %513, %cst_129 [1] : vector<8x11xf32> to vector<8xf32>
    %515 = vector.shape_cast %514 : vector<8xf32> to vector<8x1xf32>
    %516 = arith.mulf %351, %357 : vector<8x11xf32>
    %cst_130 = arith.constant dense<0.000000e+00> : vector<8xf32>
    %517 = vector.multi_reduction <add>, %516, %cst_130 [1] : vector<8x11xf32> to vector<8xf32>
    %518 = vector.shape_cast %517 : vector<8xf32> to vector<8x1xf32>
    %519 = tpu.concatenate %506, %509, %512, %515, %518 in 1 : vector<8x1xf32>, vector<8x1xf32>, vector<8x1xf32>, vector<8x1xf32>, vector<8x1xf32> -> vector<8x5xf32>
    %cst_131 = arith.constant 0.301511347 : f32
    %520 = vector.broadcast %cst_131 : f32 to vector<8x5xf32>
    %521 = arith.mulf %519, %520 : vector<8x5xf32>
    %cst_132 = arith.constant dense<0xFF800000> : vector<8xf32>
    %522 = vector.multi_reduction <maximumf>, %521, %cst_132 [1] : vector<8x5xf32> to vector<8xf32>
    %523 = vector.shape_cast %522 : vector<8xf32> to vector<8x1xf32>
    %524 = vector.broadcast %523 : vector<8x1xf32> to vector<8x5xf32>
    %525 = arith.subf %521, %524 : vector<8x5xf32>
    %526 = math.exp %525 : vector<8x5xf32>
    %cst_133 = arith.constant dense<0.000000e+00> : vector<8xf32>
    %527 = vector.multi_reduction <add>, %526, %cst_133 [1] : vector<8x5xf32> to vector<8xf32>
    %528 = vector.shape_cast %527 : vector<8xf32> to vector<8x1xf32>
    %529 = tpu.reciprocal %528 {approx = true} : vector<8x1xf32> -> vector<8x1xf32>
    %530 = vector.broadcast %529 : vector<8x1xf32> to vector<8x5xf32>
    %531 = arith.mulf %526, %530 : vector<8x5xf32>
    %532 = vector.extract_strided_slice %531 {offsets = [0, 0], sizes = [8, 1], strides = [1, 1]} : vector<8x5xf32> to vector<8x1xf32>
    %533 = vector.broadcast %532 : vector<8x1xf32> to vector<8x11xf32>
    %534 = arith.mulf %533, %358 : vector<8x11xf32>
    %535 = vector.extract_strided_slice %531 {offsets = [0, 1], sizes = [8, 1], strides = [1, 1]} : vector<8x5xf32> to vector<8x1xf32>
    %536 = vector.broadcast %535 : vector<8x1xf32> to vector<8x11xf32>
    %537 = arith.mulf %536, %359 : vector<8x11xf32>
    %538 = arith.addf %534, %537 : vector<8x11xf32>
    %539 = vector.extract_strided_slice %531 {offsets = [0, 2], sizes = [8, 1], strides = [1, 1]} : vector<8x5xf32> to vector<8x1xf32>
    %540 = vector.broadcast %539 : vector<8x1xf32> to vector<8x11xf32>
    %541 = arith.mulf %540, %360 : vector<8x11xf32>
    %542 = arith.addf %538, %541 : vector<8x11xf32>
    %543 = vector.extract_strided_slice %531 {offsets = [0, 3], sizes = [8, 1], strides = [1, 1]} : vector<8x5xf32> to vector<8x1xf32>
    %544 = vector.broadcast %543 : vector<8x1xf32> to vector<8x11xf32>
    %545 = arith.mulf %544, %361 : vector<8x11xf32>
    %546 = arith.addf %542, %545 : vector<8x11xf32>
    %547 = vector.extract_strided_slice %531 {offsets = [0, 4], sizes = [8, 1], strides = [1, 1]} : vector<8x5xf32> to vector<8x1xf32>
    %548 = vector.broadcast %547 : vector<8x1xf32> to vector<8x11xf32>
    %549 = arith.mulf %548, %362 : vector<8x11xf32>
    %550 = arith.addf %546, %549 : vector<8x11xf32>
    %551 = arith.mulf %352, %353 : vector<8x11xf32>
    %cst_134 = arith.constant dense<0.000000e+00> : vector<8xf32>
    %552 = vector.multi_reduction <add>, %551, %cst_134 [1] : vector<8x11xf32> to vector<8xf32>
    %553 = vector.shape_cast %552 : vector<8xf32> to vector<8x1xf32>
    %554 = arith.mulf %352, %354 : vector<8x11xf32>
    %cst_135 = arith.constant dense<0.000000e+00> : vector<8xf32>
    %555 = vector.multi_reduction <add>, %554, %cst_135 [1] : vector<8x11xf32> to vector<8xf32>
    %556 = vector.shape_cast %555 : vector<8xf32> to vector<8x1xf32>
    %557 = arith.mulf %352, %355 : vector<8x11xf32>
    %cst_136 = arith.constant dense<0.000000e+00> : vector<8xf32>
    %558 = vector.multi_reduction <add>, %557, %cst_136 [1] : vector<8x11xf32> to vector<8xf32>
    %559 = vector.shape_cast %558 : vector<8xf32> to vector<8x1xf32>
    %560 = arith.mulf %352, %356 : vector<8x11xf32>
    %cst_137 = arith.constant dense<0.000000e+00> : vector<8xf32>
    %561 = vector.multi_reduction <add>, %560, %cst_137 [1] : vector<8x11xf32> to vector<8xf32>
    %562 = vector.shape_cast %561 : vector<8xf32> to vector<8x1xf32>
    %563 = arith.mulf %352, %357 : vector<8x11xf32>
    %cst_138 = arith.constant dense<0.000000e+00> : vector<8xf32>
    %564 = vector.multi_reduction <add>, %563, %cst_138 [1] : vector<8x11xf32> to vector<8xf32>
    %565 = vector.shape_cast %564 : vector<8xf32> to vector<8x1xf32>
    %566 = tpu.concatenate %553, %556, %559, %562, %565 in 1 : vector<8x1xf32>, vector<8x1xf32>, vector<8x1xf32>, vector<8x1xf32>, vector<8x1xf32> -> vector<8x5xf32>
    %cst_139 = arith.constant 0.301511347 : f32
    %567 = vector.broadcast %cst_139 : f32 to vector<8x5xf32>
    %568 = arith.mulf %566, %567 : vector<8x5xf32>
    %cst_140 = arith.constant dense<0xFF800000> : vector<8xf32>
    %569 = vector.multi_reduction <maximumf>, %568, %cst_140 [1] : vector<8x5xf32> to vector<8xf32>
    %570 = vector.shape_cast %569 : vector<8xf32> to vector<8x1xf32>
    %571 = vector.broadcast %570 : vector<8x1xf32> to vector<8x5xf32>
    %572 = arith.subf %568, %571 : vector<8x5xf32>
    %573 = math.exp %572 : vector<8x5xf32>
    %cst_141 = arith.constant dense<0.000000e+00> : vector<8xf32>
    %574 = vector.multi_reduction <add>, %573, %cst_141 [1] : vector<8x5xf32> to vector<8xf32>
    %575 = vector.shape_cast %574 : vector<8xf32> to vector<8x1xf32>
    %576 = tpu.reciprocal %575 {approx = true} : vector<8x1xf32> -> vector<8x1xf32>
    %577 = vector.broadcast %576 : vector<8x1xf32> to vector<8x5xf32>
    %578 = arith.mulf %573, %577 : vector<8x5xf32>
    %579 = vector.extract_strided_slice %578 {offsets = [0, 0], sizes = [8, 1], strides = [1, 1]} : vector<8x5xf32> to vector<8x1xf32>
    %580 = vector.broadcast %579 : vector<8x1xf32> to vector<8x11xf32>
    %581 = arith.mulf %580, %358 : vector<8x11xf32>
    %582 = vector.extract_strided_slice %578 {offsets = [0, 1], sizes = [8, 1], strides = [1, 1]} : vector<8x5xf32> to vector<8x1xf32>
    %583 = vector.broadcast %582 : vector<8x1xf32> to vector<8x11xf32>
    %584 = arith.mulf %583, %359 : vector<8x11xf32>
    %585 = arith.addf %581, %584 : vector<8x11xf32>
    %586 = vector.extract_strided_slice %578 {offsets = [0, 2], sizes = [8, 1], strides = [1, 1]} : vector<8x5xf32> to vector<8x1xf32>
    %587 = vector.broadcast %586 : vector<8x1xf32> to vector<8x11xf32>
    %588 = arith.mulf %587, %360 : vector<8x11xf32>
    %589 = arith.addf %585, %588 : vector<8x11xf32>
    %590 = vector.extract_strided_slice %578 {offsets = [0, 3], sizes = [8, 1], strides = [1, 1]} : vector<8x5xf32> to vector<8x1xf32>
    %591 = vector.broadcast %590 : vector<8x1xf32> to vector<8x11xf32>
    %592 = arith.mulf %591, %361 : vector<8x11xf32>
    %593 = arith.addf %589, %592 : vector<8x11xf32>
    %594 = vector.extract_strided_slice %578 {offsets = [0, 4], sizes = [8, 1], strides = [1, 1]} : vector<8x5xf32> to vector<8x1xf32>
    %595 = vector.broadcast %594 : vector<8x1xf32> to vector<8x11xf32>
    %596 = arith.mulf %595, %362 : vector<8x11xf32>
    %597 = arith.addf %593, %596 : vector<8x11xf32>
    %598 = tpu.concatenate %409, %456, %503, %550, %597 in 0 : vector<8x11xf32>, vector<8x11xf32>, vector<8x11xf32>, vector<8x11xf32>, vector<8x11xf32> -> vector<40x11xf32>
    %cst_142 = arith.constant dense<0.000000e+00> : vector<40x11xf32>
    %599 = tpu.matmul %598, %346, %cst_142 {dimension_numbers = #tpu.dot_dimension_numbers<[1], [0], [0], [1], [0, 0, 1, 1], [], []>, precision = #tpu.contract_precision<fp32>} : vector<40x11xf32>, vector<11x11xf32>, vector<40x11xf32> -> vector<40x11xf32>
    %600 = arith.addf %347, %599 : vector<40x11xf32>
    %c1_143 = arith.constant 1 : index
    %c0_144 = arith.constant 0 : index
    %c0_145 = arith.constant 0 : index
    %601 = vector.load %arg5[%c1_143, %c0_144, %c0_145] : memref<2x1x11xf32, #tpu.memory_space<vmem>>, vector<1x1x11xf32>
    %602 = vector.shape_cast %601 : vector<1x1x11xf32> to vector<1x11xf32>
    %603 = vector.broadcast %602 : vector<1x11xf32> to vector<40x11xf32>
    %604 = arith.addf %600, %603 : vector<40x11xf32>
    %605 = arith.addf %337, %604 : vector<40x11xf32>
    %c1_146 = arith.constant 1 : index
    %c0_147 = arith.constant 0 : index
    %c0_148 = arith.constant 0 : index
    %606 = vector.load %arg6[%c1_146, %c0_147, %c0_148] : memref<2x1x11xf32, #tpu.memory_space<vmem>>, vector<1x1x11xf32>
    %607 = vector.shape_cast %606 : vector<1x1x11xf32> to vector<1x11xf32>
    %c1_149 = arith.constant 1 : index
    %c0_150 = arith.constant 0 : index
    %c0_151 = arith.constant 0 : index
    %608 = vector.load %arg7[%c1_149, %c0_150, %c0_151] : memref<2x1x11xf32, #tpu.memory_space<vmem>>, vector<1x1x11xf32>
    %609 = vector.shape_cast %608 : vector<1x1x11xf32> to vector<1x11xf32>
    %cst_152 = arith.constant dense<0.000000e+00> : vector<40xf32>
    %610 = vector.multi_reduction <add>, %605, %cst_152 [1] : vector<40x11xf32> to vector<40xf32>
    %611 = vector.shape_cast %610 : vector<40xf32> to vector<40x1xf32>
    %cst_153 = arith.constant 1.100000e+01 : f32
    %612 = vector.broadcast %cst_153 : f32 to vector<40x1xf32>
    %613 = arith.divf %611, %612 : vector<40x1xf32>
    %614 = vector.broadcast %613 : vector<40x1xf32> to vector<40x11xf32>
    %615 = arith.subf %605, %614 : vector<40x11xf32>
    %616 = arith.mulf %615, %615 : vector<40x11xf32>
    %cst_154 = arith.constant dense<0.000000e+00> : vector<40xf32>
    %617 = vector.multi_reduction <add>, %616, %cst_154 [1] : vector<40x11xf32> to vector<40xf32>
    %618 = vector.shape_cast %617 : vector<40xf32> to vector<40x1xf32>
    %cst_155 = arith.constant 1.100000e+01 : f32
    %619 = vector.broadcast %cst_155 : f32 to vector<40x1xf32>
    %620 = arith.divf %618, %619 : vector<40x1xf32>
    %621 = vector.broadcast %613 : vector<40x1xf32> to vector<40x11xf32>
    %622 = arith.subf %605, %621 : vector<40x11xf32>
    %cst_156 = arith.constant 9.99999974E-6 : f32
    %623 = vector.broadcast %cst_156 : f32 to vector<40x1xf32>
    %624 = arith.addf %620, %623 : vector<40x1xf32>
    %625 = math.rsqrt %624 : vector<40x1xf32>
    %626 = vector.broadcast %625 : vector<40x1xf32> to vector<40x11xf32>
    %627 = arith.mulf %622, %626 : vector<40x11xf32>
    %628 = vector.broadcast %607 : vector<1x11xf32> to vector<40x11xf32>
    %629 = arith.mulf %627, %628 : vector<40x11xf32>
    %630 = vector.broadcast %609 : vector<1x11xf32> to vector<40x11xf32>
    %631 = arith.addf %629, %630 : vector<40x11xf32>
    %c1_157 = arith.constant 1 : index
    %c0_158 = arith.constant 0 : index
    %c0_159 = arith.constant 0 : index
    %632 = vector.load %arg8[%c1_157, %c0_158, %c0_159] : memref<2x11x32xf32, #tpu.memory_space<vmem>>, vector<1x11x32xf32>
    %633 = vector.shape_cast %632 : vector<1x11x32xf32> to vector<11x32xf32>
    %cst_160 = arith.constant dense<0.000000e+00> : vector<40x32xf32>
    %634 = tpu.matmul %631, %633, %cst_160 {dimension_numbers = #tpu.dot_dimension_numbers<[1], [0], [0], [1], [0, 0, 1, 1], [], []>, precision = #tpu.contract_precision<fp32>} : vector<40x11xf32>, vector<11x32xf32>, vector<40x32xf32> -> vector<40x32xf32>
    %c1_161 = arith.constant 1 : index
    %c0_162 = arith.constant 0 : index
    %c0_163 = arith.constant 0 : index
    %635 = vector.load %arg9[%c1_161, %c0_162, %c0_163] : memref<2x1x32xf32, #tpu.memory_space<vmem>>, vector<1x1x32xf32>
    %636 = vector.shape_cast %635 : vector<1x1x32xf32> to vector<1x32xf32>
    %637 = vector.broadcast %636 : vector<1x32xf32> to vector<40x32xf32>
    %638 = arith.addf %634, %637 : vector<40x32xf32>
    %cst_164 = arith.constant 0.000000e+00 : f32
    %639 = vector.broadcast %cst_164 : f32 to vector<40x32xf32>
    %640 = arith.maximumf %638, %639 : vector<40x32xf32>
    %c1_165 = arith.constant 1 : index
    %c0_166 = arith.constant 0 : index
    %c0_167 = arith.constant 0 : index
    %641 = vector.load %arg10[%c1_165, %c0_166, %c0_167] : memref<2x32x11xf32, #tpu.memory_space<vmem>>, vector<1x32x11xf32>
    %642 = vector.shape_cast %641 : vector<1x32x11xf32> to vector<32x11xf32>
    %cst_168 = arith.constant dense<0.000000e+00> : vector<40x11xf32>
    %643 = tpu.matmul %640, %642, %cst_168 {dimension_numbers = #tpu.dot_dimension_numbers<[1], [0], [0], [1], [0, 0, 1, 1], [], []>, precision = #tpu.contract_precision<fp32>} : vector<40x32xf32>, vector<32x11xf32>, vector<40x11xf32> -> vector<40x11xf32>
    %c1_169 = arith.constant 1 : index
    %c0_170 = arith.constant 0 : index
    %c0_171 = arith.constant 0 : index
    %644 = vector.load %arg11[%c1_169, %c0_170, %c0_171] : memref<2x1x11xf32, #tpu.memory_space<vmem>>, vector<1x1x11xf32>
    %645 = vector.shape_cast %644 : vector<1x1x11xf32> to vector<1x11xf32>
    %646 = vector.broadcast %645 : vector<1x11xf32> to vector<40x11xf32>
    %647 = arith.addf %643, %646 : vector<40x11xf32>
    %648 = arith.addf %631, %647 : vector<40x11xf32>
    %c1_172 = arith.constant 1 : index
    %c0_173 = arith.constant 0 : index
    %c0_174 = arith.constant 0 : index
    %649 = vector.load %arg12[%c1_172, %c0_173, %c0_174] : memref<2x1x11xf32, #tpu.memory_space<vmem>>, vector<1x1x11xf32>
    %650 = vector.shape_cast %649 : vector<1x1x11xf32> to vector<1x11xf32>
    %c1_175 = arith.constant 1 : index
    %c0_176 = arith.constant 0 : index
    %c0_177 = arith.constant 0 : index
    %651 = vector.load %arg13[%c1_175, %c0_176, %c0_177] : memref<2x1x11xf32, #tpu.memory_space<vmem>>, vector<1x1x11xf32>
    %652 = vector.shape_cast %651 : vector<1x1x11xf32> to vector<1x11xf32>
    %cst_178 = arith.constant dense<0.000000e+00> : vector<40xf32>
    %653 = vector.multi_reduction <add>, %648, %cst_178 [1] : vector<40x11xf32> to vector<40xf32>
    %654 = vector.shape_cast %653 : vector<40xf32> to vector<40x1xf32>
    %cst_179 = arith.constant 1.100000e+01 : f32
    %655 = vector.broadcast %cst_179 : f32 to vector<40x1xf32>
    %656 = arith.divf %654, %655 : vector<40x1xf32>
    %657 = vector.broadcast %656 : vector<40x1xf32> to vector<40x11xf32>
    %658 = arith.subf %648, %657 : vector<40x11xf32>
    %659 = arith.mulf %658, %658 : vector<40x11xf32>
    %cst_180 = arith.constant dense<0.000000e+00> : vector<40xf32>
    %660 = vector.multi_reduction <add>, %659, %cst_180 [1] : vector<40x11xf32> to vector<40xf32>
    %661 = vector.shape_cast %660 : vector<40xf32> to vector<40x1xf32>
    %cst_181 = arith.constant 1.100000e+01 : f32
    %662 = vector.broadcast %cst_181 : f32 to vector<40x1xf32>
    %663 = arith.divf %661, %662 : vector<40x1xf32>
    %664 = vector.broadcast %656 : vector<40x1xf32> to vector<40x11xf32>
    %665 = arith.subf %648, %664 : vector<40x11xf32>
    %cst_182 = arith.constant 9.99999974E-6 : f32
    %666 = vector.broadcast %cst_182 : f32 to vector<40x1xf32>
    %667 = arith.addf %663, %666 : vector<40x1xf32>
    %668 = math.rsqrt %667 : vector<40x1xf32>
    %669 = vector.broadcast %668 : vector<40x1xf32> to vector<40x11xf32>
    %670 = arith.mulf %665, %669 : vector<40x11xf32>
    %671 = vector.broadcast %650 : vector<1x11xf32> to vector<40x11xf32>
    %672 = arith.mulf %670, %671 : vector<40x11xf32>
    %673 = vector.broadcast %652 : vector<1x11xf32> to vector<40x11xf32>
    %674 = arith.addf %672, %673 : vector<40x11xf32>
    %675 = vector.extract_strided_slice %674 {offsets = [0, 0], sizes = [8, 11], strides = [1, 1]} : vector<40x11xf32> to vector<8x11xf32>
    %c0_183 = arith.constant 0 : index
    %c0_184 = arith.constant 0 : index
    %c0_185 = arith.constant 0 : index
    %676 = vector.load %arg14[%c0_183, %c0_184, %c0_185] : memref<5x11x3xf32, #tpu.memory_space<vmem>>, vector<1x11x3xf32>
    %677 = vector.shape_cast %676 : vector<1x11x3xf32> to vector<11x3xf32>
    %cst_186 = arith.constant dense<0.000000e+00> : vector<8x3xf32>
    %678 = tpu.matmul %675, %677, %cst_186 {dimension_numbers = #tpu.dot_dimension_numbers<[1], [0], [0], [1], [0, 0, 1, 1], [], []>, precision = #tpu.contract_precision<fp32>} : vector<8x11xf32>, vector<11x3xf32>, vector<8x3xf32> -> vector<8x3xf32>
    %679 = vector.extract_strided_slice %674 {offsets = [8, 0], sizes = [8, 11], strides = [1, 1]} : vector<40x11xf32> to vector<8x11xf32>
    %c1_187 = arith.constant 1 : index
    %c0_188 = arith.constant 0 : index
    %c0_189 = arith.constant 0 : index
    %680 = vector.load %arg14[%c1_187, %c0_188, %c0_189] : memref<5x11x3xf32, #tpu.memory_space<vmem>>, vector<1x11x3xf32>
    %681 = vector.shape_cast %680 : vector<1x11x3xf32> to vector<11x3xf32>
    %cst_190 = arith.constant dense<0.000000e+00> : vector<8x3xf32>
    %682 = tpu.matmul %679, %681, %cst_190 {dimension_numbers = #tpu.dot_dimension_numbers<[1], [0], [0], [1], [0, 0, 1, 1], [], []>, precision = #tpu.contract_precision<fp32>} : vector<8x11xf32>, vector<11x3xf32>, vector<8x3xf32> -> vector<8x3xf32>
    %683 = arith.addf %678, %682 : vector<8x3xf32>
    %684 = vector.extract_strided_slice %674 {offsets = [16, 0], sizes = [8, 11], strides = [1, 1]} : vector<40x11xf32> to vector<8x11xf32>
    %c2 = arith.constant 2 : index
    %c0_191 = arith.constant 0 : index
    %c0_192 = arith.constant 0 : index
    %685 = vector.load %arg14[%c2, %c0_191, %c0_192] : memref<5x11x3xf32, #tpu.memory_space<vmem>>, vector<1x11x3xf32>
    %686 = vector.shape_cast %685 : vector<1x11x3xf32> to vector<11x3xf32>
    %cst_193 = arith.constant dense<0.000000e+00> : vector<8x3xf32>
    %687 = tpu.matmul %684, %686, %cst_193 {dimension_numbers = #tpu.dot_dimension_numbers<[1], [0], [0], [1], [0, 0, 1, 1], [], []>, precision = #tpu.contract_precision<fp32>} : vector<8x11xf32>, vector<11x3xf32>, vector<8x3xf32> -> vector<8x3xf32>
    %688 = arith.addf %683, %687 : vector<8x3xf32>
    %689 = vector.extract_strided_slice %674 {offsets = [24, 0], sizes = [8, 11], strides = [1, 1]} : vector<40x11xf32> to vector<8x11xf32>
    %c3 = arith.constant 3 : index
    %c0_194 = arith.constant 0 : index
    %c0_195 = arith.constant 0 : index
    %690 = vector.load %arg14[%c3, %c0_194, %c0_195] : memref<5x11x3xf32, #tpu.memory_space<vmem>>, vector<1x11x3xf32>
    %691 = vector.shape_cast %690 : vector<1x11x3xf32> to vector<11x3xf32>
    %cst_196 = arith.constant dense<0.000000e+00> : vector<8x3xf32>
    %692 = tpu.matmul %689, %691, %cst_196 {dimension_numbers = #tpu.dot_dimension_numbers<[1], [0], [0], [1], [0, 0, 1, 1], [], []>, precision = #tpu.contract_precision<fp32>} : vector<8x11xf32>, vector<11x3xf32>, vector<8x3xf32> -> vector<8x3xf32>
    %693 = arith.addf %688, %692 : vector<8x3xf32>
    %694 = vector.extract_strided_slice %674 {offsets = [32, 0], sizes = [8, 11], strides = [1, 1]} : vector<40x11xf32> to vector<8x11xf32>
    %c4 = arith.constant 4 : index
    %c0_197 = arith.constant 0 : index
    %c0_198 = arith.constant 0 : index
    %695 = vector.load %arg14[%c4, %c0_197, %c0_198] : memref<5x11x3xf32, #tpu.memory_space<vmem>>, vector<1x11x3xf32>
    %696 = vector.shape_cast %695 : vector<1x11x3xf32> to vector<11x3xf32>
    %cst_199 = arith.constant dense<0.000000e+00> : vector<8x3xf32>
    %697 = tpu.matmul %694, %696, %cst_199 {dimension_numbers = #tpu.dot_dimension_numbers<[1], [0], [0], [1], [0, 0, 1, 1], [], []>, precision = #tpu.contract_precision<fp32>} : vector<8x11xf32>, vector<11x3xf32>, vector<8x3xf32> -> vector<8x3xf32>
    %698 = arith.addf %693, %697 : vector<8x3xf32>
    %c0_200 = arith.constant 0 : index
    %c0_201 = arith.constant 0 : index
    %699 = vector.load %arg15[%c0_200, %c0_201] : memref<1x3xf32, #tpu.memory_space<vmem>>, vector<1x3xf32>
    %700 = vector.broadcast %699 : vector<1x3xf32> to vector<8x3xf32>
    %701 = arith.addf %698, %700 : vector<8x3xf32>
    %c0_202 = arith.constant 0 : index
    %c0_203 = arith.constant 0 : index
    %702 = vector.load %arg16[%c0_202, %c0_203] : memref<8x3xf32, #tpu.memory_space<vmem>>, vector<8x3xf32>
    tpu.vector_store %arg16[%c0_202, %c0_203], %701 {strides = array<i32>} : memref<8x3xf32, #tpu.memory_space<vmem>>, vector<8x3xf32>,
    return
  }
  func.func @transform_0(%arg0: i32) -> (i32, i32) {
    %c0_i32 = arith.constant 0 : i32
    %c0_i32_0 = arith.constant 0 : i32
    return %arg0, %c0_i32 : i32, i32
  }
  func.func @transform_1(%arg0: i32) -> (i32, i32, i32) {
    %c0_i32 = arith.constant 0 : i32
    %c0_i32_0 = arith.constant 0 : i32
    %c0_i32_1 = arith.constant 0 : i32
    %c0_i32_2 = arith.constant 0 : i32
    return %c0_i32, %c0_i32_0, %c0_i32_1 : i32, i32, i32
  }
  func.func @transform_2(%arg0: i32) -> (i32, i32, i32) {
    %c0_i32 = arith.constant 0 : i32
    %c0_i32_0 = arith.constant 0 : i32
    %c0_i32_1 = arith.constant 0 : i32
    %c0_i32_2 = arith.constant 0 : i32
    return %c0_i32, %c0_i32_0, %c0_i32_1 : i32, i32, i32
  }
  func.func @transform_3(%arg0: i32) -> (i32, i32, i32) {
    %c0_i32 = arith.constant 0 : i32
    %c0_i32_0 = arith.constant 0 : i32
    %c0_i32_1 = arith.constant 0 : i32
    %c0_i32_2 = arith.constant 0 : i32
    return %c0_i32, %c0_i32_0, %c0_i32_1 : i32, i32, i32
  }
  func.func @transform_4(%arg0: i32) -> (i32, i32, i32) {
    %c0_i32 = arith.constant 0 : i32
    %c0_i32_0 = arith.constant 0 : i32
    %c0_i32_1 = arith.constant 0 : i32
    %c0_i32_2 = arith.constant 0 : i32
    return %c0_i32, %c0_i32_0, %c0_i32_1 : i32, i32, i32
  }
  func.func @transform_5(%arg0: i32) -> (i32, i32, i32) {
    %c0_i32 = arith.constant 0 : i32
    %c0_i32_0 = arith.constant 0 : i32
    %c0_i32_1 = arith.constant 0 : i32
    %c0_i32_2 = arith.constant 0 : i32
    return %c0_i32, %c0_i32_0, %c0_i32_1 : i32, i32, i32
  }
  func.func @transform_6(%arg0: i32) -> (i32, i32, i32) {
    %c0_i32 = arith.constant 0 : i32
    %c0_i32_0 = arith.constant 0 : i32
    %c0_i32_1 = arith.constant 0 : i32
    %c0_i32_2 = arith.constant 0 : i32
    return %c0_i32, %c0_i32_0, %c0_i32_1 : i32, i32, i32
  }
  func.func @transform_7(%arg0: i32) -> (i32, i32, i32) {
    %c0_i32 = arith.constant 0 : i32
    %c0_i32_0 = arith.constant 0 : i32
    %c0_i32_1 = arith.constant 0 : i32
    %c0_i32_2 = arith.constant 0 : i32
    return %c0_i32, %c0_i32_0, %c0_i32_1 : i32, i32, i32
  }
  func.func @transform_8(%arg0: i32) -> (i32, i32, i32) {
    %c0_i32 = arith.constant 0 : i32
    %c0_i32_0 = arith.constant 0 : i32
    %c0_i32_1 = arith.constant 0 : i32
    %c0_i32_2 = arith.constant 0 : i32
    return %c0_i32, %c0_i32_0, %c0_i32_1 : i32, i32, i32
  }
  func.func @transform_9(%arg0: i32) -> (i32, i32, i32) {
    %c0_i32 = arith.constant 0 : i32
    %c0_i32_0 = arith.constant 0 : i32
    %c0_i32_1 = arith.constant 0 : i32
    %c0_i32_2 = arith.constant 0 : i32
    return %c0_i32, %c0_i32_0, %c0_i32_1 : i32, i32, i32
  }
  func.func @transform_10(%arg0: i32) -> (i32, i32, i32) {
    %c0_i32 = arith.constant 0 : i32
    %c0_i32_0 = arith.constant 0 : i32
    %c0_i32_1 = arith.constant 0 : i32
    %c0_i32_2 = arith.constant 0 : i32
    return %c0_i32, %c0_i32_0, %c0_i32_1 : i32, i32, i32
  }
  func.func @transform_11(%arg0: i32) -> (i32, i32, i32) {
    %c0_i32 = arith.constant 0 : i32
    %c0_i32_0 = arith.constant 0 : i32
    %c0_i32_1 = arith.constant 0 : i32
    %c0_i32_2 = arith.constant 0 : i32
    return %c0_i32, %c0_i32_0, %c0_i32_1 : i32, i32, i32
  }
  func.func @transform_12(%arg0: i32) -> (i32, i32, i32) {
    %c0_i32 = arith.constant 0 : i32
    %c0_i32_0 = arith.constant 0 : i32
    %c0_i32_1 = arith.constant 0 : i32
    %c0_i32_2 = arith.constant 0 : i32
    return %c0_i32, %c0_i32_0, %c0_i32_1 : i32, i32, i32
  }
  func.func @transform_13(%arg0: i32) -> (i32, i32, i32) {
    %c0_i32 = arith.constant 0 : i32
    %c0_i32_0 = arith.constant 0 : i32
    %c0_i32_1 = arith.constant 0 : i32
    %c0_i32_2 = arith.constant 0 : i32
    return %c0_i32, %c0_i32_0, %c0_i32_1 : i32, i32, i32
  }
  func.func @transform_14(%arg0: i32) -> (i32, i32) {
    %c0_i32 = arith.constant 0 : i32
    %c0_i32_0 = arith.constant 0 : i32
    %c0_i32_1 = arith.constant 0 : i32
    return %c0_i32, %c0_i32_0 : i32, i32
  }
  func.func @transform_15(%arg0: i32) -> (i32, i32) {
    %c0_i32 = arith.constant 0 : i32
    %c0_i32_0 = arith.constant 0 : i32
    return %arg0, %c0_i32 : i32, i32
  }
}

</mosaic_0001>

<llo_original>
// kernel: tpu_custom_call.1
$region0: #{tpu_custom_call.1}
  #allocation0 [shape = 'u32[]', space=smem, size = 0x4, offset = 0x4, fixed_abs, tag = 'smem constant byte address 0x4 - core index']
  #allocation1 [shape = 'u32[144,128]{1,0:T(1,128)}', space=vmem, size = 0x12000, scoped, tag = 'internal scratch']
  %s0 = inlined_call_operand.vmem [shape: f32[80,11], index: 0, kind: input, shape index: {}]
  %s1 = inlined_call_operand.vmem [shape: f32[2,11,33], index: 1, kind: input, shape index: {}]
  %s2 = inlined_call_operand.vmem [shape: f32[2,1,33], index: 2, kind: input, shape index: {}]
  %s3 = inlined_call_operand.vmem [shape: f32[2,11,11], index: 3, kind: input, shape index: {}]
  %s4 = inlined_call_operand.vmem [shape: f32[2,1,11], index: 4, kind: input, shape index: {}]
  %s5 = inlined_call_operand.vmem [shape: f32[2,1,11], index: 5, kind: input, shape index: {}]
  %s6 = inlined_call_operand.vmem [shape: f32[2,1,11], index: 6, kind: input, shape index: {}]
  %s7 = inlined_call_operand.vmem [shape: f32[2,11,32], index: 7, kind: input, shape index: {}]
  %s8 = inlined_call_operand.vmem [shape: f32[2,1,32], index: 8, kind: input, shape index: {}]
  %s9 = inlined_call_operand.vmem [shape: f32[2,32,11], index: 9, kind: input, shape index: {}]
  %s10 = inlined_call_operand.vmem [shape: f32[2,1,11], index: 10, kind: input, shape index: {}]
  %s11 = inlined_call_operand.vmem [shape: f32[2,1,11], index: 11, kind: input, shape index: {}]
  %s12 = inlined_call_operand.vmem [shape: f32[2,1,11], index: 12, kind: input, shape index: {}]
  %s13 = inlined_call_operand.vmem [shape: f32[5,11,3], index: 13, kind: input, shape index: {}]
  %s14 = inlined_call_operand.vmem [shape: f32[1,3], index: 14, kind: input, shape index: {}]
  %s15 = inlined_call_operand.vmem [shape: f32[16,3], index: 15, kind: output, shape index: {}]
  %s16 = sld [smem:[#allocation0]]
  $region93: #{tpu_custom_call.1} parent=0
    _
  %s18 = ssub.s32 1, %s16
  %s19 = scalar_select 0, %s18, %s16
  loop: start=0, step=1, limit=4
  $region2: #{tpu_custom_call.1} parent=0 // loop_pre_header
    _
  $region3: #{tpu_custom_call.1} parent=0 // loop_header
    %s21 = sphi 0, %s25
    %p22 = scmp.ge.s32.totalorder %s21, 4
    %s31 = sphi 0, %s33
    %s34 = sphi 0, %s31
    %s35 = sphi 0, %s34
    %s51 = sphi 0, %s35
    %s55 = sphi 0, %s55
    %s57 = sphi 0, %s55
    %s58 = sphi 0, %s57
    %s72 = sphi 0, %s58
    %s76 = sphi 0, %s76
    %s78 = sphi 0, %s76
    %s79 = sphi 0, %s78
    %s93 = sphi 0, %s79
    %s97 = sphi 0, %s97
    %s99 = sphi 0, %s97
    %s100 = sphi 0, %s99
    %s114 = sphi 0, %s100
    %s118 = sphi 0, %s118
    %s120 = sphi 0, %s118
    %s121 = sphi 0, %s120
    %s135 = sphi 0, %s121
    %s139 = sphi 0, %s139
    %s141 = sphi 0, %s139
    %s142 = sphi 0, %s141
    %s156 = sphi 0, %s142
    %s160 = sphi 0, %s160
    %s162 = sphi 0, %s160
    %s163 = sphi 0, %s162
    %s177 = sphi 0, %s163
    %s181 = sphi 0, %s181
    %s183 = sphi 0, %s181
    %s184 = sphi 0, %s183
    %s198 = sphi 0, %s184
    %s202 = sphi 0, %s202
    %s204 = sphi 0, %s202
    %s205 = sphi 0, %s204
    %s219 = sphi 0, %s205
    %s223 = sphi 0, %s223
    %s225 = sphi 0, %s223
    %s226 = sphi 0, %s225
    %s240 = sphi 0, %s226
    %s244 = sphi 0, %s244
    %s246 = sphi 0, %s244
    %s247 = sphi 0, %s246
    %s261 = sphi 0, %s247
    %s265 = sphi 0, %s265
    %s267 = sphi 0, %s265
    %s268 = sphi 0, %s267
    %s282 = sphi 0, %s268
    %s286 = sphi 0, %s286
    %s288 = sphi 0, %s286
    %s289 = sphi 0, %s288
    %s303 = sphi 0, %s289
    %s307 = sphi 0, %s307
    %s309 = sphi 0, %s307
    %s310 = sphi 0, %s309
    %s324 = sphi 0, %s310
    %s328 = sphi 0, %s328
    %s330 = sphi 0, %s328
    %s331 = sphi 0, %s330
    %s345 = sphi 0, %s331
    %s351 = sphi 0, %s353
    %s354 = sphi 0, %s351
    %s355 = sphi 0, %s354
    %s371 = sphi 0, %s355
  $region4: #{tpu_custom_call.1} parent=0 // loop_header_branch
    %24 = sbr.rel (%p22) target = $region8
  $region5: #{tpu_custom_call.1} parent=0 // loop_body
    %s26 = ssub.s32 %s21, 1
    %s27 = ssub.s32 %s21, 2
    %s28 = sadd.s32 %s21, 1
    %s29 = ssub.s32 %s21, %s28
    %p30 = scmp.eq.s32.totalorder %s29, 0
    %s32 = sadd.s32 %s31, 1
    %s33 = scalar_select %p30, %s31, %s32
    %p36 = pneg %p30
    %p37 = scmp.eq.s32.totalorder %s21, 1
    %p38 = por %p36, %p37
    %p39 = scmp.ne.s32.totalorder %s31, %s34
    %p40 = scmp.eq.s32.totalorder %s21, 0
    %p41 = por %p39, %p40
    %p42 = scmp.ne.s32.totalorder %s31, %s34
    %p43 = scmp.eq.s32.totalorder %s26, 1
    %p44 = por %p42, %p43
    %p45 = scmp.ne.s32.totalorder %s34, %s35
    %p46 = scmp.eq.s32.totalorder %s26, 0
    %p47 = por %p45, %p46
    %p48 = scmp.ne.s32.totalorder %s34, %s35
    %p49 = scmp.eq.s32.totalorder %s27, 1
    %p50 = por %p48, %p49
    %p52 = scmp.ne.s32.totalorder %s35, %s51
    %p53 = scmp.eq.s32.totalorder %s27, 0
    %p54 = por %p52, %p53
    %s56 = sadd.s32 %s55, 1
    %p59 = scmp.eq.s32.totalorder %s21, 1
    %p60 = scmp.ne.s32.totalorder %s55, %s57
    %p61 = scmp.eq.s32.totalorder %s21, 0
    %p62 = por %p60, %p61
    %p63 = scmp.ne.s32.totalorder %s55, %s57
    %p64 = scmp.eq.s32.totalorder %s26, 1
    %p65 = por %p63, %p64
    %p66 = scmp.ne.s32.totalorder %s57, %s58
    %p67 = scmp.eq.s32.totalorder %s26, 0
    %p68 = por %p66, %p67
    %p69 = scmp.ne.s32.totalorder %s57, %s58
    %p70 = scmp.eq.s32.totalorder %s27, 1
    %p71 = por %p69, %p70
    %p73 = scmp.ne.s32.totalorder %s58, %s72
    %p74 = scmp.eq.s32.totalorder %s27, 0
    %p75 = por %p73, %p74
    %s77 = sadd.s32 %s76, 1
    %p80 = scmp.eq.s32.totalorder %s21, 1
    %p81 = scmp.ne.s32.totalorder %s76, %s78
    %p82 = scmp.eq.s32.totalorder %s21, 0
    %p83 = por %p81, %p82
    %p84 = scmp.ne.s32.totalorder %s76, %s78
    %p85 = scmp.eq.s32.totalorder %s26, 1
    %p86 = por %p84, %p85
    %p87 = scmp.ne.s32.totalorder %s78, %s79
    %p88 = scmp.eq.s32.totalorder %s26, 0
    %p89 = por %p87, %p88
    %p90 = scmp.ne.s32.totalorder %s78, %s79
    %p91 = scmp.eq.s32.totalorder %s27, 1
    %p92 = por %p90, %p91
    %p94 = scmp.ne.s32.totalorder %s79, %s93
    %p95 = scmp.eq.s32.totalorder %s27, 0
    %p96 = por %p94, %p95
    %s98 = sadd.s32 %s97, 1
    %p101 = scmp.eq.s32.totalorder %s21, 1
    %p102 = scmp.ne.s32.totalorder %s97, %s99
    %p103 = scmp.eq.s32.totalorder %s21, 0
    %p104 = por %p102, %p103
    %p105 = scmp.ne.s32.totalorder %s97, %s99
    %p106 = scmp.eq.s32.totalorder %s26, 1
    %p107 = por %p105, %p106
    %p108 = scmp.ne.s32.totalorder %s99, %s100
    %p109 = scmp.eq.s32.totalorder %s26, 0
    %p110 = por %p108, %p109
    %p111 = scmp.ne.s32.totalorder %s99, %s100
    %p112 = scmp.eq.s32.totalorder %s27, 1
    %p113 = por %p111, %p112
    %p115 = scmp.ne.s32.totalorder %s100, %s114
    %p116 = scmp.eq.s32.totalorder %s27, 0
    %p117 = por %p115, %p116
    %s119 = sadd.s32 %s118, 1
    %p122 = scmp.eq.s32.totalorder %s21, 1
    %p123 = scmp.ne.s32.totalorder %s118, %s120
    %p124 = scmp.eq.s32.totalorder %s21, 0
    %p125 = por %p123, %p124
    %p126 = scmp.ne.s32.totalorder %s118, %s120
    %p127 = scmp.eq.s32.totalorder %s26, 1
    %p128 = por %p126, %p127
    %p129 = scmp.ne.s32.totalorder %s120, %s121
    %p130 = scmp.eq.s32.totalorder %s26, 0
    %p131 = por %p129, %p130
    %p132 = scmp.ne.s32.totalorder %s120, %s121
    %p133 = scmp.eq.s32.totalorder %s27, 1
    %p134 = por %p132, %p133
    %p136 = scmp.ne.s32.totalorder %s121, %s135
    %p137 = scmp.eq.s32.totalorder %s27, 0
    %p138 = por %p136, %p137
    %s140 = sadd.s32 %s139, 1
    %p143 = scmp.eq.s32.totalorder %s21, 1
    %p144 = scmp.ne.s32.totalorder %s139, %s141
    %p145 = scmp.eq.s32.totalorder %s21, 0
    %p146 = por %p144, %p145
    %p147 = scmp.ne.s32.totalorder %s139, %s141
    %p148 = scmp.eq.s32.totalorder %s26, 1
    %p149 = por %p147, %p148
    %p150 = scmp.ne.s32.totalorder %s141, %s142
    %p151 = scmp.eq.s32.totalorder %s26, 0
    %p152 = por %p150, %p151
    %p153 = scmp.ne.s32.totalorder %s141, %s142
    %p154 = scmp.eq.s32.totalorder %s27, 1
    %p155 = por %p153, %p154
    %p157 = scmp.ne.s32.totalorder %s142, %s156
    %p158 = scmp.eq.s32.totalorder %s27, 0
    %p159 = por %p157, %p158
    %s161 = sadd.s32 %s160, 1
    %p164 = scmp.eq.s32.totalorder %s21, 1
    %p165 = scmp.ne.s32.totalorder %s160, %s162
    %p166 = scmp.eq.s32.totalorder %s21, 0
    %p167 = por %p165, %p166
    %p168 = scmp.ne.s32.totalorder %s160, %s162
    %p169 = scmp.eq.s32.totalorder %s26, 1
    %p170 = por %p168, %p169
    %p171 = scmp.ne.s32.totalorder %s162, %s163
    %p172 = scmp.eq.s32.totalorder %s26, 0
    %p173 = por %p171, %p172
    %p174 = scmp.ne.s32.totalorder %s162, %s163
    %p175 = scmp.eq.s32.totalorder %s27, 1
    %p176 = por %p174, %p175
    %p178 = scmp.ne.s32.totalorder %s163, %s177
    %p179 = scmp.eq.s32.totalorder %s27, 0
    %p180 = por %p178, %p179
    %s182 = sadd.s32 %s181, 1
    %p185 = scmp.eq.s32.totalorder %s21, 1
    %p186 = scmp.ne.s32.totalorder %s181, %s183
    %p187 = scmp.eq.s32.totalorder %s21, 0
    %p188 = por %p186, %p187
    %p189 = scmp.ne.s32.totalorder %s181, %s183
    %p190 = scmp.eq.s32.totalorder %s26, 1
    %p191 = por %p189, %p190
    %p192 = scmp.ne.s32.totalorder %s183, %s184
    %p193 = scmp.eq.s32.totalorder %s26, 0
    %p194 = por %p192, %p193
    %p195 = scmp.ne.s32.totalorder %s183, %s184
    %p196 = scmp.eq.s32.totalorder %s27, 1
    %p197 = por %p195, %p196
    %p199 = scmp.ne.s32.totalorder %s184, %s198
    %p200 = scmp.eq.s32.totalorder %s27, 0
    %p201 = por %p199, %p200
    %s203 = sadd.s32 %s202, 1
    %p206 = scmp.eq.s32.totalorder %s21, 1
    %p207 = scmp.ne.s32.totalorder %s202, %s204
    %p208 = scmp.eq.s32.totalorder %s21, 0
    %p209 = por %p207, %p208
    %p210 = scmp.ne.s32.totalorder %s202, %s204
    %p211 = scmp.eq.s32.totalorder %s26, 1
    %p212 = por %p210, %p211
    %p213 = scmp.ne.s32.totalorder %s204, %s205
    %p214 = scmp.eq.s32.totalorder %s26, 0
    %p215 = por %p213, %p214
    %p216 = scmp.ne.s32.totalorder %s204, %s205
    %p217 = scmp.eq.s32.totalorder %s27, 1
    %p218 = por %p216, %p217
    %p220 = scmp.ne.s32.totalorder %s205, %s219
    %p221 = scmp.eq.s32.totalorder %s27, 0
    %p222 = por %p220, %p221
    %s224 = sadd.s32 %s223, 1
    %p227 = scmp.eq.s32.totalorder %s21, 1
    %p228 = scmp.ne.s32.totalorder %s223, %s225
    %p229 = scmp.eq.s32.totalorder %s21, 0
    %p230 = por %p228, %p229
    %p231 = scmp.ne.s32.totalorder %s223, %s225
    %p232 = scmp.eq.s32.totalorder %s26, 1
    %p233 = por %p231, %p232
    %p234 = scmp.ne.s32.totalorder %s225, %s226
    %p235 = scmp.eq.s32.totalorder %s26, 0
    %p236 = por %p234, %p235
    %p237 = scmp.ne.s32.totalorder %s225, %s226
    %p238 = scmp.eq.s32.totalorder %s27, 1
    %p239 = por %p237, %p238
    %p241 = scmp.ne.s32.totalorder %s226, %s240
    %p242 = scmp.eq.s32.totalorder %s27, 0
    %p243 = por %p241, %p242
    %s245 = sadd.s32 %s244, 1
    %p248 = scmp.eq.s32.totalorder %s21, 1
    %p249 = scmp.ne.s32.totalorder %s244, %s246
    %p250 = scmp.eq.s32.totalorder %s21, 0
    %p251 = por %p249, %p250
    %p252 = scmp.ne.s32.totalorder %s244, %s246
    %p253 = scmp.eq.s32.totalorder %s26, 1
    %p254 = por %p252, %p253
    %p255 = scmp.ne.s32.totalorder %s246, %s247
    %p256 = scmp.eq.s32.totalorder %s26, 0
    %p257 = por %p255, %p256
    %p258 = scmp.ne.s32.totalorder %s246, %s247
    %p259 = scmp.eq.s32.totalorder %s27, 1
    %p260 = por %p258, %p259
    %p262 = scmp.ne.s32.totalorder %s247, %s261
    %p263 = scmp.eq.s32.totalorder %s27, 0
    %p264 = por %p262, %p263
    %s266 = sadd.s32 %s265, 1
    %p269 = scmp.eq.s32.totalorder %s21, 1
    %p270 = scmp.ne.s32.totalorder %s265, %s267
    %p271 = scmp.eq.s32.totalorder %s21, 0
    %p272 = por %p270, %p271
    %p273 = scmp.ne.s32.totalorder %s265, %s267
    %p274 = scmp.eq.s32.totalorder %s26, 1
    %p275 = por %p273, %p274
    %p276 = scmp.ne.s32.totalorder %s267, %s268
    %p277 = scmp.eq.s32.totalorder %s26, 0
    %p278 = por %p276, %p277
    %p279 = scmp.ne.s32.totalorder %s267, %s268
    %p280 = scmp.eq.s32.totalorder %s27, 1
    %p281 = por %p279, %p280
    %p283 = scmp.ne.s32.totalorder %s268, %s282
    %p284 = scmp.eq.s32.totalorder %s27, 0
    %p285 = por %p283, %p284
    %s287 = sadd.s32 %s286, 1
    %p290 = scmp.eq.s32.totalorder %s21, 1
    %p291 = scmp.ne.s32.totalorder %s286, %s288
    %p292 = scmp.eq.s32.totalorder %s21, 0
    %p293 = por %p291, %p292
    %p294 = scmp.ne.s32.totalorder %s286, %s288
    %p295 = scmp.eq.s32.totalorder %s26, 1
    %p296 = por %p294, %p295
    %p297 = scmp.ne.s32.totalorder %s288, %s289
    %p298 = scmp.eq.s32.totalorder %s26, 0
    %p299 = por %p297, %p298
    %p300 = scmp.ne.s32.totalorder %s288, %s289
    %p301 = scmp.eq.s32.totalorder %s27, 1
    %p302 = por %p300, %p301
    %p304 = scmp.ne.s32.totalorder %s289, %s303
    %p305 = scmp.eq.s32.totalorder %s27, 0
    %p306 = por %p304, %p305
    %s308 = sadd.s32 %s307, 1
    %p311 = scmp.eq.s32.totalorder %s21, 1
    %p312 = scmp.ne.s32.totalorder %s307, %s309
    %p313 = scmp.eq.s32.totalorder %s21, 0
    %p314 = por %p312, %p313
    %p315 = scmp.ne.s32.totalorder %s307, %s309
    %p316 = scmp.eq.s32.totalorder %s26, 1
    %p317 = por %p315, %p316
    %p318 = scmp.ne.s32.totalorder %s309, %s310
    %p319 = scmp.eq.s32.totalorder %s26, 0
    %p320 = por %p318, %p319
    %p321 = scmp.ne.s32.totalorder %s309, %s310
    %p322 = scmp.eq.s32.totalorder %s27, 1
    %p323 = por %p321, %p322
    %p325 = scmp.ne.s32.totalorder %s310, %s324
    %p326 = scmp.eq.s32.totalorder %s27, 0
    %p327 = por %p325, %p326
    %s329 = sadd.s32 %s328, 1
    %p332 = scmp.eq.s32.totalorder %s21, 1
    %p333 = scmp.ne.s32.totalorder %s328, %s330
    %p334 = scmp.eq.s32.totalorder %s21, 0
    %p335 = por %p333, %p334
    %p336 = scmp.ne.s32.totalorder %s328, %s330
    %p337 = scmp.eq.s32.totalorder %s26, 1
    %p338 = por %p336, %p337
    %p339 = scmp.ne.s32.totalorder %s330, %s331
    %p340 = scmp.eq.s32.totalorder %s26, 0
    %p341 = por %p339, %p340
    %p342 = scmp.ne.s32.totalorder %s330, %s331
    %p343 = scmp.eq.s32.totalorder %s27, 1
    %p344 = por %p342, %p343
    %p346 = scmp.ne.s32.totalorder %s331, %s345
    %p347 = scmp.eq.s32.totalorder %s27, 0
    %p348 = por %p346, %p347
    %s349 = ssub.s32 %s21, %s28
    %p350 = scmp.eq.s32.totalorder %s349, 0
    %s352 = sadd.s32 %s351, 1
    %s353 = scalar_select %p350, %s351, %s352
    %p356 = pneg %p350
    %p357 = scmp.eq.s32.totalorder %s21, 1
    %p358 = por %p356, %p357
    %p359 = scmp.ne.s32.totalorder %s351, %s354
    %p360 = scmp.eq.s32.totalorder %s21, 0
    %p361 = por %p359, %p360
    %p362 = scmp.ne.s32.totalorder %s351, %s354
    %p363 = scmp.eq.s32.totalorder %s26, 1
    %p364 = por %p362, %p363
    %p365 = scmp.ne.s32.totalorder %s354, %s355
    %p366 = scmp.eq.s32.totalorder %s26, 0
    %p367 = por %p365, %p366
    %p368 = scmp.ne.s32.totalorder %s354, %s355
    %p369 = scmp.eq.s32.totalorder %s27, 1
    %p370 = por %p368, %p369
    %p372 = scmp.ne.s32.totalorder %s355, %s371
    %p373 = scmp.eq.s32.totalorder %s27, 0
    %p374 = por %p372, %p373
    %p375 = scmp.le.s32.totalorder 1, %s21
    %p376 = scmp.lt.s32.totalorder %s21, 3
    %p377 = pnand %p375, %p376
    %p378 = pneg %p377
    // Predicated region
    $region9: #{tpu_custom_call.1} parent=5 // pred_check
      _
    $region10: #{tpu_custom_call.1} parent=5 // pred_check_branch
      %380 = sbr.rel (%p377) target = $region12
    $region11: #{tpu_custom_call.1} parent=5 // pred_region
      %s381 = ssub.s32 %s21, 1
      // Predicated region
      $region13: #{tpu_custom_call.1} parent=11 // pred_check
        %p382 = pneg %p68
      $region14: #{tpu_custom_call.1} parent=11 // pred_check_branch
        %384 = sbr.rel (%p382) target = $region16
      $region15: #{tpu_custom_call.1} parent=11 // pred_region
        _
      $region16: #{tpu_custom_call.1} parent=11 // pred_fallthru
        _
      // Predicated region
      $region17: #{tpu_custom_call.1} parent=11 // pred_check
        %p385 = pneg %p89
      $region18: #{tpu_custom_call.1} parent=11 // pred_check_branch
        %387 = sbr.rel (%p385) target = $region20
      $region19: #{tpu_custom_call.1} parent=11 // pred_region
        _
      $region20: #{tpu_custom_call.1} parent=11 // pred_fallthru
        _
      // Predicated region
      $region21: #{tpu_custom_call.1} parent=11 // pred_check
        %p388 = pneg %p110
      $region22: #{tpu_custom_call.1} parent=11 // pred_check_branch
        %390 = sbr.rel (%p388) target = $region24
      $region23: #{tpu_custom_call.1} parent=11 // pred_region
        _
      $region24: #{tpu_custom_call.1} parent=11 // pred_fallthru
        _
      // Predicated region
      $region25: #{tpu_custom_call.1} parent=11 // pred_check
        %p391 = pneg %p131
      $region26: #{tpu_custom_call.1} parent=11 // pred_check_branch
        %393 = sbr.rel (%p391) target = $region28
      $region27: #{tpu_custom_call.1} parent=11 // pred_region
        _
      $region28: #{tpu_custom_call.1} parent=11 // pred_fallthru
        _
      // Predicated region
      $region29: #{tpu_custom_call.1} parent=11 // pred_check
        %p394 = pneg %p152
      $region30: #{tpu_custom_call.1} parent=11 // pred_check_branch
        %396 = sbr.rel (%p394) target = $region32
      $region31: #{tpu_custom_call.1} parent=11 // pred_region
        _
      $region32: #{tpu_custom_call.1} parent=11 // pred_fallthru
        _
      // Predicated region
      $region33: #{tpu_custom_call.1} parent=11 // pred_check
        %p397 = pneg %p173
      $region34: #{tpu_custom_call.1} parent=11 // pred_check_branch
        %399 = sbr.rel (%p397) target = $region36
      $region35: #{tpu_custom_call.1} parent=11 // pred_region
        _
      $region36: #{tpu_custom_call.1} parent=11 // pred_fallthru
        _
      // Predicated region
      $region37: #{tpu_custom_call.1} parent=11 // pred_check
        %p400 = pneg %p194
      $region38: #{tpu_custom_call.1} parent=11 // pred_check_branch
        %402 = sbr.rel (%p400) target = $region40
      $region39: #{tpu_custom_call.1} parent=11 // pred_region
        _
      $region40: #{tpu_custom_call.1} parent=11 // pred_fallthru
        _
      // Predicated region
      $region41: #{tpu_custom_call.1} parent=11 // pred_check
        %p403 = pneg %p215
      $region42: #{tpu_custom_call.1} parent=11 // pred_check_branch
        %405 = sbr.rel (%p403) target = $region44
      $region43: #{tpu_custom_call.1} parent=11 // pred_region
        _
      $region44: #{tpu_custom_call.1} parent=11 // pred_fallthru
        _
      // Predicated region
      $region45: #{tpu_custom_call.1} parent=11 // pred_check
        %p406 = pneg %p236
      $region46: #{tpu_custom_call.1} parent=11 // pred_check_branch
        %408 = sbr.rel (%p406) target = $region48
      $region47: #{tpu_custom_call.1} parent=11 // pred_region
        _
      $region48: #{tpu_custom_call.1} parent=11 // pred_fallthru
        _
      // Predicated region
      $region49: #{tpu_custom_call.1} parent=11 // pred_check
        %p409 = pneg %p257
      $region50: #{tpu_custom_call.1} parent=11 // pred_check_branch
        %411 = sbr.rel (%p409) target = $region52
      $region51: #{tpu_custom_call.1} parent=11 // pred_region
        _
      $region52: #{tpu_custom_call.1} parent=11 // pred_fallthru
        _
      // Predicated region
      $region53: #{tpu_custom_call.1} parent=11 // pred_check
        %p412 = pneg %p278
      $region54: #{tpu_custom_call.1} parent=11 // pred_check_branch
        %414 = sbr.rel (%p412) target = $region56
      $region55: #{tpu_custom_call.1} parent=11 // pred_region
        _
      $region56: #{tpu_custom_call.1} parent=11 // pred_fallthru
        _
      // Predicated region
      $region57: #{tpu_custom_call.1} parent=11 // pred_check
        %p415 = pneg %p299
      $region58: #{tpu_custom_call.1} parent=11 // pred_check_branch
        %417 = sbr.rel (%p415) target = $region60
      $region59: #{tpu_custom_call.1} parent=11 // pred_region
        _
      $region60: #{tpu_custom_call.1} parent=11 // pred_fallthru
        _
      // Predicated region
      $region61: #{tpu_custom_call.1} parent=11 // pred_check
        %p418 = pneg %p320
      $region62: #{tpu_custom_call.1} parent=11 // pred_check_branch
        %420 = sbr.rel (%p418) target = $region64
      $region63: #{tpu_custom_call.1} parent=11 // pred_region
        _
      $region64: #{tpu_custom_call.1} parent=11 // pred_fallthru
        _
      // Predicated region
      $region65: #{tpu_custom_call.1} parent=11 // pred_check
        %p421 = pneg %p341
      $region66: #{tpu_custom_call.1} parent=11 // pred_check_branch
        %423 = sbr.rel (%p421) target = $region68
      $region67: #{tpu_custom_call.1} parent=11 // pred_region
        _
      $region68: #{tpu_custom_call.1} parent=11 // pred_fallthru
        _
    $region12: #{tpu_custom_call.1} parent=5 // pred_fallthru
      _
    %p424 = scmp.lt.s32.totalorder %s21, 2
    // Predicated region
    $region69: #{tpu_custom_call.1} parent=5 // pred_check
      %p425 = pneg %p424
    $region70: #{tpu_custom_call.1} parent=5 // pred_check_branch
      %427 = sbr.rel (%p425) target = $region72
    $region71: #{tpu_custom_call.1} parent=5 // pred_region
      // Predicated region
      $region73: #{tpu_custom_call.1} parent=71 // pred_check
        %p428 = pneg %p41
      $region74: #{tpu_custom_call.1} parent=71 // pred_check_branch
        %430 = sbr.rel (%p428) target = $region76
      $region75: #{tpu_custom_call.1} parent=71 // pred_region
        %s431 = smul.u32 5, %s21
        %p432 = scmp.lt.s32.totalorder %s431, 9
        %s433 = scalar_select %p432, %s431, 9
        %s434 = smul.addr %s433, 8
        %s435 = scalar_lea.vmem %s0, %s434
        %s436 = smul.u32 5, %s21
      $region76: #{tpu_custom_call.1} parent=71 // pred_fallthru
        _
    $region72: #{tpu_custom_call.1} parent=5 // pred_fallthru
      _
    %p437 = scmp.le.s32.totalorder 1, %s21
    %p438 = scmp.lt.s32.totalorder %s21, 3
    %p439 = pnand %p437, %p438
    %p440 = pneg %p439
    // Predicated region
    $region77: #{tpu_custom_call.1} parent=5 // pred_check
      _
    $region78: #{tpu_custom_call.1} parent=5 // pred_check_branch
      %442 = sbr.rel (%p439) target = $region80
    $region79: #{tpu_custom_call.1} parent=5 // pred_region
      %s443 = ssub.s32 %s21, 1
      %s444 = smul.u32 5, %s26
      %p445 = scmp.lt.s32.totalorder %s444, 9
      %s446 = scalar_select %p445, %s444, 9
      %s447 = smul.addr %s446, 8
      %s448 = scalar_lea.vmem %s0, %s447
      %p449 = pneg %p47
      %p450 = pneg %p44
      %p451 = pneg %p68
      %p452 = pneg %p65
      %p453 = pneg %p89
      %p454 = pneg %p86
      %p455 = pneg %p110
      %p456 = pneg %p107
      %p457 = pneg %p131
      %p458 = pneg %p128
      %p459 = pneg %p152
      %p460 = pneg %p149
      %p461 = pneg %p173
      %p462 = pneg %p170
      %p463 = pneg %p194
      %p464 = pneg %p191
      %p465 = pneg %p215
      %p466 = pneg %p212
      %p467 = pneg %p236
      %p468 = pneg %p233
      %p469 = pneg %p257
      %p470 = pneg %p254
      %p471 = pneg %p278
      %p472 = pneg %p275
      %p473 = pneg %p299
      %p474 = pneg %p296
      %p475 = pneg %p320
      %p476 = pneg %p317
      %p477 = pneg %p341
      %p478 = pneg %p338
      %p479 = pneg %p367
      %p480 = pneg %p364
      %p481 = scmp.lt.s32.totalorder %s26, 1
      %s482 = scalar_select %p481, %s26, 1
      %s483 = smul.addr %s482, 8
      %s484 = scalar_lea.vmem %s15, %s483
      %s485 = smul.u32 5, %s26
      %p486 = scmp.lt.s32.totalorder %s485, 9
      %s487 = scalar_select %p486, %s485, 9
      %s488 = smul.addr %s487, 8
      %s489 = scalar_lea.vmem %s0, %s488
      %s490 = smul.u32 5, %s26
      %p491 = scmp.lt.s32.totalorder %s26, 1
      %s492 = scalar_select %p491, %s26, 1
      %s493 = smul.addr %s492, 8
      %s494 = scalar_lea.vmem %s15, %s493
      %v495 = vld [vmem:[%s489] sm:$0xff]
      %v496 = vld [vmem:[%s489 + $0x8] sm:$0xff]
      %v497 = vld [vmem:[%s489 + $0x10] sm:$0xff]
      %v498 = vld [vmem:[%s489 + $0x18] sm:$0xff]
      %v499 = vld [vmem:[%s489 + $0x20] sm:$0xff]
      %v500 = vld [vmem:[%s1] sm:$0xff]
      %v501 = vld [vmem:[%s1 + $0x8] sm:$0x7]
      %v502 = vld [vmem:[%s2] sm:$0x1]
      %v504 = vlaneseq
      %v505 = vshrl.u32 %v504, 7
      %v506 = vsub.s32 0, %v505
      %v507 = vrot.slane %v502, %v506
      %vm509 = vcmask 89088
      %v511 = vsel %vm509, %v495, 0
      %v514 = vsel %vm509, %v496, 0
      %v517 = vsel %vm509, %v497, 0
      %v520 = vsel %vm509, %v498, 0
      %v523 = vsel %vm509, %v499, 0
      %vm525 = vcmask 1042432
      %v527 = vsel %vm525, %v501, 0
      %529 = vmatprep.subr.mxu0 0.0
      %v530 = vand.u32 %v500, 4294901760
      %531 = vmatpush1.msra.mxu0 %v530
      %532 = vmatprep.subr.mxu0 0.0
      %v533 = vand.u32 %v527, 4294901760
      %534 = vmatpush1.msra.mxu0 %v533
      %535 = vmatprep.subr.mxu0 0.0
      %536 = vmatpush1.msra.mxu0 0.0
      %537 = vmatprep.subr.mxu0 0.0
      %538 = vmatpush1.msra.mxu0 0.0
      %539 = vmatprep.subr.mxu0 0.0
      %540 = vmatpush1.msra.mxu0 0.0
      %541 = vmatprep.subr.mxu0 0.0
      %542 = vmatpush1.msra.mxu0 0.0
      %543 = vmatprep.subr.mxu0 0.0
      %544 = vmatpush1.msra.mxu0 0.0
      %545 = vmatprep.subr.mxu0 0.0
      %546 = vmatpush1.msra.mxu0 0.0
      %547 = vmatprep.subr.mxu0 0.0
      %548 = vmatpush1.msra.mxu0 0.0
      %549 = vmatprep.subr.mxu0 0.0
      %550 = vmatpush1.msra.mxu0 0.0
      %551 = vmatprep.subr.mxu0 0.0
      %552 = vmatpush1.msra.mxu0 0.0
      %553 = vmatprep.subr.mxu0 0.0
      %554 = vmatpush1.msra.mxu0 0.0
      %555 = vmatprep.subr.mxu0 0.0
      %556 = vmatpush1.msra.mxu0 0.0
      %557 = vmatprep.subr.mxu0 0.0
      %558 = vmatpush1.msra.mxu0 0.0
      %559 = vmatprep.subr.mxu0 0.0
      %560 = vmatpush1.msra.mxu0 0.0
      %561 = vmatprep.subr.mxu0 0.0
      %562 = vmatpush1.msra.mxu0 0.0
      %563 = vmatprep.subr.mxu0 0.0
      %564 = vmatpush1.msra.mxu0 0.0
      %565 = vmatprep.subr.mxu0 0.0
      %566 = vmatpush1.msra.mxu0 0.0
      %567 = vmatprep.subr.mxu0 0.0
      %568 = vmatpush1.msra.mxu0 0.0
      %569 = vmatprep.subr.mxu0 0.0
      %570 = vmatpush1.msra.mxu0 0.0
      %571 = vmatprep.subr.mxu0 0.0
      %572 = vmatpush1.msra.mxu0 0.0
      %573 = vmatprep.subr.mxu0 0.0
      %574 = vmatpush1.msra.mxu0 0.0
      %575 = vmatprep.subr.mxu0 0.0
      %576 = vmatpush1.msra.mxu0 0.0
      %577 = vmatprep.subr.mxu0 0.0
      %578 = vmatpush1.msra.mxu0 0.0
      %579 = vmatprep.subr.mxu0 0.0
      %580 = vmatpush1.msra.mxu0 0.0
      %581 = vmatprep.subr.mxu0 0.0
      %582 = vmatpush1.msra.mxu0 0.0
      %583 = vmatprep.subr.mxu0 0.0
      %584 = vmatpush1.msra.mxu0 0.0
      %585 = vmatprep.subr.mxu0 0.0
      %586 = vmatpush1.msra.mxu0 0.0
      %587 = vmatprep.subr.mxu0 0.0
      %588 = vmatpush1.msra.mxu0 0.0
      %589 = vmatprep.subr.mxu0 0.0
      %590 = vmatpush1.msra.mxu0 0.0
      %591 = vmatprep.subr.mxu0 0.0
      %592 = vmatpush1.msra.mxu0 0.0
      %593 = vmatprep.subr.mxu0 0.0
      %594 = vmatpush1.msra.mxu0 0.0
      %595 = vmatprep.mubr.f32.mxu0 0.0
      %v596 = vand.u32 %v511, 4294901760
      %v597 = vsub.f32 %v511, %v596
      %v598 = vand.u32 %v597, 4294901760
      %v599 = vsub.f32 %v597, %v598
      %v600 = vand.u32 %v599, 4294901760
      %601 = vmatmul.mubr.f32.gmra.mrb[0].mxu0 %v600
      %v602 = vpop.f32.mrb[0].mxu0
      %v603 = vadd.f32 %v507, %v602
      %v604 = vpop.f32.mrb[0].mxu0
      %605 = vmatprep.mubr.f32.mxu0 0.0
      %v606 = vand.u32 %v514, 4294901760
      %v607 = vsub.f32 %v514, %v606
      %v608 = vand.u32 %v607, 4294901760
      %v609 = vsub.f32 %v607, %v608
      %v610 = vand.u32 %v609, 4294901760
      %611 = vmatmul.mubr.f32.gmra.mrb[0].mxu0 %v610
      %v612 = vpop.f32.mrb[0].mxu0
      %v613 = vadd.f32 %v507, %v612
      %v614 = vpop.f32.mrb[0].mxu0
      %615 = vmatprep.mubr.f32.mxu0 0.0
      %v616 = vand.u32 %v517, 4294901760
      %v617 = vsub.f32 %v517, %v616
      %v618 = vand.u32 %v617, 4294901760
      %v619 = vsub.f32 %v617, %v618
      %v620 = vand.u32 %v619, 4294901760
      %621 = vmatmul.mubr.f32.gmra.mrb[0].mxu0 %v620
      %v622 = vpop.f32.mrb[0].mxu0
      %v623 = vadd.f32 %v507, %v622
      %v624 = vpop.f32.mrb[0].mxu0
      %625 = vmatprep.mubr.f32.mxu0 0.0
      %v626 = vand.u32 %v520, 4294901760
      %v627 = vsub.f32 %v520, %v626
      %v628 = vand.u32 %v627, 4294901760
      %v629 = vsub.f32 %v627, %v628
      %v630 = vand.u32 %v629, 4294901760
      %631 = vmatmul.mubr.f32.gmra.mrb[0].mxu0 %v630
      %v632 = vpop.f32.mrb[0].mxu0
      %v633 = vadd.f32 %v507, %v632
      %v634 = vpop.f32.mrb[0].mxu0
      %635 = vmatprep.mubr.f32.mxu0 0.0
      %v636 = vand.u32 %v523, 4294901760
      %v637 = vsub.f32 %v523, %v636
      %v638 = vand.u32 %v637, 4294901760
      %v639 = vsub.f32 %v637, %v638
      %v640 = vand.u32 %v639, 4294901760
      %641 = vmatmul.mubr.f32.gmra.mrb[0].mxu0 %v640
      %v642 = vpop.f32.mrb[0].mxu0
      %v643 = vadd.f32 %v507, %v642
      %v644 = vpop.f32.mrb[0].mxu0
      %645 = vdwg.mxu0
      %646 = vmatprep.subr.mxu0 0.0
      %v647 = vand.u32 %v500, 4294901760
      %v648 = vsub.f32 %v500, %v647
      %v649 = vand.u32 %v648, 4294901760
      %v650 = vsub.f32 %v648, %v649
      %v651 = vand.u32 %v650, 4294901760
      %652 = vmatpush1.msra.mxu0 %v651
      %653 = vmatprep.subr.mxu0 0.0
      %v654 = vand.u32 %v527, 4294901760
      %v655 = vsub.f32 %v527, %v654
      %v656 = vand.u32 %v655, 4294901760
      %v657 = vsub.f32 %v655, %v656
      %v658 = vand.u32 %v657, 4294901760
      %659 = vmatpush1.msra.mxu0 %v658
      %660 = vmatprep.subr.mxu0 0.0
      %661 = vmatpush1.msra.mxu0 0.0
      %662 = vmatprep.subr.mxu0 0.0
      %663 = vmatpush1.msra.mxu0 0.0
      %664 = vmatprep.subr.mxu0 0.0
      %665 = vmatpush1.msra.mxu0 0.0
      %666 = vmatprep.subr.mxu0 0.0
      %667 = vmatpush1.msra.mxu0 0.0
      %668 = vmatprep.subr.mxu0 0.0
      %669 = vmatpush1.msra.mxu0 0.0
      %670 = vmatprep.subr.mxu0 0.0
      %671 = vmatpush1.msra.mxu0 0.0
      %672 = vmatprep.subr.mxu0 0.0
      %673 = vmatpush1.msra.mxu0 0.0
      %674 = vmatprep.subr.mxu0 0.0
      %675 = vmatpush1.msra.mxu0 0.0
      %676 = vmatprep.subr.mxu0 0.0
      %677 = vmatpush1.msra.mxu0 0.0
      %678 = vmatprep.subr.mxu0 0.0
      %679 = vmatpush1.msra.mxu0 0.0
      %680 = vmatprep.subr.mxu0 0.0
      %681 = vmatpush1.msra.mxu0 0.0
      %682 = vmatprep.subr.mxu0 0.0
      %683 = vmatpush1.msra.mxu0 0.0
      %684 = vmatprep.subr.mxu0 0.0
      %685 = vmatpush1.msra.mxu0 0.0
      %686 = vmatprep.subr.mxu0 0.0
      %687 = vmatpush1.msra.mxu0 0.0
      %688 = vmatprep.subr.mxu0 0.0
      %689 = vmatpush1.msra.mxu0 0.0
      %690 = vmatprep.subr.mxu0 0.0
      %691 = vmatpush1.msra.mxu0 0.0
      %692 = vmatprep.subr.mxu0 0.0
      %693 = vmatpush1.msra.mxu0 0.0
      %694 = vmatprep.subr.mxu0 0.0
      %695 = vmatpush1.msra.mxu0 0.0
      %696 = vmatprep.subr.mxu0 0.0
      %697 = vmatpush1.msra.mxu0 0.0
      %698 = vmatprep.subr.mxu0 0.0
      %699 = vmatpush1.msra.mxu0 0.0
      %700 = vmatprep.subr.mxu0 0.0
      %701 = vmatpush1.msra.mxu0 0.0
      %702 = vmatprep.subr.mxu0 0.0
      %703 = vmatpush1.msra.mxu0 0.0
      %704 = vmatprep.subr.mxu0 0.0
      %705 = vmatpush1.msra.mxu0 0.0
      %706 = vmatprep.subr.mxu0 0.0
      %707 = vmatpush1.msra.mxu0 0.0
      %708 = vmatprep.subr.mxu0 0.0
      %709 = vmatpush1.msra.mxu0 0.0
      %710 = vmatprep.subr.mxu0 0.0
      %711 = vmatpush1.msra.mxu0 0.0
      %712 = vmatprep.subr.mxu0 0.0
      %713 = vmatpush1.msra.mxu0 0.0
      %714 = vmatprep.subr.mxu0 0.0
      %715 = vmatpush1.msra.mxu0 0.0
      %716 = vmatprep.subr.mxu0 0.0
      %717 = vmatpush1.msra.mxu0 0.0
      %718 = vmatprep.subr.mxu0 0.0
      %719 = vmatpush1.msra.mxu0 0.0
      %720 = vmatprep.mubr.f32.mxu0 0.0
      %v721 = vand.u32 %v511, 4294901760
      %722 = vmatmul.mubr.f32.gmra.mrb[0].mxu0 %v721
      %v723 = vpop.f32.mrb[0].mxu0
      %v724 = vadd.f32 %v603, %v723
      %v725 = vpop.f32.mrb[0].mxu0
      %726 = vmatprep.mubr.f32.mxu0 0.0
      %v727 = vand.u32 %v514, 4294901760
      %728 = vmatmul.mubr.f32.gmra.mrb[0].mxu0 %v727
      %v729 = vpop.f32.mrb[0].mxu0
      %v730 = vadd.f32 %v613, %v729
      %v731 = vpop.f32.mrb[0].mxu0
      %732 = vmatprep.mubr.f32.mxu0 0.0
      %v733 = vand.u32 %v517, 4294901760
      %734 = vmatmul.mubr.f32.gmra.mrb[0].mxu0 %v733
      %v735 = vpop.f32.mrb[0].mxu0
      %v736 = vadd.f32 %v623, %v735
      %v737 = vpop.f32.mrb[0].mxu0
      %738 = vmatprep.mubr.f32.mxu0 0.0
      %v739 = vand.u32 %v520, 4294901760
      %740 = vmatmul.mubr.f32.gmra.mrb[0].mxu0 %v739
      %v741 = vpop.f32.mrb[0].mxu0
      %v742 = vadd.f32 %v633, %v741
      %v743 = vpop.f32.mrb[0].mxu0
      %744 = vmatprep.mubr.f32.mxu0 0.0
      %v745 = vand.u32 %v523, 4294901760
      %746 = vmatmul.mubr.f32.gmra.mrb[0].mxu0 %v745
      %v747 = vpop.f32.mrb[0].mxu0
      %v748 = vadd.f32 %v643, %v747
      %v749 = vpop.f32.mrb[0].mxu0
      %750 = vdwg.mxu0
      %751 = vmatprep.subr.mxu0 0.0
      %v752 = vand.u32 %v500, 4294901760
      %v753 = vsub.f32 %v500, %v752
      %754 = vmatpush1.msra.mxu0 %v753
      %755 = vmatprep.subr.mxu0 0.0
      %v756 = vand.u32 %v527, 4294901760
      %v757 = vsub.f32 %v527, %v756
      %758 = vmatpush1.msra.mxu0 %v757
      %759 = vmatprep.subr.mxu0 0.0
      %760 = vmatpush1.msra.mxu0 0.0
      %761 = vmatprep.subr.mxu0 0.0
      %762 = vmatpush1.msra.mxu0 0.0
      %763 = vmatprep.subr.mxu0 0.0
      %764 = vmatpush1.msra.mxu0 0.0
      %765 = vmatprep.subr.mxu0 0.0
      %766 = vmatpush1.msra.mxu0 0.0
      %767 = vmatprep.subr.mxu0 0.0
      %768 = vmatpush1.msra.mxu0 0.0
      %769 = vmatprep.subr.mxu0 0.0
      %770 = vmatpush1.msra.mxu0 0.0
      %771 = vmatprep.subr.mxu0 0.0
      %772 = vmatpush1.msra.mxu0 0.0
      %773 = vmatprep.subr.mxu0 0.0
      %774 = vmatpush1.msra.mxu0 0.0
      %775 = vmatprep.subr.mxu0 0.0
      %776 = vmatpush1.msra.mxu0 0.0
      %777 = vmatprep.subr.mxu0 0.0
      %778 = vmatpush1.msra.mxu0 0.0
      %779 = vmatprep.subr.mxu0 0.0
      %780 = vmatpush1.msra.mxu0 0.0
      %781 = vmatprep.subr.mxu0 0.0
      %782 = vmatpush1.msra.mxu0 0.0
      %783 = vmatprep.subr.mxu0 0.0
      %784 = vmatpush1.msra.mxu0 0.0
      %785 = vmatprep.subr.mxu0 0.0
      %786 = vmatpush1.msra.mxu0 0.0
      %787 = vmatprep.subr.mxu0 0.0
      %788 = vmatpush1.msra.mxu0 0.0
      %789 = vmatprep.subr.mxu0 0.0
      %790 = vmatpush1.msra.mxu0 0.0
      %791 = vmatprep.subr.mxu0 0.0
      %792 = vmatpush1.msra.mxu0 0.0
      %793 = vmatprep.subr.mxu0 0.0
      %794 = vmatpush1.msra.mxu0 0.0
      %795 = vmatprep.subr.mxu0 0.0
      %796 = vmatpush1.msra.mxu0 0.0
      %797 = vmatprep.subr.mxu0 0.0
      %798 = vmatpush1.msra.mxu0 0.0
      %799 = vmatprep.subr.mxu0 0.0
      %800 = vmatpush1.msra.mxu0 0.0
      %801 = vmatprep.subr.mxu0 0.0
      %802 = vmatpush1.msra.mxu0 0.0
      %803 = vmatprep.subr.mxu0 0.0
      %804 = vmatpush1.msra.mxu0 0.0
      %805 = vmatprep.subr.mxu0 0.0
      %806 = vmatpush1.msra.mxu0 0.0
      %807 = vmatprep.subr.mxu0 0.0
      %808 = vmatpush1.msra.mxu0 0.0
      %809 = vmatprep.subr.mxu0 0.0
      %810 = vmatpush1.msra.mxu0 0.0
      %811 = vmatprep.subr.mxu0 0.0
      %812 = vmatpush1.msra.mxu0 0.0
      %813 = vmatprep.subr.mxu0 0.0
      %814 = vmatpush1.msra.mxu0 0.0
      %815 = vmatprep.subr.mxu0 0.0
      %816 = vmatpush1.msra.mxu0 0.0
      %817 = vmatprep.subr.mxu0 0.0
      %818 = vmatpush1.msra.mxu0 0.0
      %819 = vmatprep.mubr.f32.mxu0 0.0
      %v820 = vand.u32 %v511, 4294901760
      %v821 = vsub.f32 %v511, %v820
      %822 = vmatmul.mubr.f32.gmra.mrb[0].mxu0 %v821
      %v823 = vpop.f32.mrb[0].mxu0
      %v824 = vadd.f32 %v724, %v823
      %v825 = vpop.f32.mrb[0].mxu0
      %826 = vmatprep.mubr.f32.mxu0 0.0
      %v827 = vand.u32 %v514, 4294901760
      %v828 = vsub.f32 %v514, %v827
      %829 = vmatmul.mubr.f32.gmra.mrb[0].mxu0 %v828
      %v830 = vpop.f32.mrb[0].mxu0
      %v831 = vadd.f32 %v730, %v830
      %v832 = vpop.f32.mrb[0].mxu0
      %833 = vmatprep.mubr.f32.mxu0 0.0
      %v834 = vand.u32 %v517, 4294901760
      %v835 = vsub.f32 %v517, %v834
      %836 = vmatmul.mubr.f32.gmra.mrb[0].mxu0 %v835
      %v837 = vpop.f32.mrb[0].mxu0
      %v838 = vadd.f32 %v736, %v837
      %v839 = vpop.f32.mrb[0].mxu0
      %840 = vmatprep.mubr.f32.mxu0 0.0
      %v841 = vand.u32 %v520, 4294901760
      %v842 = vsub.f32 %v520, %v841
      %843 = vmatmul.mubr.f32.gmra.mrb[0].mxu0 %v842
      %v844 = vpop.f32.mrb[0].mxu0
      %v845 = vadd.f32 %v742, %v844
      %v846 = vpop.f32.mrb[0].mxu0
      %847 = vmatprep.mubr.f32.mxu0 0.0
      %v848 = vand.u32 %v523, 4294901760
      %v849 = vsub.f32 %v523, %v848
      %850 = vmatmul.mubr.f32.gmra.mrb[0].mxu0 %v849
      %v851 = vpop.f32.mrb[0].mxu0
      %v852 = vadd.f32 %v748, %v851
      %v853 = vpop.f32.mrb[0].mxu0
      %854 = vdwg.mxu0
      %855 = vmatprep.subr.mxu0 0.0
      %v856 = vand.u32 %v500, 4294901760
      %857 = vmatpush1.msra.mxu0 %v856
      %858 = vmatprep.subr.mxu0 0.0
      %v859 = vand.u32 %v527, 4294901760
      %860 = vmatpush1.msra.mxu0 %v859
      %861 = vmatprep.subr.mxu0 0.0
      %862 = vmatpush1.msra.mxu0 0.0
      %863 = vmatprep.subr.mxu0 0.0
      %864 = vmatpush1.msra.mxu0 0.0
      %865 = vmatprep.subr.mxu0 0.0
      %866 = vmatpush1.msra.mxu0 0.0
      %867 = vmatprep.subr.mxu0 0.0
      %868 = vmatpush1.msra.mxu0 0.0
      %869 = vmatprep.subr.mxu0 0.0
      %870 = vmatpush1.msra.mxu0 0.0
      %871 = vmatprep.subr.mxu0 0.0
      %872 = vmatpush1.msra.mxu0 0.0
      %873 = vmatprep.subr.mxu0 0.0
      %874 = vmatpush1.msra.mxu0 0.0
      %875 = vmatprep.subr.mxu0 0.0
      %876 = vmatpush1.msra.mxu0 0.0
      %877 = vmatprep.subr.mxu0 0.0
      %878 = vmatpush1.msra.mxu0 0.0
      %879 = vmatprep.subr.mxu0 0.0
      %880 = vmatpush1.msra.mxu0 0.0
      %881 = vmatprep.subr.mxu0 0.0
      %882 = vmatpush1.msra.mxu0 0.0
      %883 = vmatprep.subr.mxu0 0.0
      %884 = vmatpush1.msra.mxu0 0.0
      %885 = vmatprep.subr.mxu0 0.0
      %886 = vmatpush1.msra.mxu0 0.0
      %887 = vmatprep.subr.mxu0 0.0
      %888 = vmatpush1.msra.mxu0 0.0
      %889 = vmatprep.subr.mxu0 0.0
      %890 = vmatpush1.msra.mxu0 0.0
      %891 = vmatprep.subr.mxu0 0.0
      %892 = vmatpush1.msra.mxu0 0.0
      %893 = vmatprep.subr.mxu0 0.0
      %894 = vmatpush1.msra.mxu0 0.0
      %895 = vmatprep.subr.mxu0 0.0
      %896 = vmatpush1.msra.mxu0 0.0
      %897 = vmatprep.subr.mxu0 0.0
      %898 = vmatpush1.msra.mxu0 0.0
      %899 = vmatprep.subr.mxu0 0.0
      %900 = vmatpush1.msra.mxu0 0.0
      %901 = vmatprep.subr.mxu0 0.0
      %902 = vmatpush1.msra.mxu0 0.0
      %903 = vmatprep.subr.mxu0 0.0
      %904 = vmatpush1.msra.mxu0 0.0
      %905 = vmatprep.subr.mxu0 0.0
      %906 = vmatpush1.msra.mxu0 0.0
      %907 = vmatprep.subr.mxu0 0.0
      %908 = vmatpush1.msra.mxu0 0.0
      %909 = vmatprep.subr.mxu0 0.0
      %910 = vmatpush1.msra.mxu0 0.0
      %911 = vmatprep.subr.mxu0 0.0
      %912 = vmatpush1.msra.mxu0 0.0
      %913 = vmatprep.subr.mxu0 0.0
      %914 = vmatpush1.msra.mxu0 0.0
      %915 = vmatprep.subr.mxu0 0.0
      %916 = vmatpush1.msra.mxu0 0.0
      %917 = vmatprep.subr.mxu0 0.0
      %918 = vmatpush1.msra.mxu0 0.0
      %919 = vmatprep.subr.mxu0 0.0
      %920 = vmatpush1.msra.mxu0 0.0
      %921 = vmatprep.mubr.f32.mxu0 0.0
      %v922 = vand.u32 %v511, 4294901760
      %v923 = vsub.f32 %v511, %v922
      %v924 = vand.u32 %v923, 4294901760
      %925 = vmatmul.mubr.f32.gmra.mrb[0].mxu0 %v924
      %v926 = vpop.f32.mrb[0].mxu0
      %v927 = vadd.f32 %v824, %v926
      %v928 = vpop.f32.mrb[0].mxu0
      %929 = vmatprep.mubr.f32.mxu0 0.0
      %v930 = vand.u32 %v514, 4294901760
      %v931 = vsub.f32 %v514, %v930
      %v932 = vand.u32 %v931, 4294901760
      %933 = vmatmul.mubr.f32.gmra.mrb[0].mxu0 %v932
      %v934 = vpop.f32.mrb[0].mxu0
      %v935 = vadd.f32 %v831, %v934
      %v936 = vpop.f32.mrb[0].mxu0
      %937 = vmatprep.mubr.f32.mxu0 0.0
      %v938 = vand.u32 %v517, 4294901760
      %v939 = vsub.f32 %v517, %v938
      %v940 = vand.u32 %v939, 4294901760
      %941 = vmatmul.mubr.f32.gmra.mrb[0].mxu0 %v940
      %v942 = vpop.f32.mrb[0].mxu0
      %v943 = vadd.f32 %v838, %v942
      %v944 = vpop.f32.mrb[0].mxu0
      %945 = vmatprep.mubr.f32.mxu0 0.0
      %v946 = vand.u32 %v520, 4294901760
      %v947 = vsub.f32 %v520, %v946
      %v948 = vand.u32 %v947, 4294901760
      %949 = vmatmul.mubr.f32.gmra.mrb[0].mxu0 %v948
      %v950 = vpop.f32.mrb[0].mxu0
      %v951 = vadd.f32 %v845, %v950
      %v952 = vpop.f32.mrb[0].mxu0
      %953 = vmatprep.mubr.f32.mxu0 0.0
      %v954 = vand.u32 %v523, 4294901760
      %v955 = vsub.f32 %v523, %v954
      %v956 = vand.u32 %v955, 4294901760
      %957 = vmatmul.mubr.f32.gmra.mrb[0].mxu0 %v956
      %v958 = vpop.f32.mrb[0].mxu0
      %v959 = vadd.f32 %v852, %v958
      %v960 = vpop.f32.mrb[0].mxu0
      %961 = vdwg.mxu0
      %962 = vmatprep.subr.mxu0 0.0
      %v963 = vand.u32 %v500, 4294901760
      %v964 = vsub.f32 %v500, %v963
      %v965 = vand.u32 %v964, 4294901760
      %966 = vmatpush1.msra.mxu0 %v965
      %967 = vmatprep.subr.mxu0 0.0
      %v968 = vand.u32 %v527, 4294901760
      %v969 = vsub.f32 %v527, %v968
      %v970 = vand.u32 %v969, 4294901760
      %971 = vmatpush1.msra.mxu0 %v970
      %972 = vmatprep.subr.mxu0 0.0
      %973 = vmatpush1.msra.mxu0 0.0
      %974 = vmatprep.subr.mxu0 0.0
      %975 = vmatpush1.msra.mxu0 0.0
      %976 = vmatprep.subr.mxu0 0.0
      %977 = vmatpush1.msra.mxu0 0.0
      %978 = vmatprep.subr.mxu0 0.0
      %979 = vmatpush1.msra.mxu0 0.0
      %980 = vmatprep.subr.mxu0 0.0
      %981 = vmatpush1.msra.mxu0 0.0
      %982 = vmatprep.subr.mxu0 0.0
      %983 = vmatpush1.msra.mxu0 0.0
      %984 = vmatprep.subr.mxu0 0.0
      %985 = vmatpush1.msra.mxu0 0.0
      %986 = vmatprep.subr.mxu0 0.0
      %987 = vmatpush1.msra.mxu0 0.0
      %988 = vmatprep.subr.mxu0 0.0
      %989 = vmatpush1.msra.mxu0 0.0
      %990 = vmatprep.subr.mxu0 0.0
      %991 = vmatpush1.msra.mxu0 0.0
      %992 = vmatprep.subr.mxu0 0.0
      %993 = vmatpush1.msra.mxu0 0.0
      %994 = vmatprep.subr.mxu0 0.0
      %995 = vmatpush1.msra.mxu0 0.0
      %996 = vmatprep.subr.mxu0 0.0
      %997 = vmatpush1.msra.mxu0 0.0
      %998 = vmatprep.subr.mxu0 0.0
      %999 = vmatpush1.msra.mxu0 0.0
      %1000 = vmatprep.subr.mxu0 0.0
      %1001 = vmatpush1.msra.mxu0 0.0
      %1002 = vmatprep.subr.mxu0 0.0
      %1003 = vmatpush1.msra.mxu0 0.0
      %1004 = vmatprep.subr.mxu0 0.0
      %1005 = vmatpush1.msra.mxu0 0.0
      %1006 = vmatprep.subr.mxu0 0.0
      %1007 = vmatpush1.msra.mxu0 0.0
      %1008 = vmatprep.subr.mxu0 0.0
      %1009 = vmatpush1.msra.mxu0 0.0
      %1010 = vmatprep.subr.mxu0 0.0
      %1011 = vmatpush1.msra.mxu0 0.0
      %1012 = vmatprep.subr.mxu0 0.0
      %1013 = vmatpush1.msra.mxu0 0.0
      %1014 = vmatprep.subr.mxu0 0.0
      %1015 = vmatpush1.msra.mxu0 0.0
      %1016 = vmatprep.subr.mxu0 0.0
      %1017 = vmatpush1.msra.mxu0 0.0
      %1018 = vmatprep.subr.mxu0 0.0
      %1019 = vmatpush1.msra.mxu0 0.0
      %1020 = vmatprep.subr.mxu0 0.0
      %1021 = vmatpush1.msra.mxu0 0.0
      %1022 = vmatprep.subr.mxu0 0.0
      %1023 = vmatpush1.msra.mxu0 0.0
      %1024 = vmatprep.subr.mxu0 0.0
      %1025 = vmatpush1.msra.mxu0 0.0
      %1026 = vmatprep.subr.mxu0 0.0
      %1027 = vmatpush1.msra.mxu0 0.0
      %1028 = vmatprep.subr.mxu0 0.0
      %1029 = vmatpush1.msra.mxu0 0.0
      %1030 = vmatprep.subr.mxu0 0.0
      %1031 = vmatpush1.msra.mxu0 0.0
      %1032 = vmatprep.mubr.f32.mxu0 0.0
      %v1033 = vand.u32 %v511, 4294901760
      %1034 = vmatmul.mubr.f32.gmra.mrb[0].mxu0 %v1033
      %v1035 = vpop.f32.mrb[0].mxu0
      %v1036 = vadd.f32 %v927, %v1035
      %v1037 = vpop.f32.mrb[0].mxu0
      %1038 = vmatprep.mubr.f32.mxu0 0.0
      %v1039 = vand.u32 %v514, 4294901760
      %1040 = vmatmul.mubr.f32.gmra.mrb[0].mxu0 %v1039
      %v1041 = vpop.f32.mrb[0].mxu0
      %v1042 = vadd.f32 %v935, %v1041
      %v1043 = vpop.f32.mrb[0].mxu0
      %1044 = vmatprep.mubr.f32.mxu0 0.0
      %v1045 = vand.u32 %v517, 4294901760
      %1046 = vmatmul.mubr.f32.gmra.mrb[0].mxu0 %v1045
      %v1047 = vpop.f32.mrb[0].mxu0
      %v1048 = vadd.f32 %v943, %v1047
      %v1049 = vpop.f32.mrb[0].mxu0
      %1050 = vmatprep.mubr.f32.mxu0 0.0
      %v1051 = vand.u32 %v520, 4294901760
      %1052 = vmatmul.mubr.f32.gmra.mrb[0].mxu0 %v1051
      %v1053 = vpop.f32.mrb[0].mxu0
      %v1054 = vadd.f32 %v951, %v1053
      %v1055 = vpop.f32.mrb[0].mxu0
      %1056 = vmatprep.mubr.f32.mxu0 0.0
      %v1057 = vand.u32 %v523, 4294901760
      %1058 = vmatmul.mubr.f32.gmra.mrb[0].mxu0 %v1057
      %v1059 = vpop.f32.mrb[0].mxu0
      %v1060 = vadd.f32 %v959, %v1059
      %v1061 = vpop.f32.mrb[0].mxu0
      %1062 = vdwg.mxu0
      %1063 = vmatprep.subr.mxu0 0.0
      %v1064 = vand.u32 %v500, 4294901760
      %1065 = vmatpush1.msra.mxu0 %v1064
      %1066 = vmatprep.subr.mxu0 0.0
      %v1067 = vand.u32 %v527, 4294901760
      %1068 = vmatpush1.msra.mxu0 %v1067
      %1069 = vmatprep.subr.mxu0 0.0
      %1070 = vmatpush1.msra.mxu0 0.0
      %1071 = vmatprep.subr.mxu0 0.0
      %1072 = vmatpush1.msra.mxu0 0.0
      %1073 = vmatprep.subr.mxu0 0.0
      %1074 = vmatpush1.msra.mxu0 0.0
      %1075 = vmatprep.subr.mxu0 0.0
      %1076 = vmatpush1.msra.mxu0 0.0
      %1077 = vmatprep.subr.mxu0 0.0
      %1078 = vmatpush1.msra.mxu0 0.0
      %1079 = vmatprep.subr.mxu0 0.0
      %1080 = vmatpush1.msra.mxu0 0.0
      %1081 = vmatprep.subr.mxu0 0.0
      %1082 = vmatpush1.msra.mxu0 0.0
      %1083 = vmatprep.subr.mxu0 0.0
      %1084 = vmatpush1.msra.mxu0 0.0
      %1085 = vmatprep.subr.mxu0 0.0
      %1086 = vmatpush1.msra.mxu0 0.0
      %1087 = vmatprep.subr.mxu0 0.0
      %1088 = vmatpush1.msra.mxu0 0.0
      %1089 = vmatprep.subr.mxu0 0.0
      %1090 = vmatpush1.msra.mxu0 0.0
      %1091 = vmatprep.subr.mxu0 0.0
      %1092 = vmatpush1.msra.mxu0 0.0
      %1093 = vmatprep.subr.mxu0 0.0
      %1094 = vmatpush1.msra.mxu0 0.0
      %1095 = vmatprep.subr.mxu0 0.0
      %1096 = vmatpush1.msra.mxu0 0.0
      %1097 = vmatprep.subr.mxu0 0.0
      %1098 = vmatpush1.msra.mxu0 0.0
      %1099 = vmatprep.subr.mxu0 0.0
      %1100 = vmatpush1.msra.mxu0 0.0
      %1101 = vmatprep.subr.mxu0 0.0
      %1102 = vmatpush1.msra.mxu0 0.0
      %1103 = vmatprep.subr.mxu0 0.0
      %1104 = vmatpush1.msra.mxu0 0.0
      %1105 = vmatprep.subr.mxu0 0.0
      %1106 = vmatpush1.msra.mxu0 0.0
      %1107 = vmatprep.subr.mxu0 0.0
      %1108 = vmatpush1.msra.mxu0 0.0
      %1109 = vmatprep.subr.mxu0 0.0
      %1110 = vmatpush1.msra.mxu0 0.0
      %1111 = vmatprep.subr.mxu0 0.0
      %1112 = vmatpush1.msra.mxu0 0.0
      %1113 = vmatprep.subr.mxu0 0.0
      %1114 = vmatpush1.msra.mxu0 0.0
      %1115 = vmatprep.subr.mxu0 0.0
      %1116 = vmatpush1.msra.mxu0 0.0
      %1117 = vmatprep.subr.mxu0 0.0
      %1118 = vmatpush1.msra.mxu0 0.0
      %1119 = vmatprep.subr.mxu0 0.0
      %1120 = vmatpush1.msra.mxu0 0.0
      %1121 = vmatprep.subr.mxu0 0.0
      %1122 = vmatpush1.msra.mxu0 0.0
      %1123 = vmatprep.subr.mxu0 0.0
      %1124 = vmatpush1.msra.mxu0 0.0
      %1125 = vmatprep.subr.mxu0 0.0
      %1126 = vmatpush1.msra.mxu0 0.0
      %1127 = vmatprep.subr.mxu0 0.0
      %1128 = vmatpush1.msra.mxu0 0.0
      %1129 = vmatprep.mubr.f32.mxu0 0.0
      %v1130 = vand.u32 %v511, 4294901760
      %1131 = vmatmul.mubr.f32.gmra.mrb[0].mxu0 %v1130
      %v1132 = vpop.f32.mrb[0].mxu0
      %v1133 = vadd.f32 %v1036, %v1132
      %v1134 = vpop.f32.mrb[0].mxu0
      %1135 = vmatprep.mubr.f32.mxu0 0.0
      %v1136 = vand.u32 %v514, 4294901760
      %1137 = vmatmul.mubr.f32.gmra.mrb[0].mxu0 %v1136
      %v1138 = vpop.f32.mrb[0].mxu0
      %v1139 = vadd.f32 %v1042, %v1138
      %v1140 = vpop.f32.mrb[0].mxu0
      %1141 = vmatprep.mubr.f32.mxu0 0.0
      %v1142 = vand.u32 %v517, 4294901760
      %1143 = vmatmul.mubr.f32.gmra.mrb[0].mxu0 %v1142
      %v1144 = vpop.f32.mrb[0].mxu0
      %v1145 = vadd.f32 %v1048, %v1144
      %v1146 = vpop.f32.mrb[0].mxu0
      %1147 = vmatprep.mubr.f32.mxu0 0.0
      %v1148 = vand.u32 %v520, 4294901760
      %1149 = vmatmul.mubr.f32.gmra.mrb[0].mxu0 %v1148
      %v1150 = vpop.f32.mrb[0].mxu0
      %v1151 = vadd.f32 %v1054, %v1150
      %v1152 = vpop.f32.mrb[0].mxu0
      %1153 = vmatprep.mubr.f32.mxu0 0.0
      %v1154 = vand.u32 %v523, 4294901760
      %1155 = vmatmul.mubr.f32.gmra.mrb[0].mxu0 %v1154
      %v1156 = vpop.f32.mrb[0].mxu0
      %v1157 = vadd.f32 %v1060, %v1156
      %v1158 = vpop.f32.mrb[0].mxu0
      %1159 = vdwg.mxu0
      %v1160 = vld [vmem:[%s3] sm:$0xff]
      %v1161 = vld [vmem:[%s3 + $0x8] sm:$0x7]
      %1163 = vrot.lane.b32.xlu0 %v1133, 117
      %v1164 = vpop.permute.xlu0 %1163
      %v1166 = vmul.f32 %v1133, %v1164
      %v1167 = vsel %vm509, %v1166, 0.0
      %1168 = vadd.xlane.f32.xlu0 %v1167
      %v1169 = vpop.xlane.xlu0 %1168
      %1171 = vrot.lane.b32.xlu0 %v1139, 117
      %v1172 = vpop.permute.xlu0 %1171
      %v1174 = vmul.f32 %v1133, %v1172
      %v1175 = vsel %vm509, %v1174, 0.0
      %1176 = vadd.xlane.f32.xlu0 %v1175
      %v1177 = vpop.xlane.xlu0 %1176
      %1179 = vrot.lane.b32.xlu0 %v1145, 117
      %v1180 = vpop.permute.xlu0 %1179
      %v1182 = vmul.f32 %v1133, %v1180
      %v1183 = vsel %vm509, %v1182, 0.0
      %1184 = vadd.xlane.f32.xlu0 %v1183
      %v1185 = vpop.xlane.xlu0 %1184
      %1187 = vrot.lane.b32.xlu0 %v1151, 117
      %v1188 = vpop.permute.xlu0 %1187
      %v1190 = vmul.f32 %v1133, %v1188
      %v1191 = vsel %vm509, %v1190, 0.0
      %1192 = vadd.xlane.f32.xlu0 %v1191
      %v1193 = vpop.xlane.xlu0 %1192
      %1195 = vrot.lane.b32.xlu0 %v1157, 117
      %v1196 = vpop.permute.xlu0 %1195
      %v1198 = vmul.f32 %v1133, %v1196
      %v1199 = vsel %vm509, %v1198, 0.0
      %1200 = vadd.xlane.f32.xlu0 %v1199
      %v1201 = vpop.xlane.xlu0 %1200
      %vm1202 = vcmask 7168
      %v1203 = vsel %vm1202, %v1169, %v1177
      %vm1204 = vcmask 15360
      %v1205 = vsel %vm1204, %v1203, %v1185
      %vm1206 = vcmask 23552
      %v1207 = vsel %vm1206, %v1205, %v1193
      %vm1208 = vcmask 31744
      %v1209 = vsel %vm1208, %v1207, %v1201
      %v1210 = vmul.f32 %v1209, 0.30151135
      %vm1211 = vcmask 39936
      %v1212 = vsel %vm1211, %v1210, -inf
      %1213 = vmax.xlane.f32.xlu0 %v1212
      %v1214 = vpop.xlane.xlu0 %1213
      %v1215 = vsub.f32 %v1210, %v1214
      %v1216 = vmul.f32 %v1215, 1.442695
      %v1217 = vpow.pop %v1216
      %v1218 = vsel %vm1211, %v1217, 0.0
      %1219 = vadd.xlane.f32.xlu0 %v1218
      %v1220 = vpop.xlane.xlu0 %1219
      %v1221 = vrcp.pop %v1220
      %v1222 = vmul.f32 %v1217, %v1221
      %1224 = vset.pattern.permute.xlu0 0
      %1225 = vperm.xlu0 %1224, %v1222
      %v1226 = vpop.permute.xlu0 %1225
      %v1228 = vmul.f32 %v1226, %v1133
      %1229 = vset.pattern.permute.xlu0 1
      %1230 = vperm.xlu0 %1229, %v1222
      %v1231 = vpop.permute.xlu0 %1230
      %v1233 = vmul.f32 %v1231, %v1139
      %v1234 = vadd.f32 %v1228, %v1233
      %1235 = vset.pattern.permute.xlu0 2
      %1236 = vperm.xlu0 %1235, %v1222
      %v1237 = vpop.permute.xlu0 %1236
      %v1239 = vmul.f32 %v1237, %v1145
      %v1240 = vadd.f32 %v1234, %v1239
      %1241 = vset.pattern.permute.xlu0 3
      %1242 = vperm.xlu0 %1241, %v1222
      %v1243 = vpop.permute.xlu0 %1242
      %v1245 = vmul.f32 %v1243, %v1151
      %v1246 = vadd.f32 %v1240, %v1245
      %1247 = vset.pattern.permute.xlu0 4
      %1248 = vperm.xlu0 %1247, %v1222
      %v1249 = vpop.permute.xlu0 %1248
      %v1251 = vmul.f32 %v1249, %v1157
      %v1252 = vadd.f32 %v1246, %v1251
      %v1253 = vmul.f32 %v1139, %v1164
      %v1254 = vsel %vm509, %v1253, 0.0
      %1255 = vadd.xlane.f32.xlu0 %v1254
      %v1256 = vpop.xlane.xlu0 %1255
      %v1257 = vmul.f32 %v1139, %v1172
      %v1258 = vsel %vm509, %v1257, 0.0
      %1259 = vadd.xlane.f32.xlu0 %v1258
      %v1260 = vpop.xlane.xlu0 %1259
      %v1261 = vmul.f32 %v1139, %v1180
      %v1262 = vsel %vm509, %v1261, 0.0
      %1263 = vadd.xlane.f32.xlu0 %v1262
      %v1264 = vpop.xlane.xlu0 %1263
      %v1265 = vmul.f32 %v1139, %v1188
      %v1266 = vsel %vm509, %v1265, 0.0
      %1267 = vadd.xlane.f32.xlu0 %v1266
      %v1268 = vpop.xlane.xlu0 %1267
      %v1269 = vmul.f32 %v1139, %v1196
      %v1270 = vsel %vm509, %v1269, 0.0
      %1271 = vadd.xlane.f32.xlu0 %v1270
      %v1272 = vpop.xlane.xlu0 %1271
      %v1273 = vsel %vm1202, %v1256, %v1260
      %v1274 = vsel %vm1204, %v1273, %v1264
      %v1275 = vsel %vm1206, %v1274, %v1268
      %v1276 = vsel %vm1208, %v1275, %v1272
      %v1277 = vmul.f32 %v1276, 0.30151135
      %v1278 = vsel %vm1211, %v1277, -inf
      %1279 = vmax.xlane.f32.xlu0 %v1278
      %v1280 = vpop.xlane.xlu0 %1279
      %v1281 = vsub.f32 %v1277, %v1280
      %v1282 = vmul.f32 %v1281, 1.442695
      %v1283 = vpow.pop %v1282
      %v1284 = vsel %vm1211, %v1283, 0.0
      %1285 = vadd.xlane.f32.xlu0 %v1284
      %v1286 = vpop.xlane.xlu0 %1285
      %v1287 = vrcp.pop %v1286
      %v1288 = vmul.f32 %v1283, %v1287
      %1290 = vset.pattern.permute.xlu0 0
      %1291 = vperm.xlu0 %1290, %v1288
      %v1292 = vpop.permute.xlu0 %1291
      %v1294 = vmul.f32 %v1292, %v1133
      %1295 = vset.pattern.permute.xlu0 1
      %1296 = vperm.xlu0 %1295, %v1288
      %v1297 = vpop.permute.xlu0 %1296
      %v1299 = vmul.f32 %v1297, %v1139
      %v1300 = vadd.f32 %v1294, %v1299
      %1301 = vset.pattern.permute.xlu0 2
      %1302 = vperm.xlu0 %1301, %v1288
      %v1303 = vpop.permute.xlu0 %1302
      %v1305 = vmul.f32 %v1303, %v1145
      %v1306 = vadd.f32 %v1300, %v1305
      %1307 = vset.pattern.permute.xlu0 3
      %1308 = vperm.xlu0 %1307, %v1288
      %v1309 = vpop.permute.xlu0 %1308
      %v1311 = vmul.f32 %v1309, %v1151
      %v1312 = vadd.f32 %v1306, %v1311
      %1313 = vset.pattern.permute.xlu0 4
      %1314 = vperm.xlu0 %1313, %v1288
      %v1315 = vpop.permute.xlu0 %1314
      %v1317 = vmul.f32 %v1315, %v1157
      %v1318 = vadd.f32 %v1312, %v1317
      %v1319 = vmul.f32 %v1145, %v1164
      %v1320 = vsel %vm509, %v1319, 0.0
      %1321 = vadd.xlane.f32.xlu0 %v1320
      %v1322 = vpop.xlane.xlu0 %1321
      %v1323 = vmul.f32 %v1145, %v1172
      %v1324 = vsel %vm509, %v1323, 0.0
      %1325 = vadd.xlane.f32.xlu0 %v1324
      %v1326 = vpop.xlane.xlu0 %1325
      %v1327 = vmul.f32 %v1145, %v1180
      %v1328 = vsel %vm509, %v1327, 0.0
      %1329 = vadd.xlane.f32.xlu0 %v1328
      %v1330 = vpop.xlane.xlu0 %1329
      %v1331 = vmul.f32 %v1145, %v1188
      %v1332 = vsel %vm509, %v1331, 0.0
      %1333 = vadd.xlane.f32.xlu0 %v1332
      %v1334 = vpop.xlane.xlu0 %1333
      %v1335 = vmul.f32 %v1145, %v1196
      %v1336 = vsel %vm509, %v1335, 0.0
      %1337 = vadd.xlane.f32.xlu0 %v1336
      %v1338 = vpop.xlane.xlu0 %1337
      %v1339 = vsel %vm1202, %v1322, %v1326
      %v1340 = vsel %vm1204, %v1339, %v1330
      %v1341 = vsel %vm1206, %v1340, %v1334
      %v1342 = vsel %vm1208, %v1341, %v1338
      %v1343 = vmul.f32 %v1342, 0.30151135
      %v1344 = vsel %vm1211, %v1343, -inf
      %1345 = vmax.xlane.f32.xlu0 %v1344
      %v1346 = vpop.xlane.xlu0 %1345
      %v1347 = vsub.f32 %v1343, %v1346
      %v1348 = vmul.f32 %v1347, 1.442695
      %v1349 = vpow.pop %v1348
      %v1350 = vsel %vm1211, %v1349, 0.0
      %1351 = vadd.xlane.f32.xlu0 %v1350
      %v1352 = vpop.xlane.xlu0 %1351
      %v1353 = vrcp.pop %v1352
      %v1354 = vmul.f32 %v1349, %v1353
      %1356 = vset.pattern.permute.xlu0 0
      %1357 = vperm.xlu0 %1356, %v1354
      %v1358 = vpop.permute.xlu0 %1357
      %v1360 = vmul.f32 %v1358, %v1133
      %1361 = vset.pattern.permute.xlu0 1
      %1362 = vperm.xlu0 %1361, %v1354
      %v1363 = vpop.permute.xlu0 %1362
      %v1365 = vmul.f32 %v1363, %v1139
      %v1366 = vadd.f32 %v1360, %v1365
      %1367 = vset.pattern.permute.xlu0 2
      %1368 = vperm.xlu0 %1367, %v1354
      %v1369 = vpop.permute.xlu0 %1368
      %v1371 = vmul.f32 %v1369, %v1145
      %v1372 = vadd.f32 %v1366, %v1371
      %1373 = vset.pattern.permute.xlu0 3
      %1374 = vperm.xlu0 %1373, %v1354
      %v1375 = vpop.permute.xlu0 %1374
      %v1377 = vmul.f32 %v1375, %v1151
      %v1378 = vadd.f32 %v1372, %v1377
      %1379 = vset.pattern.permute.xlu0 4
      %1380 = vperm.xlu0 %1379, %v1354
      %v1381 = vpop.permute.xlu0 %1380
      %v1383 = vmul.f32 %v1381, %v1157
      %v1384 = vadd.f32 %v1378, %v1383
      %v1385 = vmul.f32 %v1151, %v1164
      %v1386 = vsel %vm509, %v1385, 0.0
      %1387 = vadd.xlane.f32.xlu0 %v1386
      %v1388 = vpop.xlane.xlu0 %1387
      %v1389 = vmul.f32 %v1151, %v1172
      %v1390 = vsel %vm509, %v1389, 0.0
      %1391 = vadd.xlane.f32.xlu0 %v1390
      %v1392 = vpop.xlane.xlu0 %1391
      %v1393 = vmul.f32 %v1151, %v1180
      %v1394 = vsel %vm509, %v1393, 0.0
      %1395 = vadd.xlane.f32.xlu0 %v1394
      %v1396 = vpop.xlane.xlu0 %1395
      %v1397 = vmul.f32 %v1151, %v1188
      %v1398 = vsel %vm509, %v1397, 0.0
      %1399 = vadd.xlane.f32.xlu0 %v1398
      %v1400 = vpop.xlane.xlu0 %1399
      %v1401 = vmul.f32 %v1151, %v1196
      %v1402 = vsel %vm509, %v1401, 0.0
      %1403 = vadd.xlane.f32.xlu0 %v1402
      %v1404 = vpop.xlane.xlu0 %1403
      %v1405 = vsel %vm1202, %v1388, %v1392
      %v1406 = vsel %vm1204, %v1405, %v1396
      %v1407 = vsel %vm1206, %v1406, %v1400
      %v1408 = vsel %vm1208, %v1407, %v1404
      %v1409 = vmul.f32 %v1408, 0.30151135
      %v1410 = vsel %vm1211, %v1409, -inf
      %1411 = vmax.xlane.f32.xlu0 %v1410
      %v1412 = vpop.xlane.xlu0 %1411
      %v1413 = vsub.f32 %v1409, %v1412
      %v1414 = vmul.f32 %v1413, 1.442695
      %v1415 = vpow.pop %v1414
      %v1416 = vsel %vm1211, %v1415, 0.0
      %1417 = vadd.xlane.f32.xlu0 %v1416
      %v1418 = vpop.xlane.xlu0 %1417
      %v1419 = vrcp.pop %v1418
      %v1420 = vmul.f32 %v1415, %v1419
      %1422 = vset.pattern.permute.xlu0 0
      %1423 = vperm.xlu0 %1422, %v1420
      %v1424 = vpop.permute.xlu0 %1423
      %v1426 = vmul.f32 %v1424, %v1133
      %1427 = vset.pattern.permute.xlu0 1
      %1428 = vperm.xlu0 %1427, %v1420
      %v1429 = vpop.permute.xlu0 %1428
      %v1431 = vmul.f32 %v1429, %v1139
      %v1432 = vadd.f32 %v1426, %v1431
      %1433 = vset.pattern.permute.xlu0 2
      %1434 = vperm.xlu0 %1433, %v1420
      %v1435 = vpop.permute.xlu0 %1434
      %v1437 = vmul.f32 %v1435, %v1145
      %v1438 = vadd.f32 %v1432, %v1437
      %1439 = vset.pattern.permute.xlu0 3
      %1440 = vperm.xlu0 %1439, %v1420
      %v1441 = vpop.permute.xlu0 %1440
      %v1443 = vmul.f32 %v1441, %v1151
      %v1444 = vadd.f32 %v1438, %v1443
      %1445 = vset.pattern.permute.xlu0 4
      %1446 = vperm.xlu0 %1445, %v1420
      %v1447 = vpop.permute.xlu0 %1446
      %v1449 = vmul.f32 %v1447, %v1157
      %v1450 = vadd.f32 %v1444, %v1449
      %v1451 = vmul.f32 %v1157, %v1164
      %v1452 = vsel %vm509, %v1451, 0.0
      %1453 = vadd.xlane.f32.xlu0 %v1452
      %v1454 = vpop.xlane.xlu0 %1453
      %v1455 = vmul.f32 %v1157, %v1172
      %v1456 = vsel %vm509, %v1455, 0.0
      %1457 = vadd.xlane.f32.xlu0 %v1456
      %v1458 = vpop.xlane.xlu0 %1457
      %v1459 = vmul.f32 %v1157, %v1180
      %v1460 = vsel %vm509, %v1459, 0.0
      %1461 = vadd.xlane.f32.xlu0 %v1460
      %v1462 = vpop.xlane.xlu0 %1461
      %v1463 = vmul.f32 %v1157, %v1188
      %v1464 = vsel %vm509, %v1463, 0.0
      %1465 = vadd.xlane.f32.xlu0 %v1464
      %v1466 = vpop.xlane.xlu0 %1465
      %v1467 = vmul.f32 %v1157, %v1196
      %v1468 = vsel %vm509, %v1467, 0.0
      %1469 = vadd.xlane.f32.xlu0 %v1468
      %v1470 = vpop.xlane.xlu0 %1469
      %v1471 = vsel %vm1202, %v1454, %v1458
      %v1472 = vsel %vm1204, %v1471, %v1462
      %v1473 = vsel %vm1206, %v1472, %v1466
      %v1474 = vsel %vm1208, %v1473, %v1470
      %v1475 = vmul.f32 %v1474, 0.30151135
      %v1476 = vsel %vm1211, %v1475, -inf
      %1477 = vmax.xlane.f32.xlu0 %v1476
      %v1478 = vpop.xlane.xlu0 %1477
      %v1479 = vsub.f32 %v1475, %v1478
      %v1480 = vmul.f32 %v1479, 1.442695
      %v1481 = vpow.pop %v1480
      %v1482 = vsel %vm1211, %v1481, 0.0
      %1483 = vadd.xlane.f32.xlu0 %v1482
      %v1484 = vpop.xlane.xlu0 %1483
      %v1485 = vrcp.pop %v1484
      %v1486 = vmul.f32 %v1481, %v1485
      %1488 = vset.pattern.permute.xlu0 0
      %1489 = vperm.xlu0 %1488, %v1486
      %v1490 = vpop.permute.xlu0 %1489
      %v1492 = vmul.f32 %v1490, %v1133
      %1493 = vset.pattern.permute.xlu0 1
      %1494 = vperm.xlu0 %1493, %v1486
      %v1495 = vpop.permute.xlu0 %1494
      %v1497 = vmul.f32 %v1495, %v1139
      %v1498 = vadd.f32 %v1492, %v1497
      %1499 = vset.pattern.permute.xlu0 2
      %1500 = vperm.xlu0 %1499, %v1486
      %v1501 = vpop.permute.xlu0 %1500
      %v1503 = vmul.f32 %v1501, %v1145
      %v1504 = vadd.f32 %v1498, %v1503
      %1505 = vset.pattern.permute.xlu0 3
      %1506 = vperm.xlu0 %1505, %v1486
      %v1507 = vpop.permute.xlu0 %1506
      %v1509 = vmul.f32 %v1507, %v1151
      %v1510 = vadd.f32 %v1504, %v1509
      %1511 = vset.pattern.permute.xlu0 4
      %1512 = vperm.xlu0 %1511, %v1486
      %v1513 = vpop.permute.xlu0 %1512
      %v1515 = vmul.f32 %v1513, %v1157
      %v1516 = vadd.f32 %v1510, %v1515
      %v1517 = vld [vmem:[%s4] sm:$0x1]
      %v1519 = vlaneseq
      %v1520 = vshrl.u32 %v1519, 7
      %v1521 = vsub.s32 0, %v1520
      %v1522 = vrot.slane %v1517, %v1521
      %1529 = vrot.lane.b32.xlu0 %v1252, 106
      %v1530 = vpop.permute.xlu0 %1529
      %1531 = vrot.lane.b32.xlu0 %v1318, 106
      %v1532 = vpop.permute.xlu0 %1531
      %1533 = vrot.lane.b32.xlu0 %v1384, 106
      %v1534 = vpop.permute.xlu0 %1533
      %1535 = vrot.lane.b32.xlu0 %v1450, 106
      %v1536 = vpop.permute.xlu0 %1535
      %1537 = vrot.lane.b32.xlu0 %v1516, 106
      %v1538 = vpop.permute.xlu0 %1537
      %v1539 = vsel %vm509, %v1530, 0
      %v1541 = vsel %vm509, %v1532, 0
      %v1543 = vsel %vm509, %v1534, 0
      %v1545 = vsel %vm509, %v1536, 0
      %v1547 = vsel %vm509, %v1538, 0
      %v1550 = vsel %vm525, %v1161, 0
      %1552 = vmatprep.subr.mxu0 0.0
      %v1553 = vand.u32 %v1160, 4294901760
      %1554 = vmatpush1.msra.mxu0 %v1553
      %1555 = vmatprep.subr.mxu0 0.0
      %v1556 = vand.u32 %v1550, 4294901760
      %1557 = vmatpush1.msra.mxu0 %v1556
      %1558 = vmatprep.subr.mxu0 0.0
      %1559 = vmatpush1.msra.mxu0 0.0
      %1560 = vmatprep.subr.mxu0 0.0
      %1561 = vmatpush1.msra.mxu0 0.0
      %1562 = vmatprep.subr.mxu0 0.0
      %1563 = vmatpush1.msra.mxu0 0.0
      %1564 = vmatprep.subr.mxu0 0.0
      %1565 = vmatpush1.msra.mxu0 0.0
      %1566 = vmatprep.subr.mxu0 0.0
      %1567 = vmatpush1.msra.mxu0 0.0
      %1568 = vmatprep.subr.mxu0 0.0
      %1569 = vmatpush1.msra.mxu0 0.0
      %1570 = vmatprep.subr.mxu0 0.0
      %1571 = vmatpush1.msra.mxu0 0.0
      %1572 = vmatprep.subr.mxu0 0.0
      %1573 = vmatpush1.msra.mxu0 0.0
      %1574 = vmatprep.subr.mxu0 0.0
      %1575 = vmatpush1.msra.mxu0 0.0
      %1576 = vmatprep.subr.mxu0 0.0
      %1577 = vmatpush1.msra.mxu0 0.0
      %1578 = vmatprep.subr.mxu0 0.0
      %1579 = vmatpush1.msra.mxu0 0.0
      %1580 = vmatprep.subr.mxu0 0.0
      %1581 = vmatpush1.msra.mxu0 0.0
      %1582 = vmatprep.subr.mxu0 0.0
      %1583 = vmatpush1.msra.mxu0 0.0
      %1584 = vmatprep.subr.mxu0 0.0
      %1585 = vmatpush1.msra.mxu0 0.0
      %1586 = vmatprep.subr.mxu0 0.0
      %1587 = vmatpush1.msra.mxu0 0.0
      %1588 = vmatprep.subr.mxu0 0.0
      %1589 = vmatpush1.msra.mxu0 0.0
      %1590 = vmatprep.subr.mxu0 0.0
      %1591 = vmatpush1.msra.mxu0 0.0
      %1592 = vmatprep.subr.mxu0 0.0
      %1593 = vmatpush1.msra.mxu0 0.0
      %1594 = vmatprep.subr.mxu0 0.0
      %1595 = vmatpush1.msra.mxu0 0.0
      %1596 = vmatprep.subr.mxu0 0.0
      %1597 = vmatpush1.msra.mxu0 0.0
      %1598 = vmatprep.subr.mxu0 0.0
      %1599 = vmatpush1.msra.mxu0 0.0
      %1600 = vmatprep.subr.mxu0 0.0
      %1601 = vmatpush1.msra.mxu0 0.0
      %1602 = vmatprep.subr.mxu0 0.0
      %1603 = vmatpush1.msra.mxu0 0.0
      %1604 = vmatprep.subr.mxu0 0.0
      %1605 = vmatpush1.msra.mxu0 0.0
      %1606 = vmatprep.subr.mxu0 0.0
      %1607 = vmatpush1.msra.mxu0 0.0
      %1608 = vmatprep.subr.mxu0 0.0
      %1609 = vmatpush1.msra.mxu0 0.0
      %1610 = vmatprep.subr.mxu0 0.0
      %1611 = vmatpush1.msra.mxu0 0.0
      %1612 = vmatprep.subr.mxu0 0.0
      %1613 = vmatpush1.msra.mxu0 0.0
      %1614 = vmatprep.subr.mxu0 0.0
      %1615 = vmatpush1.msra.mxu0 0.0
      %1616 = vmatprep.subr.mxu0 0.0
      %1617 = vmatpush1.msra.mxu0 0.0
      %1618 = vmatprep.mubr.f32.mxu0 0.0
      %v1619 = vand.u32 %v1539, 4294901760
      %v1620 = vsub.f32 %v1539, %v1619
      %v1621 = vand.u32 %v1620, 4294901760
      %v1622 = vsub.f32 %v1620, %v1621
      %v1623 = vand.u32 %v1622, 4294901760
      %1624 = vmatmul.mubr.f32.gmra.mrb[0].mxu0 %v1623
      %v1625 = vpop.f32.mrb[0].mxu0
      %v1626 = vadd.f32 %v1522, %v1625
      %v1627 = vpop.f32.mrb[0].mxu0
      %1628 = vmatprep.mubr.f32.mxu0 0.0
      %v1629 = vand.u32 %v1541, 4294901760
      %v1630 = vsub.f32 %v1541, %v1629
      %v1631 = vand.u32 %v1630, 4294901760
      %v1632 = vsub.f32 %v1630, %v1631
      %v1633 = vand.u32 %v1632, 4294901760
      %1634 = vmatmul.mubr.f32.gmra.mrb[0].mxu0 %v1633
      %v1635 = vpop.f32.mrb[0].mxu0
      %v1636 = vadd.f32 %v1522, %v1635
      %v1637 = vpop.f32.mrb[0].mxu0
      %1638 = vmatprep.mubr.f32.mxu0 0.0
      %v1639 = vand.u32 %v1543, 4294901760
      %v1640 = vsub.f32 %v1543, %v1639
      %v1641 = vand.u32 %v1640, 4294901760
      %v1642 = vsub.f32 %v1640, %v1641
      %v1643 = vand.u32 %v1642, 4294901760
      %1644 = vmatmul.mubr.f32.gmra.mrb[0].mxu0 %v1643
      %v1645 = vpop.f32.mrb[0].mxu0
      %v1646 = vadd.f32 %v1522, %v1645
      %v1647 = vpop.f32.mrb[0].mxu0
      %1648 = vmatprep.mubr.f32.mxu0 0.0
      %v1649 = vand.u32 %v1545, 4294901760
      %v1650 = vsub.f32 %v1545, %v1649
      %v1651 = vand.u32 %v1650, 4294901760
      %v1652 = vsub.f32 %v1650, %v1651
      %v1653 = vand.u32 %v1652, 4294901760
      %1654 = vmatmul.mubr.f32.gmra.mrb[0].mxu0 %v1653
      %v1655 = vpop.f32.mrb[0].mxu0
      %v1656 = vadd.f32 %v1522, %v1655
      %v1657 = vpop.f32.mrb[0].mxu0
      %1658 = vmatprep.mubr.f32.mxu0 0.0
      %v1659 = vand.u32 %v1547, 4294901760
      %v1660 = vsub.f32 %v1547, %v1659
      %v1661 = vand.u32 %v1660, 4294901760
      %v1662 = vsub.f32 %v1660, %v1661
      %v1663 = vand.u32 %v1662, 4294901760
      %1664 = vmatmul.mubr.f32.gmra.mrb[0].mxu0 %v1663
      %v1665 = vpop.f32.mrb[0].mxu0
      %v1666 = vadd.f32 %v1522, %v1665
      %v1667 = vpop.f32.mrb[0].mxu0
      %1668 = vdwg.mxu0
      %1669 = vmatprep.subr.mxu0 0.0
      %v1670 = vand.u32 %v1160, 4294901760
      %v1671 = vsub.f32 %v1160, %v1670
      %v1672 = vand.u32 %v1671, 4294901760
      %v1673 = vsub.f32 %v1671, %v1672
      %v1674 = vand.u32 %v1673, 4294901760
      %1675 = vmatpush1.msra.mxu0 %v1674
      %1676 = vmatprep.subr.mxu0 0.0
      %v1677 = vand.u32 %v1550, 4294901760
      %v1678 = vsub.f32 %v1550, %v1677
      %v1679 = vand.u32 %v1678, 4294901760
      %v1680 = vsub.f32 %v1678, %v1679
      %v1681 = vand.u32 %v1680, 4294901760
      %1682 = vmatpush1.msra.mxu0 %v1681
      %1683 = vmatprep.subr.mxu0 0.0
      %1684 = vmatpush1.msra.mxu0 0.0
      %1685 = vmatprep.subr.mxu0 0.0
      %1686 = vmatpush1.msra.mxu0 0.0
      %1687 = vmatprep.subr.mxu0 0.0
      %1688 = vmatpush1.msra.mxu0 0.0
      %1689 = vmatprep.subr.mxu0 0.0
      %1690 = vmatpush1.msra.mxu0 0.0
      %1691 = vmatprep.subr.mxu0 0.0
      %1692 = vmatpush1.msra.mxu0 0.0
      %1693 = vmatprep.subr.mxu0 0.0
      %1694 = vmatpush1.msra.mxu0 0.0
      %1695 = vmatprep.subr.mxu0 0.0
      %1696 = vmatpush1.msra.mxu0 0.0
      %1697 = vmatprep.subr.mxu0 0.0
      %1698 = vmatpush1.msra.mxu0 0.0
      %1699 = vmatprep.subr.mxu0 0.0
      %1700 = vmatpush1.msra.mxu0 0.0
      %1701 = vmatprep.subr.mxu0 0.0
      %1702 = vmatpush1.msra.mxu0 0.0
      %1703 = vmatprep.subr.mxu0 0.0
      %1704 = vmatpush1.msra.mxu0 0.0
      %1705 = vmatprep.subr.mxu0 0.0
      %1706 = vmatpush1.msra.mxu0 0.0
      %1707 = vmatprep.subr.mxu0 0.0
      %1708 = vmatpush1.msra.mxu0 0.0
      %1709 = vmatprep.subr.mxu0 0.0
      %1710 = vmatpush1.msra.mxu0 0.0
      %1711 = vmatprep.subr.mxu0 0.0
      %1712 = vmatpush1.msra.mxu0 0.0
      %1713 = vmatprep.subr.mxu0 0.0
      %1714 = vmatpush1.msra.mxu0 0.0
      %1715 = vmatprep.subr.mxu0 0.0
      %1716 = vmatpush1.msra.mxu0 0.0
      %1717 = vmatprep.subr.mxu0 0.0
      %1718 = vmatpush1.msra.mxu0 0.0
      %1719 = vmatprep.subr.mxu0 0.0
      %1720 = vmatpush1.msra.mxu0 0.0
      %1721 = vmatprep.subr.mxu0 0.0
      %1722 = vmatpush1.msra.mxu0 0.0
      %1723 = vmatprep.subr.mxu0 0.0
      %1724 = vmatpush1.msra.mxu0 0.0
      %1725 = vmatprep.subr.mxu0 0.0
      %1726 = vmatpush1.msra.mxu0 0.0
      %1727 = vmatprep.subr.mxu0 0.0
      %1728 = vmatpush1.msra.mxu0 0.0
      %1729 = vmatprep.subr.mxu0 0.0
      %1730 = vmatpush1.msra.mxu0 0.0
      %1731 = vmatprep.subr.mxu0 0.0
      %1732 = vmatpush1.msra.mxu0 0.0
      %1733 = vmatprep.subr.mxu0 0.0
      %1734 = vmatpush1.msra.mxu0 0.0
      %1735 = vmatprep.subr.mxu0 0.0
      %1736 = vmatpush1.msra.mxu0 0.0
      %1737 = vmatprep.subr.mxu0 0.0
      %1738 = vmatpush1.msra.mxu0 0.0
      %1739 = vmatprep.subr.mxu0 0.0
      %1740 = vmatpush1.msra.mxu0 0.0
      %1741 = vmatprep.subr.mxu0 0.0
      %1742 = vmatpush1.msra.mxu0 0.0
      %1743 = vmatprep.mubr.f32.mxu0 0.0
      %v1744 = vand.u32 %v1539, 4294901760
      %1745 = vmatmul.mubr.f32.gmra.mrb[0].mxu0 %v1744
      %v1746 = vpop.f32.mrb[0].mxu0
      %v1747 = vadd.f32 %v1626, %v1746
      %v1748 = vpop.f32.mrb[0].mxu0
      %1749 = vmatprep.mubr.f32.mxu0 0.0
      %v1750 = vand.u32 %v1541, 4294901760
      %1751 = vmatmul.mubr.f32.gmra.mrb[0].mxu0 %v1750
      %v1752 = vpop.f32.mrb[0].mxu0
      %v1753 = vadd.f32 %v1636, %v1752
      %v1754 = vpop.f32.mrb[0].mxu0
      %1755 = vmatprep.mubr.f32.mxu0 0.0
      %v1756 = vand.u32 %v1543, 4294901760
      %1757 = vmatmul.mubr.f32.gmra.mrb[0].mxu0 %v1756
      %v1758 = vpop.f32.mrb[0].mxu0
      %v1759 = vadd.f32 %v1646, %v1758
      %v1760 = vpop.f32.mrb[0].mxu0
      %1761 = vmatprep.mubr.f32.mxu0 0.0
      %v1762 = vand.u32 %v1545, 4294901760
      %1763 = vmatmul.mubr.f32.gmra.mrb[0].mxu0 %v1762
      %v1764 = vpop.f32.mrb[0].mxu0
      %v1765 = vadd.f32 %v1656, %v1764
      %v1766 = vpop.f32.mrb[0].mxu0
      %1767 = vmatprep.mubr.f32.mxu0 0.0
      %v1768 = vand.u32 %v1547, 4294901760
      %1769 = vmatmul.mubr.f32.gmra.mrb[0].mxu0 %v1768
      %v1770 = vpop.f32.mrb[0].mxu0
      %v1771 = vadd.f32 %v1666, %v1770
      %v1772 = vpop.f32.mrb[0].mxu0
      %1773 = vdwg.mxu0
      %1774 = vmatprep.subr.mxu0 0.0
      %v1775 = vand.u32 %v1160, 4294901760
      %v1776 = vsub.f32 %v1160, %v1775
      %1777 = vmatpush1.msra.mxu0 %v1776
      %1778 = vmatprep.subr.mxu0 0.0
      %v1779 = vand.u32 %v1550, 4294901760
      %v1780 = vsub.f32 %v1550, %v1779
      %1781 = vmatpush1.msra.mxu0 %v1780
      %1782 = vmatprep.subr.mxu0 0.0
      %1783 = vmatpush1.msra.mxu0 0.0
      %1784 = vmatprep.subr.mxu0 0.0
      %1785 = vmatpush1.msra.mxu0 0.0
      %1786 = vmatprep.subr.mxu0 0.0
      %1787 = vmatpush1.msra.mxu0 0.0
      %1788 = vmatprep.subr.mxu0 0.0
      %1789 = vmatpush1.msra.mxu0 0.0
      %1790 = vmatprep.subr.mxu0 0.0
      %1791 = vmatpush1.msra.mxu0 0.0
      %1792 = vmatprep.subr.mxu0 0.0
      %1793 = vmatpush1.msra.mxu0 0.0
      %1794 = vmatprep.subr.mxu0 0.0
      %1795 = vmatpush1.msra.mxu0 0.0
      %1796 = vmatprep.subr.mxu0 0.0
      %1797 = vmatpush1.msra.mxu0 0.0
      %1798 = vmatprep.subr.mxu0 0.0
      %1799 = vmatpush1.msra.mxu0 0.0
      %1800 = vmatprep.subr.mxu0 0.0
      %1801 = vmatpush1.msra.mxu0 0.0
      %1802 = vmatprep.subr.mxu0 0.0
      %1803 = vmatpush1.msra.mxu0 0.0
      %1804 = vmatprep.subr.mxu0 0.0
      %1805 = vmatpush1.msra.mxu0 0.0
      %1806 = vmatprep.subr.mxu0 0.0
      %1807 = vmatpush1.msra.mxu0 0.0
      %1808 = vmatprep.subr.mxu0 0.0
      %1809 = vmatpush1.msra.mxu0 0.0
      %1810 = vmatprep.subr.mxu0 0.0
      %1811 = vmatpush1.msra.mxu0 0.0
      %1812 = vmatprep.subr.mxu0 0.0
      %1813 = vmatpush1.msra.mxu0 0.0
      %1814 = vmatprep.subr.mxu0 0.0
      %1815 = vmatpush1.msra.mxu0 0.0
      %1816 = vmatprep.subr.mxu0 0.0
      %1817 = vmatpush1.msra.mxu0 0.0
      %1818 = vmatprep.subr.mxu0 0.0
      %1819 = vmatpush1.msra.mxu0 0.0
      %1820 = vmatprep.subr.mxu0 0.0
      %1821 = vmatpush1.msra.mxu0 0.0
      %1822 = vmatprep.subr.mxu0 0.0
      %1823 = vmatpush1.msra.mxu0 0.0
      %1824 = vmatprep.subr.mxu0 0.0
      %1825 = vmatpush1.msra.mxu0 0.0
      %1826 = vmatprep.subr.mxu0 0.0
      %1827 = vmatpush1.msra.mxu0 0.0
      %1828 = vmatprep.subr.mxu0 0.0
      %1829 = vmatpush1.msra.mxu0 0.0
      %1830 = vmatprep.subr.mxu0 0.0
      %1831 = vmatpush1.msra.mxu0 0.0
      %1832 = vmatprep.subr.mxu0 0.0
      %1833 = vmatpush1.msra.mxu0 0.0
      %1834 = vmatprep.subr.mxu0 0.0
      %1835 = vmatpush1.msra.mxu0 0.0
      %1836 = vmatprep.subr.mxu0 0.0
      %1837 = vmatpush1.msra.mxu0 0.0
      %1838 = vmatprep.subr.mxu0 0.0
      %1839 = vmatpush1.msra.mxu0 0.0
      %1840 = vmatprep.subr.mxu0 0.0
      %1841 = vmatpush1.msra.mxu0 0.0
      %1842 = vmatprep.mubr.f32.mxu0 0.0
      %v1843 = vand.u32 %v1539, 4294901760
      %v1844 = vsub.f32 %v1539, %v1843
      %1845 = vmatmul.mubr.f32.gmra.mrb[0].mxu0 %v1844
      %v1846 = vpop.f32.mrb[0].mxu0
      %v1847 = vadd.f32 %v1747, %v1846
      %v1848 = vpop.f32.mrb[0].mxu0
      %1849 = vmatprep.mubr.f32.mxu0 0.0
      %v1850 = vand.u32 %v1541, 4294901760
      %v1851 = vsub.f32 %v1541, %v1850
      %1852 = vmatmul.mubr.f32.gmra.mrb[0].mxu0 %v1851
      %v1853 = vpop.f32.mrb[0].mxu0
      %v1854 = vadd.f32 %v1753, %v1853
      %v1855 = vpop.f32.mrb[0].mxu0
      %1856 = vmatprep.mubr.f32.mxu0 0.0
      %v1857 = vand.u32 %v1543, 4294901760
      %v1858 = vsub.f32 %v1543, %v1857
      %1859 = vmatmul.mubr.f32.gmra.mrb[0].mxu0 %v1858
      %v1860 = vpop.f32.mrb[0].mxu0
      %v1861 = vadd.f32 %v1759, %v1860
      %v1862 = vpop.f32.mrb[0].mxu0
      %1863 = vmatprep.mubr.f32.mxu0 0.0
      %v1864 = vand.u32 %v1545, 4294901760
      %v1865 = vsub.f32 %v1545, %v1864
      %1866 = vmatmul.mubr.f32.gmra.mrb[0].mxu0 %v1865
      %v1867 = vpop.f32.mrb[0].mxu0
      %v1868 = vadd.f32 %v1765, %v1867
      %v1869 = vpop.f32.mrb[0].mxu0
      %1870 = vmatprep.mubr.f32.mxu0 0.0
      %v1871 = vand.u32 %v1547, 4294901760
      %v1872 = vsub.f32 %v1547, %v1871
      %1873 = vmatmul.mubr.f32.gmra.mrb[0].mxu0 %v1872
      %v1874 = vpop.f32.mrb[0].mxu0
      %v1875 = vadd.f32 %v1771, %v1874
      %v1876 = vpop.f32.mrb[0].mxu0
      %1877 = vdwg.mxu0
      %1878 = vmatprep.subr.mxu0 0.0
      %v1879 = vand.u32 %v1160, 4294901760
      %1880 = vmatpush1.msra.mxu0 %v1879
      %1881 = vmatprep.subr.mxu0 0.0
      %v1882 = vand.u32 %v1550, 4294901760
      %1883 = vmatpush1.msra.mxu0 %v1882
      %1884 = vmatprep.subr.mxu0 0.0
      %1885 = vmatpush1.msra.mxu0 0.0
      %1886 = vmatprep.subr.mxu0 0.0
      %1887 = vmatpush1.msra.mxu0 0.0
      %1888 = vmatprep.subr.mxu0 0.0
      %1889 = vmatpush1.msra.mxu0 0.0
      %1890 = vmatprep.subr.mxu0 0.0
      %1891 = vmatpush1.msra.mxu0 0.0
      %1892 = vmatprep.subr.mxu0 0.0
      %1893 = vmatpush1.msra.mxu0 0.0
      %1894 = vmatprep.subr.mxu0 0.0
      %1895 = vmatpush1.msra.mxu0 0.0
      %1896 = vmatprep.subr.mxu0 0.0
      %1897 = vmatpush1.msra.mxu0 0.0
      %1898 = vmatprep.subr.mxu0 0.0
      %1899 = vmatpush1.msra.mxu0 0.0
      %1900 = vmatprep.subr.mxu0 0.0
      %1901 = vmatpush1.msra.mxu0 0.0
      %1902 = vmatprep.subr.mxu0 0.0
      %1903 = vmatpush1.msra.mxu0 0.0
      %1904 = vmatprep.subr.mxu0 0.0
      %1905 = vmatpush1.msra.mxu0 0.0
      %1906 = vmatprep.subr.mxu0 0.0
      %1907 = vmatpush1.msra.mxu0 0.0
      %1908 = vmatprep.subr.mxu0 0.0
      %1909 = vmatpush1.msra.mxu0 0.0
      %1910 = vmatprep.subr.mxu0 0.0
      %1911 = vmatpush1.msra.mxu0 0.0
      %1912 = vmatprep.subr.mxu0 0.0
      %1913 = vmatpush1.msra.mxu0 0.0
      %1914 = vmatprep.subr.mxu0 0.0
      %1915 = vmatpush1.msra.mxu0 0.0
      %1916 = vmatprep.subr.mxu0 0.0
      %1917 = vmatpush1.msra.mxu0 0.0
      %1918 = vmatprep.subr.mxu0 0.0
      %1919 = vmatpush1.msra.mxu0 0.0
      %1920 = vmatprep.subr.mxu0 0.0
      %1921 = vmatpush1.msra.mxu0 0.0
      %1922 = vmatprep.subr.mxu0 0.0
      %1923 = vmatpush1.msra.mxu0 0.0
      %1924 = vmatprep.subr.mxu0 0.0
      %1925 = vmatpush1.msra.mxu0 0.0
      %1926 = vmatprep.subr.mxu0 0.0
      %1927 = vmatpush1.msra.mxu0 0.0
      %1928 = vmatprep.subr.mxu0 0.0
      %1929 = vmatpush1.msra.mxu0 0.0
      %1930 = vmatprep.subr.mxu0 0.0
      %1931 = vmatpush1.msra.mxu0 0.0
      %1932 = vmatprep.subr.mxu0 0.0
      %1933 = vmatpush1.msra.mxu0 0.0
      %1934 = vmatprep.subr.mxu0 0.0
      %1935 = vmatpush1.msra.mxu0 0.0
      %1936 = vmatprep.subr.mxu0 0.0
      %1937 = vmatpush1.msra.mxu0 0.0
      %1938 = vmatprep.subr.mxu0 0.0
      %1939 = vmatpush1.msra.mxu0 0.0
      %1940 = vmatprep.subr.mxu0 0.0
      %1941 = vmatpush1.msra.mxu0 0.0
      %1942 = vmatprep.subr.mxu0 0.0
      %1943 = vmatpush1.msra.mxu0 0.0
      %1944 = vmatprep.mubr.f32.mxu0 0.0
      %v1945 = vand.u32 %v1539, 4294901760
      %v1946 = vsub.f32 %v1539, %v1945
      %v1947 = vand.u32 %v1946, 4294901760
      %1948 = vmatmul.mubr.f32.gmra.mrb[0].mxu0 %v1947
      %v1949 = vpop.f32.mrb[0].mxu0
      %v1950 = vadd.f32 %v1847, %v1949
      %v1951 = vpop.f32.mrb[0].mxu0
      %1952 = vmatprep.mubr.f32.mxu0 0.0
      %v1953 = vand.u32 %v1541, 4294901760
      %v1954 = vsub.f32 %v1541, %v1953
      %v1955 = vand.u32 %v1954, 4294901760
      %1956 = vmatmul.mubr.f32.gmra.mrb[0].mxu0 %v1955
      %v1957 = vpop.f32.mrb[0].mxu0
      %v1958 = vadd.f32 %v1854, %v1957
      %v1959 = vpop.f32.mrb[0].mxu0
      %1960 = vmatprep.mubr.f32.mxu0 0.0
      %v1961 = vand.u32 %v1543, 4294901760
      %v1962 = vsub.f32 %v1543, %v1961
      %v1963 = vand.u32 %v1962, 4294901760
      %1964 = vmatmul.mubr.f32.gmra.mrb[0].mxu0 %v1963
      %v1965 = vpop.f32.mrb[0].mxu0
      %v1966 = vadd.f32 %v1861, %v1965
      %v1967 = vpop.f32.mrb[0].mxu0
      %1968 = vmatprep.mubr.f32.mxu0 0.0
      %v1969 = vand.u32 %v1545, 4294901760
      %v1970 = vsub.f32 %v1545, %v1969
      %v1971 = vand.u32 %v1970, 4294901760
      %1972 = vmatmul.mubr.f32.gmra.mrb[0].mxu0 %v1971
      %v1973 = vpop.f32.mrb[0].mxu0
      %v1974 = vadd.f32 %v1868, %v1973
      %v1975 = vpop.f32.mrb[0].mxu0
      %1976 = vmatprep.mubr.f32.mxu0 0.0
      %v1977 = vand.u32 %v1547, 4294901760
      %v1978 = vsub.f32 %v1547, %v1977
      %v1979 = vand.u32 %v1978, 4294901760
      %1980 = vmatmul.mubr.f32.gmra.mrb[0].mxu0 %v1979
      %v1981 = vpop.f32.mrb[0].mxu0
      %v1982 = vadd.f32 %v1875, %v1981
      %v1983 = vpop.f32.mrb[0].mxu0
      %1984 = vdwg.mxu0
      %1985 = vmatprep.subr.mxu0 0.0
      %v1986 = vand.u32 %v1160, 4294901760
      %v1987 = vsub.f32 %v1160, %v1986
      %v1988 = vand.u32 %v1987, 4294901760
      %1989 = vmatpush1.msra.mxu0 %v1988
      %1990 = vmatprep.subr.mxu0 0.0
      %v1991 = vand.u32 %v1550, 4294901760
      %v1992 = vsub.f32 %v1550, %v1991
      %v1993 = vand.u32 %v1992, 4294901760
      %1994 = vmatpush1.msra.mxu0 %v1993
      %1995 = vmatprep.subr.mxu0 0.0
      %1996 = vmatpush1.msra.mxu0 0.0
      %1997 = vmatprep.subr.mxu0 0.0
      %1998 = vmatpush1.msra.mxu0 0.0
      %1999 = vmatprep.subr.mxu0 0.0
      %2000 = vmatpush1.msra.mxu0 0.0
      %2001 = vmatprep.subr.mxu0 0.0
      %2002 = vmatpush1.msra.mxu0 0.0
      %2003 = vmatprep.subr.mxu0 0.0
      %2004 = vmatpush1.msra.mxu0 0.0
      %2005 = vmatprep.subr.mxu0 0.0
      %2006 = vmatpush1.msra.mxu0 0.0
      %2007 = vmatprep.subr.mxu0 0.0
      %2008 = vmatpush1.msra.mxu0 0.0
      %2009 = vmatprep.subr.mxu0 0.0
      %2010 = vmatpush1.msra.mxu0 0.0
      %2011 = vmatprep.subr.mxu0 0.0
      %2012 = vmatpush1.msra.mxu0 0.0
      %2013 = vmatprep.subr.mxu0 0.0
      %2014 = vmatpush1.msra.mxu0 0.0
      %2015 = vmatprep.subr.mxu0 0.0
      %2016 = vmatpush1.msra.mxu0 0.0
      %2017 = vmatprep.subr.mxu0 0.0
      %2018 = vmatpush1.msra.mxu0 0.0
      %2019 = vmatprep.subr.mxu0 0.0
      %2020 = vmatpush1.msra.mxu0 0.0
      %2021 = vmatprep.subr.mxu0 0.0
      %2022 = vmatpush1.msra.mxu0 0.0
      %2023 = vmatprep.subr.mxu0 0.0
      %2024 = vmatpush1.msra.mxu0 0.0
      %2025 = vmatprep.subr.mxu0 0.0
      %2026 = vmatpush1.msra.mxu0 0.0
      %2027 = vmatprep.subr.mxu0 0.0
      %2028 = vmatpush1.msra.mxu0 0.0
      %2029 = vmatprep.subr.mxu0 0.0
      %2030 = vmatpush1.msra.mxu0 0.0
      %2031 = vmatprep.subr.mxu0 0.0
      %2032 = vmatpush1.msra.mxu0 0.0
      %2033 = vmatprep.subr.mxu0 0.0
      %2034 = vmatpush1.msra.mxu0 0.0
      %2035 = vmatprep.subr.mxu0 0.0
      %2036 = vmatpush1.msra.mxu0 0.0
      %2037 = vmatprep.subr.mxu0 0.0
      %2038 = vmatpush1.msra.mxu0 0.0
      %2039 = vmatprep.subr.mxu0 0.0
      %2040 = vmatpush1.msra.mxu0 0.0
      %2041 = vmatprep.subr.mxu0 0.0
      %2042 = vmatpush1.msra.mxu0 0.0
      %2043 = vmatprep.subr.mxu0 0.0
      %2044 = vmatpush1.msra.mxu0 0.0
      %2045 = vmatprep.subr.mxu0 0.0
      %2046 = vmatpush1.msra.mxu0 0.0
      %2047 = vmatprep.subr.mxu0 0.0
      %2048 = vmatpush1.msra.mxu0 0.0
      %2049 = vmatprep.subr.mxu0 0.0
      %2050 = vmatpush1.msra.mxu0 0.0
      %2051 = vmatprep.subr.mxu0 0.0
      %2052 = vmatpush1.msra.mxu0 0.0
      %2053 = vmatprep.subr.mxu0 0.0
      %2054 = vmatpush1.msra.mxu0 0.0
      %2055 = vmatprep.mubr.f32.mxu0 0.0
      %v2056 = vand.u32 %v1539, 4294901760
      %2057 = vmatmul.mubr.f32.gmra.mrb[0].mxu0 %v2056
      %v2058 = vpop.f32.mrb[0].mxu0
      %v2059 = vadd.f32 %v1950, %v2058
      %v2060 = vpop.f32.mrb[0].mxu0
      %2061 = vmatprep.mubr.f32.mxu0 0.0
      %v2062 = vand.u32 %v1541, 4294901760
      %2063 = vmatmul.mubr.f32.gmra.mrb[0].mxu0 %v2062
      %v2064 = vpop.f32.mrb[0].mxu0
      %v2065 = vadd.f32 %v1958, %v2064
      %v2066 = vpop.f32.mrb[0].mxu0
      %2067 = vmatprep.mubr.f32.mxu0 0.0
      %v2068 = vand.u32 %v1543, 4294901760
      %2069 = vmatmul.mubr.f32.gmra.mrb[0].mxu0 %v2068
      %v2070 = vpop.f32.mrb[0].mxu0
      %v2071 = vadd.f32 %v1966, %v2070
      %v2072 = vpop.f32.mrb[0].mxu0
      %2073 = vmatprep.mubr.f32.mxu0 0.0
      %v2074 = vand.u32 %v1545, 4294901760
      %2075 = vmatmul.mubr.f32.gmra.mrb[0].mxu0 %v2074
      %v2076 = vpop.f32.mrb[0].mxu0
      %v2077 = vadd.f32 %v1974, %v2076
      %v2078 = vpop.f32.mrb[0].mxu0
      %2079 = vmatprep.mubr.f32.mxu0 0.0
      %v2080 = vand.u32 %v1547, 4294901760
      %2081 = vmatmul.mubr.f32.gmra.mrb[0].mxu0 %v2080
      %v2082 = vpop.f32.mrb[0].mxu0
      %v2083 = vadd.f32 %v1982, %v2082
      %v2084 = vpop.f32.mrb[0].mxu0
      %2085 = vdwg.mxu0
      %2086 = vmatprep.subr.mxu0 0.0
      %v2087 = vand.u32 %v1160, 4294901760
      %2088 = vmatpush1.msra.mxu0 %v2087
      %2089 = vmatprep.subr.mxu0 0.0
      %v2090 = vand.u32 %v1550, 4294901760
      %2091 = vmatpush1.msra.mxu0 %v2090
      %2092 = vmatprep.subr.mxu0 0.0
      %2093 = vmatpush1.msra.mxu0 0.0
      %2094 = vmatprep.subr.mxu0 0.0
      %2095 = vmatpush1.msra.mxu0 0.0
      %2096 = vmatprep.subr.mxu0 0.0
      %2097 = vmatpush1.msra.mxu0 0.0
      %2098 = vmatprep.subr.mxu0 0.0
      %2099 = vmatpush1.msra.mxu0 0.0
      %2100 = vmatprep.subr.mxu0 0.0
      %2101 = vmatpush1.msra.mxu0 0.0
      %2102 = vmatprep.subr.mxu0 0.0
      %2103 = vmatpush1.msra.mxu0 0.0
      %2104 = vmatprep.subr.mxu0 0.0
      %2105 = vmatpush1.msra.mxu0 0.0
      %2106 = vmatprep.subr.mxu0 0.0
      %2107 = vmatpush1.msra.mxu0 0.0
      %2108 = vmatprep.subr.mxu0 0.0
      %2109 = vmatpush1.msra.mxu0 0.0
      %2110 = vmatprep.subr.mxu0 0.0
      %2111 = vmatpush1.msra.mxu0 0.0
      %2112 = vmatprep.subr.mxu0 0.0
      %2113 = vmatpush1.msra.mxu0 0.0
      %2114 = vmatprep.subr.mxu0 0.0
      %2115 = vmatpush1.msra.mxu0 0.0
      %2116 = vmatprep.subr.mxu0 0.0
      %2117 = vmatpush1.msra.mxu0 0.0
      %2118 = vmatprep.subr.mxu0 0.0
      %2119 = vmatpush1.msra.mxu0 0.0
      %2120 = vmatprep.subr.mxu0 0.0
      %2121 = vmatpush1.msra.mxu0 0.0
      %2122 = vmatprep.subr.mxu0 0.0
      %2123 = vmatpush1.msra.mxu0 0.0
      %2124 = vmatprep.subr.mxu0 0.0
      %2125 = vmatpush1.msra.mxu0 0.0
      %2126 = vmatprep.subr.mxu0 0.0
      %2127 = vmatpush1.msra.mxu0 0.0
      %2128 = vmatprep.subr.mxu0 0.0
      %2129 = vmatpush1.msra.mxu0 0.0
      %2130 = vmatprep.subr.mxu0 0.0
      %2131 = vmatpush1.msra.mxu0 0.0
      %2132 = vmatprep.subr.mxu0 0.0
      %2133 = vmatpush1.msra.mxu0 0.0
      %2134 = vmatprep.subr.mxu0 0.0
      %2135 = vmatpush1.msra.mxu0 0.0
      %2136 = vmatprep.subr.mxu0 0.0
      %2137 = vmatpush1.msra.mxu0 0.0
      %2138 = vmatprep.subr.mxu0 0.0
      %2139 = vmatpush1.msra.mxu0 0.0
      %2140 = vmatprep.subr.mxu0 0.0
      %2141 = vmatpush1.msra.mxu0 0.0
      %2142 = vmatprep.subr.mxu0 0.0
      %2143 = vmatpush1.msra.mxu0 0.0
      %2144 = vmatprep.subr.mxu0 0.0
      %2145 = vmatpush1.msra.mxu0 0.0
      %2146 = vmatprep.subr.mxu0 0.0
      %2147 = vmatpush1.msra.mxu0 0.0
      %2148 = vmatprep.subr.mxu0 0.0
      %2149 = vmatpush1.msra.mxu0 0.0
      %2150 = vmatprep.subr.mxu0 0.0
      %2151 = vmatpush1.msra.mxu0 0.0
      %2152 = vmatprep.mubr.f32.mxu0 0.0
      %v2153 = vand.u32 %v1539, 4294901760
      %2154 = vmatmul.mubr.f32.gmra.mrb[0].mxu0 %v2153
      %v2155 = vpop.f32.mrb[0].mxu0
      %v2156 = vadd.f32 %v2059, %v2155
      %v2157 = vpop.f32.mrb[0].mxu0
      %2158 = vmatprep.mubr.f32.mxu0 0.0
      %v2159 = vand.u32 %v1541, 4294901760
      %2160 = vmatmul.mubr.f32.gmra.mrb[0].mxu0 %v2159
      %v2161 = vpop.f32.mrb[0].mxu0
      %v2162 = vadd.f32 %v2065, %v2161
      %v2163 = vpop.f32.mrb[0].mxu0
      %2164 = vmatprep.mubr.f32.mxu0 0.0
      %v2165 = vand.u32 %v1543, 4294901760
      %2166 = vmatmul.mubr.f32.gmra.mrb[0].mxu0 %v2165
      %v2167 = vpop.f32.mrb[0].mxu0
      %v2168 = vadd.f32 %v2071, %v2167
      %v2169 = vpop.f32.mrb[0].mxu0
      %2170 = vmatprep.mubr.f32.mxu0 0.0
      %v2171 = vand.u32 %v1545, 4294901760
      %2172 = vmatmul.mubr.f32.gmra.mrb[0].mxu0 %v2171
      %v2173 = vpop.f32.mrb[0].mxu0
      %v2174 = vadd.f32 %v2077, %v2173
      %v2175 = vpop.f32.mrb[0].mxu0
      %2176 = vmatprep.mubr.f32.mxu0 0.0
      %v2177 = vand.u32 %v1547, 4294901760
      %2178 = vmatmul.mubr.f32.gmra.mrb[0].mxu0 %v2177
      %v2179 = vpop.f32.mrb[0].mxu0
      %v2180 = vadd.f32 %v2083, %v2179
      %v2181 = vpop.f32.mrb[0].mxu0
      %2182 = vdwg.mxu0
      %v2183 = vadd.f32 %v495, %v2156
      %v2184 = vadd.f32 %v496, %v2162
      %v2185 = vadd.f32 %v497, %v2168
      %v2186 = vadd.f32 %v498, %v2174
      %v2187 = vadd.f32 %v499, %v2180
      %v2188 = vld [vmem:[%s5] sm:$0x1]
      %v2189 = vld [vmem:[%s6] sm:$0x1]
      %v2190 = vsel %vm509, %v2183, 0.0
      %2191 = vadd.xlane.f32.xlu0 %v2190
      %v2192 = vpop.xlane.xlu0 %2191
      %v2193 = vsel %vm509, %v2184, 0.0
      %2194 = vadd.xlane.f32.xlu0 %v2193
      %v2195 = vpop.xlane.xlu0 %2194
      %v2196 = vsel %vm509, %v2185, 0.0
      %2197 = vadd.xlane.f32.xlu0 %v2196
      %v2198 = vpop.xlane.xlu0 %2197
      %v2199 = vsel %vm509, %v2186, 0.0
      %2200 = vadd.xlane.f32.xlu0 %v2199
      %v2201 = vpop.xlane.xlu0 %2200
      %v2202 = vsel %vm509, %v2187, 0.0
      %2203 = vadd.xlane.f32.xlu0 %v2202
      %v2204 = vpop.xlane.xlu0 %2203
      %v2205 = vrcp.pop 11.0
      %v2206 = vmul.f32 %v2192, %v2205
      %v2207 = vmul.f32 %v2195, %v2205
      %v2208 = vmul.f32 %v2198, %v2205
      %v2209 = vmul.f32 %v2201, %v2205
      %v2210 = vmul.f32 %v2204, %v2205
      %v2211 = vsub.f32 %v2183, %v2206
      %v2212 = vsub.f32 %v2184, %v2207
      %v2213 = vsub.f32 %v2185, %v2208
      %v2214 = vsub.f32 %v2186, %v2209
      %v2215 = vsub.f32 %v2187, %v2210
      %v2216 = vmul.f32 %v2211, %v2211
      %v2217 = vmul.f32 %v2212, %v2212
      %v2218 = vmul.f32 %v2213, %v2213
      %v2219 = vmul.f32 %v2214, %v2214
      %v2220 = vmul.f32 %v2215, %v2215
      %v2221 = vsel %vm509, %v2216, 0.0
      %2222 = vadd.xlane.f32.xlu0 %v2221
      %v2223 = vpop.xlane.xlu0 %2222
      %v2224 = vsel %vm509, %v2217, 0.0
      %2225 = vadd.xlane.f32.xlu0 %v2224
      %v2226 = vpop.xlane.xlu0 %2225
      %v2227 = vsel %vm509, %v2218, 0.0
      %2228 = vadd.xlane.f32.xlu0 %v2227
      %v2229 = vpop.xlane.xlu0 %2228
      %v2230 = vsel %vm509, %v2219, 0.0
      %2231 = vadd.xlane.f32.xlu0 %v2230
      %v2232 = vpop.xlane.xlu0 %2231
      %v2233 = vsel %vm509, %v2220, 0.0
      %2234 = vadd.xlane.f32.xlu0 %v2233
      %v2235 = vpop.xlane.xlu0 %2234
      %v2236 = vmul.f32 %v2223, %v2205
      %v2237 = vmul.f32 %v2226, %v2205
      %v2238 = vmul.f32 %v2229, %v2205
      %v2239 = vmul.f32 %v2232, %v2205
      %v2240 = vmul.f32 %v2235, %v2205
      %v2241 = vadd.f32 %v2236, 1e-05
      %v2242 = vadd.f32 %v2237, 1e-05
      %v2243 = vadd.f32 %v2238, 1e-05
      %v2244 = vadd.f32 %v2239, 1e-05
      %v2245 = vadd.f32 %v2240, 1e-05
      %v2246 = vrsqrt.pop %v2241
      %v2247 = vrsqrt.pop %v2242
      %v2248 = vrsqrt.pop %v2243
      %v2249 = vrsqrt.pop %v2244
      %v2250 = vrsqrt.pop %v2245
      %v2251 = vmul.f32 %v2211, %v2246
      %v2252 = vmul.f32 %v2212, %v2247
      %v2253 = vmul.f32 %v2213, %v2248
      %v2254 = vmul.f32 %v2214, %v2249
      %v2255 = vmul.f32 %v2215, %v2250
      %v2257 = vlaneseq
      %v2258 = vshrl.u32 %v2257, 7
      %v2259 = vsub.s32 0, %v2258
      %v2260 = vrot.slane %v2188, %v2259
      %v2262 = vmul.f32 %v2251, %v2260
      %v2263 = vmul.f32 %v2252, %v2260
      %v2264 = vmul.f32 %v2253, %v2260
      %v2265 = vmul.f32 %v2254, %v2260
      %v2266 = vmul.f32 %v2255, %v2260
      %v2268 = vlaneseq
      %v2269 = vshrl.u32 %v2268, 7
      %v2270 = vsub.s32 0, %v2269
      %v2271 = vrot.slane %v2189, %v2270
      %v2273 = vadd.f32 %v2262, %v2271
      %v2274 = vadd.f32 %v2263, %v2271
      %v2275 = vadd.f32 %v2264, %v2271
      %v2276 = vadd.f32 %v2265, %v2271
      %v2277 = vadd.f32 %v2266, %v2271
      %v2278 = vld [vmem:[%s7] sm:$0xff]
      %v2279 = vld [vmem:[%s7 + $0x8] sm:$0x7]
      %v2280 = vld [vmem:[%s8] sm:$0x1]
      %v2282 = vlaneseq
      %v2283 = vshrl.u32 %v2282, 7
      %v2284 = vsub.s32 0, %v2283
      %v2285 = vrot.slane %v2280, %v2284
      %v2288 = vsel %vm509, %v2273, 0
      %v2291 = vsel %vm509, %v2274, 0
      %v2294 = vsel %vm509, %v2275, 0
      %v2297 = vsel %vm509, %v2276, 0
      %v2300 = vsel %vm509, %v2277, 0
      %v2303 = vsel %vm525, %v2279, 0
      %2305 = vmatprep.subr.mxu0 0.0
      %v2306 = vand.u32 %v2278, 4294901760
      %2307 = vmatpush1.msra.mxu0 %v2306
      %2308 = vmatprep.subr.mxu0 0.0
      %v2309 = vand.u32 %v2303, 4294901760
      %2310 = vmatpush1.msra.mxu0 %v2309
      %2311 = vmatprep.subr.mxu0 0.0
      %2312 = vmatpush1.msra.mxu0 0.0
      %2313 = vmatprep.subr.mxu0 0.0
      %2314 = vmatpush1.msra.mxu0 0.0
      %2315 = vmatprep.subr.mxu0 0.0
      %2316 = vmatpush1.msra.mxu0 0.0
      %2317 = vmatprep.subr.mxu0 0.0
      %2318 = vmatpush1.msra.mxu0 0.0
      %2319 = vmatprep.subr.mxu0 0.0
      %2320 = vmatpush1.msra.mxu0 0.0
      %2321 = vmatprep.subr.mxu0 0.0
      %2322 = vmatpush1.msra.mxu0 0.0
      %2323 = vmatprep.subr.mxu0 0.0
      %2324 = vmatpush1.msra.mxu0 0.0
      %2325 = vmatprep.subr.mxu0 0.0
      %2326 = vmatpush1.msra.mxu0 0.0
      %2327 = vmatprep.subr.mxu0 0.0
      %2328 = vmatpush1.msra.mxu0 0.0
      %2329 = vmatprep.subr.mxu0 0.0
      %2330 = vmatpush1.msra.mxu0 0.0
      %2331 = vmatprep.subr.mxu0 0.0
      %2332 = vmatpush1.msra.mxu0 0.0
      %2333 = vmatprep.subr.mxu0 0.0
      %2334 = vmatpush1.msra.mxu0 0.0
      %2335 = vmatprep.subr.mxu0 0.0
      %2336 = vmatpush1.msra.mxu0 0.0
      %2337 = vmatprep.subr.mxu0 0.0
      %2338 = vmatpush1.msra.mxu0 0.0
      %2339 = vmatprep.subr.mxu0 0.0
      %2340 = vmatpush1.msra.mxu0 0.0
      %2341 = vmatprep.subr.mxu0 0.0
      %2342 = vmatpush1.msra.mxu0 0.0
      %2343 = vmatprep.subr.mxu0 0.0
      %2344 = vmatpush1.msra.mxu0 0.0
      %2345 = vmatprep.subr.mxu0 0.0
      %2346 = vmatpush1.msra.mxu0 0.0
      %2347 = vmatprep.subr.mxu0 0.0
      %2348 = vmatpush1.msra.mxu0 0.0
      %2349 = vmatprep.subr.mxu0 0.0
      %2350 = vmatpush1.msra.mxu0 0.0
      %2351 = vmatprep.subr.mxu0 0.0
      %2352 = vmatpush1.msra.mxu0 0.0
      %2353 = vmatprep.subr.mxu0 0.0
      %2354 = vmatpush1.msra.mxu0 0.0
      %2355 = vmatprep.subr.mxu0 0.0
      %2356 = vmatpush1.msra.mxu0 0.0
      %2357 = vmatprep.subr.mxu0 0.0
      %2358 = vmatpush1.msra.mxu0 0.0
      %2359 = vmatprep.subr.mxu0 0.0
      %2360 = vmatpush1.msra.mxu0 0.0
      %2361 = vmatprep.subr.mxu0 0.0
      %2362 = vmatpush1.msra.mxu0 0.0
      %2363 = vmatprep.subr.mxu0 0.0
      %2364 = vmatpush1.msra.mxu0 0.0
      %2365 = vmatprep.subr.mxu0 0.0
      %2366 = vmatpush1.msra.mxu0 0.0
      %2367 = vmatprep.subr.mxu0 0.0
      %2368 = vmatpush1.msra.mxu0 0.0
      %2369 = vmatprep.subr.mxu0 0.0
      %2370 = vmatpush1.msra.mxu0 0.0
      %2371 = vmatprep.mubr.f32.mxu0 0.0
      %v2372 = vand.u32 %v2288, 4294901760
      %v2373 = vsub.f32 %v2288, %v2372
      %v2374 = vand.u32 %v2373, 4294901760
      %v2375 = vsub.f32 %v2373, %v2374
      %v2376 = vand.u32 %v2375, 4294901760
      %2377 = vmatmul.mubr.f32.gmra.mrb[0].mxu0 %v2376
      %v2378 = vpop.f32.mrb[0].mxu0
      %v2379 = vadd.f32 %v2285, %v2378
      %v2380 = vpop.f32.mrb[0].mxu0
      %2381 = vmatprep.mubr.f32.mxu0 0.0
      %v2382 = vand.u32 %v2291, 4294901760
      %v2383 = vsub.f32 %v2291, %v2382
      %v2384 = vand.u32 %v2383, 4294901760
      %v2385 = vsub.f32 %v2383, %v2384
      %v2386 = vand.u32 %v2385, 4294901760
      %2387 = vmatmul.mubr.f32.gmra.mrb[0].mxu0 %v2386
      %v2388 = vpop.f32.mrb[0].mxu0
      %v2389 = vadd.f32 %v2285, %v2388
      %v2390 = vpop.f32.mrb[0].mxu0
      %2391 = vmatprep.mubr.f32.mxu0 0.0
      %v2392 = vand.u32 %v2294, 4294901760
      %v2393 = vsub.f32 %v2294, %v2392
      %v2394 = vand.u32 %v2393, 4294901760
      %v2395 = vsub.f32 %v2393, %v2394
      %v2396 = vand.u32 %v2395, 4294901760
      %2397 = vmatmul.mubr.f32.gmra.mrb[0].mxu0 %v2396
      %v2398 = vpop.f32.mrb[0].mxu0
      %v2399 = vadd.f32 %v2285, %v2398
      %v2400 = vpop.f32.mrb[0].mxu0
      %2401 = vmatprep.mubr.f32.mxu0 0.0
      %v2402 = vand.u32 %v2297, 4294901760
      %v2403 = vsub.f32 %v2297, %v2402
      %v2404 = vand.u32 %v2403, 4294901760
      %v2405 = vsub.f32 %v2403, %v2404
      %v2406 = vand.u32 %v2405, 4294901760
      %2407 = vmatmul.mubr.f32.gmra.mrb[0].mxu0 %v2406
      %v2408 = vpop.f32.mrb[0].mxu0
      %v2409 = vadd.f32 %v2285, %v2408
      %v2410 = vpop.f32.mrb[0].mxu0
      %2411 = vmatprep.mubr.f32.mxu0 0.0
      %v2412 = vand.u32 %v2300, 4294901760
      %v2413 = vsub.f32 %v2300, %v2412
      %v2414 = vand.u32 %v2413, 4294901760
      %v2415 = vsub.f32 %v2413, %v2414
      %v2416 = vand.u32 %v2415, 4294901760
      %2417 = vmatmul.mubr.f32.gmra.mrb[0].mxu0 %v2416
      %v2418 = vpop.f32.mrb[0].mxu0
      %v2419 = vadd.f32 %v2285, %v2418
      %v2420 = vpop.f32.mrb[0].mxu0
      %2421 = vdwg.mxu0
      %2422 = vmatprep.subr.mxu0 0.0
      %v2423 = vand.u32 %v2278, 4294901760
      %v2424 = vsub.f32 %v2278, %v2423
      %v2425 = vand.u32 %v2424, 4294901760
      %v2426 = vsub.f32 %v2424, %v2425
      %v2427 = vand.u32 %v2426, 4294901760
      %2428 = vmatpush1.msra.mxu0 %v2427
      %2429 = vmatprep.subr.mxu0 0.0
      %v2430 = vand.u32 %v2303, 4294901760
      %v2431 = vsub.f32 %v2303, %v2430
      %v2432 = vand.u32 %v2431, 4294901760
      %v2433 = vsub.f32 %v2431, %v2432
      %v2434 = vand.u32 %v2433, 4294901760
      %2435 = vmatpush1.msra.mxu0 %v2434
      %2436 = vmatprep.subr.mxu0 0.0
      %2437 = vmatpush1.msra.mxu0 0.0
      %2438 = vmatprep.subr.mxu0 0.0
      %2439 = vmatpush1.msra.mxu0 0.0
      %2440 = vmatprep.subr.mxu0 0.0
      %2441 = vmatpush1.msra.mxu0 0.0
      %2442 = vmatprep.subr.mxu0 0.0
      %2443 = vmatpush1.msra.mxu0 0.0
      %2444 = vmatprep.subr.mxu0 0.0
      %2445 = vmatpush1.msra.mxu0 0.0
      %2446 = vmatprep.subr.mxu0 0.0
      %2447 = vmatpush1.msra.mxu0 0.0
      %2448 = vmatprep.subr.mxu0 0.0
      %2449 = vmatpush1.msra.mxu0 0.0
      %2450 = vmatprep.subr.mxu0 0.0
      %2451 = vmatpush1.msra.mxu0 0.0
      %2452 = vmatprep.subr.mxu0 0.0
      %2453 = vmatpush1.msra.mxu0 0.0
      %2454 = vmatprep.subr.mxu0 0.0
      %2455 = vmatpush1.msra.mxu0 0.0
      %2456 = vmatprep.subr.mxu0 0.0
      %2457 = vmatpush1.msra.mxu0 0.0
      %2458 = vmatprep.subr.mxu0 0.0
      %2459 = vmatpush1.msra.mxu0 0.0
      %2460 = vmatprep.subr.mxu0 0.0
      %2461 = vmatpush1.msra.mxu0 0.0
      %2462 = vmatprep.subr.mxu0 0.0
      %2463 = vmatpush1.msra.mxu0 0.0
      %2464 = vmatprep.subr.mxu0 0.0
      %2465 = vmatpush1.msra.mxu0 0.0
      %2466 = vmatprep.subr.mxu0 0.0
      %2467 = vmatpush1.msra.mxu0 0.0
      %2468 = vmatprep.subr.mxu0 0.0
      %2469 = vmatpush1.msra.mxu0 0.0
      %2470 = vmatprep.subr.mxu0 0.0
      %2471 = vmatpush1.msra.mxu0 0.0
      %2472 = vmatprep.subr.mxu0 0.0
      %2473 = vmatpush1.msra.mxu0 0.0
      %2474 = vmatprep.subr.mxu0 0.0
      %2475 = vmatpush1.msra.mxu0 0.0
      %2476 = vmatprep.subr.mxu0 0.0
      %2477 = vmatpush1.msra.mxu0 0.0
      %2478 = vmatprep.subr.mxu0 0.0
      %2479 = vmatpush1.msra.mxu0 0.0
      %2480 = vmatprep.subr.mxu0 0.0
      %2481 = vmatpush1.msra.mxu0 0.0
      %2482 = vmatprep.subr.mxu0 0.0
      %2483 = vmatpush1.msra.mxu0 0.0
      %2484 = vmatprep.subr.mxu0 0.0
      %2485 = vmatpush1.msra.mxu0 0.0
      %2486 = vmatprep.subr.mxu0 0.0
      %2487 = vmatpush1.msra.mxu0 0.0
      %2488 = vmatprep.subr.mxu0 0.0
      %2489 = vmatpush1.msra.mxu0 0.0
      %2490 = vmatprep.subr.mxu0 0.0
      %2491 = vmatpush1.msra.mxu0 0.0
      %2492 = vmatprep.subr.mxu0 0.0
      %2493 = vmatpush1.msra.mxu0 0.0
      %2494 = vmatprep.subr.mxu0 0.0
      %2495 = vmatpush1.msra.mxu0 0.0
      %2496 = vmatprep.mubr.f32.mxu0 0.0
      %v2497 = vand.u32 %v2288, 4294901760
      %2498 = vmatmul.mubr.f32.gmra.mrb[0].mxu0 %v2497
      %v2499 = vpop.f32.mrb[0].mxu0
      %v2500 = vadd.f32 %v2379, %v2499
      %v2501 = vpop.f32.mrb[0].mxu0
      %2502 = vmatprep.mubr.f32.mxu0 0.0
      %v2503 = vand.u32 %v2291, 4294901760
      %2504 = vmatmul.mubr.f32.gmra.mrb[0].mxu0 %v2503
      %v2505 = vpop.f32.mrb[0].mxu0
      %v2506 = vadd.f32 %v2389, %v2505
      %v2507 = vpop.f32.mrb[0].mxu0
      %2508 = vmatprep.mubr.f32.mxu0 0.0
      %v2509 = vand.u32 %v2294, 4294901760
      %2510 = vmatmul.mubr.f32.gmra.mrb[0].mxu0 %v2509
      %v2511 = vpop.f32.mrb[0].mxu0
      %v2512 = vadd.f32 %v2399, %v2511
      %v2513 = vpop.f32.mrb[0].mxu0
      %2514 = vmatprep.mubr.f32.mxu0 0.0
      %v2515 = vand.u32 %v2297, 4294901760
      %2516 = vmatmul.mubr.f32.gmra.mrb[0].mxu0 %v2515
      %v2517 = vpop.f32.mrb[0].mxu0
      %v2518 = vadd.f32 %v2409, %v2517
      %v2519 = vpop.f32.mrb[0].mxu0
      %2520 = vmatprep.mubr.f32.mxu0 0.0
      %v2521 = vand.u32 %v2300, 4294901760
      %2522 = vmatmul.mubr.f32.gmra.mrb[0].mxu0 %v2521
      %v2523 = vpop.f32.mrb[0].mxu0
      %v2524 = vadd.f32 %v2419, %v2523
      %v2525 = vpop.f32.mrb[0].mxu0
      %2526 = vdwg.mxu0
      %2527 = vmatprep.subr.mxu0 0.0
      %v2528 = vand.u32 %v2278, 4294901760
      %v2529 = vsub.f32 %v2278, %v2528
      %2530 = vmatpush1.msra.mxu0 %v2529
      %2531 = vmatprep.subr.mxu0 0.0
      %v2532 = vand.u32 %v2303, 4294901760
      %v2533 = vsub.f32 %v2303, %v2532
      %2534 = vmatpush1.msra.mxu0 %v2533
      %2535 = vmatprep.subr.mxu0 0.0
      %2536 = vmatpush1.msra.mxu0 0.0
      %2537 = vmatprep.subr.mxu0 0.0
      %2538 = vmatpush1.msra.mxu0 0.0
      %2539 = vmatprep.subr.mxu0 0.0
      %2540 = vmatpush1.msra.mxu0 0.0
      %2541 = vmatprep.subr.mxu0 0.0
      %2542 = vmatpush1.msra.mxu0 0.0
      %2543 = vmatprep.subr.mxu0 0.0
      %2544 = vmatpush1.msra.mxu0 0.0
      %2545 = vmatprep.subr.mxu0 0.0
      %2546 = vmatpush1.msra.mxu0 0.0
      %2547 = vmatprep.subr.mxu0 0.0
      %2548 = vmatpush1.msra.mxu0 0.0
      %2549 = vmatprep.subr.mxu0 0.0
      %2550 = vmatpush1.msra.mxu0 0.0
      %2551 = vmatprep.subr.mxu0 0.0
      %2552 = vmatpush1.msra.mxu0 0.0
      %2553 = vmatprep.subr.mxu0 0.0
      %2554 = vmatpush1.msra.mxu0 0.0
      %2555 = vmatprep.subr.mxu0 0.0
      %2556 = vmatpush1.msra.mxu0 0.0
      %2557 = vmatprep.subr.mxu0 0.0
      %2558 = vmatpush1.msra.mxu0 0.0
      %2559 = vmatprep.subr.mxu0 0.0
      %2560 = vmatpush1.msra.mxu0 0.0
      %2561 = vmatprep.subr.mxu0 0.0
      %2562 = vmatpush1.msra.mxu0 0.0
      %2563 = vmatprep.subr.mxu0 0.0
      %2564 = vmatpush1.msra.mxu0 0.0
      %2565 = vmatprep.subr.mxu0 0.0
      %2566 = vmatpush1.msra.mxu0 0.0
      %2567 = vmatprep.subr.mxu0 0.0
      %2568 = vmatpush1.msra.mxu0 0.0
      %2569 = vmatprep.subr.mxu0 0.0
      %2570 = vmatpush1.msra.mxu0 0.0
      %2571 = vmatprep.subr.mxu0 0.0
      %2572 = vmatpush1.msra.mxu0 0.0
      %2573 = vmatprep.subr.mxu0 0.0
      %2574 = vmatpush1.msra.mxu0 0.0
      %2575 = vmatprep.subr.mxu0 0.0
      %2576 = vmatpush1.msra.mxu0 0.0
      %2577 = vmatprep.subr.mxu0 0.0
      %2578 = vmatpush1.msra.mxu0 0.0
      %2579 = vmatprep.subr.mxu0 0.0
      %2580 = vmatpush1.msra.mxu0 0.0
      %2581 = vmatprep.subr.mxu0 0.0
      %2582 = vmatpush1.msra.mxu0 0.0
      %2583 = vmatprep.subr.mxu0 0.0
      %2584 = vmatpush1.msra.mxu0 0.0
      %2585 = vmatprep.subr.mxu0 0.0
      %2586 = vmatpush1.msra.mxu0 0.0
      %2587 = vmatprep.subr.mxu0 0.0
      %2588 = vmatpush1.msra.mxu0 0.0
      %2589 = vmatprep.subr.mxu0 0.0
      %2590 = vmatpush1.msra.mxu0 0.0
      %2591 = vmatprep.subr.mxu0 0.0
      %2592 = vmatpush1.msra.mxu0 0.0
      %2593 = vmatprep.subr.mxu0 0.0
      %2594 = vmatpush1.msra.mxu0 0.0
      %2595 = vmatprep.mubr.f32.mxu0 0.0
      %v2596 = vand.u32 %v2288, 4294901760
      %v2597 = vsub.f32 %v2288, %v2596
      %2598 = vmatmul.mubr.f32.gmra.mrb[0].mxu0 %v2597
      %v2599 = vpop.f32.mrb[0].mxu0
      %v2600 = vadd.f32 %v2500, %v2599
      %v2601 = vpop.f32.mrb[0].mxu0
      %2602 = vmatprep.mubr.f32.mxu0 0.0
      %v2603 = vand.u32 %v2291, 4294901760
      %v2604 = vsub.f32 %v2291, %v2603
      %2605 = vmatmul.mubr.f32.gmra.mrb[0].mxu0 %v2604
      %v2606 = vpop.f32.mrb[0].mxu0
      %v2607 = vadd.f32 %v2506, %v2606
      %v2608 = vpop.f32.mrb[0].mxu0
      %2609 = vmatprep.mubr.f32.mxu0 0.0
      %v2610 = vand.u32 %v2294, 4294901760
      %v2611 = vsub.f32 %v2294, %v2610
      %2612 = vmatmul.mubr.f32.gmra.mrb[0].mxu0 %v2611
      %v2613 = vpop.f32.mrb[0].mxu0
      %v2614 = vadd.f32 %v2512, %v2613
      %v2615 = vpop.f32.mrb[0].mxu0
      %2616 = vmatprep.mubr.f32.mxu0 0.0
      %v2617 = vand.u32 %v2297, 4294901760
      %v2618 = vsub.f32 %v2297, %v2617
      %2619 = vmatmul.mubr.f32.gmra.mrb[0].mxu0 %v2618
      %v2620 = vpop.f32.mrb[0].mxu0
      %v2621 = vadd.f32 %v2518, %v2620
      %v2622 = vpop.f32.mrb[0].mxu0
      %2623 = vmatprep.mubr.f32.mxu0 0.0
      %v2624 = vand.u32 %v2300, 4294901760
      %v2625 = vsub.f32 %v2300, %v2624
      %2626 = vmatmul.mubr.f32.gmra.mrb[0].mxu0 %v2625
      %v2627 = vpop.f32.mrb[0].mxu0
      %v2628 = vadd.f32 %v2524, %v2627
      %v2629 = vpop.f32.mrb[0].mxu0
      %2630 = vdwg.mxu0
      %2631 = vmatprep.subr.mxu0 0.0
      %v2632 = vand.u32 %v2278, 4294901760
      %2633 = vmatpush1.msra.mxu0 %v2632
      %2634 = vmatprep.subr.mxu0 0.0
      %v2635 = vand.u32 %v2303, 4294901760
      %2636 = vmatpush1.msra.mxu0 %v2635
      %2637 = vmatprep.subr.mxu0 0.0
      %2638 = vmatpush1.msra.mxu0 0.0
      %2639 = vmatprep.subr.mxu0 0.0
      %2640 = vmatpush1.msra.mxu0 0.0
      %2641 = vmatprep.subr.mxu0 0.0
      %2642 = vmatpush1.msra.mxu0 0.0
      %2643 = vmatprep.subr.mxu0 0.0
      %2644 = vmatpush1.msra.mxu0 0.0
      %2645 = vmatprep.subr.mxu0 0.0
      %2646 = vmatpush1.msra.mxu0 0.0
      %2647 = vmatprep.subr.mxu0 0.0
      %2648 = vmatpush1.msra.mxu0 0.0
      %2649 = vmatprep.subr.mxu0 0.0
      %2650 = vmatpush1.msra.mxu0 0.0
      %2651 = vmatprep.subr.mxu0 0.0
      %2652 = vmatpush1.msra.mxu0 0.0
      %2653 = vmatprep.subr.mxu0 0.0
      %2654 = vmatpush1.msra.mxu0 0.0
      %2655 = vmatprep.subr.mxu0 0.0
      %2656 = vmatpush1.msra.mxu0 0.0
      %2657 = vmatprep.subr.mxu0 0.0
      %2658 = vmatpush1.msra.mxu0 0.0
      %2659 = vmatprep.subr.mxu0 0.0
      %2660 = vmatpush1.msra.mxu0 0.0
      %2661 = vmatprep.subr.mxu0 0.0
      %2662 = vmatpush1.msra.mxu0 0.0
      %2663 = vmatprep.subr.mxu0 0.0
      %2664 = vmatpush1.msra.mxu0 0.0
      %2665 = vmatprep.subr.mxu0 0.0
      %2666 = vmatpush1.msra.mxu0 0.0
      %2667 = vmatprep.subr.mxu0 0.0
      %2668 = vmatpush1.msra.mxu0 0.0
      %2669 = vmatprep.subr.mxu0 0.0
      %2670 = vmatpush1.msra.mxu0 0.0
      %2671 = vmatprep.subr.mxu0 0.0
      %2672 = vmatpush1.msra.mxu0 0.0
      %2673 = vmatprep.subr.mxu0 0.0
      %2674 = vmatpush1.msra.mxu0 0.0
      %2675 = vmatprep.subr.mxu0 0.0
      %2676 = vmatpush1.msra.mxu0 0.0
      %2677 = vmatprep.subr.mxu0 0.0
      %2678 = vmatpush1.msra.mxu0 0.0
      %2679 = vmatprep.subr.mxu0 0.0
      %2680 = vmatpush1.msra.mxu0 0.0
      %2681 = vmatprep.subr.mxu0 0.0
      %2682 = vmatpush1.msra.mxu0 0.0
      %2683 = vmatprep.subr.mxu0 0.0
      %2684 = vmatpush1.msra.mxu0 0.0
      %2685 = vmatprep.subr.mxu0 0.0
      %2686 = vmatpush1.msra.mxu0 0.0
      %2687 = vmatprep.subr.mxu0 0.0
      %2688 = vmatpush1.msra.mxu0 0.0
      %2689 = vmatprep.subr.mxu0 0.0
      %2690 = vmatpush1.msra.mxu0 0.0
      %2691 = vmatprep.subr.mxu0 0.0
      %2692 = vmatpush1.msra.mxu0 0.0
      %2693 = vmatprep.subr.mxu0 0.0
      %2694 = vmatpush1.msra.mxu0 0.0
      %2695 = vmatprep.subr.mxu0 0.0
      %2696 = vmatpush1.msra.mxu0 0.0
      %2697 = vmatprep.mubr.f32.mxu0 0.0
      %v2698 = vand.u32 %v2288, 4294901760
      %v2699 = vsub.f32 %v2288, %v2698
      %v2700 = vand.u32 %v2699, 4294901760
      %2701 = vmatmul.mubr.f32.gmra.mrb[0].mxu0 %v2700
      %v2702 = vpop.f32.mrb[0].mxu0
      %v2703 = vadd.f32 %v2600, %v2702
      %v2704 = vpop.f32.mrb[0].mxu0
      %2705 = vmatprep.mubr.f32.mxu0 0.0
      %v2706 = vand.u32 %v2291, 4294901760
      %v2707 = vsub.f32 %v2291, %v2706
      %v2708 = vand.u32 %v2707, 4294901760
      %2709 = vmatmul.mubr.f32.gmra.mrb[0].mxu0 %v2708
      %v2710 = vpop.f32.mrb[0].mxu0
      %v2711 = vadd.f32 %v2607, %v2710
      %v2712 = vpop.f32.mrb[0].mxu0
      %2713 = vmatprep.mubr.f32.mxu0 0.0
      %v2714 = vand.u32 %v2294, 4294901760
      %v2715 = vsub.f32 %v2294, %v2714
      %v2716 = vand.u32 %v2715, 4294901760
      %2717 = vmatmul.mubr.f32.gmra.mrb[0].mxu0 %v2716
      %v2718 = vpop.f32.mrb[0].mxu0
      %v2719 = vadd.f32 %v2614, %v2718
      %v2720 = vpop.f32.mrb[0].mxu0
      %2721 = vmatprep.mubr.f32.mxu0 0.0
      %v2722 = vand.u32 %v2297, 4294901760
      %v2723 = vsub.f32 %v2297, %v2722
      %v2724 = vand.u32 %v2723, 4294901760
      %2725 = vmatmul.mubr.f32.gmra.mrb[0].mxu0 %v2724
      %v2726 = vpop.f32.mrb[0].mxu0
      %v2727 = vadd.f32 %v2621, %v2726
      %v2728 = vpop.f32.mrb[0].mxu0
      %2729 = vmatprep.mubr.f32.mxu0 0.0
      %v2730 = vand.u32 %v2300, 4294901760
      %v2731 = vsub.f32 %v2300, %v2730
      %v2732 = vand.u32 %v2731, 4294901760
      %2733 = vmatmul.mubr.f32.gmra.mrb[0].mxu0 %v2732
      %v2734 = vpop.f32.mrb[0].mxu0
      %v2735 = vadd.f32 %v2628, %v2734
      %v2736 = vpop.f32.mrb[0].mxu0
      %2737 = vdwg.mxu0
      %2738 = vmatprep.subr.mxu0 0.0
      %v2739 = vand.u32 %v2278, 4294901760
      %v2740 = vsub.f32 %v2278, %v2739
      %v2741 = vand.u32 %v2740, 4294901760
      %2742 = vmatpush1.msra.mxu0 %v2741
      %2743 = vmatprep.subr.mxu0 0.0
      %v2744 = vand.u32 %v2303, 4294901760
      %v2745 = vsub.f32 %v2303, %v2744
      %v2746 = vand.u32 %v2745, 4294901760
      %2747 = vmatpush1.msra.mxu0 %v2746
      %2748 = vmatprep.subr.mxu0 0.0
      %2749 = vmatpush1.msra.mxu0 0.0
      %2750 = vmatprep.subr.mxu0 0.0
      %2751 = vmatpush1.msra.mxu0 0.0
      %2752 = vmatprep.subr.mxu0 0.0
      %2753 = vmatpush1.msra.mxu0 0.0
      %2754 = vmatprep.subr.mxu0 0.0
      %2755 = vmatpush1.msra.mxu0 0.0
      %2756 = vmatprep.subr.mxu0 0.0
      %2757 = vmatpush1.msra.mxu0 0.0
      %2758 = vmatprep.subr.mxu0 0.0
      %2759 = vmatpush1.msra.mxu0 0.0
      %2760 = vmatprep.subr.mxu0 0.0
      %2761 = vmatpush1.msra.mxu0 0.0
      %2762 = vmatprep.subr.mxu0 0.0
      %2763 = vmatpush1.msra.mxu0 0.0
      %2764 = vmatprep.subr.mxu0 0.0
      %2765 = vmatpush1.msra.mxu0 0.0
      %2766 = vmatprep.subr.mxu0 0.0
      %2767 = vmatpush1.msra.mxu0 0.0
      %2768 = vmatprep.subr.mxu0 0.0
      %2769 = vmatpush1.msra.mxu0 0.0
      %2770 = vmatprep.subr.mxu0 0.0
      %2771 = vmatpush1.msra.mxu0 0.0
      %2772 = vmatprep.subr.mxu0 0.0
      %2773 = vmatpush1.msra.mxu0 0.0
      %2774 = vmatprep.subr.mxu0 0.0
      %2775 = vmatpush1.msra.mxu0 0.0
      %2776 = vmatprep.subr.mxu0 0.0
      %2777 = vmatpush1.msra.mxu0 0.0
      %2778 = vmatprep.subr.mxu0 0.0
      %2779 = vmatpush1.msra.mxu0 0.0
      %2780 = vmatprep.subr.mxu0 0.0
      %2781 = vmatpush1.msra.mxu0 0.0
      %2782 = vmatprep.subr.mxu0 0.0
      %2783 = vmatpush1.msra.mxu0 0.0
      %2784 = vmatprep.subr.mxu0 0.0
      %2785 = vmatpush1.msra.mxu0 0.0
      %2786 = vmatprep.subr.mxu0 0.0
      %2787 = vmatpush1.msra.mxu0 0.0
      %2788 = vmatprep.subr.mxu0 0.0
      %2789 = vmatpush1.msra.mxu0 0.0
      %2790 = vmatprep.subr.mxu0 0.0
      %2791 = vmatpush1.msra.mxu0 0.0
      %2792 = vmatprep.subr.mxu0 0.0
      %2793 = vmatpush1.msra.mxu0 0.0
      %2794 = vmatprep.subr.mxu0 0.0
      %2795 = vmatpush1.msra.mxu0 0.0
      %2796 = vmatprep.subr.mxu0 0.0
      %2797 = vmatpush1.msra.mxu0 0.0
      %2798 = vmatprep.subr.mxu0 0.0
      %2799 = vmatpush1.msra.mxu0 0.0
      %2800 = vmatprep.subr.mxu0 0.0
      %2801 = vmatpush1.msra.mxu0 0.0
      %2802 = vmatprep.subr.mxu0 0.0
      %2803 = vmatpush1.msra.mxu0 0.0
      %2804 = vmatprep.subr.mxu0 0.0
      %2805 = vmatpush1.msra.mxu0 0.0
      %2806 = vmatprep.subr.mxu0 0.0
      %2807 = vmatpush1.msra.mxu0 0.0
      %2808 = vmatprep.mubr.f32.mxu0 0.0
      %v2809 = vand.u32 %v2288, 4294901760
      %2810 = vmatmul.mubr.f32.gmra.mrb[0].mxu0 %v2809
      %v2811 = vpop.f32.mrb[0].mxu0
      %v2812 = vadd.f32 %v2703, %v2811
      %v2813 = vpop.f32.mrb[0].mxu0
      %2814 = vmatprep.mubr.f32.mxu0 0.0
      %v2815 = vand.u32 %v2291, 4294901760
      %2816 = vmatmul.mubr.f32.gmra.mrb[0].mxu0 %v2815
      %v2817 = vpop.f32.mrb[0].mxu0
      %v2818 = vadd.f32 %v2711, %v2817
      %v2819 = vpop.f32.mrb[0].mxu0
      %2820 = vmatprep.mubr.f32.mxu0 0.0
      %v2821 = vand.u32 %v2294, 4294901760
      %2822 = vmatmul.mubr.f32.gmra.mrb[0].mxu0 %v2821
      %v2823 = vpop.f32.mrb[0].mxu0
      %v2824 = vadd.f32 %v2719, %v2823
      %v2825 = vpop.f32.mrb[0].mxu0
      %2826 = vmatprep.mubr.f32.mxu0 0.0
      %v2827 = vand.u32 %v2297, 4294901760
      %2828 = vmatmul.mubr.f32.gmra.mrb[0].mxu0 %v2827
      %v2829 = vpop.f32.mrb[0].mxu0
      %v2830 = vadd.f32 %v2727, %v2829
      %v2831 = vpop.f32.mrb[0].mxu0
      %2832 = vmatprep.mubr.f32.mxu0 0.0
      %v2833 = vand.u32 %v2300, 4294901760
      %2834 = vmatmul.mubr.f32.gmra.mrb[0].mxu0 %v2833
      %v2835 = vpop.f32.mrb[0].mxu0
      %v2836 = vadd.f32 %v2735, %v2835
      %v2837 = vpop.f32.mrb[0].mxu0
      %2838 = vdwg.mxu0
      %2839 = vmatprep.subr.mxu0 0.0
      %v2840 = vand.u32 %v2278, 4294901760
      %2841 = vmatpush1.msra.mxu0 %v2840
      %2842 = vmatprep.subr.mxu0 0.0
      %v2843 = vand.u32 %v2303, 4294901760
      %2844 = vmatpush1.msra.mxu0 %v2843
      %2845 = vmatprep.subr.mxu0 0.0
      %2846 = vmatpush1.msra.mxu0 0.0
      %2847 = vmatprep.subr.mxu0 0.0
      %2848 = vmatpush1.msra.mxu0 0.0
      %2849 = vmatprep.subr.mxu0 0.0
      %2850 = vmatpush1.msra.mxu0 0.0
      %2851 = vmatprep.subr.mxu0 0.0
      %2852 = vmatpush1.msra.mxu0 0.0
      %2853 = vmatprep.subr.mxu0 0.0
      %2854 = vmatpush1.msra.mxu0 0.0
      %2855 = vmatprep.subr.mxu0 0.0
      %2856 = vmatpush1.msra.mxu0 0.0
      %2857 = vmatprep.subr.mxu0 0.0
      %2858 = vmatpush1.msra.mxu0 0.0
      %2859 = vmatprep.subr.mxu0 0.0
      %2860 = vmatpush1.msra.mxu0 0.0
      %2861 = vmatprep.subr.mxu0 0.0
      %2862 = vmatpush1.msra.mxu0 0.0
      %2863 = vmatprep.subr.mxu0 0.0
      %2864 = vmatpush1.msra.mxu0 0.0
      %2865 = vmatprep.subr.mxu0 0.0
      %2866 = vmatpush1.msra.mxu0 0.0
      %2867 = vmatprep.subr.mxu0 0.0
      %2868 = vmatpush1.msra.mxu0 0.0
      %2869 = vmatprep.subr.mxu0 0.0
      %2870 = vmatpush1.msra.mxu0 0.0
      %2871 = vmatprep.subr.mxu0 0.0
      %2872 = vmatpush1.msra.mxu0 0.0
      %2873 = vmatprep.subr.mxu0 0.0
      %2874 = vmatpush1.msra.mxu0 0.0
      %2875 = vmatprep.subr.mxu0 0.0
      %2876 = vmatpush1.msra.mxu0 0.0
      %2877 = vmatprep.subr.mxu0 0.0
      %2878 = vmatpush1.msra.mxu0 0.0
      %2879 = vmatprep.subr.mxu0 0.0
      %2880 = vmatpush1.msra.mxu0 0.0
      %2881 = vmatprep.subr.mxu0 0.0
      %2882 = vmatpush1.msra.mxu0 0.0
      %2883 = vmatprep.subr.mxu0 0.0
      %2884 = vmatpush1.msra.mxu0 0.0
      %2885 = vmatprep.subr.mxu0 0.0
      %2886 = vmatpush1.msra.mxu0 0.0
      %2887 = vmatprep.subr.mxu0 0.0
      %2888 = vmatpush1.msra.mxu0 0.0
      %2889 = vmatprep.subr.mxu0 0.0
      %2890 = vmatpush1.msra.mxu0 0.0
      %2891 = vmatprep.subr.mxu0 0.0
      %2892 = vmatpush1.msra.mxu0 0.0
      %2893 = vmatprep.subr.mxu0 0.0
      %2894 = vmatpush1.msra.mxu0 0.0
      %2895 = vmatprep.subr.mxu0 0.0
      %2896 = vmatpush1.msra.mxu0 0.0
      %2897 = vmatprep.subr.mxu0 0.0
      %2898 = vmatpush1.msra.mxu0 0.0
      %2899 = vmatprep.subr.mxu0 0.0
      %2900 = vmatpush1.msra.mxu0 0.0
      %2901 = vmatprep.subr.mxu0 0.0
      %2902 = vmatpush1.msra.mxu0 0.0
      %2903 = vmatprep.subr.mxu0 0.0
      %2904 = vmatpush1.msra.mxu0 0.0
      %2905 = vmatprep.mubr.f32.mxu0 0.0
      %v2906 = vand.u32 %v2288, 4294901760
      %2907 = vmatmul.mubr.f32.gmra.mrb[0].mxu0 %v2906
      %v2908 = vpop.f32.mrb[0].mxu0
      %v2909 = vadd.f32 %v2812, %v2908
      %v2910 = vpop.f32.mrb[0].mxu0
      %2911 = vmatprep.mubr.f32.mxu0 0.0
      %v2912 = vand.u32 %v2291, 4294901760
      %2913 = vmatmul.mubr.f32.gmra.mrb[0].mxu0 %v2912
      %v2914 = vpop.f32.mrb[0].mxu0
      %v2915 = vadd.f32 %v2818, %v2914
      %v2916 = vpop.f32.mrb[0].mxu0
      %2917 = vmatprep.mubr.f32.mxu0 0.0
      %v2918 = vand.u32 %v2294, 4294901760
      %2919 = vmatmul.mubr.f32.gmra.mrb[0].mxu0 %v2918
      %v2920 = vpop.f32.mrb[0].mxu0
      %v2921 = vadd.f32 %v2824, %v2920
      %v2922 = vpop.f32.mrb[0].mxu0
      %2923 = vmatprep.mubr.f32.mxu0 0.0
      %v2924 = vand.u32 %v2297, 4294901760
      %2925 = vmatmul.mubr.f32.gmra.mrb[0].mxu0 %v2924
      %v2926 = vpop.f32.mrb[0].mxu0
      %v2927 = vadd.f32 %v2830, %v2926
      %v2928 = vpop.f32.mrb[0].mxu0
      %2929 = vmatprep.mubr.f32.mxu0 0.0
      %v2930 = vand.u32 %v2300, 4294901760
      %2931 = vmatmul.mubr.f32.gmra.mrb[0].mxu0 %v2930
      %v2932 = vpop.f32.mrb[0].mxu0
      %v2933 = vadd.f32 %v2836, %v2932
      %v2934 = vpop.f32.mrb[0].mxu0
      %2935 = vdwg.mxu0
      %v2936 = vmax.f32 %v2909, 0.0
      %v2937 = vmax.f32 %v2915, 0.0
      %v2938 = vmax.f32 %v2921, 0.0
      %v2939 = vmax.f32 %v2927, 0.0
      %v2940 = vmax.f32 %v2933, 0.0
      %v2941 = vld [vmem:[%s9] sm:$0xff]
      %v2942 = vld [vmem:[%s9 + $0x8] sm:$0xff]
      %v2943 = vld [vmem:[%s9 + $0x10] sm:$0xff]
      %v2944 = vld [vmem:[%s9 + $0x18] sm:$0xff]
      %v2945 = vld [vmem:[%s10] sm:$0x1]
      %v2947 = vlaneseq
      %v2948 = vshrl.u32 %v2947, 7
      %v2949 = vsub.s32 0, %v2948
      %v2950 = vrot.slane %v2945, %v2949
      %vm2952 = vcmask 261120
      %v2954 = vsel %vm2952, %v2936, 0
      %v2957 = vsel %vm2952, %v2937, 0
      %v2960 = vsel %vm2952, %v2938, 0
      %v2963 = vsel %vm2952, %v2939, 0
      %v2966 = vsel %vm2952, %v2940, 0
      %2968 = vmatprep.subr.mxu0 0.0
      %v2969 = vand.u32 %v2941, 4294901760
      %2970 = vmatpush1.msra.mxu0 %v2969
      %2971 = vmatprep.subr.mxu0 0.0
      %v2972 = vand.u32 %v2942, 4294901760
      %2973 = vmatpush1.msra.mxu0 %v2972
      %2974 = vmatprep.subr.mxu0 0.0
      %v2975 = vand.u32 %v2943, 4294901760
      %2976 = vmatpush1.msra.mxu0 %v2975
      %2977 = vmatprep.subr.mxu0 0.0
      %v2978 = vand.u32 %v2944, 4294901760
      %2979 = vmatpush1.msra.mxu0 %v2978
      %2980 = vmatprep.subr.mxu0 0.0
      %2981 = vmatpush1.msra.mxu0 0.0
      %2982 = vmatprep.subr.mxu0 0.0
      %2983 = vmatpush1.msra.mxu0 0.0
      %2984 = vmatprep.subr.mxu0 0.0
      %2985 = vmatpush1.msra.mxu0 0.0
      %2986 = vmatprep.subr.mxu0 0.0
      %2987 = vmatpush1.msra.mxu0 0.0
      %2988 = vmatprep.subr.mxu0 0.0
      %2989 = vmatpush1.msra.mxu0 0.0
      %2990 = vmatprep.subr.mxu0 0.0
      %2991 = vmatpush1.msra.mxu0 0.0
      %2992 = vmatprep.subr.mxu0 0.0
      %2993 = vmatpush1.msra.mxu0 0.0
      %2994 = vmatprep.subr.mxu0 0.0
      %2995 = vmatpush1.msra.mxu0 0.0
      %2996 = vmatprep.subr.mxu0 0.0
      %2997 = vmatpush1.msra.mxu0 0.0
      %2998 = vmatprep.subr.mxu0 0.0
      %2999 = vmatpush1.msra.mxu0 0.0
      %3000 = vmatprep.subr.mxu0 0.0
      %3001 = vmatpush1.msra.mxu0 0.0
      %3002 = vmatprep.subr.mxu0 0.0
      %3003 = vmatpush1.msra.mxu0 0.0
      %3004 = vmatprep.subr.mxu0 0.0
      %3005 = vmatpush1.msra.mxu0 0.0
      %3006 = vmatprep.subr.mxu0 0.0
      %3007 = vmatpush1.msra.mxu0 0.0
      %3008 = vmatprep.subr.mxu0 0.0
      %3009 = vmatpush1.msra.mxu0 0.0
      %3010 = vmatprep.subr.mxu0 0.0
      %3011 = vmatpush1.msra.mxu0 0.0
      %3012 = vmatprep.subr.mxu0 0.0
      %3013 = vmatpush1.msra.mxu0 0.0
      %3014 = vmatprep.subr.mxu0 0.0
      %3015 = vmatpush1.msra.mxu0 0.0
      %3016 = vmatprep.subr.mxu0 0.0
      %3017 = vmatpush1.msra.mxu0 0.0
      %3018 = vmatprep.subr.mxu0 0.0
      %3019 = vmatpush1.msra.mxu0 0.0
      %3020 = vmatprep.subr.mxu0 0.0
      %3021 = vmatpush1.msra.mxu0 0.0
      %3022 = vmatprep.subr.mxu0 0.0
      %3023 = vmatpush1.msra.mxu0 0.0
      %3024 = vmatprep.subr.mxu0 0.0
      %3025 = vmatpush1.msra.mxu0 0.0
      %3026 = vmatprep.subr.mxu0 0.0
      %3027 = vmatpush1.msra.mxu0 0.0
      %3028 = vmatprep.subr.mxu0 0.0
      %3029 = vmatpush1.msra.mxu0 0.0
      %3030 = vmatprep.subr.mxu0 0.0
      %3031 = vmatpush1.msra.mxu0 0.0
      %3032 = vmatprep.subr.mxu0 0.0
      %3033 = vmatpush1.msra.mxu0 0.0
      %3034 = vmatprep.subr.mxu0 0.0
      %3035 = vmatpush1.msra.mxu0 0.0
      %3036 = vmatprep.mubr.f32.mxu0 0.0
      %v3037 = vand.u32 %v2954, 4294901760
      %v3038 = vsub.f32 %v2954, %v3037
      %v3039 = vand.u32 %v3038, 4294901760
      %v3040 = vsub.f32 %v3038, %v3039
      %v3041 = vand.u32 %v3040, 4294901760
      %3042 = vmatmul.mubr.f32.gmra.mrb[0].mxu0 %v3041
      %v3043 = vpop.f32.mrb[0].mxu0
      %v3044 = vadd.f32 %v2950, %v3043
      %v3045 = vpop.f32.mrb[0].mxu0
      %3046 = vmatprep.mubr.f32.mxu0 0.0
      %v3047 = vand.u32 %v2957, 4294901760
      %v3048 = vsub.f32 %v2957, %v3047
      %v3049 = vand.u32 %v3048, 4294901760
      %v3050 = vsub.f32 %v3048, %v3049
      %v3051 = vand.u32 %v3050, 4294901760
      %3052 = vmatmul.mubr.f32.gmra.mrb[0].mxu0 %v3051
      %v3053 = vpop.f32.mrb[0].mxu0
      %v3054 = vadd.f32 %v2950, %v3053
      %v3055 = vpop.f32.mrb[0].mxu0
      %3056 = vmatprep.mubr.f32.mxu0 0.0
      %v3057 = vand.u32 %v2960, 4294901760
      %v3058 = vsub.f32 %v2960, %v3057
      %v3059 = vand.u32 %v3058, 4294901760
      %v3060 = vsub.f32 %v3058, %v3059
      %v3061 = vand.u32 %v3060, 4294901760
      %3062 = vmatmul.mubr.f32.gmra.mrb[0].mxu0 %v3061
      %v3063 = vpop.f32.mrb[0].mxu0
      %v3064 = vadd.f32 %v2950, %v3063
      %v3065 = vpop.f32.mrb[0].mxu0
      %3066 = vmatprep.mubr.f32.mxu0 0.0
      %v3067 = vand.u32 %v2963, 4294901760
      %v3068 = vsub.f32 %v2963, %v3067
      %v3069 = vand.u32 %v3068, 4294901760
      %v3070 = vsub.f32 %v3068, %v3069
      %v3071 = vand.u32 %v3070, 4294901760
      %3072 = vmatmul.mubr.f32.gmra.mrb[0].mxu0 %v3071
      %v3073 = vpop.f32.mrb[0].mxu0
      %v3074 = vadd.f32 %v2950, %v3073
      %v3075 = vpop.f32.mrb[0].mxu0
      %3076 = vmatprep.mubr.f32.mxu0 0.0
      %v3077 = vand.u32 %v2966, 4294901760
      %v3078 = vsub.f32 %v2966, %v3077
      %v3079 = vand.u32 %v3078, 4294901760
      %v3080 = vsub.f32 %v3078, %v3079
      %v3081 = vand.u32 %v3080, 4294901760
      %3082 = vmatmul.mubr.f32.gmra.mrb[0].mxu0 %v3081
      %v3083 = vpop.f32.mrb[0].mxu0
      %v3084 = vadd.f32 %v2950, %v3083
      %v3085 = vpop.f32.mrb[0].mxu0
      %3086 = vdwg.mxu0
      %3087 = vmatprep.subr.mxu0 0.0
      %v3088 = vand.u32 %v2941, 4294901760
      %v3089 = vsub.f32 %v2941, %v3088
      %v3090 = vand.u32 %v3089, 4294901760
      %v3091 = vsub.f32 %v3089, %v3090
      %v3092 = vand.u32 %v3091, 4294901760
      %3093 = vmatpush1.msra.mxu0 %v3092
      %3094 = vmatprep.subr.mxu0 0.0
      %v3095 = vand.u32 %v2942, 4294901760
      %v3096 = vsub.f32 %v2942, %v3095
      %v3097 = vand.u32 %v3096, 4294901760
      %v3098 = vsub.f32 %v3096, %v3097
      %v3099 = vand.u32 %v3098, 4294901760
      %3100 = vmatpush1.msra.mxu0 %v3099
      %3101 = vmatprep.subr.mxu0 0.0
      %v3102 = vand.u32 %v2943, 4294901760
      %v3103 = vsub.f32 %v2943, %v3102
      %v3104 = vand.u32 %v3103, 4294901760
      %v3105 = vsub.f32 %v3103, %v3104
      %v3106 = vand.u32 %v3105, 4294901760
      %3107 = vmatpush1.msra.mxu0 %v3106
      %3108 = vmatprep.subr.mxu0 0.0
      %v3109 = vand.u32 %v2944, 4294901760
      %v3110 = vsub.f32 %v2944, %v3109
      %v3111 = vand.u32 %v3110, 4294901760
      %v3112 = vsub.f32 %v3110, %v3111
      %v3113 = vand.u32 %v3112, 4294901760
      %3114 = vmatpush1.msra.mxu0 %v3113
      %3115 = vmatprep.subr.mxu0 0.0
      %3116 = vmatpush1.msra.mxu0 0.0
      %3117 = vmatprep.subr.mxu0 0.0
      %3118 = vmatpush1.msra.mxu0 0.0
      %3119 = vmatprep.subr.mxu0 0.0
      %3120 = vmatpush1.msra.mxu0 0.0
      %3121 = vmatprep.subr.mxu0 0.0
      %3122 = vmatpush1.msra.mxu0 0.0
      %3123 = vmatprep.subr.mxu0 0.0
      %3124 = vmatpush1.msra.mxu0 0.0
      %3125 = vmatprep.subr.mxu0 0.0
      %3126 = vmatpush1.msra.mxu0 0.0
      %3127 = vmatprep.subr.mxu0 0.0
      %3128 = vmatpush1.msra.mxu0 0.0
      %3129 = vmatprep.subr.mxu0 0.0
      %3130 = vmatpush1.msra.mxu0 0.0
      %3131 = vmatprep.subr.mxu0 0.0
      %3132 = vmatpush1.msra.mxu0 0.0
      %3133 = vmatprep.subr.mxu0 0.0
      %3134 = vmatpush1.msra.mxu0 0.0
      %3135 = vmatprep.subr.mxu0 0.0
      %3136 = vmatpush1.msra.mxu0 0.0
      %3137 = vmatprep.subr.mxu0 0.0
      %3138 = vmatpush1.msra.mxu0 0.0
      %3139 = vmatprep.subr.mxu0 0.0
      %3140 = vmatpush1.msra.mxu0 0.0
      %3141 = vmatprep.subr.mxu0 0.0
      %3142 = vmatpush1.msra.mxu0 0.0
      %3143 = vmatprep.subr.mxu0 0.0
      %3144 = vmatpush1.msra.mxu0 0.0
      %3145 = vmatprep.subr.mxu0 0.0
      %3146 = vmatpush1.msra.mxu0 0.0
      %3147 = vmatprep.subr.mxu0 0.0
      %3148 = vmatpush1.msra.mxu0 0.0
      %3149 = vmatprep.subr.mxu0 0.0
      %3150 = vmatpush1.msra.mxu0 0.0
      %3151 = vmatprep.subr.mxu0 0.0
      %3152 = vmatpush1.msra.mxu0 0.0
      %3153 = vmatprep.subr.mxu0 0.0
      %3154 = vmatpush1.msra.mxu0 0.0
      %3155 = vmatprep.subr.mxu0 0.0
      %3156 = vmatpush1.msra.mxu0 0.0
      %3157 = vmatprep.subr.mxu0 0.0
      %3158 = vmatpush1.msra.mxu0 0.0
      %3159 = vmatprep.subr.mxu0 0.0
      %3160 = vmatpush1.msra.mxu0 0.0
      %3161 = vmatprep.subr.mxu0 0.0
      %3162 = vmatpush1.msra.mxu0 0.0
      %3163 = vmatprep.subr.mxu0 0.0
      %3164 = vmatpush1.msra.mxu0 0.0
      %3165 = vmatprep.subr.mxu0 0.0
      %3166 = vmatpush1.msra.mxu0 0.0
      %3167 = vmatprep.subr.mxu0 0.0
      %3168 = vmatpush1.msra.mxu0 0.0
      %3169 = vmatprep.subr.mxu0 0.0
      %3170 = vmatpush1.msra.mxu0 0.0
      %3171 = vmatprep.mubr.f32.mxu0 0.0
      %v3172 = vand.u32 %v2954, 4294901760
      %3173 = vmatmul.mubr.f32.gmra.mrb[0].mxu0 %v3172
      %v3174 = vpop.f32.mrb[0].mxu0
      %v3175 = vadd.f32 %v3044, %v3174
      %v3176 = vpop.f32.mrb[0].mxu0
      %3177 = vmatprep.mubr.f32.mxu0 0.0
      %v3178 = vand.u32 %v2957, 4294901760
      %3179 = vmatmul.mubr.f32.gmra.mrb[0].mxu0 %v3178
      %v3180 = vpop.f32.mrb[0].mxu0
      %v3181 = vadd.f32 %v3054, %v3180
      %v3182 = vpop.f32.mrb[0].mxu0
      %3183 = vmatprep.mubr.f32.mxu0 0.0
      %v3184 = vand.u32 %v2960, 4294901760
      %3185 = vmatmul.mubr.f32.gmra.mrb[0].mxu0 %v3184
      %v3186 = vpop.f32.mrb[0].mxu0
      %v3187 = vadd.f32 %v3064, %v3186
      %v3188 = vpop.f32.mrb[0].mxu0
      %3189 = vmatprep.mubr.f32.mxu0 0.0
      %v3190 = vand.u32 %v2963, 4294901760
      %3191 = vmatmul.mubr.f32.gmra.mrb[0].mxu0 %v3190
      %v3192 = vpop.f32.mrb[0].mxu0
      %v3193 = vadd.f32 %v3074, %v3192
      %v3194 = vpop.f32.mrb[0].mxu0
      %3195 = vmatprep.mubr.f32.mxu0 0.0
      %v3196 = vand.u32 %v2966, 4294901760
      %3197 = vmatmul.mubr.f32.gmra.mrb[0].mxu0 %v3196
      %v3198 = vpop.f32.mrb[0].mxu0
      %v3199 = vadd.f32 %v3084, %v3198
      %v3200 = vpop.f32.mrb[0].mxu0
      %3201 = vdwg.mxu0
      %3202 = vmatprep.subr.mxu0 0.0
      %v3203 = vand.u32 %v2941, 4294901760
      %v3204 = vsub.f32 %v2941, %v3203
      %3205 = vmatpush1.msra.mxu0 %v3204
      %3206 = vmatprep.subr.mxu0 0.0
      %v3207 = vand.u32 %v2942, 4294901760
      %v3208 = vsub.f32 %v2942, %v3207
      %3209 = vmatpush1.msra.mxu0 %v3208
      %3210 = vmatprep.subr.mxu0 0.0
      %v3211 = vand.u32 %v2943, 4294901760
      %v3212 = vsub.f32 %v2943, %v3211
      %3213 = vmatpush1.msra.mxu0 %v3212
      %3214 = vmatprep.subr.mxu0 0.0
      %v3215 = vand.u32 %v2944, 4294901760
      %v3216 = vsub.f32 %v2944, %v3215
      %3217 = vmatpush1.msra.mxu0 %v3216
      %3218 = vmatprep.subr.mxu0 0.0
      %3219 = vmatpush1.msra.mxu0 0.0
      %3220 = vmatprep.subr.mxu0 0.0
      %3221 = vmatpush1.msra.mxu0 0.0
      %3222 = vmatprep.subr.mxu0 0.0
      %3223 = vmatpush1.msra.mxu0 0.0
      %3224 = vmatprep.subr.mxu0 0.0
      %3225 = vmatpush1.msra.mxu0 0.0
      %3226 = vmatprep.subr.mxu0 0.0
      %3227 = vmatpush1.msra.mxu0 0.0
      %3228 = vmatprep.subr.mxu0 0.0
      %3229 = vmatpush1.msra.mxu0 0.0
      %3230 = vmatprep.subr.mxu0 0.0
      %3231 = vmatpush1.msra.mxu0 0.0
      %3232 = vmatprep.subr.mxu0 0.0
      %3233 = vmatpush1.msra.mxu0 0.0
      %3234 = vmatprep.subr.mxu0 0.0
      %3235 = vmatpush1.msra.mxu0 0.0
      %3236 = vmatprep.subr.mxu0 0.0
      %3237 = vmatpush1.msra.mxu0 0.0
      %3238 = vmatprep.subr.mxu0 0.0
      %3239 = vmatpush1.msra.mxu0 0.0
      %3240 = vmatprep.subr.mxu0 0.0
      %3241 = vmatpush1.msra.mxu0 0.0
      %3242 = vmatprep.subr.mxu0 0.0
      %3243 = vmatpush1.msra.mxu0 0.0
      %3244 = vmatprep.subr.mxu0 0.0
      %3245 = vmatpush1.msra.mxu0 0.0
      %3246 = vmatprep.subr.mxu0 0.0
      %3247 = vmatpush1.msra.mxu0 0.0
      %3248 = vmatprep.subr.mxu0 0.0
      %3249 = vmatpush1.msra.mxu0 0.0
      %3250 = vmatprep.subr.mxu0 0.0
      %3251 = vmatpush1.msra.mxu0 0.0
      %3252 = vmatprep.subr.mxu0 0.0
      %3253 = vmatpush1.msra.mxu0 0.0
      %3254 = vmatprep.subr.mxu0 0.0
      %3255 = vmatpush1.msra.mxu0 0.0
      %3256 = vmatprep.subr.mxu0 0.0
      %3257 = vmatpush1.msra.mxu0 0.0
      %3258 = vmatprep.subr.mxu0 0.0
      %3259 = vmatpush1.msra.mxu0 0.0
      %3260 = vmatprep.subr.mxu0 0.0
      %3261 = vmatpush1.msra.mxu0 0.0
      %3262 = vmatprep.subr.mxu0 0.0
      %3263 = vmatpush1.msra.mxu0 0.0
      %3264 = vmatprep.subr.mxu0 0.0
      %3265 = vmatpush1.msra.mxu0 0.0
      %3266 = vmatprep.subr.mxu0 0.0
      %3267 = vmatpush1.msra.mxu0 0.0
      %3268 = vmatprep.subr.mxu0 0.0
      %3269 = vmatpush1.msra.mxu0 0.0
      %3270 = vmatprep.subr.mxu0 0.0
      %3271 = vmatpush1.msra.mxu0 0.0
      %3272 = vmatprep.subr.mxu0 0.0
      %3273 = vmatpush1.msra.mxu0 0.0
      %3274 = vmatprep.mubr.f32.mxu0 0.0
      %v3275 = vand.u32 %v2954, 4294901760
      %v3276 = vsub.f32 %v2954, %v3275
      %3277 = vmatmul.mubr.f32.gmra.mrb[0].mxu0 %v3276
      %v3278 = vpop.f32.mrb[0].mxu0
      %v3279 = vadd.f32 %v3175, %v3278
      %v3280 = vpop.f32.mrb[0].mxu0
      %3281 = vmatprep.mubr.f32.mxu0 0.0
      %v3282 = vand.u32 %v2957, 4294901760
      %v3283 = vsub.f32 %v2957, %v3282
      %3284 = vmatmul.mubr.f32.gmra.mrb[0].mxu0 %v3283
      %v3285 = vpop.f32.mrb[0].mxu0
      %v3286 = vadd.f32 %v3181, %v3285
      %v3287 = vpop.f32.mrb[0].mxu0
      %3288 = vmatprep.mubr.f32.mxu0 0.0
      %v3289 = vand.u32 %v2960, 4294901760
      %v3290 = vsub.f32 %v2960, %v3289
      %3291 = vmatmul.mubr.f32.gmra.mrb[0].mxu0 %v3290
      %v3292 = vpop.f32.mrb[0].mxu0
      %v3293 = vadd.f32 %v3187, %v3292
      %v3294 = vpop.f32.mrb[0].mxu0
      %3295 = vmatprep.mubr.f32.mxu0 0.0
      %v3296 = vand.u32 %v2963, 4294901760
      %v3297 = vsub.f32 %v2963, %v3296
      %3298 = vmatmul.mubr.f32.gmra.mrb[0].mxu0 %v3297
      %v3299 = vpop.f32.mrb[0].mxu0
      %v3300 = vadd.f32 %v3193, %v3299
      %v3301 = vpop.f32.mrb[0].mxu0
      %3302 = vmatprep.mubr.f32.mxu0 0.0
      %v3303 = vand.u32 %v2966, 4294901760
      %v3304 = vsub.f32 %v2966, %v3303
      %3305 = vmatmul.mubr.f32.gmra.mrb[0].mxu0 %v3304
      %v3306 = vpop.f32.mrb[0].mxu0
      %v3307 = vadd.f32 %v3199, %v3306
      %v3308 = vpop.f32.mrb[0].mxu0
      %3309 = vdwg.mxu0
      %3310 = vmatprep.subr.mxu0 0.0
      %v3311 = vand.u32 %v2941, 4294901760
      %3312 = vmatpush1.msra.mxu0 %v3311
      %3313 = vmatprep.subr.mxu0 0.0
      %v3314 = vand.u32 %v2942, 4294901760
      %3315 = vmatpush1.msra.mxu0 %v3314
      %3316 = vmatprep.subr.mxu0 0.0
      %v3317 = vand.u32 %v2943, 4294901760
      %3318 = vmatpush1.msra.mxu0 %v3317
      %3319 = vmatprep.subr.mxu0 0.0
      %v3320 = vand.u32 %v2944, 4294901760
      %3321 = vmatpush1.msra.mxu0 %v3320
      %3322 = vmatprep.subr.mxu0 0.0
      %3323 = vmatpush1.msra.mxu0 0.0
      %3324 = vmatprep.subr.mxu0 0.0
      %3325 = vmatpush1.msra.mxu0 0.0
      %3326 = vmatprep.subr.mxu0 0.0
      %3327 = vmatpush1.msra.mxu0 0.0
      %3328 = vmatprep.subr.mxu0 0.0
      %3329 = vmatpush1.msra.mxu0 0.0
      %3330 = vmatprep.subr.mxu0 0.0
      %3331 = vmatpush1.msra.mxu0 0.0
      %3332 = vmatprep.subr.mxu0 0.0
      %3333 = vmatpush1.msra.mxu0 0.0
      %3334 = vmatprep.subr.mxu0 0.0
      %3335 = vmatpush1.msra.mxu0 0.0
      %3336 = vmatprep.subr.mxu0 0.0
      %3337 = vmatpush1.msra.mxu0 0.0
      %3338 = vmatprep.subr.mxu0 0.0
      %3339 = vmatpush1.msra.mxu0 0.0
      %3340 = vmatprep.subr.mxu0 0.0
      %3341 = vmatpush1.msra.mxu0 0.0
      %3342 = vmatprep.subr.mxu0 0.0
      %3343 = vmatpush1.msra.mxu0 0.0
      %3344 = vmatprep.subr.mxu0 0.0
      %3345 = vmatpush1.msra.mxu0 0.0
      %3346 = vmatprep.subr.mxu0 0.0
      %3347 = vmatpush1.msra.mxu0 0.0
      %3348 = vmatprep.subr.mxu0 0.0
      %3349 = vmatpush1.msra.mxu0 0.0
      %3350 = vmatprep.subr.mxu0 0.0
      %3351 = vmatpush1.msra.mxu0 0.0
      %3352 = vmatprep.subr.mxu0 0.0
      %3353 = vmatpush1.msra.mxu0 0.0
      %3354 = vmatprep.subr.mxu0 0.0
      %3355 = vmatpush1.msra.mxu0 0.0
      %3356 = vmatprep.subr.mxu0 0.0
      %3357 = vmatpush1.msra.mxu0 0.0
      %3358 = vmatprep.subr.mxu0 0.0
      %3359 = vmatpush1.msra.mxu0 0.0
      %3360 = vmatprep.subr.mxu0 0.0
      %3361 = vmatpush1.msra.mxu0 0.0
      %3362 = vmatprep.subr.mxu0 0.0
      %3363 = vmatpush1.msra.mxu0 0.0
      %3364 = vmatprep.subr.mxu0 0.0
      %3365 = vmatpush1.msra.mxu0 0.0
      %3366 = vmatprep.subr.mxu0 0.0
      %3367 = vmatpush1.msra.mxu0 0.0
      %3368 = vmatprep.subr.mxu0 0.0
      %3369 = vmatpush1.msra.mxu0 0.0
      %3370 = vmatprep.subr.mxu0 0.0
      %3371 = vmatpush1.msra.mxu0 0.0
      %3372 = vmatprep.subr.mxu0 0.0
      %3373 = vmatpush1.msra.mxu0 0.0
      %3374 = vmatprep.subr.mxu0 0.0
      %3375 = vmatpush1.msra.mxu0 0.0
      %3376 = vmatprep.subr.mxu0 0.0
      %3377 = vmatpush1.msra.mxu0 0.0
      %3378 = vmatprep.mubr.f32.mxu0 0.0
      %v3379 = vand.u32 %v2954, 4294901760
      %v3380 = vsub.f32 %v2954, %v3379
      %v3381 = vand.u32 %v3380, 4294901760
      %3382 = vmatmul.mubr.f32.gmra.mrb[0].mxu0 %v3381
      %v3383 = vpop.f32.mrb[0].mxu0
      %v3384 = vadd.f32 %v3279, %v3383
      %v3385 = vpop.f32.mrb[0].mxu0
      %3386 = vmatprep.mubr.f32.mxu0 0.0
      %v3387 = vand.u32 %v2957, 4294901760
      %v3388 = vsub.f32 %v2957, %v3387
      %v3389 = vand.u32 %v3388, 4294901760
      %3390 = vmatmul.mubr.f32.gmra.mrb[0].mxu0 %v3389
      %v3391 = vpop.f32.mrb[0].mxu0
      %v3392 = vadd.f32 %v3286, %v3391
      %v3393 = vpop.f32.mrb[0].mxu0
      %3394 = vmatprep.mubr.f32.mxu0 0.0
      %v3395 = vand.u32 %v2960, 4294901760
      %v3396 = vsub.f32 %v2960, %v3395
      %v3397 = vand.u32 %v3396, 4294901760
      %3398 = vmatmul.mubr.f32.gmra.mrb[0].mxu0 %v3397
      %v3399 = vpop.f32.mrb[0].mxu0
      %v3400 = vadd.f32 %v3293, %v3399
      %v3401 = vpop.f32.mrb[0].mxu0
      %3402 = vmatprep.mubr.f32.mxu0 0.0
      %v3403 = vand.u32 %v2963, 4294901760
      %v3404 = vsub.f32 %v2963, %v3403
      %v3405 = vand.u32 %v3404, 4294901760
      %3406 = vmatmul.mubr.f32.gmra.mrb[0].mxu0 %v3405
      %v3407 = vpop.f32.mrb[0].mxu0
      %v3408 = vadd.f32 %v3300, %v3407
      %v3409 = vpop.f32.mrb[0].mxu0
      %3410 = vmatprep.mubr.f32.mxu0 0.0
      %v3411 = vand.u32 %v2966, 4294901760
      %v3412 = vsub.f32 %v2966, %v3411
      %v3413 = vand.u32 %v3412, 4294901760
      %3414 = vmatmul.mubr.f32.gmra.mrb[0].mxu0 %v3413
      %v3415 = vpop.f32.mrb[0].mxu0
      %v3416 = vadd.f32 %v3307, %v3415
      %v3417 = vpop.f32.mrb[0].mxu0
      %3418 = vdwg.mxu0
      %3419 = vmatprep.subr.mxu0 0.0
      %v3420 = vand.u32 %v2941, 4294901760
      %v3421 = vsub.f32 %v2941, %v3420
      %v3422 = vand.u32 %v3421, 4294901760
      %3423 = vmatpush1.msra.mxu0 %v3422
      %3424 = vmatprep.subr.mxu0 0.0
      %v3425 = vand.u32 %v2942, 4294901760
      %v3426 = vsub.f32 %v2942, %v3425
      %v3427 = vand.u32 %v3426, 4294901760
      %3428 = vmatpush1.msra.mxu0 %v3427
      %3429 = vmatprep.subr.mxu0 0.0
      %v3430 = vand.u32 %v2943, 4294901760
      %v3431 = vsub.f32 %v2943, %v3430
      %v3432 = vand.u32 %v3431, 4294901760
      %3433 = vmatpush1.msra.mxu0 %v3432
      %3434 = vmatprep.subr.mxu0 0.0
      %v3435 = vand.u32 %v2944, 4294901760
      %v3436 = vsub.f32 %v2944, %v3435
      %v3437 = vand.u32 %v3436, 4294901760
      %3438 = vmatpush1.msra.mxu0 %v3437
      %3439 = vmatprep.subr.mxu0 0.0
      %3440 = vmatpush1.msra.mxu0 0.0
      %3441 = vmatprep.subr.mxu0 0.0
      %3442 = vmatpush1.msra.mxu0 0.0
      %3443 = vmatprep.subr.mxu0 0.0
      %3444 = vmatpush1.msra.mxu0 0.0
      %3445 = vmatprep.subr.mxu0 0.0
      %3446 = vmatpush1.msra.mxu0 0.0
      %3447 = vmatprep.subr.mxu0 0.0
      %3448 = vmatpush1.msra.mxu0 0.0
      %3449 = vmatprep.subr.mxu0 0.0
      %3450 = vmatpush1.msra.mxu0 0.0
      %3451 = vmatprep.subr.mxu0 0.0
      %3452 = vmatpush1.msra.mxu0 0.0
      %3453 = vmatprep.subr.mxu0 0.0
      %3454 = vmatpush1.msra.mxu0 0.0
      %3455 = vmatprep.subr.mxu0 0.0
      %3456 = vmatpush1.msra.mxu0 0.0
      %3457 = vmatprep.subr.mxu0 0.0
      %3458 = vmatpush1.msra.mxu0 0.0
      %3459 = vmatprep.subr.mxu0 0.0
      %3460 = vmatpush1.msra.mxu0 0.0
      %3461 = vmatprep.subr.mxu0 0.0
      %3462 = vmatpush1.msra.mxu0 0.0
      %3463 = vmatprep.subr.mxu0 0.0
      %3464 = vmatpush1.msra.mxu0 0.0
      %3465 = vmatprep.subr.mxu0 0.0
      %3466 = vmatpush1.msra.mxu0 0.0
      %3467 = vmatprep.subr.mxu0 0.0
      %3468 = vmatpush1.msra.mxu0 0.0
      %3469 = vmatprep.subr.mxu0 0.0
      %3470 = vmatpush1.msra.mxu0 0.0
      %3471 = vmatprep.subr.mxu0 0.0
      %3472 = vmatpush1.msra.mxu0 0.0
      %3473 = vmatprep.subr.mxu0 0.0
      %3474 = vmatpush1.msra.mxu0 0.0
      %3475 = vmatprep.subr.mxu0 0.0
      %3476 = vmatpush1.msra.mxu0 0.0
      %3477 = vmatprep.subr.mxu0 0.0
      %3478 = vmatpush1.msra.mxu0 0.0
      %3479 = vmatprep.subr.mxu0 0.0
      %3480 = vmatpush1.msra.mxu0 0.0
      %3481 = vmatprep.subr.mxu0 0.0
      %3482 = vmatpush1.msra.mxu0 0.0
      %3483 = vmatprep.subr.mxu0 0.0
      %3484 = vmatpush1.msra.mxu0 0.0
      %3485 = vmatprep.subr.mxu0 0.0
      %3486 = vmatpush1.msra.mxu0 0.0
      %3487 = vmatprep.subr.mxu0 0.0
      %3488 = vmatpush1.msra.mxu0 0.0
      %3489 = vmatprep.subr.mxu0 0.0
      %3490 = vmatpush1.msra.mxu0 0.0
      %3491 = vmatprep.subr.mxu0 0.0
      %3492 = vmatpush1.msra.mxu0 0.0
      %3493 = vmatprep.subr.mxu0 0.0
      %3494 = vmatpush1.msra.mxu0 0.0
      %3495 = vmatprep.mubr.f32.mxu0 0.0
      %v3496 = vand.u32 %v2954, 4294901760
      %3497 = vmatmul.mubr.f32.gmra.mrb[0].mxu0 %v3496
      %v3498 = vpop.f32.mrb[0].mxu0
      %v3499 = vadd.f32 %v3384, %v3498
      %v3500 = vpop.f32.mrb[0].mxu0
      %3501 = vmatprep.mubr.f32.mxu0 0.0
      %v3502 = vand.u32 %v2957, 4294901760
      %3503 = vmatmul.mubr.f32.gmra.mrb[0].mxu0 %v3502
      %v3504 = vpop.f32.mrb[0].mxu0
      %v3505 = vadd.f32 %v3392, %v3504
      %v3506 = vpop.f32.mrb[0].mxu0
      %3507 = vmatprep.mubr.f32.mxu0 0.0
      %v3508 = vand.u32 %v2960, 4294901760
      %3509 = vmatmul.mubr.f32.gmra.mrb[0].mxu0 %v3508
      %v3510 = vpop.f32.mrb[0].mxu0
      %v3511 = vadd.f32 %v3400, %v3510
      %v3512 = vpop.f32.mrb[0].mxu0
      %3513 = vmatprep.mubr.f32.mxu0 0.0
      %v3514 = vand.u32 %v2963, 4294901760
      %3515 = vmatmul.mubr.f32.gmra.mrb[0].mxu0 %v3514
      %v3516 = vpop.f32.mrb[0].mxu0
      %v3517 = vadd.f32 %v3408, %v3516
      %v3518 = vpop.f32.mrb[0].mxu0
      %3519 = vmatprep.mubr.f32.mxu0 0.0
      %v3520 = vand.u32 %v2966, 4294901760
      %3521 = vmatmul.mubr.f32.gmra.mrb[0].mxu0 %v3520
      %v3522 = vpop.f32.mrb[0].mxu0
      %v3523 = vadd.f32 %v3416, %v3522
      %v3524 = vpop.f32.mrb[0].mxu0
      %3525 = vdwg.mxu0
      %3526 = vmatprep.subr.mxu0 0.0
      %v3527 = vand.u32 %v2941, 4294901760
      %3528 = vmatpush1.msra.mxu0 %v3527
      %3529 = vmatprep.subr.mxu0 0.0
      %v3530 = vand.u32 %v2942, 4294901760
      %3531 = vmatpush1.msra.mxu0 %v3530
      %3532 = vmatprep.subr.mxu0 0.0
      %v3533 = vand.u32 %v2943, 4294901760
      %3534 = vmatpush1.msra.mxu0 %v3533
      %3535 = vmatprep.subr.mxu0 0.0
      %v3536 = vand.u32 %v2944, 4294901760
      %3537 = vmatpush1.msra.mxu0 %v3536
      %3538 = vmatprep.subr.mxu0 0.0
      %3539 = vmatpush1.msra.mxu0 0.0
      %3540 = vmatprep.subr.mxu0 0.0
      %3541 = vmatpush1.msra.mxu0 0.0
      %3542 = vmatprep.subr.mxu0 0.0
      %3543 = vmatpush1.msra.mxu0 0.0
      %3544 = vmatprep.subr.mxu0 0.0
      %3545 = vmatpush1.msra.mxu0 0.0
      %3546 = vmatprep.subr.mxu0 0.0
      %3547 = vmatpush1.msra.mxu0 0.0
      %3548 = vmatprep.subr.mxu0 0.0
      %3549 = vmatpush1.msra.mxu0 0.0
      %3550 = vmatprep.subr.mxu0 0.0
      %3551 = vmatpush1.msra.mxu0 0.0
      %3552 = vmatprep.subr.mxu0 0.0
      %3553 = vmatpush1.msra.mxu0 0.0
      %3554 = vmatprep.subr.mxu0 0.0
      %3555 = vmatpush1.msra.mxu0 0.0
      %3556 = vmatprep.subr.mxu0 0.0
      %3557 = vmatpush1.msra.mxu0 0.0
      %3558 = vmatprep.subr.mxu0 0.0
      %3559 = vmatpush1.msra.mxu0 0.0
      %3560 = vmatprep.subr.mxu0 0.0
      %3561 = vmatpush1.msra.mxu0 0.0
      %3562 = vmatprep.subr.mxu0 0.0
      %3563 = vmatpush1.msra.mxu0 0.0
      %3564 = vmatprep.subr.mxu0 0.0
      %3565 = vmatpush1.msra.mxu0 0.0
      %3566 = vmatprep.subr.mxu0 0.0
      %3567 = vmatpush1.msra.mxu0 0.0
      %3568 = vmatprep.subr.mxu0 0.0
      %3569 = vmatpush1.msra.mxu0 0.0
      %3570 = vmatprep.subr.mxu0 0.0
      %3571 = vmatpush1.msra.mxu0 0.0
      %3572 = vmatprep.subr.mxu0 0.0
      %3573 = vmatpush1.msra.mxu0 0.0
      %3574 = vmatprep.subr.mxu0 0.0
      %3575 = vmatpush1.msra.mxu0 0.0
      %3576 = vmatprep.subr.mxu0 0.0
      %3577 = vmatpush1.msra.mxu0 0.0
      %3578 = vmatprep.subr.mxu0 0.0
      %3579 = vmatpush1.msra.mxu0 0.0
      %3580 = vmatprep.subr.mxu0 0.0
      %3581 = vmatpush1.msra.mxu0 0.0
      %3582 = vmatprep.subr.mxu0 0.0
      %3583 = vmatpush1.msra.mxu0 0.0
      %3584 = vmatprep.subr.mxu0 0.0
      %3585 = vmatpush1.msra.mxu0 0.0
      %3586 = vmatprep.subr.mxu0 0.0
      %3587 = vmatpush1.msra.mxu0 0.0
      %3588 = vmatprep.subr.mxu0 0.0
      %3589 = vmatpush1.msra.mxu0 0.0
      %3590 = vmatprep.subr.mxu0 0.0
      %3591 = vmatpush1.msra.mxu0 0.0
      %3592 = vmatprep.subr.mxu0 0.0
      %3593 = vmatpush1.msra.mxu0 0.0
      %3594 = vmatprep.mubr.f32.mxu0 0.0
      %v3595 = vand.u32 %v2954, 4294901760
      %3596 = vmatmul.mubr.f32.gmra.mrb[0].mxu0 %v3595
      %v3597 = vpop.f32.mrb[0].mxu0
      %v3598 = vadd.f32 %v3499, %v3597
      %v3599 = vpop.f32.mrb[0].mxu0
      %3600 = vmatprep.mubr.f32.mxu0 0.0
      %v3601 = vand.u32 %v2957, 4294901760
      %3602 = vmatmul.mubr.f32.gmra.mrb[0].mxu0 %v3601
      %v3603 = vpop.f32.mrb[0].mxu0
      %v3604 = vadd.f32 %v3505, %v3603
      %v3605 = vpop.f32.mrb[0].mxu0
      %3606 = vmatprep.mubr.f32.mxu0 0.0
      %v3607 = vand.u32 %v2960, 4294901760
      %3608 = vmatmul.mubr.f32.gmra.mrb[0].mxu0 %v3607
      %v3609 = vpop.f32.mrb[0].mxu0
      %v3610 = vadd.f32 %v3511, %v3609
      %v3611 = vpop.f32.mrb[0].mxu0
      %3612 = vmatprep.mubr.f32.mxu0 0.0
      %v3613 = vand.u32 %v2963, 4294901760
      %3614 = vmatmul.mubr.f32.gmra.mrb[0].mxu0 %v3613
      %v3615 = vpop.f32.mrb[0].mxu0
      %v3616 = vadd.f32 %v3517, %v3615
      %v3617 = vpop.f32.mrb[0].mxu0
      %3618 = vmatprep.mubr.f32.mxu0 0.0
      %v3619 = vand.u32 %v2966, 4294901760
      %3620 = vmatmul.mubr.f32.gmra.mrb[0].mxu0 %v3619
      %v3621 = vpop.f32.mrb[0].mxu0
      %v3622 = vadd.f32 %v3523, %v3621
      %v3623 = vpop.f32.mrb[0].mxu0
      %3624 = vdwg.mxu0
      %v3625 = vadd.f32 %v2273, %v3598
      %v3626 = vadd.f32 %v2274, %v3604
      %v3627 = vadd.f32 %v2275, %v3610
      %v3628 = vadd.f32 %v2276, %v3616
      %v3629 = vadd.f32 %v2277, %v3622
      %v3630 = vld [vmem:[%s11] sm:$0x1]
      %v3631 = vld [vmem:[%s12] sm:$0x1]
      %v3632 = vsel %vm509, %v3625, 0.0
      %3633 = vadd.xlane.f32.xlu0 %v3632
      %v3634 = vpop.xlane.xlu0 %3633
      %v3635 = vsel %vm509, %v3626, 0.0
      %3636 = vadd.xlane.f32.xlu0 %v3635
      %v3637 = vpop.xlane.xlu0 %3636
      %v3638 = vsel %vm509, %v3627, 0.0
      %3639 = vadd.xlane.f32.xlu0 %v3638
      %v3640 = vpop.xlane.xlu0 %3639
      %v3641 = vsel %vm509, %v3628, 0.0
      %3642 = vadd.xlane.f32.xlu0 %v3641
      %v3643 = vpop.xlane.xlu0 %3642
      %v3644 = vsel %vm509, %v3629, 0.0
      %3645 = vadd.xlane.f32.xlu0 %v3644
      %v3646 = vpop.xlane.xlu0 %3645
      %v3647 = vmul.f32 %v3634, %v2205
      %v3648 = vmul.f32 %v3637, %v2205
      %v3649 = vmul.f32 %v3640, %v2205
      %v3650 = vmul.f32 %v3643, %v2205
      %v3651 = vmul.f32 %v3646, %v2205
      %v3652 = vsub.f32 %v3625, %v3647
      %v3653 = vsub.f32 %v3626, %v3648
      %v3654 = vsub.f32 %v3627, %v3649
      %v3655 = vsub.f32 %v3628, %v3650
      %v3656 = vsub.f32 %v3629, %v3651
      %v3657 = vmul.f32 %v3652, %v3652
      %v3658 = vmul.f32 %v3653, %v3653
      %v3659 = vmul.f32 %v3654, %v3654
      %v3660 = vmul.f32 %v3655, %v3655
      %v3661 = vmul.f32 %v3656, %v3656
      %v3662 = vsel %vm509, %v3657, 0.0
      %3663 = vadd.xlane.f32.xlu0 %v3662
      %v3664 = vpop.xlane.xlu0 %3663
      %v3665 = vsel %vm509, %v3658, 0.0
      %3666 = vadd.xlane.f32.xlu0 %v3665
      %v3667 = vpop.xlane.xlu0 %3666
      %v3668 = vsel %vm509, %v3659, 0.0
      %3669 = vadd.xlane.f32.xlu0 %v3668
      %v3670 = vpop.xlane.xlu0 %3669
      %v3671 = vsel %vm509, %v3660, 0.0
      %3672 = vadd.xlane.f32.xlu0 %v3671
      %v3673 = vpop.xlane.xlu0 %3672
      %v3674 = vsel %vm509, %v3661, 0.0
      %3675 = vadd.xlane.f32.xlu0 %v3674
      %v3676 = vpop.xlane.xlu0 %3675
      %v3677 = vmul.f32 %v3664, %v2205
      %v3678 = vmul.f32 %v3667, %v2205
      %v3679 = vmul.f32 %v3670, %v2205
      %v3680 = vmul.f32 %v3673, %v2205
      %v3681 = vmul.f32 %v3676, %v2205
      %v3682 = vadd.f32 %v3677, 1e-05
      %v3683 = vadd.f32 %v3678, 1e-05
      %v3684 = vadd.f32 %v3679, 1e-05
      %v3685 = vadd.f32 %v3680, 1e-05
      %v3686 = vadd.f32 %v3681, 1e-05
      %v3687 = vrsqrt.pop %v3682
      %v3688 = vrsqrt.pop %v3683
      %v3689 = vrsqrt.pop %v3684
      %v3690 = vrsqrt.pop %v3685
      %v3691 = vrsqrt.pop %v3686
      %v3692 = vmul.f32 %v3652, %v3687
      %v3693 = vmul.f32 %v3653, %v3688
      %v3694 = vmul.f32 %v3654, %v3689
      %v3695 = vmul.f32 %v3655, %v3690
      %v3696 = vmul.f32 %v3656, %v3691
      %v3698 = vlaneseq
      %v3699 = vshrl.u32 %v3698, 7
      %v3700 = vsub.s32 0, %v3699
      %v3701 = vrot.slane %v3630, %v3700
      %v3703 = vmul.f32 %v3692, %v3701
      %v3704 = vmul.f32 %v3693, %v3701
      %v3705 = vmul.f32 %v3694, %v3701
      %v3706 = vmul.f32 %v3695, %v3701
      %v3707 = vmul.f32 %v3696, %v3701
      %v3709 = vlaneseq
      %v3710 = vshrl.u32 %v3709, 7
      %v3711 = vsub.s32 0, %v3710
      %v3712 = vrot.slane %v3631, %v3711
      %v3714 = vadd.f32 %v3703, %v3712
      %v3715 = vadd.f32 %v3704, %v3712
      %v3716 = vadd.f32 %v3705, %v3712
      %v3717 = vadd.f32 %v3706, %v3712
      %v3718 = vadd.f32 %v3707, %v3712
      %s3719 = scalar_lea.vmem %s1, 16
      %v3720 = vld [vmem:[%s3719] sm:$0xff]
      %v3721 = vld [vmem:[%s3719 + $0x8] sm:$0x7]
      %s3722 = scalar_lea.vmem %s2, 1
      %v3723 = vld [vmem:[%s3722] sm:$0x1]
      %v3725 = vlaneseq
      %v3726 = vshrl.u32 %v3725, 7
      %v3727 = vsub.s32 0, %v3726
      %v3728 = vrot.slane %v3723, %v3727
      %v3731 = vsel %vm509, %v3714, 0
      %v3734 = vsel %vm509, %v3715, 0
      %v3737 = vsel %vm509, %v3716, 0
      %v3740 = vsel %vm509, %v3717, 0
      %v3743 = vsel %vm509, %v3718, 0
      %v3746 = vsel %vm525, %v3721, 0
      %3748 = vmatprep.subr.mxu0 0.0
      %v3749 = vand.u32 %v3720, 4294901760
      %3750 = vmatpush1.msra.mxu0 %v3749
      %3751 = vmatprep.subr.mxu0 0.0
      %v3752 = vand.u32 %v3746, 4294901760
      %3753 = vmatpush1.msra.mxu0 %v3752
      %3754 = vmatprep.subr.mxu0 0.0
      %3755 = vmatpush1.msra.mxu0 0.0
      %3756 = vmatprep.subr.mxu0 0.0
      %3757 = vmatpush1.msra.mxu0 0.0
      %3758 = vmatprep.subr.mxu0 0.0
      %3759 = vmatpush1.msra.mxu0 0.0
      %3760 = vmatprep.subr.mxu0 0.0
      %3761 = vmatpush1.msra.mxu0 0.0
      %3762 = vmatprep.subr.mxu0 0.0
      %3763 = vmatpush1.msra.mxu0 0.0
      %3764 = vmatprep.subr.mxu0 0.0
      %3765 = vmatpush1.msra.mxu0 0.0
      %3766 = vmatprep.subr.mxu0 0.0
      %3767 = vmatpush1.msra.mxu0 0.0
      %3768 = vmatprep.subr.mxu0 0.0
      %3769 = vmatpush1.msra.mxu0 0.0
      %3770 = vmatprep.subr.mxu0 0.0
      %3771 = vmatpush1.msra.mxu0 0.0
      %3772 = vmatprep.subr.mxu0 0.0
      %3773 = vmatpush1.msra.mxu0 0.0
      %3774 = vmatprep.subr.mxu0 0.0
      %3775 = vmatpush1.msra.mxu0 0.0
      %3776 = vmatprep.subr.mxu0 0.0
      %3777 = vmatpush1.msra.mxu0 0.0
      %3778 = vmatprep.subr.mxu0 0.0
      %3779 = vmatpush1.msra.mxu0 0.0
      %3780 = vmatprep.subr.mxu0 0.0
      %3781 = vmatpush1.msra.mxu0 0.0
      %3782 = vmatprep.subr.mxu0 0.0
      %3783 = vmatpush1.msra.mxu0 0.0
      %3784 = vmatprep.subr.mxu0 0.0
      %3785 = vmatpush1.msra.mxu0 0.0
      %3786 = vmatprep.subr.mxu0 0.0
      %3787 = vmatpush1.msra.mxu0 0.0
      %3788 = vmatprep.subr.mxu0 0.0
      %3789 = vmatpush1.msra.mxu0 0.0
      %3790 = vmatprep.subr.mxu0 0.0
      %3791 = vmatpush1.msra.mxu0 0.0
      %3792 = vmatprep.subr.mxu0 0.0
      %3793 = vmatpush1.msra.mxu0 0.0
      %3794 = vmatprep.subr.mxu0 0.0
      %3795 = vmatpush1.msra.mxu0 0.0
      %3796 = vmatprep.subr.mxu0 0.0
      %3797 = vmatpush1.msra.mxu0 0.0
      %3798 = vmatprep.subr.mxu0 0.0
      %3799 = vmatpush1.msra.mxu0 0.0
      %3800 = vmatprep.subr.mxu0 0.0
      %3801 = vmatpush1.msra.mxu0 0.0
      %3802 = vmatprep.subr.mxu0 0.0
      %3803 = vmatpush1.msra.mxu0 0.0
      %3804 = vmatprep.subr.mxu0 0.0
      %3805 = vmatpush1.msra.mxu0 0.0
      %3806 = vmatprep.subr.mxu0 0.0
      %3807 = vmatpush1.msra.mxu0 0.0
      %3808 = vmatprep.subr.mxu0 0.0
      %3809 = vmatpush1.msra.mxu0 0.0
      %3810 = vmatprep.subr.mxu0 0.0
      %3811 = vmatpush1.msra.mxu0 0.0
      %3812 = vmatprep.subr.mxu0 0.0
      %3813 = vmatpush1.msra.mxu0 0.0
      %3814 = vmatprep.mubr.f32.mxu0 0.0
      %v3815 = vand.u32 %v3731, 4294901760
      %v3816 = vsub.f32 %v3731, %v3815
      %v3817 = vand.u32 %v3816, 4294901760
      %v3818 = vsub.f32 %v3816, %v3817
      %v3819 = vand.u32 %v3818, 4294901760
      %3820 = vmatmul.mubr.f32.gmra.mrb[0].mxu0 %v3819
      %v3821 = vpop.f32.mrb[0].mxu0
      %v3822 = vadd.f32 %v3728, %v3821
      %v3823 = vpop.f32.mrb[0].mxu0
      %3824 = vmatprep.mubr.f32.mxu0 0.0
      %v3825 = vand.u32 %v3734, 4294901760
      %v3826 = vsub.f32 %v3734, %v3825
      %v3827 = vand.u32 %v3826, 4294901760
      %v3828 = vsub.f32 %v3826, %v3827
      %v3829 = vand.u32 %v3828, 4294901760
      %3830 = vmatmul.mubr.f32.gmra.mrb[0].mxu0 %v3829
      %v3831 = vpop.f32.mrb[0].mxu0
      %v3832 = vadd.f32 %v3728, %v3831
      %v3833 = vpop.f32.mrb[0].mxu0
      %3834 = vmatprep.mubr.f32.mxu0 0.0
      %v3835 = vand.u32 %v3737, 4294901760
      %v3836 = vsub.f32 %v3737, %v3835
      %v3837 = vand.u32 %v3836, 4294901760
      %v3838 = vsub.f32 %v3836, %v3837
      %v3839 = vand.u32 %v3838, 4294901760
      %3840 = vmatmul.mubr.f32.gmra.mrb[0].mxu0 %v3839
      %v3841 = vpop.f32.mrb[0].mxu0
      %v3842 = vadd.f32 %v3728, %v3841
      %v3843 = vpop.f32.mrb[0].mxu0
      %3844 = vmatprep.mubr.f32.mxu0 0.0
      %v3845 = vand.u32 %v3740, 4294901760
      %v3846 = vsub.f32 %v3740, %v3845
      %v3847 = vand.u32 %v3846, 4294901760
      %v3848 = vsub.f32 %v3846, %v3847
      %v3849 = vand.u32 %v3848, 4294901760
      %3850 = vmatmul.mubr.f32.gmra.mrb[0].mxu0 %v3849
      %v3851 = vpop.f32.mrb[0].mxu0
      %v3852 = vadd.f32 %v3728, %v3851
      %v3853 = vpop.f32.mrb[0].mxu0
      %3854 = vmatprep.mubr.f32.mxu0 0.0
      %v3855 = vand.u32 %v3743, 4294901760
      %v3856 = vsub.f32 %v3743, %v3855
      %v3857 = vand.u32 %v3856, 4294901760
      %v3858 = vsub.f32 %v3856, %v3857
      %v3859 = vand.u32 %v3858, 4294901760
      %3860 = vmatmul.mubr.f32.gmra.mrb[0].mxu0 %v3859
      %v3861 = vpop.f32.mrb[0].mxu0
      %v3862 = vadd.f32 %v3728, %v3861
      %v3863 = vpop.f32.mrb[0].mxu0
      %3864 = vdwg.mxu0
      %3865 = vmatprep.subr.mxu0 0.0
      %v3866 = vand.u32 %v3720, 4294901760
      %v3867 = vsub.f32 %v3720, %v3866
      %v3868 = vand.u32 %v3867, 4294901760
      %v3869 = vsub.f32 %v3867, %v3868
      %v3870 = vand.u32 %v3869, 4294901760
      %3871 = vmatpush1.msra.mxu0 %v3870
      %3872 = vmatprep.subr.mxu0 0.0
      %v3873 = vand.u32 %v3746, 4294901760
      %v3874 = vsub.f32 %v3746, %v3873
      %v3875 = vand.u32 %v3874, 4294901760
      %v3876 = vsub.f32 %v3874, %v3875
      %v3877 = vand.u32 %v3876, 4294901760
      %3878 = vmatpush1.msra.mxu0 %v3877
      %3879 = vmatprep.subr.mxu0 0.0
      %3880 = vmatpush1.msra.mxu0 0.0
      %3881 = vmatprep.subr.mxu0 0.0
      %3882 = vmatpush1.msra.mxu0 0.0
      %3883 = vmatprep.subr.mxu0 0.0
      %3884 = vmatpush1.msra.mxu0 0.0
      %3885 = vmatprep.subr.mxu0 0.0
      %3886 = vmatpush1.msra.mxu0 0.0
      %3887 = vmatprep.subr.mxu0 0.0
      %3888 = vmatpush1.msra.mxu0 0.0
      %3889 = vmatprep.subr.mxu0 0.0
      %3890 = vmatpush1.msra.mxu0 0.0
      %3891 = vmatprep.subr.mxu0 0.0
      %3892 = vmatpush1.msra.mxu0 0.0
      %3893 = vmatprep.subr.mxu0 0.0
      %3894 = vmatpush1.msra.mxu0 0.0
      %3895 = vmatprep.subr.mxu0 0.0
      %3896 = vmatpush1.msra.mxu0 0.0
      %3897 = vmatprep.subr.mxu0 0.0
      %3898 = vmatpush1.msra.mxu0 0.0
      %3899 = vmatprep.subr.mxu0 0.0
      %3900 = vmatpush1.msra.mxu0 0.0
      %3901 = vmatprep.subr.mxu0 0.0
      %3902 = vmatpush1.msra.mxu0 0.0
      %3903 = vmatprep.subr.mxu0 0.0
      %3904 = vmatpush1.msra.mxu0 0.0
      %3905 = vmatprep.subr.mxu0 0.0
      %3906 = vmatpush1.msra.mxu0 0.0
      %3907 = vmatprep.subr.mxu0 0.0
      %3908 = vmatpush1.msra.mxu0 0.0
      %3909 = vmatprep.subr.mxu0 0.0
      %3910 = vmatpush1.msra.mxu0 0.0
      %3911 = vmatprep.subr.mxu0 0.0
      %3912 = vmatpush1.msra.mxu0 0.0
      %3913 = vmatprep.subr.mxu0 0.0
      %3914 = vmatpush1.msra.mxu0 0.0
      %3915 = vmatprep.subr.mxu0 0.0
      %3916 = vmatpush1.msra.mxu0 0.0
      %3917 = vmatprep.subr.mxu0 0.0
      %3918 = vmatpush1.msra.mxu0 0.0
      %3919 = vmatprep.subr.mxu0 0.0
      %3920 = vmatpush1.msra.mxu0 0.0
      %3921 = vmatprep.subr.mxu0 0.0
      %3922 = vmatpush1.msra.mxu0 0.0
      %3923 = vmatprep.subr.mxu0 0.0
      %3924 = vmatpush1.msra.mxu0 0.0
      %3925 = vmatprep.subr.mxu0 0.0
      %3926 = vmatpush1.msra.mxu0 0.0
      %3927 = vmatprep.subr.mxu0 0.0
      %3928 = vmatpush1.msra.mxu0 0.0
      %3929 = vmatprep.subr.mxu0 0.0
      %3930 = vmatpush1.msra.mxu0 0.0
      %3931 = vmatprep.subr.mxu0 0.0
      %3932 = vmatpush1.msra.mxu0 0.0
      %3933 = vmatprep.subr.mxu0 0.0
      %3934 = vmatpush1.msra.mxu0 0.0
      %3935 = vmatprep.subr.mxu0 0.0
      %3936 = vmatpush1.msra.mxu0 0.0
      %3937 = vmatprep.subr.mxu0 0.0
      %3938 = vmatpush1.msra.mxu0 0.0
      %3939 = vmatprep.mubr.f32.mxu0 0.0
      %v3940 = vand.u32 %v3731, 4294901760
      %3941 = vmatmul.mubr.f32.gmra.mrb[0].mxu0 %v3940
      %v3942 = vpop.f32.mrb[0].mxu0
      %v3943 = vadd.f32 %v3822, %v3942
      %v3944 = vpop.f32.mrb[0].mxu0
      %3945 = vmatprep.mubr.f32.mxu0 0.0
      %v3946 = vand.u32 %v3734, 4294901760
      %3947 = vmatmul.mubr.f32.gmra.mrb[0].mxu0 %v3946
      %v3948 = vpop.f32.mrb[0].mxu0
      %v3949 = vadd.f32 %v3832, %v3948
      %v3950 = vpop.f32.mrb[0].mxu0
      %3951 = vmatprep.mubr.f32.mxu0 0.0
      %v3952 = vand.u32 %v3737, 4294901760
      %3953 = vmatmul.mubr.f32.gmra.mrb[0].mxu0 %v3952
      %v3954 = vpop.f32.mrb[0].mxu0
      %v3955 = vadd.f32 %v3842, %v3954
      %v3956 = vpop.f32.mrb[0].mxu0
      %3957 = vmatprep.mubr.f32.mxu0 0.0
      %v3958 = vand.u32 %v3740, 4294901760
      %3959 = vmatmul.mubr.f32.gmra.mrb[0].mxu0 %v3958
      %v3960 = vpop.f32.mrb[0].mxu0
      %v3961 = vadd.f32 %v3852, %v3960
      %v3962 = vpop.f32.mrb[0].mxu0
      %3963 = vmatprep.mubr.f32.mxu0 0.0
      %v3964 = vand.u32 %v3743, 4294901760
      %3965 = vmatmul.mubr.f32.gmra.mrb[0].mxu0 %v3964
      %v3966 = vpop.f32.mrb[0].mxu0
      %v3967 = vadd.f32 %v3862, %v3966
      %v3968 = vpop.f32.mrb[0].mxu0
      %3969 = vdwg.mxu0
      %3970 = vmatprep.subr.mxu0 0.0
      %v3971 = vand.u32 %v3720, 4294901760
      %v3972 = vsub.f32 %v3720, %v3971
      %3973 = vmatpush1.msra.mxu0 %v3972
      %3974 = vmatprep.subr.mxu0 0.0
      %v3975 = vand.u32 %v3746, 4294901760
      %v3976 = vsub.f32 %v3746, %v3975
      %3977 = vmatpush1.msra.mxu0 %v3976
      %3978 = vmatprep.subr.mxu0 0.0
      %3979 = vmatpush1.msra.mxu0 0.0
      %3980 = vmatprep.subr.mxu0 0.0
      %3981 = vmatpush1.msra.mxu0 0.0
      %3982 = vmatprep.subr.mxu0 0.0
      %3983 = vmatpush1.msra.mxu0 0.0
      %3984 = vmatprep.subr.mxu0 0.0
      %3985 = vmatpush1.msra.mxu0 0.0
      %3986 = vmatprep.subr.mxu0 0.0
      %3987 = vmatpush1.msra.mxu0 0.0
      %3988 = vmatprep.subr.mxu0 0.0
      %3989 = vmatpush1.msra.mxu0 0.0
      %3990 = vmatprep.subr.mxu0 0.0
      %3991 = vmatpush1.msra.mxu0 0.0
      %3992 = vmatprep.subr.mxu0 0.0
      %3993 = vmatpush1.msra.mxu0 0.0
      %3994 = vmatprep.subr.mxu0 0.0
      %3995 = vmatpush1.msra.mxu0 0.0
      %3996 = vmatprep.subr.mxu0 0.0
      %3997 = vmatpush1.msra.mxu0 0.0
      %3998 = vmatprep.subr.mxu0 0.0
      %3999 = vmatpush1.msra.mxu0 0.0
      %4000 = vmatprep.subr.mxu0 0.0
      %4001 = vmatpush1.msra.mxu0 0.0
      %4002 = vmatprep.subr.mxu0 0.0
      %4003 = vmatpush1.msra.mxu0 0.0
      %4004 = vmatprep.subr.mxu0 0.0
      %4005 = vmatpush1.msra.mxu0 0.0
      %4006 = vmatprep.subr.mxu0 0.0
      %4007 = vmatpush1.msra.mxu0 0.0
      %4008 = vmatprep.subr.mxu0 0.0
      %4009 = vmatpush1.msra.mxu0 0.0
      %4010 = vmatprep.subr.mxu0 0.0
      %4011 = vmatpush1.msra.mxu0 0.0
      %4012 = vmatprep.subr.mxu0 0.0
      %4013 = vmatpush1.msra.mxu0 0.0
      %4014 = vmatprep.subr.mxu0 0.0
      %4015 = vmatpush1.msra.mxu0 0.0
      %4016 = vmatprep.subr.mxu0 0.0
      %4017 = vmatpush1.msra.mxu0 0.0
      %4018 = vmatprep.subr.mxu0 0.0
      %4019 = vmatpush1.msra.mxu0 0.0
      %4020 = vmatprep.subr.mxu0 0.0
      %4021 = vmatpush1.msra.mxu0 0.0
      %4022 = vmatprep.subr.mxu0 0.0
      %4023 = vmatpush1.msra.mxu0 0.0
      %4024 = vmatprep.subr.mxu0 0.0
      %4025 = vmatpush1.msra.mxu0 0.0
      %4026 = vmatprep.subr.mxu0 0.0
      %4027 = vmatpush1.msra.mxu0 0.0
      %4028 = vmatprep.subr.mxu0 0.0
      %4029 = vmatpush1.msra.mxu0 0.0
      %4030 = vmatprep.subr.mxu0 0.0
      %4031 = vmatpush1.msra.mxu0 0.0
      %4032 = vmatprep.subr.mxu0 0.0
      %4033 = vmatpush1.msra.mxu0 0.0
      %4034 = vmatprep.subr.mxu0 0.0
      %4035 = vmatpush1.msra.mxu0 0.0
      %4036 = vmatprep.subr.mxu0 0.0
      %4037 = vmatpush1.msra.mxu0 0.0
      %4038 = vmatprep.mubr.f32.mxu0 0.0
      %v4039 = vand.u32 %v3731, 4294901760
      %v4040 = vsub.f32 %v3731, %v4039
      %4041 = vmatmul.mubr.f32.gmra.mrb[0].mxu0 %v4040
      %v4042 = vpop.f32.mrb[0].mxu0
      %v4043 = vadd.f32 %v3943, %v4042
      %v4044 = vpop.f32.mrb[0].mxu0
      %4045 = vmatprep.mubr.f32.mxu0 0.0
      %v4046 = vand.u32 %v3734, 4294901760
      %v4047 = vsub.f32 %v3734, %v4046
      %4048 = vmatmul.mubr.f32.gmra.mrb[0].mxu0 %v4047
      %v4049 = vpop.f32.mrb[0].mxu0
      %v4050 = vadd.f32 %v3949, %v4049
      %v4051 = vpop.f32.mrb[0].mxu0
      %4052 = vmatprep.mubr.f32.mxu0 0.0
      %v4053 = vand.u32 %v3737, 4294901760
      %v4054 = vsub.f32 %v3737, %v4053
      %4055 = vmatmul.mubr.f32.gmra.mrb[0].mxu0 %v4054
      %v4056 = vpop.f32.mrb[0].mxu0
      %v4057 = vadd.f32 %v3955, %v4056
      %v4058 = vpop.f32.mrb[0].mxu0
      %4059 = vmatprep.mubr.f32.mxu0 0.0
      %v4060 = vand.u32 %v3740, 4294901760
      %v4061 = vsub.f32 %v3740, %v4060
      %4062 = vmatmul.mubr.f32.gmra.mrb[0].mxu0 %v4061
      %v4063 = vpop.f32.mrb[0].mxu0
      %v4064 = vadd.f32 %v3961, %v4063
      %v4065 = vpop.f32.mrb[0].mxu0
      %4066 = vmatprep.mubr.f32.mxu0 0.0
      %v4067 = vand.u32 %v3743, 4294901760
      %v4068 = vsub.f32 %v3743, %v4067
      %4069 = vmatmul.mubr.f32.gmra.mrb[0].mxu0 %v4068
      %v4070 = vpop.f32.mrb[0].mxu0
      %v4071 = vadd.f32 %v3967, %v4070
      %v4072 = vpop.f32.mrb[0].mxu0
      %4073 = vdwg.mxu0
      %4074 = vmatprep.subr.mxu0 0.0
      %v4075 = vand.u32 %v3720, 4294901760
      %4076 = vmatpush1.msra.mxu0 %v4075
      %4077 = vmatprep.subr.mxu0 0.0
      %v4078 = vand.u32 %v3746, 4294901760
      %4079 = vmatpush1.msra.mxu0 %v4078
      %4080 = vmatprep.subr.mxu0 0.0
      %4081 = vmatpush1.msra.mxu0 0.0
      %4082 = vmatprep.subr.mxu0 0.0
      %4083 = vmatpush1.msra.mxu0 0.0
      %4084 = vmatprep.subr.mxu0 0.0
      %4085 = vmatpush1.msra.mxu0 0.0
      %4086 = vmatprep.subr.mxu0 0.0
      %4087 = vmatpush1.msra.mxu0 0.0
      %4088 = vmatprep.subr.mxu0 0.0
      %4089 = vmatpush1.msra.mxu0 0.0
      %4090 = vmatprep.subr.mxu0 0.0
      %4091 = vmatpush1.msra.mxu0 0.0
      %4092 = vmatprep.subr.mxu0 0.0
      %4093 = vmatpush1.msra.mxu0 0.0
      %4094 = vmatprep.subr.mxu0 0.0
      %4095 = vmatpush1.msra.mxu0 0.0
      %4096 = vmatprep.subr.mxu0 0.0
      %4097 = vmatpush1.msra.mxu0 0.0
      %4098 = vmatprep.subr.mxu0 0.0
      %4099 = vmatpush1.msra.mxu0 0.0
      %4100 = vmatprep.subr.mxu0 0.0
      %4101 = vmatpush1.msra.mxu0 0.0
      %4102 = vmatprep.subr.mxu0 0.0
      %4103 = vmatpush1.msra.mxu0 0.0
      %4104 = vmatprep.subr.mxu0 0.0
      %4105 = vmatpush1.msra.mxu0 0.0
      %4106 = vmatprep.subr.mxu0 0.0
      %4107 = vmatpush1.msra.mxu0 0.0
      %4108 = vmatprep.subr.mxu0 0.0
      %4109 = vmatpush1.msra.mxu0 0.0
      %4110 = vmatprep.subr.mxu0 0.0
      %4111 = vmatpush1.msra.mxu0 0.0
      %4112 = vmatprep.subr.mxu0 0.0
      %4113 = vmatpush1.msra.mxu0 0.0
      %4114 = vmatprep.subr.mxu0 0.0
      %4115 = vmatpush1.msra.mxu0 0.0
      %4116 = vmatprep.subr.mxu0 0.0
      %4117 = vmatpush1.msra.mxu0 0.0
      %4118 = vmatprep.subr.mxu0 0.0
      %4119 = vmatpush1.msra.mxu0 0.0
      %4120 = vmatprep.subr.mxu0 0.0
      %4121 = vmatpush1.msra.mxu0 0.0
      %4122 = vmatprep.subr.mxu0 0.0
      %4123 = vmatpush1.msra.mxu0 0.0
      %4124 = vmatprep.subr.mxu0 0.0
      %4125 = vmatpush1.msra.mxu0 0.0
      %4126 = vmatprep.subr.mxu0 0.0
      %4127 = vmatpush1.msra.mxu0 0.0
      %4128 = vmatprep.subr.mxu0 0.0
      %4129 = vmatpush1.msra.mxu0 0.0
      %4130 = vmatprep.subr.mxu0 0.0
      %4131 = vmatpush1.msra.mxu0 0.0
      %4132 = vmatprep.subr.mxu0 0.0
      %4133 = vmatpush1.msra.mxu0 0.0
      %4134 = vmatprep.subr.mxu0 0.0
      %4135 = vmatpush1.msra.mxu0 0.0
      %4136 = vmatprep.subr.mxu0 0.0
      %4137 = vmatpush1.msra.mxu0 0.0
      %4138 = vmatprep.subr.mxu0 0.0
      %4139 = vmatpush1.msra.mxu0 0.0
      %4140 = vmatprep.mubr.f32.mxu0 0.0
      %v4141 = vand.u32 %v3731, 4294901760
      %v4142 = vsub.f32 %v3731, %v4141
      %v4143 = vand.u32 %v4142, 4294901760
      %4144 = vmatmul.mubr.f32.gmra.mrb[0].mxu0 %v4143
      %v4145 = vpop.f32.mrb[0].mxu0
      %v4146 = vadd.f32 %v4043, %v4145
      %v4147 = vpop.f32.mrb[0].mxu0
      %4148 = vmatprep.mubr.f32.mxu0 0.0
      %v4149 = vand.u32 %v3734, 4294901760
      %v4150 = vsub.f32 %v3734, %v4149
      %v4151 = vand.u32 %v4150, 4294901760
      %4152 = vmatmul.mubr.f32.gmra.mrb[0].mxu0 %v4151
      %v4153 = vpop.f32.mrb[0].mxu0
      %v4154 = vadd.f32 %v4050, %v4153
      %v4155 = vpop.f32.mrb[0].mxu0
      %4156 = vmatprep.mubr.f32.mxu0 0.0
      %v4157 = vand.u32 %v3737, 4294901760
      %v4158 = vsub.f32 %v3737, %v4157
      %v4159 = vand.u32 %v4158, 4294901760
      %4160 = vmatmul.mubr.f32.gmra.mrb[0].mxu0 %v4159
      %v4161 = vpop.f32.mrb[0].mxu0
      %v4162 = vadd.f32 %v4057, %v4161
      %v4163 = vpop.f32.mrb[0].mxu0
      %4164 = vmatprep.mubr.f32.mxu0 0.0
      %v4165 = vand.u32 %v3740, 4294901760
      %v4166 = vsub.f32 %v3740, %v4165
      %v4167 = vand.u32 %v4166, 4294901760
      %4168 = vmatmul.mubr.f32.gmra.mrb[0].mxu0 %v4167
      %v4169 = vpop.f32.mrb[0].mxu0
      %v4170 = vadd.f32 %v4064, %v4169
      %v4171 = vpop.f32.mrb[0].mxu0
      %4172 = vmatprep.mubr.f32.mxu0 0.0
      %v4173 = vand.u32 %v3743, 4294901760
      %v4174 = vsub.f32 %v3743, %v4173
      %v4175 = vand.u32 %v4174, 4294901760
      %4176 = vmatmul.mubr.f32.gmra.mrb[0].mxu0 %v4175
      %v4177 = vpop.f32.mrb[0].mxu0
      %v4178 = vadd.f32 %v4071, %v4177
      %v4179 = vpop.f32.mrb[0].mxu0
      %4180 = vdwg.mxu0
      %4181 = vmatprep.subr.mxu0 0.0
      %v4182 = vand.u32 %v3720, 4294901760
      %v4183 = vsub.f32 %v3720, %v4182
      %v4184 = vand.u32 %v4183, 4294901760
      %4185 = vmatpush1.msra.mxu0 %v4184
      %4186 = vmatprep.subr.mxu0 0.0
      %v4187 = vand.u32 %v3746, 4294901760
      %v4188 = vsub.f32 %v3746, %v4187
      %v4189 = vand.u32 %v4188, 4294901760
      %4190 = vmatpush1.msra.mxu0 %v4189
      %4191 = vmatprep.subr.mxu0 0.0
      %4192 = vmatpush1.msra.mxu0 0.0
      %4193 = vmatprep.subr.mxu0 0.0
      %4194 = vmatpush1.msra.mxu0 0.0
      %4195 = vmatprep.subr.mxu0 0.0
      %4196 = vmatpush1.msra.mxu0 0.0
      %4197 = vmatprep.subr.mxu0 0.0
      %4198 = vmatpush1.msra.mxu0 0.0
      %4199 = vmatprep.subr.mxu0 0.0
      %4200 = vmatpush1.msra.mxu0 0.0
      %4201 = vmatprep.subr.mxu0 0.0
      %4202 = vmatpush1.msra.mxu0 0.0
      %4203 = vmatprep.subr.mxu0 0.0
      %4204 = vmatpush1.msra.mxu0 0.0
      %4205 = vmatprep.subr.mxu0 0.0
      %4206 = vmatpush1.msra.mxu0 0.0
      %4207 = vmatprep.subr.mxu0 0.0
      %4208 = vmatpush1.msra.mxu0 0.0
      %4209 = vmatprep.subr.mxu0 0.0
      %4210 = vmatpush1.msra.mxu0 0.0
      %4211 = vmatprep.subr.mxu0 0.0
      %4212 = vmatpush1.msra.mxu0 0.0
      %4213 = vmatprep.subr.mxu0 0.0
      %4214 = vmatpush1.msra.mxu0 0.0
      %4215 = vmatprep.subr.mxu0 0.0
      %4216 = vmatpush1.msra.mxu0 0.0
      %4217 = vmatprep.subr.mxu0 0.0
      %4218 = vmatpush1.msra.mxu0 0.0
      %4219 = vmatprep.subr.mxu0 0.0
      %4220 = vmatpush1.msra.mxu0 0.0
      %4221 = vmatprep.subr.mxu0 0.0
      %4222 = vmatpush1.msra.mxu0 0.0
      %4223 = vmatprep.subr.mxu0 0.0
      %4224 = vmatpush1.msra.mxu0 0.0
      %4225 = vmatprep.subr.mxu0 0.0
      %4226 = vmatpush1.msra.mxu0 0.0
      %4227 = vmatprep.subr.mxu0 0.0
      %4228 = vmatpush1.msra.mxu0 0.0
      %4229 = vmatprep.subr.mxu0 0.0
      %4230 = vmatpush1.msra.mxu0 0.0
      %4231 = vmatprep.subr.mxu0 0.0
      %4232 = vmatpush1.msra.mxu0 0.0
      %4233 = vmatprep.subr.mxu0 0.0
      %4234 = vmatpush1.msra.mxu0 0.0
      %4235 = vmatprep.subr.mxu0 0.0
      %4236 = vmatpush1.msra.mxu0 0.0
      %4237 = vmatprep.subr.mxu0 0.0
      %4238 = vmatpush1.msra.mxu0 0.0
      %4239 = vmatprep.subr.mxu0 0.0
      %4240 = vmatpush1.msra.mxu0 0.0
      %4241 = vmatprep.subr.mxu0 0.0
      %4242 = vmatpush1.msra.mxu0 0.0
      %4243 = vmatprep.subr.mxu0 0.0
      %4244 = vmatpush1.msra.mxu0 0.0
      %4245 = vmatprep.subr.mxu0 0.0
      %4246 = vmatpush1.msra.mxu0 0.0
      %4247 = vmatprep.subr.mxu0 0.0
      %4248 = vmatpush1.msra.mxu0 0.0
      %4249 = vmatprep.subr.mxu0 0.0
      %4250 = vmatpush1.msra.mxu0 0.0
      %4251 = vmatprep.mubr.f32.mxu0 0.0
      %v4252 = vand.u32 %v3731, 4294901760
      %4253 = vmatmul.mubr.f32.gmra.mrb[0].mxu0 %v4252
      %v4254 = vpop.f32.mrb[0].mxu0
      %v4255 = vadd.f32 %v4146, %v4254
      %v4256 = vpop.f32.mrb[0].mxu0
      %4257 = vmatprep.mubr.f32.mxu0 0.0
      %v4258 = vand.u32 %v3734, 4294901760
      %4259 = vmatmul.mubr.f32.gmra.mrb[0].mxu0 %v4258
      %v4260 = vpop.f32.mrb[0].mxu0
      %v4261 = vadd.f32 %v4154, %v4260
      %v4262 = vpop.f32.mrb[0].mxu0
      %4263 = vmatprep.mubr.f32.mxu0 0.0
      %v4264 = vand.u32 %v3737, 4294901760
      %4265 = vmatmul.mubr.f32.gmra.mrb[0].mxu0 %v4264
      %v4266 = vpop.f32.mrb[0].mxu0
      %v4267 = vadd.f32 %v4162, %v4266
      %v4268 = vpop.f32.mrb[0].mxu0
      %4269 = vmatprep.mubr.f32.mxu0 0.0
      %v4270 = vand.u32 %v3740, 4294901760
      %4271 = vmatmul.mubr.f32.gmra.mrb[0].mxu0 %v4270
      %v4272 = vpop.f32.mrb[0].mxu0
      %v4273 = vadd.f32 %v4170, %v4272
      %v4274 = vpop.f32.mrb[0].mxu0
      %4275 = vmatprep.mubr.f32.mxu0 0.0
      %v4276 = vand.u32 %v3743, 4294901760
      %4277 = vmatmul.mubr.f32.gmra.mrb[0].mxu0 %v4276
      %v4278 = vpop.f32.mrb[0].mxu0
      %v4279 = vadd.f32 %v4178, %v4278
      %v4280 = vpop.f32.mrb[0].mxu0
      %4281 = vdwg.mxu0
      %4282 = vmatprep.subr.mxu0 0.0
      %v4283 = vand.u32 %v3720, 4294901760
      %4284 = vmatpush1.msra.mxu0 %v4283
      %4285 = vmatprep.subr.mxu0 0.0
      %v4286 = vand.u32 %v3746, 4294901760
      %4287 = vmatpush1.msra.mxu0 %v4286
      %4288 = vmatprep.subr.mxu0 0.0
      %4289 = vmatpush1.msra.mxu0 0.0
      %4290 = vmatprep.subr.mxu0 0.0
      %4291 = vmatpush1.msra.mxu0 0.0
      %4292 = vmatprep.subr.mxu0 0.0
      %4293 = vmatpush1.msra.mxu0 0.0
      %4294 = vmatprep.subr.mxu0 0.0
      %4295 = vmatpush1.msra.mxu0 0.0
      %4296 = vmatprep.subr.mxu0 0.0
      %4297 = vmatpush1.msra.mxu0 0.0
      %4298 = vmatprep.subr.mxu0 0.0
      %4299 = vmatpush1.msra.mxu0 0.0
      %4300 = vmatprep.subr.mxu0 0.0
      %4301 = vmatpush1.msra.mxu0 0.0
      %4302 = vmatprep.subr.mxu0 0.0
      %4303 = vmatpush1.msra.mxu0 0.0
      %4304 = vmatprep.subr.mxu0 0.0
      %4305 = vmatpush1.msra.mxu0 0.0
      %4306 = vmatprep.subr.mxu0 0.0
      %4307 = vmatpush1.msra.mxu0 0.0
      %4308 = vmatprep.subr.mxu0 0.0
      %4309 = vmatpush1.msra.mxu0 0.0
      %4310 = vmatprep.subr.mxu0 0.0
      %4311 = vmatpush1.msra.mxu0 0.0
      %4312 = vmatprep.subr.mxu0 0.0
      %4313 = vmatpush1.msra.mxu0 0.0
      %4314 = vmatprep.subr.mxu0 0.0
      %4315 = vmatpush1.msra.mxu0 0.0
      %4316 = vmatprep.subr.mxu0 0.0
      %4317 = vmatpush1.msra.mxu0 0.0
      %4318 = vmatprep.subr.mxu0 0.0
      %4319 = vmatpush1.msra.mxu0 0.0
      %4320 = vmatprep.subr.mxu0 0.0
      %4321 = vmatpush1.msra.mxu0 0.0
      %4322 = vmatprep.subr.mxu0 0.0
      %4323 = vmatpush1.msra.mxu0 0.0
      %4324 = vmatprep.subr.mxu0 0.0
      %4325 = vmatpush1.msra.mxu0 0.0
      %4326 = vmatprep.subr.mxu0 0.0
      %4327 = vmatpush1.msra.mxu0 0.0
      %4328 = vmatprep.subr.mxu0 0.0
      %4329 = vmatpush1.msra.mxu0 0.0
      %4330 = vmatprep.subr.mxu0 0.0
      %4331 = vmatpush1.msra.mxu0 0.0
      %4332 = vmatprep.subr.mxu0 0.0
      %4333 = vmatpush1.msra.mxu0 0.0
      %4334 = vmatprep.subr.mxu0 0.0
      %4335 = vmatpush1.msra.mxu0 0.0
      %4336 = vmatprep.subr.mxu0 0.0
      %4337 = vmatpush1.msra.mxu0 0.0
      %4338 = vmatprep.subr.mxu0 0.0
      %4339 = vmatpush1.msra.mxu0 0.0
      %4340 = vmatprep.subr.mxu0 0.0
      %4341 = vmatpush1.msra.mxu0 0.0
      %4342 = vmatprep.subr.mxu0 0.0
      %4343 = vmatpush1.msra.mxu0 0.0
      %4344 = vmatprep.subr.mxu0 0.0
      %4345 = vmatpush1.msra.mxu0 0.0
      %4346 = vmatprep.subr.mxu0 0.0
      %4347 = vmatpush1.msra.mxu0 0.0
      %4348 = vmatprep.mubr.f32.mxu0 0.0
      %v4349 = vand.u32 %v3731, 4294901760
      %4350 = vmatmul.mubr.f32.gmra.mrb[0].mxu0 %v4349
      %v4351 = vpop.f32.mrb[0].mxu0
      %v4352 = vadd.f32 %v4255, %v4351
      %v4353 = vpop.f32.mrb[0].mxu0
      %4354 = vmatprep.mubr.f32.mxu0 0.0
      %v4355 = vand.u32 %v3734, 4294901760
      %4356 = vmatmul.mubr.f32.gmra.mrb[0].mxu0 %v4355
      %v4357 = vpop.f32.mrb[0].mxu0
      %v4358 = vadd.f32 %v4261, %v4357
      %v4359 = vpop.f32.mrb[0].mxu0
      %4360 = vmatprep.mubr.f32.mxu0 0.0
      %v4361 = vand.u32 %v3737, 4294901760
      %4362 = vmatmul.mubr.f32.gmra.mrb[0].mxu0 %v4361
      %v4363 = vpop.f32.mrb[0].mxu0
      %v4364 = vadd.f32 %v4267, %v4363
      %v4365 = vpop.f32.mrb[0].mxu0
      %4366 = vmatprep.mubr.f32.mxu0 0.0
      %v4367 = vand.u32 %v3740, 4294901760
      %4368 = vmatmul.mubr.f32.gmra.mrb[0].mxu0 %v4367
      %v4369 = vpop.f32.mrb[0].mxu0
      %v4370 = vadd.f32 %v4273, %v4369
      %v4371 = vpop.f32.mrb[0].mxu0
      %4372 = vmatprep.mubr.f32.mxu0 0.0
      %v4373 = vand.u32 %v3743, 4294901760
      %4374 = vmatmul.mubr.f32.gmra.mrb[0].mxu0 %v4373
      %v4375 = vpop.f32.mrb[0].mxu0
      %v4376 = vadd.f32 %v4279, %v4375
      %v4377 = vpop.f32.mrb[0].mxu0
      %4378 = vdwg.mxu0
      %s4379 = scalar_lea.vmem %s3, 16
      %v4380 = vld [vmem:[%s4379] sm:$0xff]
      %v4381 = vld [vmem:[%s4379 + $0x8] sm:$0x7]
      %4383 = vrot.lane.b32.xlu0 %v4352, 117
      %v4384 = vpop.permute.xlu0 %4383
      %v4386 = vmul.f32 %v4352, %v4384
      %v4387 = vsel %vm509, %v4386, 0.0
      %4388 = vadd.xlane.f32.xlu0 %v4387
      %v4389 = vpop.xlane.xlu0 %4388
      %4391 = vrot.lane.b32.xlu0 %v4358, 117
      %v4392 = vpop.permute.xlu0 %4391
      %v4394 = vmul.f32 %v4352, %v4392
      %v4395 = vsel %vm509, %v4394, 0.0
      %4396 = vadd.xlane.f32.xlu0 %v4395
      %v4397 = vpop.xlane.xlu0 %4396
      %4399 = vrot.lane.b32.xlu0 %v4364, 117
      %v4400 = vpop.permute.xlu0 %4399
      %v4402 = vmul.f32 %v4352, %v4400
      %v4403 = vsel %vm509, %v4402, 0.0
      %4404 = vadd.xlane.f32.xlu0 %v4403
      %v4405 = vpop.xlane.xlu0 %4404
      %4407 = vrot.lane.b32.xlu0 %v4370, 117
      %v4408 = vpop.permute.xlu0 %4407
      %v4410 = vmul.f32 %v4352, %v4408
      %v4411 = vsel %vm509, %v4410, 0.0
      %4412 = vadd.xlane.f32.xlu0 %v4411
      %v4413 = vpop.xlane.xlu0 %4412
      %4415 = vrot.lane.b32.xlu0 %v4376, 117
      %v4416 = vpop.permute.xlu0 %4415
      %v4418 = vmul.f32 %v4352, %v4416
      %v4419 = vsel %vm509, %v4418, 0.0
      %4420 = vadd.xlane.f32.xlu0 %v4419
      %v4421 = vpop.xlane.xlu0 %4420
      %v4422 = vsel %vm1202, %v4389, %v4397
      %v4423 = vsel %vm1204, %v4422, %v4405
      %v4424 = vsel %vm1206, %v4423, %v4413
      %v4425 = vsel %vm1208, %v4424, %v4421
      %v4426 = vmul.f32 %v4425, 0.30151135
      %v4427 = vsel %vm1211, %v4426, -inf
      %4428 = vmax.xlane.f32.xlu0 %v4427
      %v4429 = vpop.xlane.xlu0 %4428
      %v4430 = vsub.f32 %v4426, %v4429
      %v4431 = vmul.f32 %v4430, 1.442695
      %v4432 = vpow.pop %v4431
      %v4433 = vsel %vm1211, %v4432, 0.0
      %4434 = vadd.xlane.f32.xlu0 %v4433
      %v4435 = vpop.xlane.xlu0 %4434
      %v4436 = vrcp.pop %v4435
      %v4437 = vmul.f32 %v4432, %v4436
      %4439 = vset.pattern.permute.xlu0 0
      %4440 = vperm.xlu0 %4439, %v4437
      %v4441 = vpop.permute.xlu0 %4440
      %v4443 = vmul.f32 %v4441, %v4352
      %4444 = vset.pattern.permute.xlu0 1
      %4445 = vperm.xlu0 %4444, %v4437
      %v4446 = vpop.permute.xlu0 %4445
      %v4448 = vmul.f32 %v4446, %v4358
      %v4449 = vadd.f32 %v4443, %v4448
      %4450 = vset.pattern.permute.xlu0 2
      %4451 = vperm.xlu0 %4450, %v4437
      %v4452 = vpop.permute.xlu0 %4451
      %v4454 = vmul.f32 %v4452, %v4364
      %v4455 = vadd.f32 %v4449, %v4454
      %4456 = vset.pattern.permute.xlu0 3
      %4457 = vperm.xlu0 %4456, %v4437
      %v4458 = vpop.permute.xlu0 %4457
      %v4460 = vmul.f32 %v4458, %v4370
      %v4461 = vadd.f32 %v4455, %v4460
      %4462 = vset.pattern.permute.xlu0 4
      %4463 = vperm.xlu0 %4462, %v4437
      %v4464 = vpop.permute.xlu0 %4463
      %v4466 = vmul.f32 %v4464, %v4376
      %v4467 = vadd.f32 %v4461, %v4466
      %v4468 = vmul.f32 %v4358, %v4384
      %v4469 = vsel %vm509, %v4468, 0.0
      %4470 = vadd.xlane.f32.xlu0 %v4469
      %v4471 = vpop.xlane.xlu0 %4470
      %v4472 = vmul.f32 %v4358, %v4392
      %v4473 = vsel %vm509, %v4472, 0.0
      %4474 = vadd.xlane.f32.xlu0 %v4473
      %v4475 = vpop.xlane.xlu0 %4474
      %v4476 = vmul.f32 %v4358, %v4400
      %v4477 = vsel %vm509, %v4476, 0.0
      %4478 = vadd.xlane.f32.xlu0 %v4477
      %v4479 = vpop.xlane.xlu0 %4478
      %v4480 = vmul.f32 %v4358, %v4408
      %v4481 = vsel %vm509, %v4480, 0.0
      %4482 = vadd.xlane.f32.xlu0 %v4481
      %v4483 = vpop.xlane.xlu0 %4482
      %v4484 = vmul.f32 %v4358, %v4416
      %v4485 = vsel %vm509, %v4484, 0.0
      %4486 = vadd.xlane.f32.xlu0 %v4485
      %v4487 = vpop.xlane.xlu0 %4486
      %v4488 = vsel %vm1202, %v4471, %v4475
      %v4489 = vsel %vm1204, %v4488, %v4479
      %v4490 = vsel %vm1206, %v4489, %v4483
      %v4491 = vsel %vm1208, %v4490, %v4487
      %v4492 = vmul.f32 %v4491, 0.30151135
      %v4493 = vsel %vm1211, %v4492, -inf
      %4494 = vmax.xlane.f32.xlu0 %v4493
      %v4495 = vpop.xlane.xlu0 %4494
      %v4496 = vsub.f32 %v4492, %v4495
      %v4497 = vmul.f32 %v4496, 1.442695
      %v4498 = vpow.pop %v4497
      %v4499 = vsel %vm1211, %v4498, 0.0
      %4500 = vadd.xlane.f32.xlu0 %v4499
      %v4501 = vpop.xlane.xlu0 %4500
      %v4502 = vrcp.pop %v4501
      %v4503 = vmul.f32 %v4498, %v4502
      %4505 = vset.pattern.permute.xlu0 0
      %4506 = vperm.xlu0 %4505, %v4503
      %v4507 = vpop.permute.xlu0 %4506
      %v4509 = vmul.f32 %v4507, %v4352
      %4510 = vset.pattern.permute.xlu0 1
      %4511 = vperm.xlu0 %4510, %v4503
      %v4512 = vpop.permute.xlu0 %4511
      %v4514 = vmul.f32 %v4512, %v4358
      %v4515 = vadd.f32 %v4509, %v4514
      %4516 = vset.pattern.permute.xlu0 2
      %4517 = vperm.xlu0 %4516, %v4503
      %v4518 = vpop.permute.xlu0 %4517
      %v4520 = vmul.f32 %v4518, %v4364
      %v4521 = vadd.f32 %v4515, %v4520
      %4522 = vset.pattern.permute.xlu0 3
      %4523 = vperm.xlu0 %4522, %v4503
      %v4524 = vpop.permute.xlu0 %4523
      %v4526 = vmul.f32 %v4524, %v4370
      %v4527 = vadd.f32 %v4521, %v4526
      %4528 = vset.pattern.permute.xlu0 4
      %4529 = vperm.xlu0 %4528, %v4503
      %v4530 = vpop.permute.xlu0 %4529
      %v4532 = vmul.f32 %v4530, %v4376
      %v4533 = vadd.f32 %v4527, %v4532
      %v4534 = vmul.f32 %v4364, %v4384
      %v4535 = vsel %vm509, %v4534, 0.0
      %4536 = vadd.xlane.f32.xlu0 %v4535
      %v4537 = vpop.xlane.xlu0 %4536
      %v4538 = vmul.f32 %v4364, %v4392
      %v4539 = vsel %vm509, %v4538, 0.0
      %4540 = vadd.xlane.f32.xlu0 %v4539
      %v4541 = vpop.xlane.xlu0 %4540
      %v4542 = vmul.f32 %v4364, %v4400
      %v4543 = vsel %vm509, %v4542, 0.0
      %4544 = vadd.xlane.f32.xlu0 %v4543
      %v4545 = vpop.xlane.xlu0 %4544
      %v4546 = vmul.f32 %v4364, %v4408
      %v4547 = vsel %vm509, %v4546, 0.0
      %4548 = vadd.xlane.f32.xlu0 %v4547
      %v4549 = vpop.xlane.xlu0 %4548
      %v4550 = vmul.f32 %v4364, %v4416
      %v4551 = vsel %vm509, %v4550, 0.0
      %4552 = vadd.xlane.f32.xlu0 %v4551
      %v4553 = vpop.xlane.xlu0 %4552
      %v4554 = vsel %vm1202, %v4537, %v4541
      %v4555 = vsel %vm1204, %v4554, %v4545
      %v4556 = vsel %vm1206, %v4555, %v4549
      %v4557 = vsel %vm1208, %v4556, %v4553
      %v4558 = vmul.f32 %v4557, 0.30151135
      %v4559 = vsel %vm1211, %v4558, -inf
      %4560 = vmax.xlane.f32.xlu0 %v4559
      %v4561 = vpop.xlane.xlu0 %4560
      %v4562 = vsub.f32 %v4558, %v4561
      %v4563 = vmul.f32 %v4562, 1.442695
      %v4564 = vpow.pop %v4563
      %v4565 = vsel %vm1211, %v4564, 0.0
      %4566 = vadd.xlane.f32.xlu0 %v4565
      %v4567 = vpop.xlane.xlu0 %4566
      %v4568 = vrcp.pop %v4567
      %v4569 = vmul.f32 %v4564, %v4568
      %4571 = vset.pattern.permute.xlu0 0
      %4572 = vperm.xlu0 %4571, %v4569
      %v4573 = vpop.permute.xlu0 %4572
      %v4575 = vmul.f32 %v4573, %v4352
      %4576 = vset.pattern.permute.xlu0 1
      %4577 = vperm.xlu0 %4576, %v4569
      %v4578 = vpop.permute.xlu0 %4577
      %v4580 = vmul.f32 %v4578, %v4358
      %v4581 = vadd.f32 %v4575, %v4580
      %4582 = vset.pattern.permute.xlu0 2
      %4583 = vperm.xlu0 %4582, %v4569
      %v4584 = vpop.permute.xlu0 %4583
      %v4586 = vmul.f32 %v4584, %v4364
      %v4587 = vadd.f32 %v4581, %v4586
      %4588 = vset.pattern.permute.xlu0 3
      %4589 = vperm.xlu0 %4588, %v4569
      %v4590 = vpop.permute.xlu0 %4589
      %v4592 = vmul.f32 %v4590, %v4370
      %v4593 = vadd.f32 %v4587, %v4592
      %4594 = vset.pattern.permute.xlu0 4
      %4595 = vperm.xlu0 %4594, %v4569
      %v4596 = vpop.permute.xlu0 %4595
      %v4598 = vmul.f32 %v4596, %v4376
      %v4599 = vadd.f32 %v4593, %v4598
      %v4600 = vmul.f32 %v4370, %v4384
      %v4601 = vsel %vm509, %v4600, 0.0
      %4602 = vadd.xlane.f32.xlu0 %v4601
      %v4603 = vpop.xlane.xlu0 %4602
      %v4604 = vmul.f32 %v4370, %v4392
      %v4605 = vsel %vm509, %v4604, 0.0
      %4606 = vadd.xlane.f32.xlu0 %v4605
      %v4607 = vpop.xlane.xlu0 %4606
      %v4608 = vmul.f32 %v4370, %v4400
      %v4609 = vsel %vm509, %v4608, 0.0
      %4610 = vadd.xlane.f32.xlu0 %v4609
      %v4611 = vpop.xlane.xlu0 %4610
      %v4612 = vmul.f32 %v4370, %v4408
      %v4613 = vsel %vm509, %v4612, 0.0
      %4614 = vadd.xlane.f32.xlu0 %v4613
      %v4615 = vpop.xlane.xlu0 %4614
      %v4616 = vmul.f32 %v4370, %v4416
      %v4617 = vsel %vm509, %v4616, 0.0
      %4618 = vadd.xlane.f32.xlu0 %v4617
      %v4619 = vpop.xlane.xlu0 %4618
      %v4620 = vsel %vm1202, %v4603, %v4607
      %v4621 = vsel %vm1204, %v4620, %v4611
      %v4622 = vsel %vm1206, %v4621, %v4615
      %v4623 = vsel %vm1208, %v4622, %v4619
      %v4624 = vmul.f32 %v4623, 0.30151135
      %v4625 = vsel %vm1211, %v4624, -inf
      %4626 = vmax.xlane.f32.xlu0 %v4625
      %v4627 = vpop.xlane.xlu0 %4626
      %v4628 = vsub.f32 %v4624, %v4627
      %v4629 = vmul.f32 %v4628, 1.442695
      %v4630 = vpow.pop %v4629
      %v4631 = vsel %vm1211, %v4630, 0.0
      %4632 = vadd.xlane.f32.xlu0 %v4631
      %v4633 = vpop.xlane.xlu0 %4632
      %v4634 = vrcp.pop %v4633
      %v4635 = vmul.f32 %v4630, %v4634
      %4637 = vset.pattern.permute.xlu0 0
      %4638 = vperm.xlu0 %4637, %v4635
      %v4639 = vpop.permute.xlu0 %4638
      %v4641 = vmul.f32 %v4639, %v4352
      %4642 = vset.pattern.permute.xlu0 1
      %4643 = vperm.xlu0 %4642, %v4635
      %v4644 = vpop.permute.xlu0 %4643
      %v4646 = vmul.f32 %v4644, %v4358
      %v4647 = vadd.f32 %v4641, %v4646
      %4648 = vset.pattern.permute.xlu0 2
      %4649 = vperm.xlu0 %4648, %v4635
      %v4650 = vpop.permute.xlu0 %4649
      %v4652 = vmul.f32 %v4650, %v4364
      %v4653 = vadd.f32 %v4647, %v4652
      %4654 = vset.pattern.permute.xlu0 3
      %4655 = vperm.xlu0 %4654, %v4635
      %v4656 = vpop.permute.xlu0 %4655
      %v4658 = vmul.f32 %v4656, %v4370
      %v4659 = vadd.f32 %v4653, %v4658
      %4660 = vset.pattern.permute.xlu0 4
      %4661 = vperm.xlu0 %4660, %v4635
      %v4662 = vpop.permute.xlu0 %4661
      %v4664 = vmul.f32 %v4662, %v4376
      %v4665 = vadd.f32 %v4659, %v4664
      %v4666 = vmul.f32 %v4376, %v4384
      %v4667 = vsel %vm509, %v4666, 0.0
      %4668 = vadd.xlane.f32.xlu0 %v4667
      %v4669 = vpop.xlane.xlu0 %4668
      %v4670 = vmul.f32 %v4376, %v4392
      %v4671 = vsel %vm509, %v4670, 0.0
      %4672 = vadd.xlane.f32.xlu0 %v4671
      %v4673 = vpop.xlane.xlu0 %4672
      %v4674 = vmul.f32 %v4376, %v4400
      %v4675 = vsel %vm509, %v4674, 0.0
      %4676 = vadd.xlane.f32.xlu0 %v4675
      %v4677 = vpop.xlane.xlu0 %4676
      %v4678 = vmul.f32 %v4376, %v4408
      %v4679 = vsel %vm509, %v4678, 0.0
      %4680 = vadd.xlane.f32.xlu0 %v4679
      %v4681 = vpop.xlane.xlu0 %4680
      %v4682 = vmul.f32 %v4376, %v4416
      %v4683 = vsel %vm509, %v4682, 0.0
      %4684 = vadd.xlane.f32.xlu0 %v4683
      %v4685 = vpop.xlane.xlu0 %4684
      %v4686 = vsel %vm1202, %v4669, %v4673
      %v4687 = vsel %vm1204, %v4686, %v4677
      %v4688 = vsel %vm1206, %v4687, %v4681
      %v4689 = vsel %vm1208, %v4688, %v4685
      %v4690 = vmul.f32 %v4689, 0.30151135
      %v4691 = vsel %vm1211, %v4690, -inf
      %4692 = vmax.xlane.f32.xlu0 %v4691
      %v4693 = vpop.xlane.xlu0 %4692
      %v4694 = vsub.f32 %v4690, %v4693
      %v4695 = vmul.f32 %v4694, 1.442695
      %v4696 = vpow.pop %v4695
      %v4697 = vsel %vm1211, %v4696, 0.0
      %4698 = vadd.xlane.f32.xlu0 %v4697
      %v4699 = vpop.xlane.xlu0 %4698
      %v4700 = vrcp.pop %v4699
      %v4701 = vmul.f32 %v4696, %v4700
      %4703 = vset.pattern.permute.xlu0 0
      %4704 = vperm.xlu0 %4703, %v4701
      %v4705 = vpop.permute.xlu0 %4704
      %v4707 = vmul.f32 %v4705, %v4352
      %4708 = vset.pattern.permute.xlu0 1
      %4709 = vperm.xlu0 %4708, %v4701
      %v4710 = vpop.permute.xlu0 %4709
      %v4712 = vmul.f32 %v4710, %v4358
      %v4713 = vadd.f32 %v4707, %v4712
      %4714 = vset.pattern.permute.xlu0 2
      %4715 = vperm.xlu0 %4714, %v4701
      %v4716 = vpop.permute.xlu0 %4715
      %v4718 = vmul.f32 %v4716, %v4364
      %v4719 = vadd.f32 %v4713, %v4718
      %4720 = vset.pattern.permute.xlu0 3
      %4721 = vperm.xlu0 %4720, %v4701
      %v4722 = vpop.permute.xlu0 %4721
      %v4724 = vmul.f32 %v4722, %v4370
      %v4725 = vadd.f32 %v4719, %v4724
      %4726 = vset.pattern.permute.xlu0 4
      %4727 = vperm.xlu0 %4726, %v4701
      %v4728 = vpop.permute.xlu0 %4727
      %v4730 = vmul.f32 %v4728, %v4376
      %v4731 = vadd.f32 %v4725, %v4730
      %s4732 = scalar_lea.vmem %s4, 1
      %v4733 = vld [vmem:[%s4732] sm:$0x1]
      %v4735 = vlaneseq
      %v4736 = vshrl.u32 %v4735, 7
      %v4737 = vsub.s32 0, %v4736
      %v4738 = vrot.slane %v4733, %v4737
      %4745 = vrot.lane.b32.xlu0 %v4467, 106
      %v4746 = vpop.permute.xlu0 %4745
      %4747 = vrot.lane.b32.xlu0 %v4533, 106
      %v4748 = vpop.permute.xlu0 %4747
      %4749 = vrot.lane.b32.xlu0 %v4599, 106
      %v4750 = vpop.permute.xlu0 %4749
      %4751 = vrot.lane.b32.xlu0 %v4665, 106
      %v4752 = vpop.permute.xlu0 %4751
      %4753 = vrot.lane.b32.xlu0 %v4731, 106
      %v4754 = vpop.permute.xlu0 %4753
      %v4755 = vsel %vm509, %v4746, 0
      %v4757 = vsel %vm509, %v4748, 0
      %v4759 = vsel %vm509, %v4750, 0
      %v4761 = vsel %vm509, %v4752, 0
      %v4763 = vsel %vm509, %v4754, 0
      %v4766 = vsel %vm525, %v4381, 0
      %4768 = vmatprep.subr.mxu0 0.0
      %v4769 = vand.u32 %v4380, 4294901760
      %4770 = vmatpush1.msra.mxu0 %v4769
      %4771 = vmatprep.subr.mxu0 0.0
      %v4772 = vand.u32 %v4766, 4294901760
      %4773 = vmatpush1.msra.mxu0 %v4772
      %4774 = vmatprep.subr.mxu0 0.0
      %4775 = vmatpush1.msra.mxu0 0.0
      %4776 = vmatprep.subr.mxu0 0.0
      %4777 = vmatpush1.msra.mxu0 0.0
      %4778 = vmatprep.subr.mxu0 0.0
      %4779 = vmatpush1.msra.mxu0 0.0
      %4780 = vmatprep.subr.mxu0 0.0
      %4781 = vmatpush1.msra.mxu0 0.0
      %4782 = vmatprep.subr.mxu0 0.0
      %4783 = vmatpush1.msra.mxu0 0.0
      %4784 = vmatprep.subr.mxu0 0.0
      %4785 = vmatpush1.msra.mxu0 0.0
      %4786 = vmatprep.subr.mxu0 0.0
      %4787 = vmatpush1.msra.mxu0 0.0
      %4788 = vmatprep.subr.mxu0 0.0
      %4789 = vmatpush1.msra.mxu0 0.0
      %4790 = vmatprep.subr.mxu0 0.0
      %4791 = vmatpush1.msra.mxu0 0.0
      %4792 = vmatprep.subr.mxu0 0.0
      %4793 = vmatpush1.msra.mxu0 0.0
      %4794 = vmatprep.subr.mxu0 0.0
      %4795 = vmatpush1.msra.mxu0 0.0
      %4796 = vmatprep.subr.mxu0 0.0
      %4797 = vmatpush1.msra.mxu0 0.0
      %4798 = vmatprep.subr.mxu0 0.0
      %4799 = vmatpush1.msra.mxu0 0.0
      %4800 = vmatprep.subr.mxu0 0.0
      %4801 = vmatpush1.msra.mxu0 0.0
      %4802 = vmatprep.subr.mxu0 0.0
      %4803 = vmatpush1.msra.mxu0 0.0
      %4804 = vmatprep.subr.mxu0 0.0
      %4805 = vmatpush1.msra.mxu0 0.0
      %4806 = vmatprep.subr.mxu0 0.0
      %4807 = vmatpush1.msra.mxu0 0.0
      %4808 = vmatprep.subr.mxu0 0.0
      %4809 = vmatpush1.msra.mxu0 0.0
      %4810 = vmatprep.subr.mxu0 0.0
      %4811 = vmatpush1.msra.mxu0 0.0
      %4812 = vmatprep.subr.mxu0 0.0
      %4813 = vmatpush1.msra.mxu0 0.0
      %4814 = vmatprep.subr.mxu0 0.0
      %4815 = vmatpush1.msra.mxu0 0.0
      %4816 = vmatprep.subr.mxu0 0.0
      %4817 = vmatpush1.msra.mxu0 0.0
      %4818 = vmatprep.subr.mxu0 0.0
      %4819 = vmatpush1.msra.mxu0 0.0
      %4820 = vmatprep.subr.mxu0 0.0
      %4821 = vmatpush1.msra.mxu0 0.0
      %4822 = vmatprep.subr.mxu0 0.0
      %4823 = vmatpush1.msra.mxu0 0.0
      %4824 = vmatprep.subr.mxu0 0.0
      %4825 = vmatpush1.msra.mxu0 0.0
      %4826 = vmatprep.subr.mxu0 0.0
      %4827 = vmatpush1.msra.mxu0 0.0
      %4828 = vmatprep.subr.mxu0 0.0
      %4829 = vmatpush1.msra.mxu0 0.0
      %4830 = vmatprep.subr.mxu0 0.0
      %4831 = vmatpush1.msra.mxu0 0.0
      %4832 = vmatprep.subr.mxu0 0.0
      %4833 = vmatpush1.msra.mxu0 0.0
      %4834 = vmatprep.mubr.f32.mxu0 0.0
      %v4835 = vand.u32 %v4755, 4294901760
      %v4836 = vsub.f32 %v4755, %v4835
      %v4837 = vand.u32 %v4836, 4294901760
      %v4838 = vsub.f32 %v4836, %v4837
      %v4839 = vand.u32 %v4838, 4294901760
      %4840 = vmatmul.mubr.f32.gmra.mrb[0].mxu0 %v4839
      %v4841 = vpop.f32.mrb[0].mxu0
      %v4842 = vadd.f32 %v4738, %v4841
      %v4843 = vpop.f32.mrb[0].mxu0
      %4844 = vmatprep.mubr.f32.mxu0 0.0
      %v4845 = vand.u32 %v4757, 4294901760
      %v4846 = vsub.f32 %v4757, %v4845
      %v4847 = vand.u32 %v4846, 4294901760
      %v4848 = vsub.f32 %v4846, %v4847
      %v4849 = vand.u32 %v4848, 4294901760
      %4850 = vmatmul.mubr.f32.gmra.mrb[0].mxu0 %v4849
      %v4851 = vpop.f32.mrb[0].mxu0
      %v4852 = vadd.f32 %v4738, %v4851
      %v4853 = vpop.f32.mrb[0].mxu0
      %4854 = vmatprep.mubr.f32.mxu0 0.0
      %v4855 = vand.u32 %v4759, 4294901760
      %v4856 = vsub.f32 %v4759, %v4855
      %v4857 = vand.u32 %v4856, 4294901760
      %v4858 = vsub.f32 %v4856, %v4857
      %v4859 = vand.u32 %v4858, 4294901760
      %4860 = vmatmul.mubr.f32.gmra.mrb[0].mxu0 %v4859
      %v4861 = vpop.f32.mrb[0].mxu0
      %v4862 = vadd.f32 %v4738, %v4861
      %v4863 = vpop.f32.mrb[0].mxu0
      %4864 = vmatprep.mubr.f32.mxu0 0.0
      %v4865 = vand.u32 %v4761, 4294901760
      %v4866 = vsub.f32 %v4761, %v4865
      %v4867 = vand.u32 %v4866, 4294901760
      %v4868 = vsub.f32 %v4866, %v4867
      %v4869 = vand.u32 %v4868, 4294901760
      %4870 = vmatmul.mubr.f32.gmra.mrb[0].mxu0 %v4869
      %v4871 = vpop.f32.mrb[0].mxu0
      %v4872 = vadd.f32 %v4738, %v4871
      %v4873 = vpop.f32.mrb[0].mxu0
      %4874 = vmatprep.mubr.f32.mxu0 0.0
      %v4875 = vand.u32 %v4763, 4294901760
      %v4876 = vsub.f32 %v4763, %v4875
      %v4877 = vand.u32 %v4876, 4294901760
      %v4878 = vsub.f32 %v4876, %v4877
      %v4879 = vand.u32 %v4878, 4294901760
      %4880 = vmatmul.mubr.f32.gmra.mrb[0].mxu0 %v4879
      %v4881 = vpop.f32.mrb[0].mxu0
      %v4882 = vadd.f32 %v4738, %v4881
      %v4883 = vpop.f32.mrb[0].mxu0
      %4884 = vdwg.mxu0
      %4885 = vmatprep.subr.mxu0 0.0
      %v4886 = vand.u32 %v4380, 4294901760
      %v4887 = vsub.f32 %v4380, %v4886
      %v4888 = vand.u32 %v4887, 4294901760
      %v4889 = vsub.f32 %v4887, %v4888
      %v4890 = vand.u32 %v4889, 4294901760
      %4891 = vmatpush1.msra.mxu0 %v4890
      %4892 = vmatprep.subr.mxu0 0.0
      %v4893 = vand.u32 %v4766, 4294901760
      %v4894 = vsub.f32 %v4766, %v4893
      %v4895 = vand.u32 %v4894, 4294901760
      %v4896 = vsub.f32 %v4894, %v4895
      %v4897 = vand.u32 %v4896, 4294901760
      %4898 = vmatpush1.msra.mxu0 %v4897
      %4899 = vmatprep.subr.mxu0 0.0
      %4900 = vmatpush1.msra.mxu0 0.0
      %4901 = vmatprep.subr.mxu0 0.0
      %4902 = vmatpush1.msra.mxu0 0.0
      %4903 = vmatprep.subr.mxu0 0.0
      %4904 = vmatpush1.msra.mxu0 0.0
      %4905 = vmatprep.subr.mxu0 0.0
      %4906 = vmatpush1.msra.mxu0 0.0
      %4907 = vmatprep.subr.mxu0 0.0
      %4908 = vmatpush1.msra.mxu0 0.0
      %4909 = vmatprep.subr.mxu0 0.0
      %4910 = vmatpush1.msra.mxu0 0.0
      %4911 = vmatprep.subr.mxu0 0.0
      %4912 = vmatpush1.msra.mxu0 0.0
      %4913 = vmatprep.subr.mxu0 0.0
      %4914 = vmatpush1.msra.mxu0 0.0
      %4915 = vmatprep.subr.mxu0 0.0
      %4916 = vmatpush1.msra.mxu0 0.0
      %4917 = vmatprep.subr.mxu0 0.0
      %4918 = vmatpush1.msra.mxu0 0.0
      %4919 = vmatprep.subr.mxu0 0.0
      %4920 = vmatpush1.msra.mxu0 0.0
      %4921 = vmatprep.subr.mxu0 0.0
      %4922 = vmatpush1.msra.mxu0 0.0
      %4923 = vmatprep.subr.mxu0 0.0
      %4924 = vmatpush1.msra.mxu0 0.0
      %4925 = vmatprep.subr.mxu0 0.0
      %4926 = vmatpush1.msra.mxu0 0.0
      %4927 = vmatprep.subr.mxu0 0.0
      %4928 = vmatpush1.msra.mxu0 0.0
      %4929 = vmatprep.subr.mxu0 0.0
      %4930 = vmatpush1.msra.mxu0 0.0
      %4931 = vmatprep.subr.mxu0 0.0
      %4932 = vmatpush1.msra.mxu0 0.0
      %4933 = vmatprep.subr.mxu0 0.0
      %4934 = vmatpush1.msra.mxu0 0.0
      %4935 = vmatprep.subr.mxu0 0.0
      %4936 = vmatpush1.msra.mxu0 0.0
      %4937 = vmatprep.subr.mxu0 0.0
      %4938 = vmatpush1.msra.mxu0 0.0
      %4939 = vmatprep.subr.mxu0 0.0
      %4940 = vmatpush1.msra.mxu0 0.0
      %4941 = vmatprep.subr.mxu0 0.0
      %4942 = vmatpush1.msra.mxu0 0.0
      %4943 = vmatprep.subr.mxu0 0.0
      %4944 = vmatpush1.msra.mxu0 0.0
      %4945 = vmatprep.subr.mxu0 0.0
      %4946 = vmatpush1.msra.mxu0 0.0
      %4947 = vmatprep.subr.mxu0 0.0
      %4948 = vmatpush1.msra.mxu0 0.0
      %4949 = vmatprep.subr.mxu0 0.0
      %4950 = vmatpush1.msra.mxu0 0.0
      %4951 = vmatprep.subr.mxu0 0.0
      %4952 = vmatpush1.msra.mxu0 0.0
      %4953 = vmatprep.subr.mxu0 0.0
      %4954 = vmatpush1.msra.mxu0 0.0
      %4955 = vmatprep.subr.mxu0 0.0
      %4956 = vmatpush1.msra.mxu0 0.0
      %4957 = vmatprep.subr.mxu0 0.0
      %4958 = vmatpush1.msra.mxu0 0.0
      %4959 = vmatprep.mubr.f32.mxu0 0.0
      %v4960 = vand.u32 %v4755, 4294901760
      %4961 = vmatmul.mubr.f32.gmra.mrb[0].mxu0 %v4960
      %v4962 = vpop.f32.mrb[0].mxu0
      %v4963 = vadd.f32 %v4842, %v4962
      %v4964 = vpop.f32.mrb[0].mxu0
      %4965 = vmatprep.mubr.f32.mxu0 0.0
      %v4966 = vand.u32 %v4757, 4294901760
      %4967 = vmatmul.mubr.f32.gmra.mrb[0].mxu0 %v4966
      %v4968 = vpop.f32.mrb[0].mxu0
      %v4969 = vadd.f32 %v4852, %v4968
      %v4970 = vpop.f32.mrb[0].mxu0
      %4971 = vmatprep.mubr.f32.mxu0 0.0
      %v4972 = vand.u32 %v4759, 4294901760
      %4973 = vmatmul.mubr.f32.gmra.mrb[0].mxu0 %v4972
      %v4974 = vpop.f32.mrb[0].mxu0
      %v4975 = vadd.f32 %v4862, %v4974
      %v4976 = vpop.f32.mrb[0].mxu0
      %4977 = vmatprep.mubr.f32.mxu0 0.0
      %v4978 = vand.u32 %v4761, 4294901760
      %4979 = vmatmul.mubr.f32.gmra.mrb[0].mxu0 %v4978
      %v4980 = vpop.f32.mrb[0].mxu0
      %v4981 = vadd.f32 %v4872, %v4980
      %v4982 = vpop.f32.mrb[0].mxu0
      %4983 = vmatprep.mubr.f32.mxu0 0.0
      %v4984 = vand.u32 %v4763, 4294901760
      %4985 = vmatmul.mubr.f32.gmra.mrb[0].mxu0 %v4984
      %v4986 = vpop.f32.mrb[0].mxu0
      %v4987 = vadd.f32 %v4882, %v4986
      %v4988 = vpop.f32.mrb[0].mxu0
      %4989 = vdwg.mxu0
      %4990 = vmatprep.subr.mxu0 0.0
      %v4991 = vand.u32 %v4380, 4294901760
      %v4992 = vsub.f32 %v4380, %v4991
      %4993 = vmatpush1.msra.mxu0 %v4992
      %4994 = vmatprep.subr.mxu0 0.0
      %v4995 = vand.u32 %v4766, 4294901760
      %v4996 = vsub.f32 %v4766, %v4995
      %4997 = vmatpush1.msra.mxu0 %v4996
      %4998 = vmatprep.subr.mxu0 0.0
      %4999 = vmatpush1.msra.mxu0 0.0
      %5000 = vmatprep.subr.mxu0 0.0
      %5001 = vmatpush1.msra.mxu0 0.0
      %5002 = vmatprep.subr.mxu0 0.0
      %5003 = vmatpush1.msra.mxu0 0.0
      %5004 = vmatprep.subr.mxu0 0.0
      %5005 = vmatpush1.msra.mxu0 0.0
      %5006 = vmatprep.subr.mxu0 0.0
      %5007 = vmatpush1.msra.mxu0 0.0
      %5008 = vmatprep.subr.mxu0 0.0
      %5009 = vmatpush1.msra.mxu0 0.0
      %5010 = vmatprep.subr.mxu0 0.0
      %5011 = vmatpush1.msra.mxu0 0.0
      %5012 = vmatprep.subr.mxu0 0.0
      %5013 = vmatpush1.msra.mxu0 0.0
      %5014 = vmatprep.subr.mxu0 0.0
      %5015 = vmatpush1.msra.mxu0 0.0
      %5016 = vmatprep.subr.mxu0 0.0
      %5017 = vmatpush1.msra.mxu0 0.0
      %5018 = vmatprep.subr.mxu0 0.0
      %5019 = vmatpush1.msra.mxu0 0.0
      %5020 = vmatprep.subr.mxu0 0.0
      %5021 = vmatpush1.msra.mxu0 0.0
      %5022 = vmatprep.subr.mxu0 0.0
      %5023 = vmatpush1.msra.mxu0 0.0
      %5024 = vmatprep.subr.mxu0 0.0
      %5025 = vmatpush1.msra.mxu0 0.0
      %5026 = vmatprep.subr.mxu0 0.0
      %5027 = vmatpush1.msra.mxu0 0.0
      %5028 = vmatprep.subr.mxu0 0.0
      %5029 = vmatpush1.msra.mxu0 0.0
      %5030 = vmatprep.subr.mxu0 0.0
      %5031 = vmatpush1.msra.mxu0 0.0
      %5032 = vmatprep.subr.mxu0 0.0
      %5033 = vmatpush1.msra.mxu0 0.0
      %5034 = vmatprep.subr.mxu0 0.0
      %5035 = vmatpush1.msra.mxu0 0.0
      %5036 = vmatprep.subr.mxu0 0.0
      %5037 = vmatpush1.msra.mxu0 0.0
      %5038 = vmatprep.subr.mxu0 0.0
      %5039 = vmatpush1.msra.mxu0 0.0
      %5040 = vmatprep.subr.mxu0 0.0
      %5041 = vmatpush1.msra.mxu0 0.0
      %5042 = vmatprep.subr.mxu0 0.0
      %5043 = vmatpush1.msra.mxu0 0.0
      %5044 = vmatprep.subr.mxu0 0.0
      %5045 = vmatpush1.msra.mxu0 0.0
      %5046 = vmatprep.subr.mxu0 0.0
      %5047 = vmatpush1.msra.mxu0 0.0
      %5048 = vmatprep.subr.mxu0 0.0
      %5049 = vmatpush1.msra.mxu0 0.0
      %5050 = vmatprep.subr.mxu0 0.0
      %5051 = vmatpush1.msra.mxu0 0.0
      %5052 = vmatprep.subr.mxu0 0.0
      %5053 = vmatpush1.msra.mxu0 0.0
      %5054 = vmatprep.subr.mxu0 0.0
      %5055 = vmatpush1.msra.mxu0 0.0
      %5056 = vmatprep.subr.mxu0 0.0
      %5057 = vmatpush1.msra.mxu0 0.0
      %5058 = vmatprep.mubr.f32.mxu0 0.0
      %v5059 = vand.u32 %v4755, 4294901760
      %v5060 = vsub.f32 %v4755, %v5059
      %5061 = vmatmul.mubr.f32.gmra.mrb[0].mxu0 %v5060
      %v5062 = vpop.f32.mrb[0].mxu0
      %v5063 = vadd.f32 %v4963, %v5062
      %v5064 = vpop.f32.mrb[0].mxu0
      %5065 = vmatprep.mubr.f32.mxu0 0.0
      %v5066 = vand.u32 %v4757, 4294901760
      %v5067 = vsub.f32 %v4757, %v5066
      %5068 = vmatmul.mubr.f32.gmra.mrb[0].mxu0 %v5067
      %v5069 = vpop.f32.mrb[0].mxu0
      %v5070 = vadd.f32 %v4969, %v5069
      %v5071 = vpop.f32.mrb[0].mxu0
      %5072 = vmatprep.mubr.f32.mxu0 0.0
      %v5073 = vand.u32 %v4759, 4294901760
      %v5074 = vsub.f32 %v4759, %v5073
      %5075 = vmatmul.mubr.f32.gmra.mrb[0].mxu0 %v5074
      %v5076 = vpop.f32.mrb[0].mxu0
      %v5077 = vadd.f32 %v4975, %v5076
      %v5078 = vpop.f32.mrb[0].mxu0
      %5079 = vmatprep.mubr.f32.mxu0 0.0
      %v5080 = vand.u32 %v4761, 4294901760
      %v5081 = vsub.f32 %v4761, %v5080
      %5082 = vmatmul.mubr.f32.gmra.mrb[0].mxu0 %v5081
      %v5083 = vpop.f32.mrb[0].mxu0
      %v5084 = vadd.f32 %v4981, %v5083
      %v5085 = vpop.f32.mrb[0].mxu0
      %5086 = vmatprep.mubr.f32.mxu0 0.0
      %v5087 = vand.u32 %v4763, 4294901760
      %v5088 = vsub.f32 %v4763, %v5087
      %5089 = vmatmul.mubr.f32.gmra.mrb[0].mxu0 %v5088
      %v5090 = vpop.f32.mrb[0].mxu0
      %v5091 = vadd.f32 %v4987, %v5090
      %v5092 = vpop.f32.mrb[0].mxu0
      %5093 = vdwg.mxu0
      %5094 = vmatprep.subr.mxu0 0.0
      %v5095 = vand.u32 %v4380, 4294901760
      %5096 = vmatpush1.msra.mxu0 %v5095
      %5097 = vmatprep.subr.mxu0 0.0
      %v5098 = vand.u32 %v4766, 4294901760
      %5099 = vmatpush1.msra.mxu0 %v5098
      %5100 = vmatprep.subr.mxu0 0.0
      %5101 = vmatpush1.msra.mxu0 0.0
      %5102 = vmatprep.subr.mxu0 0.0
      %5103 = vmatpush1.msra.mxu0 0.0
      %5104 = vmatprep.subr.mxu0 0.0
      %5105 = vmatpush1.msra.mxu0 0.0
      %5106 = vmatprep.subr.mxu0 0.0
      %5107 = vmatpush1.msra.mxu0 0.0
      %5108 = vmatprep.subr.mxu0 0.0
      %5109 = vmatpush1.msra.mxu0 0.0
      %5110 = vmatprep.subr.mxu0 0.0
      %5111 = vmatpush1.msra.mxu0 0.0
      %5112 = vmatprep.subr.mxu0 0.0
      %5113 = vmatpush1.msra.mxu0 0.0
      %5114 = vmatprep.subr.mxu0 0.0
      %5115 = vmatpush1.msra.mxu0 0.0
      %5116 = vmatprep.subr.mxu0 0.0
      %5117 = vmatpush1.msra.mxu0 0.0
      %5118 = vmatprep.subr.mxu0 0.0
      %5119 = vmatpush1.msra.mxu0 0.0
      %5120 = vmatprep.subr.mxu0 0.0
      %5121 = vmatpush1.msra.mxu0 0.0
      %5122 = vmatprep.subr.mxu0 0.0
      %5123 = vmatpush1.msra.mxu0 0.0
      %5124 = vmatprep.subr.mxu0 0.0
      %5125 = vmatpush1.msra.mxu0 0.0
      %5126 = vmatprep.subr.mxu0 0.0
      %5127 = vmatpush1.msra.mxu0 0.0
      %5128 = vmatprep.subr.mxu0 0.0
      %5129 = vmatpush1.msra.mxu0 0.0
      %5130 = vmatprep.subr.mxu0 0.0
      %5131 = vmatpush1.msra.mxu0 0.0
      %5132 = vmatprep.subr.mxu0 0.0
      %5133 = vmatpush1.msra.mxu0 0.0
      %5134 = vmatprep.subr.mxu0 0.0
      %5135 = vmatpush1.msra.mxu0 0.0
      %5136 = vmatprep.subr.mxu0 0.0
      %5137 = vmatpush1.msra.mxu0 0.0
      %5138 = vmatprep.subr.mxu0 0.0
      %5139 = vmatpush1.msra.mxu0 0.0
      %5140 = vmatprep.subr.mxu0 0.0
      %5141 = vmatpush1.msra.mxu0 0.0
      %5142 = vmatprep.subr.mxu0 0.0
      %5143 = vmatpush1.msra.mxu0 0.0
      %5144 = vmatprep.subr.mxu0 0.0
      %5145 = vmatpush1.msra.mxu0 0.0
      %5146 = vmatprep.subr.mxu0 0.0
      %5147 = vmatpush1.msra.mxu0 0.0
      %5148 = vmatprep.subr.mxu0 0.0
      %5149 = vmatpush1.msra.mxu0 0.0
      %5150 = vmatprep.subr.mxu0 0.0
      %5151 = vmatpush1.msra.mxu0 0.0
      %5152 = vmatprep.subr.mxu0 0.0
      %5153 = vmatpush1.msra.mxu0 0.0
      %5154 = vmatprep.subr.mxu0 0.0
      %5155 = vmatpush1.msra.mxu0 0.0
      %5156 = vmatprep.subr.mxu0 0.0
      %5157 = vmatpush1.msra.mxu0 0.0
      %5158 = vmatprep.subr.mxu0 0.0
      %5159 = vmatpush1.msra.mxu0 0.0
      %5160 = vmatprep.mubr.f32.mxu0 0.0
      %v5161 = vand.u32 %v4755, 4294901760
      %v5162 = vsub.f32 %v4755, %v5161
      %v5163 = vand.u32 %v5162, 4294901760
      %5164 = vmatmul.mubr.f32.gmra.mrb[0].mxu0 %v5163
      %v5165 = vpop.f32.mrb[0].mxu0
      %v5166 = vadd.f32 %v5063, %v5165
      %v5167 = vpop.f32.mrb[0].mxu0
      %5168 = vmatprep.mubr.f32.mxu0 0.0
      %v5169 = vand.u32 %v4757, 4294901760
      %v5170 = vsub.f32 %v4757, %v5169
      %v5171 = vand.u32 %v5170, 4294901760
      %5172 = vmatmul.mubr.f32.gmra.mrb[0].mxu0 %v5171
      %v5173 = vpop.f32.mrb[0].mxu0
      %v5174 = vadd.f32 %v5070, %v5173
      %v5175 = vpop.f32.mrb[0].mxu0
      %5176 = vmatprep.mubr.f32.mxu0 0.0
      %v5177 = vand.u32 %v4759, 4294901760
      %v5178 = vsub.f32 %v4759, %v5177
      %v5179 = vand.u32 %v5178, 4294901760
      %5180 = vmatmul.mubr.f32.gmra.mrb[0].mxu0 %v5179
      %v5181 = vpop.f32.mrb[0].mxu0
      %v5182 = vadd.f32 %v5077, %v5181
      %v5183 = vpop.f32.mrb[0].mxu0
      %5184 = vmatprep.mubr.f32.mxu0 0.0
      %v5185 = vand.u32 %v4761, 4294901760
      %v5186 = vsub.f32 %v4761, %v5185
      %v5187 = vand.u32 %v5186, 4294901760
      %5188 = vmatmul.mubr.f32.gmra.mrb[0].mxu0 %v5187
      %v5189 = vpop.f32.mrb[0].mxu0
      %v5190 = vadd.f32 %v5084, %v5189
      %v5191 = vpop.f32.mrb[0].mxu0
      %5192 = vmatprep.mubr.f32.mxu0 0.0
      %v5193 = vand.u32 %v4763, 4294901760
      %v5194 = vsub.f32 %v4763, %v5193
      %v5195 = vand.u32 %v5194, 4294901760
      %5196 = vmatmul.mubr.f32.gmra.mrb[0].mxu0 %v5195
      %v5197 = vpop.f32.mrb[0].mxu0
      %v5198 = vadd.f32 %v5091, %v5197
      %v5199 = vpop.f32.mrb[0].mxu0
      %5200 = vdwg.mxu0
      %5201 = vmatprep.subr.mxu0 0.0
      %v5202 = vand.u32 %v4380, 4294901760
      %v5203 = vsub.f32 %v4380, %v5202
      %v5204 = vand.u32 %v5203, 4294901760
      %5205 = vmatpush1.msra.mxu0 %v5204
      %5206 = vmatprep.subr.mxu0 0.0
      %v5207 = vand.u32 %v4766, 4294901760
      %v5208 = vsub.f32 %v4766, %v5207
      %v5209 = vand.u32 %v5208, 4294901760
      %5210 = vmatpush1.msra.mxu0 %v5209
      %5211 = vmatprep.subr.mxu0 0.0
      %5212 = vmatpush1.msra.mxu0 0.0
      %5213 = vmatprep.subr.mxu0 0.0
      %5214 = vmatpush1.msra.mxu0 0.0
      %5215 = vmatprep.subr.mxu0 0.0
      %5216 = vmatpush1.msra.mxu0 0.0
      %5217 = vmatprep.subr.mxu0 0.0
      %5218 = vmatpush1.msra.mxu0 0.0
      %5219 = vmatprep.subr.mxu0 0.0
      %5220 = vmatpush1.msra.mxu0 0.0
      %5221 = vmatprep.subr.mxu0 0.0
      %5222 = vmatpush1.msra.mxu0 0.0
      %5223 = vmatprep.subr.mxu0 0.0
      %5224 = vmatpush1.msra.mxu0 0.0
      %5225 = vmatprep.subr.mxu0 0.0
      %5226 = vmatpush1.msra.mxu0 0.0
      %5227 = vmatprep.subr.mxu0 0.0
      %5228 = vmatpush1.msra.mxu0 0.0
      %5229 = vmatprep.subr.mxu0 0.0
      %5230 = vmatpush1.msra.mxu0 0.0
      %5231 = vmatprep.subr.mxu0 0.0
      %5232 = vmatpush1.msra.mxu0 0.0
      %5233 = vmatprep.subr.mxu0 0.0
      %5234 = vmatpush1.msra.mxu0 0.0
      %5235 = vmatprep.subr.mxu0 0.0
      %5236 = vmatpush1.msra.mxu0 0.0
      %5237 = vmatprep.subr.mxu0 0.0
      %5238 = vmatpush1.msra.mxu0 0.0
      %5239 = vmatprep.subr.mxu0 0.0
      %5240 = vmatpush1.msra.mxu0 0.0
      %5241 = vmatprep.subr.mxu0 0.0
      %5242 = vmatpush1.msra.mxu0 0.0
      %5243 = vmatprep.subr.mxu0 0.0
      %5244 = vmatpush1.msra.mxu0 0.0
      %5245 = vmatprep.subr.mxu0 0.0
      %5246 = vmatpush1.msra.mxu0 0.0
      %5247 = vmatprep.subr.mxu0 0.0
      %5248 = vmatpush1.msra.mxu0 0.0
      %5249 = vmatprep.subr.mxu0 0.0
      %5250 = vmatpush1.msra.mxu0 0.0
      %5251 = vmatprep.subr.mxu0 0.0
      %5252 = vmatpush1.msra.mxu0 0.0
      %5253 = vmatprep.subr.mxu0 0.0
      %5254 = vmatpush1.msra.mxu0 0.0
      %5255 = vmatprep.subr.mxu0 0.0
      %5256 = vmatpush1.msra.mxu0 0.0
      %5257 = vmatprep.subr.mxu0 0.0
      %5258 = vmatpush1.msra.mxu0 0.0
      %5259 = vmatprep.subr.mxu0 0.0
      %5260 = vmatpush1.msra.mxu0 0.0
      %5261 = vmatprep.subr.mxu0 0.0
      %5262 = vmatpush1.msra.mxu0 0.0
      %5263 = vmatprep.subr.mxu0 0.0
      %5264 = vmatpush1.msra.mxu0 0.0
      %5265 = vmatprep.subr.mxu0 0.0
      %5266 = vmatpush1.msra.mxu0 0.0
      %5267 = vmatprep.subr.mxu0 0.0
      %5268 = vmatpush1.msra.mxu0 0.0
      %5269 = vmatprep.subr.mxu0 0.0
      %5270 = vmatpush1.msra.mxu0 0.0
      %5271 = vmatprep.mubr.f32.mxu0 0.0
      %v5272 = vand.u32 %v4755, 4294901760
      %5273 = vmatmul.mubr.f32.gmra.mrb[0].mxu0 %v5272
      %v5274 = vpop.f32.mrb[0].mxu0
      %v5275 = vadd.f32 %v5166, %v5274
      %v5276 = vpop.f32.mrb[0].mxu0
      %5277 = vmatprep.mubr.f32.mxu0 0.0
      %v5278 = vand.u32 %v4757, 4294901760
      %5279 = vmatmul.mubr.f32.gmra.mrb[0].mxu0 %v5278
      %v5280 = vpop.f32.mrb[0].mxu0
      %v5281 = vadd.f32 %v5174, %v5280
      %v5282 = vpop.f32.mrb[0].mxu0
      %5283 = vmatprep.mubr.f32.mxu0 0.0
      %v5284 = vand.u32 %v4759, 4294901760
      %5285 = vmatmul.mubr.f32.gmra.mrb[0].mxu0 %v5284
      %v5286 = vpop.f32.mrb[0].mxu0
      %v5287 = vadd.f32 %v5182, %v5286
      %v5288 = vpop.f32.mrb[0].mxu0
      %5289 = vmatprep.mubr.f32.mxu0 0.0
      %v5290 = vand.u32 %v4761, 4294901760
      %5291 = vmatmul.mubr.f32.gmra.mrb[0].mxu0 %v5290
      %v5292 = vpop.f32.mrb[0].mxu0
      %v5293 = vadd.f32 %v5190, %v5292
      %v5294 = vpop.f32.mrb[0].mxu0
      %5295 = vmatprep.mubr.f32.mxu0 0.0
      %v5296 = vand.u32 %v4763, 4294901760
      %5297 = vmatmul.mubr.f32.gmra.mrb[0].mxu0 %v5296
      %v5298 = vpop.f32.mrb[0].mxu0
      %v5299 = vadd.f32 %v5198, %v5298
      %v5300 = vpop.f32.mrb[0].mxu0
      %5301 = vdwg.mxu0
      %5302 = vmatprep.subr.mxu0 0.0
      %v5303 = vand.u32 %v4380, 4294901760
      %5304 = vmatpush1.msra.mxu0 %v5303
      %5305 = vmatprep.subr.mxu0 0.0
      %v5306 = vand.u32 %v4766, 4294901760
      %5307 = vmatpush1.msra.mxu0 %v5306
      %5308 = vmatprep.subr.mxu0 0.0
      %5309 = vmatpush1.msra.mxu0 0.0
      %5310 = vmatprep.subr.mxu0 0.0
      %5311 = vmatpush1.msra.mxu0 0.0
      %5312 = vmatprep.subr.mxu0 0.0
      %5313 = vmatpush1.msra.mxu0 0.0
      %5314 = vmatprep.subr.mxu0 0.0
      %5315 = vmatpush1.msra.mxu0 0.0
      %5316 = vmatprep.subr.mxu0 0.0
      %5317 = vmatpush1.msra.mxu0 0.0
      %5318 = vmatprep.subr.mxu0 0.0
      %5319 = vmatpush1.msra.mxu0 0.0
      %5320 = vmatprep.subr.mxu0 0.0
      %5321 = vmatpush1.msra.mxu0 0.0
      %5322 = vmatprep.subr.mxu0 0.0
      %5323 = vmatpush1.msra.mxu0 0.0
      %5324 = vmatprep.subr.mxu0 0.0
      %5325 = vmatpush1.msra.mxu0 0.0
      %5326 = vmatprep.subr.mxu0 0.0
      %5327 = vmatpush1.msra.mxu0 0.0
      %5328 = vmatprep.subr.mxu0 0.0
      %5329 = vmatpush1.msra.mxu0 0.0
      %5330 = vmatprep.subr.mxu0 0.0
      %5331 = vmatpush1.msra.mxu0 0.0
      %5332 = vmatprep.subr.mxu0 0.0
      %5333 = vmatpush1.msra.mxu0 0.0
      %5334 = vmatprep.subr.mxu0 0.0
      %5335 = vmatpush1.msra.mxu0 0.0
      %5336 = vmatprep.subr.mxu0 0.0
      %5337 = vmatpush1.msra.mxu0 0.0
      %5338 = vmatprep.subr.mxu0 0.0
      %5339 = vmatpush1.msra.mxu0 0.0
      %5340 = vmatprep.subr.mxu0 0.0
      %5341 = vmatpush1.msra.mxu0 0.0
      %5342 = vmatprep.subr.mxu0 0.0
      %5343 = vmatpush1.msra.mxu0 0.0
      %5344 = vmatprep.subr.mxu0 0.0
      %5345 = vmatpush1.msra.mxu0 0.0
      %5346 = vmatprep.subr.mxu0 0.0
      %5347 = vmatpush1.msra.mxu0 0.0
      %5348 = vmatprep.subr.mxu0 0.0
      %5349 = vmatpush1.msra.mxu0 0.0
      %5350 = vmatprep.subr.mxu0 0.0
      %5351 = vmatpush1.msra.mxu0 0.0
      %5352 = vmatprep.subr.mxu0 0.0
      %5353 = vmatpush1.msra.mxu0 0.0
      %5354 = vmatprep.subr.mxu0 0.0
      %5355 = vmatpush1.msra.mxu0 0.0
      %5356 = vmatprep.subr.mxu0 0.0
      %5357 = vmatpush1.msra.mxu0 0.0
      %5358 = vmatprep.subr.mxu0 0.0
      %5359 = vmatpush1.msra.mxu0 0.0
      %5360 = vmatprep.subr.mxu0 0.0
      %5361 = vmatpush1.msra.mxu0 0.0
      %5362 = vmatprep.subr.mxu0 0.0
      %5363 = vmatpush1.msra.mxu0 0.0
      %5364 = vmatprep.subr.mxu0 0.0
      %5365 = vmatpush1.msra.mxu0 0.0
      %5366 = vmatprep.subr.mxu0 0.0
      %5367 = vmatpush1.msra.mxu0 0.0
      %5368 = vmatprep.mubr.f32.mxu0 0.0
      %v5369 = vand.u32 %v4755, 4294901760
      %5370 = vmatmul.mubr.f32.gmra.mrb[0].mxu0 %v5369
      %v5371 = vpop.f32.mrb[0].mxu0
      %v5372 = vadd.f32 %v5275, %v5371
      %v5373 = vpop.f32.mrb[0].mxu0
      %5374 = vmatprep.mubr.f32.mxu0 0.0
      %v5375 = vand.u32 %v4757, 4294901760
      %5376 = vmatmul.mubr.f32.gmra.mrb[0].mxu0 %v5375
      %v5377 = vpop.f32.mrb[0].mxu0
      %v5378 = vadd.f32 %v5281, %v5377
      %v5379 = vpop.f32.mrb[0].mxu0
      %5380 = vmatprep.mubr.f32.mxu0 0.0
      %v5381 = vand.u32 %v4759, 4294901760
      %5382 = vmatmul.mubr.f32.gmra.mrb[0].mxu0 %v5381
      %v5383 = vpop.f32.mrb[0].mxu0
      %v5384 = vadd.f32 %v5287, %v5383
      %v5385 = vpop.f32.mrb[0].mxu0
      %5386 = vmatprep.mubr.f32.mxu0 0.0
      %v5387 = vand.u32 %v4761, 4294901760
      %5388 = vmatmul.mubr.f32.gmra.mrb[0].mxu0 %v5387
      %v5389 = vpop.f32.mrb[0].mxu0
      %v5390 = vadd.f32 %v5293, %v5389
      %v5391 = vpop.f32.mrb[0].mxu0
      %5392 = vmatprep.mubr.f32.mxu0 0.0
      %v5393 = vand.u32 %v4763, 4294901760
      %5394 = vmatmul.mubr.f32.gmra.mrb[0].mxu0 %v5393
      %v5395 = vpop.f32.mrb[0].mxu0
      %v5396 = vadd.f32 %v5299, %v5395
      %v5397 = vpop.f32.mrb[0].mxu0
      %5398 = vdwg.mxu0
      %v5399 = vadd.f32 %v3714, %v5372
      %v5400 = vadd.f32 %v3715, %v5378
      %v5401 = vadd.f32 %v3716, %v5384
      %v5402 = vadd.f32 %v3717, %v5390
      %v5403 = vadd.f32 %v3718, %v5396
      %s5404 = scalar_lea.vmem %s5, 1
      %v5405 = vld [vmem:[%s5404] sm:$0x1]
      %s5406 = scalar_lea.vmem %s6, 1
      %v5407 = vld [vmem:[%s5406] sm:$0x1]
      %v5408 = vsel %vm509, %v5399, 0.0
      %5409 = vadd.xlane.f32.xlu0 %v5408
      %v5410 = vpop.xlane.xlu0 %5409
      %v5411 = vsel %vm509, %v5400, 0.0
      %5412 = vadd.xlane.f32.xlu0 %v5411
      %v5413 = vpop.xlane.xlu0 %5412
      %v5414 = vsel %vm509, %v5401, 0.0
      %5415 = vadd.xlane.f32.xlu0 %v5414
      %v5416 = vpop.xlane.xlu0 %5415
      %v5417 = vsel %vm509, %v5402, 0.0
      %5418 = vadd.xlane.f32.xlu0 %v5417
      %v5419 = vpop.xlane.xlu0 %5418
      %v5420 = vsel %vm509, %v5403, 0.0
      %5421 = vadd.xlane.f32.xlu0 %v5420
      %v5422 = vpop.xlane.xlu0 %5421
      %v5423 = vmul.f32 %v5410, %v2205
      %v5424 = vmul.f32 %v5413, %v2205
      %v5425 = vmul.f32 %v5416, %v2205
      %v5426 = vmul.f32 %v5419, %v2205
      %v5427 = vmul.f32 %v5422, %v2205
      %v5428 = vsub.f32 %v5399, %v5423
      %v5429 = vsub.f32 %v5400, %v5424
      %v5430 = vsub.f32 %v5401, %v5425
      %v5431 = vsub.f32 %v5402, %v5426
      %v5432 = vsub.f32 %v5403, %v5427
      %v5433 = vmul.f32 %v5428, %v5428
      %v5434 = vmul.f32 %v5429, %v5429
      %v5435 = vmul.f32 %v5430, %v5430
      %v5436 = vmul.f32 %v5431, %v5431
      %v5437 = vmul.f32 %v5432, %v5432
      %v5438 = vsel %vm509, %v5433, 0.0
      %5439 = vadd.xlane.f32.xlu0 %v5438
      %v5440 = vpop.xlane.xlu0 %5439
      %v5441 = vsel %vm509, %v5434, 0.0
      %5442 = vadd.xlane.f32.xlu0 %v5441
      %v5443 = vpop.xlane.xlu0 %5442
      %v5444 = vsel %vm509, %v5435, 0.0
      %5445 = vadd.xlane.f32.xlu0 %v5444
      %v5446 = vpop.xlane.xlu0 %5445
      %v5447 = vsel %vm509, %v5436, 0.0
      %5448 = vadd.xlane.f32.xlu0 %v5447
      %v5449 = vpop.xlane.xlu0 %5448
      %v5450 = vsel %vm509, %v5437, 0.0
      %5451 = vadd.xlane.f32.xlu0 %v5450
      %v5452 = vpop.xlane.xlu0 %5451
      %v5453 = vmul.f32 %v5440, %v2205
      %v5454 = vmul.f32 %v5443, %v2205
      %v5455 = vmul.f32 %v5446, %v2205
      %v5456 = vmul.f32 %v5449, %v2205
      %v5457 = vmul.f32 %v5452, %v2205
      %v5458 = vadd.f32 %v5453, 1e-05
      %v5459 = vadd.f32 %v5454, 1e-05
      %v5460 = vadd.f32 %v5455, 1e-05
      %v5461 = vadd.f32 %v5456, 1e-05
      %v5462 = vadd.f32 %v5457, 1e-05
      %v5463 = vrsqrt.pop %v5458
      %v5464 = vrsqrt.pop %v5459
      %v5465 = vrsqrt.pop %v5460
      %v5466 = vrsqrt.pop %v5461
      %v5467 = vrsqrt.pop %v5462
      %v5468 = vmul.f32 %v5428, %v5463
      %v5469 = vmul.f32 %v5429, %v5464
      %v5470 = vmul.f32 %v5430, %v5465
      %v5471 = vmul.f32 %v5431, %v5466
      %v5472 = vmul.f32 %v5432, %v5467
      %v5474 = vlaneseq
      %v5475 = vshrl.u32 %v5474, 7
      %v5476 = vsub.s32 0, %v5475
      %v5477 = vrot.slane %v5405, %v5476
      %v5479 = vmul.f32 %v5468, %v5477
      %v5480 = vmul.f32 %v5469, %v5477
      %v5481 = vmul.f32 %v5470, %v5477
      %v5482 = vmul.f32 %v5471, %v5477
      %v5483 = vmul.f32 %v5472, %v5477
      %v5485 = vlaneseq
      %v5486 = vshrl.u32 %v5485, 7
      %v5487 = vsub.s32 0, %v5486
      %v5488 = vrot.slane %v5407, %v5487
      %v5490 = vadd.f32 %v5479, %v5488
      %v5491 = vadd.f32 %v5480, %v5488
      %v5492 = vadd.f32 %v5481, %v5488
      %v5493 = vadd.f32 %v5482, %v5488
      %v5494 = vadd.f32 %v5483, %v5488
      %s5495 = scalar_lea.vmem %s7, 16
      %v5496 = vld [vmem:[%s5495] sm:$0xff]
      %v5497 = vld [vmem:[%s5495 + $0x8] sm:$0x7]
      %s5498 = scalar_lea.vmem %s8, 1
      %v5499 = vld [vmem:[%s5498] sm:$0x1]
      %v5501 = vlaneseq
      %v5502 = vshrl.u32 %v5501, 7
      %v5503 = vsub.s32 0, %v5502
      %v5504 = vrot.slane %v5499, %v5503
      %v5507 = vsel %vm509, %v5490, 0
      %v5510 = vsel %vm509, %v5491, 0
      %v5513 = vsel %vm509, %v5492, 0
      %v5516 = vsel %vm509, %v5493, 0
      %v5519 = vsel %vm509, %v5494, 0
      %v5522 = vsel %vm525, %v5497, 0
      %5524 = vmatprep.subr.mxu0 0.0
      %v5525 = vand.u32 %v5496, 4294901760
      %5526 = vmatpush1.msra.mxu0 %v5525
      %5527 = vmatprep.subr.mxu0 0.0
      %v5528 = vand.u32 %v5522, 4294901760
      %5529 = vmatpush1.msra.mxu0 %v5528
      %5530 = vmatprep.subr.mxu0 0.0
      %5531 = vmatpush1.msra.mxu0 0.0
      %5532 = vmatprep.subr.mxu0 0.0
      %5533 = vmatpush1.msra.mxu0 0.0
      %5534 = vmatprep.subr.mxu0 0.0
      %5535 = vmatpush1.msra.mxu0 0.0
      %5536 = vmatprep.subr.mxu0 0.0
      %5537 = vmatpush1.msra.mxu0 0.0
      %5538 = vmatprep.subr.mxu0 0.0
      %5539 = vmatpush1.msra.mxu0 0.0
      %5540 = vmatprep.subr.mxu0 0.0
      %5541 = vmatpush1.msra.mxu0 0.0
      %5542 = vmatprep.subr.mxu0 0.0
      %5543 = vmatpush1.msra.mxu0 0.0
      %5544 = vmatprep.subr.mxu0 0.0
      %5545 = vmatpush1.msra.mxu0 0.0
      %5546 = vmatprep.subr.mxu0 0.0
      %5547 = vmatpush1.msra.mxu0 0.0
      %5548 = vmatprep.subr.mxu0 0.0
      %5549 = vmatpush1.msra.mxu0 0.0
      %5550 = vmatprep.subr.mxu0 0.0
      %5551 = vmatpush1.msra.mxu0 0.0
      %5552 = vmatprep.subr.mxu0 0.0
      %5553 = vmatpush1.msra.mxu0 0.0
      %5554 = vmatprep.subr.mxu0 0.0
      %5555 = vmatpush1.msra.mxu0 0.0
      %5556 = vmatprep.subr.mxu0 0.0
      %5557 = vmatpush1.msra.mxu0 0.0
      %5558 = vmatprep.subr.mxu0 0.0
      %5559 = vmatpush1.msra.mxu0 0.0
      %5560 = vmatprep.subr.mxu0 0.0
      %5561 = vmatpush1.msra.mxu0 0.0
      %5562 = vmatprep.subr.mxu0 0.0
      %5563 = vmatpush1.msra.mxu0 0.0
      %5564 = vmatprep.subr.mxu0 0.0
      %5565 = vmatpush1.msra.mxu0 0.0
      %5566 = vmatprep.subr.mxu0 0.0
      %5567 = vmatpush1.msra.mxu0 0.0
      %5568 = vmatprep.subr.mxu0 0.0
      %5569 = vmatpush1.msra.mxu0 0.0
      %5570 = vmatprep.subr.mxu0 0.0
      %5571 = vmatpush1.msra.mxu0 0.0
      %5572 = vmatprep.subr.mxu0 0.0
      %5573 = vmatpush1.msra.mxu0 0.0
      %5574 = vmatprep.subr.mxu0 0.0
      %5575 = vmatpush1.msra.mxu0 0.0
      %5576 = vmatprep.subr.mxu0 0.0
      %5577 = vmatpush1.msra.mxu0 0.0
      %5578 = vmatprep.subr.mxu0 0.0
      %5579 = vmatpush1.msra.mxu0 0.0
      %5580 = vmatprep.subr.mxu0 0.0
      %5581 = vmatpush1.msra.mxu0 0.0
      %5582 = vmatprep.subr.mxu0 0.0
      %5583 = vmatpush1.msra.mxu0 0.0
      %5584 = vmatprep.subr.mxu0 0.0
      %5585 = vmatpush1.msra.mxu0 0.0
      %5586 = vmatprep.subr.mxu0 0.0
      %5587 = vmatpush1.msra.mxu0 0.0
      %5588 = vmatprep.subr.mxu0 0.0
      %5589 = vmatpush1.msra.mxu0 0.0
      %5590 = vmatprep.mubr.f32.mxu0 0.0
      %v5591 = vand.u32 %v5507, 4294901760
      %v5592 = vsub.f32 %v5507, %v5591
      %v5593 = vand.u32 %v5592, 4294901760
      %v5594 = vsub.f32 %v5592, %v5593
      %v5595 = vand.u32 %v5594, 4294901760
      %5596 = vmatmul.mubr.f32.gmra.mrb[0].mxu0 %v5595
      %v5597 = vpop.f32.mrb[0].mxu0
      %v5598 = vadd.f32 %v5504, %v5597
      %v5599 = vpop.f32.mrb[0].mxu0
      %5600 = vmatprep.mubr.f32.mxu0 0.0
      %v5601 = vand.u32 %v5510, 4294901760
      %v5602 = vsub.f32 %v5510, %v5601
      %v5603 = vand.u32 %v5602, 4294901760
      %v5604 = vsub.f32 %v5602, %v5603
      %v5605 = vand.u32 %v5604, 4294901760
      %5606 = vmatmul.mubr.f32.gmra.mrb[0].mxu0 %v5605
      %v5607 = vpop.f32.mrb[0].mxu0
      %v5608 = vadd.f32 %v5504, %v5607
      %v5609 = vpop.f32.mrb[0].mxu0
      %5610 = vmatprep.mubr.f32.mxu0 0.0
      %v5611 = vand.u32 %v5513, 4294901760
      %v5612 = vsub.f32 %v5513, %v5611
      %v5613 = vand.u32 %v5612, 4294901760
      %v5614 = vsub.f32 %v5612, %v5613
      %v5615 = vand.u32 %v5614, 4294901760
      %5616 = vmatmul.mubr.f32.gmra.mrb[0].mxu0 %v5615
      %v5617 = vpop.f32.mrb[0].mxu0
      %v5618 = vadd.f32 %v5504, %v5617
      %v5619 = vpop.f32.mrb[0].mxu0
      %5620 = vmatprep.mubr.f32.mxu0 0.0
      %v5621 = vand.u32 %v5516, 4294901760
      %v5622 = vsub.f32 %v5516, %v5621
      %v5623 = vand.u32 %v5622, 4294901760
      %v5624 = vsub.f32 %v5622, %v5623
      %v5625 = vand.u32 %v5624, 4294901760
      %5626 = vmatmul.mubr.f32.gmra.mrb[0].mxu0 %v5625
      %v5627 = vpop.f32.mrb[0].mxu0
      %v5628 = vadd.f32 %v5504, %v5627
      %v5629 = vpop.f32.mrb[0].mxu0
      %5630 = vmatprep.mubr.f32.mxu0 0.0
      %v5631 = vand.u32 %v5519, 4294901760
      %v5632 = vsub.f32 %v5519, %v5631
      %v5633 = vand.u32 %v5632, 4294901760
      %v5634 = vsub.f32 %v5632, %v5633
      %v5635 = vand.u32 %v5634, 4294901760
      %5636 = vmatmul.mubr.f32.gmra.mrb[0].mxu0 %v5635
      %v5637 = vpop.f32.mrb[0].mxu0
      %v5638 = vadd.f32 %v5504, %v5637
      %v5639 = vpop.f32.mrb[0].mxu0
      %5640 = vdwg.mxu0
      %5641 = vmatprep.subr.mxu0 0.0
      %v5642 = vand.u32 %v5496, 4294901760
      %v5643 = vsub.f32 %v5496, %v5642
      %v5644 = vand.u32 %v5643, 4294901760
      %v5645 = vsub.f32 %v5643, %v5644
      %v5646 = vand.u32 %v5645, 4294901760
      %5647 = vmatpush1.msra.mxu0 %v5646
      %5648 = vmatprep.subr.mxu0 0.0
      %v5649 = vand.u32 %v5522, 4294901760
      %v5650 = vsub.f32 %v5522, %v5649
      %v5651 = vand.u32 %v5650, 4294901760
      %v5652 = vsub.f32 %v5650, %v5651
      %v5653 = vand.u32 %v5652, 4294901760
      %5654 = vmatpush1.msra.mxu0 %v5653
      %5655 = vmatprep.subr.mxu0 0.0
      %5656 = vmatpush1.msra.mxu0 0.0
      %5657 = vmatprep.subr.mxu0 0.0
      %5658 = vmatpush1.msra.mxu0 0.0
      %5659 = vmatprep.subr.mxu0 0.0
      %5660 = vmatpush1.msra.mxu0 0.0
      %5661 = vmatprep.subr.mxu0 0.0
      %5662 = vmatpush1.msra.mxu0 0.0
      %5663 = vmatprep.subr.mxu0 0.0
      %5664 = vmatpush1.msra.mxu0 0.0
      %5665 = vmatprep.subr.mxu0 0.0
      %5666 = vmatpush1.msra.mxu0 0.0
      %5667 = vmatprep.subr.mxu0 0.0
      %5668 = vmatpush1.msra.mxu0 0.0
      %5669 = vmatprep.subr.mxu0 0.0
      %5670 = vmatpush1.msra.mxu0 0.0
      %5671 = vmatprep.subr.mxu0 0.0
      %5672 = vmatpush1.msra.mxu0 0.0
      %5673 = vmatprep.subr.mxu0 0.0
      %5674 = vmatpush1.msra.mxu0 0.0
      %5675 = vmatprep.subr.mxu0 0.0
      %5676 = vmatpush1.msra.mxu0 0.0
      %5677 = vmatprep.subr.mxu0 0.0
      %5678 = vmatpush1.msra.mxu0 0.0
      %5679 = vmatprep.subr.mxu0 0.0
      %5680 = vmatpush1.msra.mxu0 0.0
      %5681 = vmatprep.subr.mxu0 0.0
      %5682 = vmatpush1.msra.mxu0 0.0
      %5683 = vmatprep.subr.mxu0 0.0
      %5684 = vmatpush1.msra.mxu0 0.0
      %5685 = vmatprep.subr.mxu0 0.0
      %5686 = vmatpush1.msra.mxu0 0.0
      %5687 = vmatprep.subr.mxu0 0.0
      %5688 = vmatpush1.msra.mxu0 0.0
      %5689 = vmatprep.subr.mxu0 0.0
      %5690 = vmatpush1.msra.mxu0 0.0
      %5691 = vmatprep.subr.mxu0 0.0
      %5692 = vmatpush1.msra.mxu0 0.0
      %5693 = vmatprep.subr.mxu0 0.0
      %5694 = vmatpush1.msra.mxu0 0.0
      %5695 = vmatprep.subr.mxu0 0.0
      %5696 = vmatpush1.msra.mxu0 0.0
      %5697 = vmatprep.subr.mxu0 0.0
      %5698 = vmatpush1.msra.mxu0 0.0
      %5699 = vmatprep.subr.mxu0 0.0
      %5700 = vmatpush1.msra.mxu0 0.0
      %5701 = vmatprep.subr.mxu0 0.0
      %5702 = vmatpush1.msra.mxu0 0.0
      %5703 = vmatprep.subr.mxu0 0.0
      %5704 = vmatpush1.msra.mxu0 0.0
      %5705 = vmatprep.subr.mxu0 0.0
      %5706 = vmatpush1.msra.mxu0 0.0
      %5707 = vmatprep.subr.mxu0 0.0
      %5708 = vmatpush1.msra.mxu0 0.0
      %5709 = vmatprep.subr.mxu0 0.0
      %5710 = vmatpush1.msra.mxu0 0.0
      %5711 = vmatprep.subr.mxu0 0.0
      %5712 = vmatpush1.msra.mxu0 0.0
      %5713 = vmatprep.subr.mxu0 0.0
      %5714 = vmatpush1.msra.mxu0 0.0
      %5715 = vmatprep.mubr.f32.mxu0 0.0
      %v5716 = vand.u32 %v5507, 4294901760
      %5717 = vmatmul.mubr.f32.gmra.mrb[0].mxu0 %v5716
      %v5718 = vpop.f32.mrb[0].mxu0
      %v5719 = vadd.f32 %v5598, %v5718
      %v5720 = vpop.f32.mrb[0].mxu0
      %5721 = vmatprep.mubr.f32.mxu0 0.0
      %v5722 = vand.u32 %v5510, 4294901760
      %5723 = vmatmul.mubr.f32.gmra.mrb[0].mxu0 %v5722
      %v5724 = vpop.f32.mrb[0].mxu0
      %v5725 = vadd.f32 %v5608, %v5724
      %v5726 = vpop.f32.mrb[0].mxu0
      %5727 = vmatprep.mubr.f32.mxu0 0.0
      %v5728 = vand.u32 %v5513, 4294901760
      %5729 = vmatmul.mubr.f32.gmra.mrb[0].mxu0 %v5728
      %v5730 = vpop.f32.mrb[0].mxu0
      %v5731 = vadd.f32 %v5618, %v5730
      %v5732 = vpop.f32.mrb[0].mxu0
      %5733 = vmatprep.mubr.f32.mxu0 0.0
      %v5734 = vand.u32 %v5516, 4294901760
      %5735 = vmatmul.mubr.f32.gmra.mrb[0].mxu0 %v5734
      %v5736 = vpop.f32.mrb[0].mxu0
      %v5737 = vadd.f32 %v5628, %v5736
      %v5738 = vpop.f32.mrb[0].mxu0
      %5739 = vmatprep.mubr.f32.mxu0 0.0
      %v5740 = vand.u32 %v5519, 4294901760
      %5741 = vmatmul.mubr.f32.gmra.mrb[0].mxu0 %v5740
      %v5742 = vpop.f32.mrb[0].mxu0
      %v5743 = vadd.f32 %v5638, %v5742
      %v5744 = vpop.f32.mrb[0].mxu0
      %5745 = vdwg.mxu0
      %5746 = vmatprep.subr.mxu0 0.0
      %v5747 = vand.u32 %v5496, 4294901760
      %v5748 = vsub.f32 %v5496, %v5747
      %5749 = vmatpush1.msra.mxu0 %v5748
      %5750 = vmatprep.subr.mxu0 0.0
      %v5751 = vand.u32 %v5522, 4294901760
      %v5752 = vsub.f32 %v5522, %v5751
      %5753 = vmatpush1.msra.mxu0 %v5752
      %5754 = vmatprep.subr.mxu0 0.0
      %5755 = vmatpush1.msra.mxu0 0.0
      %5756 = vmatprep.subr.mxu0 0.0
      %5757 = vmatpush1.msra.mxu0 0.0
      %5758 = vmatprep.subr.mxu0 0.0
      %5759 = vmatpush1.msra.mxu0 0.0
      %5760 = vmatprep.subr.mxu0 0.0
      %5761 = vmatpush1.msra.mxu0 0.0
      %5762 = vmatprep.subr.mxu0 0.0
      %5763 = vmatpush1.msra.mxu0 0.0
      %5764 = vmatprep.subr.mxu0 0.0
      %5765 = vmatpush1.msra.mxu0 0.0
      %5766 = vmatprep.subr.mxu0 0.0
      %5767 = vmatpush1.msra.mxu0 0.0
      %5768 = vmatprep.subr.mxu0 0.0
      %5769 = vmatpush1.msra.mxu0 0.0
      %5770 = vmatprep.subr.mxu0 0.0
      %5771 = vmatpush1.msra.mxu0 0.0
      %5772 = vmatprep.subr.mxu0 0.0
      %5773 = vmatpush1.msra.mxu0 0.0
      %5774 = vmatprep.subr.mxu0 0.0
      %5775 = vmatpush1.msra.mxu0 0.0
      %5776 = vmatprep.subr.mxu0 0.0
      %5777 = vmatpush1.msra.mxu0 0.0
      %5778 = vmatprep.subr.mxu0 0.0
      %5779 = vmatpush1.msra.mxu0 0.0
      %5780 = vmatprep.subr.mxu0 0.0
      %5781 = vmatpush1.msra.mxu0 0.0
      %5782 = vmatprep.subr.mxu0 0.0
      %5783 = vmatpush1.msra.mxu0 0.0
      %5784 = vmatprep.subr.mxu0 0.0
      %5785 = vmatpush1.msra.mxu0 0.0
      %5786 = vmatprep.subr.mxu0 0.0
      %5787 = vmatpush1.msra.mxu0 0.0
      %5788 = vmatprep.subr.mxu0 0.0
      %5789 = vmatpush1.msra.mxu0 0.0
      %5790 = vmatprep.subr.mxu0 0.0
      %5791 = vmatpush1.msra.mxu0 0.0
      %5792 = vmatprep.subr.mxu0 0.0
      %5793 = vmatpush1.msra.mxu0 0.0
      %5794 = vmatprep.subr.mxu0 0.0
      %5795 = vmatpush1.msra.mxu0 0.0
      %5796 = vmatprep.subr.mxu0 0.0
      %5797 = vmatpush1.msra.mxu0 0.0
      %5798 = vmatprep.subr.mxu0 0.0
      %5799 = vmatpush1.msra.mxu0 0.0
      %5800 = vmatprep.subr.mxu0 0.0
      %5801 = vmatpush1.msra.mxu0 0.0
      %5802 = vmatprep.subr.mxu0 0.0
      %5803 = vmatpush1.msra.mxu0 0.0
      %5804 = vmatprep.subr.mxu0 0.0
      %5805 = vmatpush1.msra.mxu0 0.0
      %5806 = vmatprep.subr.mxu0 0.0
      %5807 = vmatpush1.msra.mxu0 0.0
      %5808 = vmatprep.subr.mxu0 0.0
      %5809 = vmatpush1.msra.mxu0 0.0
      %5810 = vmatprep.subr.mxu0 0.0
      %5811 = vmatpush1.msra.mxu0 0.0
      %5812 = vmatprep.subr.mxu0 0.0
      %5813 = vmatpush1.msra.mxu0 0.0
      %5814 = vmatprep.mubr.f32.mxu0 0.0
      %v5815 = vand.u32 %v5507, 4294901760
      %v5816 = vsub.f32 %v5507, %v5815
      %5817 = vmatmul.mubr.f32.gmra.mrb[0].mxu0 %v5816
      %v5818 = vpop.f32.mrb[0].mxu0
      %v5819 = vadd.f32 %v5719, %v5818
      %v5820 = vpop.f32.mrb[0].mxu0
      %5821 = vmatprep.mubr.f32.mxu0 0.0
      %v5822 = vand.u32 %v5510, 4294901760
      %v5823 = vsub.f32 %v5510, %v5822
      %5824 = vmatmul.mubr.f32.gmra.mrb[0].mxu0 %v5823
      %v5825 = vpop.f32.mrb[0].mxu0
      %v5826 = vadd.f32 %v5725, %v5825
      %v5827 = vpop.f32.mrb[0].mxu0
      %5828 = vmatprep.mubr.f32.mxu0 0.0
      %v5829 = vand.u32 %v5513, 4294901760
      %v5830 = vsub.f32 %v5513, %v5829
      %5831 = vmatmul.mubr.f32.gmra.mrb[0].mxu0 %v5830
      %v5832 = vpop.f32.mrb[0].mxu0
      %v5833 = vadd.f32 %v5731, %v5832
      %v5834 = vpop.f32.mrb[0].mxu0
      %5835 = vmatprep.mubr.f32.mxu0 0.0
      %v5836 = vand.u32 %v5516, 4294901760
      %v5837 = vsub.f32 %v5516, %v5836
      %5838 = vmatmul.mubr.f32.gmra.mrb[0].mxu0 %v5837
      %v5839 = vpop.f32.mrb[0].mxu0
      %v5840 = vadd.f32 %v5737, %v5839
      %v5841 = vpop.f32.mrb[0].mxu0
      %5842 = vmatprep.mubr.f32.mxu0 0.0
      %v5843 = vand.u32 %v5519, 4294901760
      %v5844 = vsub.f32 %v5519, %v5843
      %5845 = vmatmul.mubr.f32.gmra.mrb[0].mxu0 %v5844
      %v5846 = vpop.f32.mrb[0].mxu0
      %v5847 = vadd.f32 %v5743, %v5846
      %v5848 = vpop.f32.mrb[0].mxu0
      %5849 = vdwg.mxu0
      %5850 = vmatprep.subr.mxu0 0.0
      %v5851 = vand.u32 %v5496, 4294901760
      %5852 = vmatpush1.msra.mxu0 %v5851
      %5853 = vmatprep.subr.mxu0 0.0
      %v5854 = vand.u32 %v5522, 4294901760
      %5855 = vmatpush1.msra.mxu0 %v5854
      %5856 = vmatprep.subr.mxu0 0.0
      %5857 = vmatpush1.msra.mxu0 0.0
      %5858 = vmatprep.subr.mxu0 0.0
      %5859 = vmatpush1.msra.mxu0 0.0
      %5860 = vmatprep.subr.mxu0 0.0
      %5861 = vmatpush1.msra.mxu0 0.0
      %5862 = vmatprep.subr.mxu0 0.0
      %5863 = vmatpush1.msra.mxu0 0.0
      %5864 = vmatprep.subr.mxu0 0.0
      %5865 = vmatpush1.msra.mxu0 0.0
      %5866 = vmatprep.subr.mxu0 0.0
      %5867 = vmatpush1.msra.mxu0 0.0
      %5868 = vmatprep.subr.mxu0 0.0
      %5869 = vmatpush1.msra.mxu0 0.0
      %5870 = vmatprep.subr.mxu0 0.0
      %5871 = vmatpush1.msra.mxu0 0.0
      %5872 = vmatprep.subr.mxu0 0.0
      %5873 = vmatpush1.msra.mxu0 0.0
      %5874 = vmatprep.subr.mxu0 0.0
      %5875 = vmatpush1.msra.mxu0 0.0
      %5876 = vmatprep.subr.mxu0 0.0
      %5877 = vmatpush1.msra.mxu0 0.0
      %5878 = vmatprep.subr.mxu0 0.0
      %5879 = vmatpush1.msra.mxu0 0.0
      %5880 = vmatprep.subr.mxu0 0.0
      %5881 = vmatpush1.msra.mxu0 0.0
      %5882 = vmatprep.subr.mxu0 0.0
      %5883 = vmatpush1.msra.mxu0 0.0
      %5884 = vmatprep.subr.mxu0 0.0
      %5885 = vmatpush1.msra.mxu0 0.0
      %5886 = vmatprep.subr.mxu0 0.0
      %5887 = vmatpush1.msra.mxu0 0.0
      %5888 = vmatprep.subr.mxu0 0.0
      %5889 = vmatpush1.msra.mxu0 0.0
      %5890 = vmatprep.subr.mxu0 0.0
      %5891 = vmatpush1.msra.mxu0 0.0
      %5892 = vmatprep.subr.mxu0 0.0
      %5893 = vmatpush1.msra.mxu0 0.0
      %5894 = vmatprep.subr.mxu0 0.0
      %5895 = vmatpush1.msra.mxu0 0.0
      %5896 = vmatprep.subr.mxu0 0.0
      %5897 = vmatpush1.msra.mxu0 0.0
      %5898 = vmatprep.subr.mxu0 0.0
      %5899 = vmatpush1.msra.mxu0 0.0
      %5900 = vmatprep.subr.mxu0 0.0
      %5901 = vmatpush1.msra.mxu0 0.0
      %5902 = vmatprep.subr.mxu0 0.0
      %5903 = vmatpush1.msra.mxu0 0.0
      %5904 = vmatprep.subr.mxu0 0.0
      %5905 = vmatpush1.msra.mxu0 0.0
      %5906 = vmatprep.subr.mxu0 0.0
      %5907 = vmatpush1.msra.mxu0 0.0
      %5908 = vmatprep.subr.mxu0 0.0
      %5909 = vmatpush1.msra.mxu0 0.0
      %5910 = vmatprep.subr.mxu0 0.0
      %5911 = vmatpush1.msra.mxu0 0.0
      %5912 = vmatprep.subr.mxu0 0.0
      %5913 = vmatpush1.msra.mxu0 0.0
      %5914 = vmatprep.subr.mxu0 0.0
      %5915 = vmatpush1.msra.mxu0 0.0
      %5916 = vmatprep.mubr.f32.mxu0 0.0
      %v5917 = vand.u32 %v5507, 4294901760
      %v5918 = vsub.f32 %v5507, %v5917
      %v5919 = vand.u32 %v5918, 4294901760
      %5920 = vmatmul.mubr.f32.gmra.mrb[0].mxu0 %v5919
      %v5921 = vpop.f32.mrb[0].mxu0
      %v5922 = vadd.f32 %v5819, %v5921
      %v5923 = vpop.f32.mrb[0].mxu0
      %5924 = vmatprep.mubr.f32.mxu0 0.0
      %v5925 = vand.u32 %v5510, 4294901760
      %v5926 = vsub.f32 %v5510, %v5925
      %v5927 = vand.u32 %v5926, 4294901760
      %5928 = vmatmul.mubr.f32.gmra.mrb[0].mxu0 %v5927
      %v5929 = vpop.f32.mrb[0].mxu0
      %v5930 = vadd.f32 %v5826, %v5929
      %v5931 = vpop.f32.mrb[0].mxu0
      %5932 = vmatprep.mubr.f32.mxu0 0.0
      %v5933 = vand.u32 %v5513, 4294901760
      %v5934 = vsub.f32 %v5513, %v5933
      %v5935 = vand.u32 %v5934, 4294901760
      %5936 = vmatmul.mubr.f32.gmra.mrb[0].mxu0 %v5935
      %v5937 = vpop.f32.mrb[0].mxu0
      %v5938 = vadd.f32 %v5833, %v5937
      %v5939 = vpop.f32.mrb[0].mxu0
      %5940 = vmatprep.mubr.f32.mxu0 0.0
      %v5941 = vand.u32 %v5516, 4294901760
      %v5942 = vsub.f32 %v5516, %v5941
      %v5943 = vand.u32 %v5942, 4294901760
      %5944 = vmatmul.mubr.f32.gmra.mrb[0].mxu0 %v5943
      %v5945 = vpop.f32.mrb[0].mxu0
      %v5946 = vadd.f32 %v5840, %v5945
      %v5947 = vpop.f32.mrb[0].mxu0
      %5948 = vmatprep.mubr.f32.mxu0 0.0
      %v5949 = vand.u32 %v5519, 4294901760
      %v5950 = vsub.f32 %v5519, %v5949
      %v5951 = vand.u32 %v5950, 4294901760
      %5952 = vmatmul.mubr.f32.gmra.mrb[0].mxu0 %v5951
      %v5953 = vpop.f32.mrb[0].mxu0
      %v5954 = vadd.f32 %v5847, %v5953
      %v5955 = vpop.f32.mrb[0].mxu0
      %5956 = vdwg.mxu0
      %5957 = vmatprep.subr.mxu0 0.0
      %v5958 = vand.u32 %v5496, 4294901760
      %v5959 = vsub.f32 %v5496, %v5958
      %v5960 = vand.u32 %v5959, 4294901760
      %5961 = vmatpush1.msra.mxu0 %v5960
      %5962 = vmatprep.subr.mxu0 0.0
      %v5963 = vand.u32 %v5522, 4294901760
      %v5964 = vsub.f32 %v5522, %v5963
      %v5965 = vand.u32 %v5964, 4294901760
      %5966 = vmatpush1.msra.mxu0 %v5965
      %5967 = vmatprep.subr.mxu0 0.0
      %5968 = vmatpush1.msra.mxu0 0.0
      %5969 = vmatprep.subr.mxu0 0.0
      %5970 = vmatpush1.msra.mxu0 0.0
      %5971 = vmatprep.subr.mxu0 0.0
      %5972 = vmatpush1.msra.mxu0 0.0
      %5973 = vmatprep.subr.mxu0 0.0
      %5974 = vmatpush1.msra.mxu0 0.0
      %5975 = vmatprep.subr.mxu0 0.0
      %5976 = vmatpush1.msra.mxu0 0.0
      %5977 = vmatprep.subr.mxu0 0.0
      %5978 = vmatpush1.msra.mxu0 0.0
      %5979 = vmatprep.subr.mxu0 0.0
      %5980 = vmatpush1.msra.mxu0 0.0
      %5981 = vmatprep.subr.mxu0 0.0
      %5982 = vmatpush1.msra.mxu0 0.0
      %5983 = vmatprep.subr.mxu0 0.0
      %5984 = vmatpush1.msra.mxu0 0.0
      %5985 = vmatprep.subr.mxu0 0.0
      %5986 = vmatpush1.msra.mxu0 0.0
      %5987 = vmatprep.subr.mxu0 0.0
      %5988 = vmatpush1.msra.mxu0 0.0
      %5989 = vmatprep.subr.mxu0 0.0
      %5990 = vmatpush1.msra.mxu0 0.0
      %5991 = vmatprep.subr.mxu0 0.0
      %5992 = vmatpush1.msra.mxu0 0.0
      %5993 = vmatprep.subr.mxu0 0.0
      %5994 = vmatpush1.msra.mxu0 0.0
      %5995 = vmatprep.subr.mxu0 0.0
      %5996 = vmatpush1.msra.mxu0 0.0
      %5997 = vmatprep.subr.mxu0 0.0
      %5998 = vmatpush1.msra.mxu0 0.0
      %5999 = vmatprep.subr.mxu0 0.0
      %6000 = vmatpush1.msra.mxu0 0.0
      %6001 = vmatprep.subr.mxu0 0.0
      %6002 = vmatpush1.msra.mxu0 0.0
      %6003 = vmatprep.subr.mxu0 0.0
      %6004 = vmatpush1.msra.mxu0 0.0
      %6005 = vmatprep.subr.mxu0 0.0
      %6006 = vmatpush1.msra.mxu0 0.0
      %6007 = vmatprep.subr.mxu0 0.0
      %6008 = vmatpush1.msra.mxu0 0.0
      %6009 = vmatprep.subr.mxu0 0.0
      %6010 = vmatpush1.msra.mxu0 0.0
      %6011 = vmatprep.subr.mxu0 0.0
      %6012 = vmatpush1.msra.mxu0 0.0
      %6013 = vmatprep.subr.mxu0 0.0
      %6014 = vmatpush1.msra.mxu0 0.0
      %6015 = vmatprep.subr.mxu0 0.0
      %6016 = vmatpush1.msra.mxu0 0.0
      %6017 = vmatprep.subr.mxu0 0.0
      %6018 = vmatpush1.msra.mxu0 0.0
      %6019 = vmatprep.subr.mxu0 0.0
      %6020 = vmatpush1.msra.mxu0 0.0
      %6021 = vmatprep.subr.mxu0 0.0
      %6022 = vmatpush1.msra.mxu0 0.0
      %6023 = vmatprep.subr.mxu0 0.0
      %6024 = vmatpush1.msra.mxu0 0.0
      %6025 = vmatprep.subr.mxu0 0.0
      %6026 = vmatpush1.msra.mxu0 0.0
      %6027 = vmatprep.mubr.f32.mxu0 0.0
      %v6028 = vand.u32 %v5507, 4294901760
      %6029 = vmatmul.mubr.f32.gmra.mrb[0].mxu0 %v6028
      %v6030 = vpop.f32.mrb[0].mxu0
      %v6031 = vadd.f32 %v5922, %v6030
      %v6032 = vpop.f32.mrb[0].mxu0
      %6033 = vmatprep.mubr.f32.mxu0 0.0
      %v6034 = vand.u32 %v5510, 4294901760
      %6035 = vmatmul.mubr.f32.gmra.mrb[0].mxu0 %v6034
      %v6036 = vpop.f32.mrb[0].mxu0
      %v6037 = vadd.f32 %v5930, %v6036
      %v6038 = vpop.f32.mrb[0].mxu0
      %6039 = vmatprep.mubr.f32.mxu0 0.0
      %v6040 = vand.u32 %v5513, 4294901760
      %6041 = vmatmul.mubr.f32.gmra.mrb[0].mxu0 %v6040
      %v6042 = vpop.f32.mrb[0].mxu0
      %v6043 = vadd.f32 %v5938, %v6042
      %v6044 = vpop.f32.mrb[0].mxu0
      %6045 = vmatprep.mubr.f32.mxu0 0.0
      %v6046 = vand.u32 %v5516, 4294901760
      %6047 = vmatmul.mubr.f32.gmra.mrb[0].mxu0 %v6046
      %v6048 = vpop.f32.mrb[0].mxu0
      %v6049 = vadd.f32 %v5946, %v6048
      %v6050 = vpop.f32.mrb[0].mxu0
      %6051 = vmatprep.mubr.f32.mxu0 0.0
      %v6052 = vand.u32 %v5519, 4294901760
      %6053 = vmatmul.mubr.f32.gmra.mrb[0].mxu0 %v6052
      %v6054 = vpop.f32.mrb[0].mxu0
      %v6055 = vadd.f32 %v5954, %v6054
      %v6056 = vpop.f32.mrb[0].mxu0
      %6057 = vdwg.mxu0
      %6058 = vmatprep.subr.mxu0 0.0
      %v6059 = vand.u32 %v5496, 4294901760
      %6060 = vmatpush1.msra.mxu0 %v6059
      %6061 = vmatprep.subr.mxu0 0.0
      %v6062 = vand.u32 %v5522, 4294901760
      %6063 = vmatpush1.msra.mxu0 %v6062
      %6064 = vmatprep.subr.mxu0 0.0
      %6065 = vmatpush1.msra.mxu0 0.0
      %6066 = vmatprep.subr.mxu0 0.0
      %6067 = vmatpush1.msra.mxu0 0.0
      %6068 = vmatprep.subr.mxu0 0.0
      %6069 = vmatpush1.msra.mxu0 0.0
      %6070 = vmatprep.subr.mxu0 0.0
      %6071 = vmatpush1.msra.mxu0 0.0
      %6072 = vmatprep.subr.mxu0 0.0
      %6073 = vmatpush1.msra.mxu0 0.0
      %6074 = vmatprep.subr.mxu0 0.0
      %6075 = vmatpush1.msra.mxu0 0.0
      %6076 = vmatprep.subr.mxu0 0.0
      %6077 = vmatpush1.msra.mxu0 0.0
      %6078 = vmatprep.subr.mxu0 0.0
      %6079 = vmatpush1.msra.mxu0 0.0
      %6080 = vmatprep.subr.mxu0 0.0
      %6081 = vmatpush1.msra.mxu0 0.0
      %6082 = vmatprep.subr.mxu0 0.0
      %6083 = vmatpush1.msra.mxu0 0.0
      %6084 = vmatprep.subr.mxu0 0.0
      %6085 = vmatpush1.msra.mxu0 0.0
      %6086 = vmatprep.subr.mxu0 0.0
      %6087 = vmatpush1.msra.mxu0 0.0
      %6088 = vmatprep.subr.mxu0 0.0
      %6089 = vmatpush1.msra.mxu0 0.0
      %6090 = vmatprep.subr.mxu0 0.0
      %6091 = vmatpush1.msra.mxu0 0.0
      %6092 = vmatprep.subr.mxu0 0.0
      %6093 = vmatpush1.msra.mxu0 0.0
      %6094 = vmatprep.subr.mxu0 0.0
      %6095 = vmatpush1.msra.mxu0 0.0
      %6096 = vmatprep.subr.mxu0 0.0
      %6097 = vmatpush1.msra.mxu0 0.0
      %6098 = vmatprep.subr.mxu0 0.0
      %6099 = vmatpush1.msra.mxu0 0.0
      %6100 = vmatprep.subr.mxu0 0.0
      %6101 = vmatpush1.msra.mxu0 0.0
      %6102 = vmatprep.subr.mxu0 0.0
      %6103 = vmatpush1.msra.mxu0 0.0
      %6104 = vmatprep.subr.mxu0 0.0
      %6105 = vmatpush1.msra.mxu0 0.0
      %6106 = vmatprep.subr.mxu0 0.0
      %6107 = vmatpush1.msra.mxu0 0.0
      %6108 = vmatprep.subr.mxu0 0.0
      %6109 = vmatpush1.msra.mxu0 0.0
      %6110 = vmatprep.subr.mxu0 0.0
      %6111 = vmatpush1.msra.mxu0 0.0
      %6112 = vmatprep.subr.mxu0 0.0
      %6113 = vmatpush1.msra.mxu0 0.0
      %6114 = vmatprep.subr.mxu0 0.0
      %6115 = vmatpush1.msra.mxu0 0.0
      %6116 = vmatprep.subr.mxu0 0.0
      %6117 = vmatpush1.msra.mxu0 0.0
      %6118 = vmatprep.subr.mxu0 0.0
      %6119 = vmatpush1.msra.mxu0 0.0
      %6120 = vmatprep.subr.mxu0 0.0
      %6121 = vmatpush1.msra.mxu0 0.0
      %6122 = vmatprep.subr.mxu0 0.0
      %6123 = vmatpush1.msra.mxu0 0.0
      %6124 = vmatprep.mubr.f32.mxu0 0.0
      %v6125 = vand.u32 %v5507, 4294901760
      %6126 = vmatmul.mubr.f32.gmra.mrb[0].mxu0 %v6125
      %v6127 = vpop.f32.mrb[0].mxu0
      %v6128 = vadd.f32 %v6031, %v6127
      %v6129 = vpop.f32.mrb[0].mxu0
      %6130 = vmatprep.mubr.f32.mxu0 0.0
      %v6131 = vand.u32 %v5510, 4294901760
      %6132 = vmatmul.mubr.f32.gmra.mrb[0].mxu0 %v6131
      %v6133 = vpop.f32.mrb[0].mxu0
      %v6134 = vadd.f32 %v6037, %v6133
      %v6135 = vpop.f32.mrb[0].mxu0
      %6136 = vmatprep.mubr.f32.mxu0 0.0
      %v6137 = vand.u32 %v5513, 4294901760
      %6138 = vmatmul.mubr.f32.gmra.mrb[0].mxu0 %v6137
      %v6139 = vpop.f32.mrb[0].mxu0
      %v6140 = vadd.f32 %v6043, %v6139
      %v6141 = vpop.f32.mrb[0].mxu0
      %6142 = vmatprep.mubr.f32.mxu0 0.0
      %v6143 = vand.u32 %v5516, 4294901760
      %6144 = vmatmul.mubr.f32.gmra.mrb[0].mxu0 %v6143
      %v6145 = vpop.f32.mrb[0].mxu0
      %v6146 = vadd.f32 %v6049, %v6145
      %v6147 = vpop.f32.mrb[0].mxu0
      %6148 = vmatprep.mubr.f32.mxu0 0.0
      %v6149 = vand.u32 %v5519, 4294901760
      %6150 = vmatmul.mubr.f32.gmra.mrb[0].mxu0 %v6149
      %v6151 = vpop.f32.mrb[0].mxu0
      %v6152 = vadd.f32 %v6055, %v6151
      %v6153 = vpop.f32.mrb[0].mxu0
      %6154 = vdwg.mxu0
      %v6155 = vmax.f32 %v6128, 0.0
      %v6156 = vmax.f32 %v6134, 0.0
      %v6157 = vmax.f32 %v6140, 0.0
      %v6158 = vmax.f32 %v6146, 0.0
      %v6159 = vmax.f32 %v6152, 0.0
      %s6160 = scalar_lea.vmem %s9, 32
      %v6161 = vld [vmem:[%s6160] sm:$0xff]
      %v6162 = vld [vmem:[%s6160 + $0x8] sm:$0xff]
      %v6163 = vld [vmem:[%s6160 + $0x10] sm:$0xff]
      %v6164 = vld [vmem:[%s6160 + $0x18] sm:$0xff]
      %s6165 = scalar_lea.vmem %s10, 1
      %v6166 = vld [vmem:[%s6165] sm:$0x1]
      %v6168 = vlaneseq
      %v6169 = vshrl.u32 %v6168, 7
      %v6170 = vsub.s32 0, %v6169
      %v6171 = vrot.slane %v6166, %v6170
      %v6174 = vsel %vm2952, %v6155, 0
      %v6177 = vsel %vm2952, %v6156, 0
      %v6180 = vsel %vm2952, %v6157, 0
      %v6183 = vsel %vm2952, %v6158, 0
      %v6186 = vsel %vm2952, %v6159, 0
      %6188 = vmatprep.subr.mxu0 0.0
      %v6189 = vand.u32 %v6161, 4294901760
      %6190 = vmatpush1.msra.mxu0 %v6189
      %6191 = vmatprep.subr.mxu0 0.0
      %v6192 = vand.u32 %v6162, 4294901760
      %6193 = vmatpush1.msra.mxu0 %v6192
      %6194 = vmatprep.subr.mxu0 0.0
      %v6195 = vand.u32 %v6163, 4294901760
      %6196 = vmatpush1.msra.mxu0 %v6195
      %6197 = vmatprep.subr.mxu0 0.0
      %v6198 = vand.u32 %v6164, 4294901760
      %6199 = vmatpush1.msra.mxu0 %v6198
      %6200 = vmatprep.subr.mxu0 0.0
      %6201 = vmatpush1.msra.mxu0 0.0
      %6202 = vmatprep.subr.mxu0 0.0
      %6203 = vmatpush1.msra.mxu0 0.0
      %6204 = vmatprep.subr.mxu0 0.0
      %6205 = vmatpush1.msra.mxu0 0.0
      %6206 = vmatprep.subr.mxu0 0.0
      %6207 = vmatpush1.msra.mxu0 0.0
      %6208 = vmatprep.subr.mxu0 0.0
      %6209 = vmatpush1.msra.mxu0 0.0
      %6210 = vmatprep.subr.mxu0 0.0
      %6211 = vmatpush1.msra.mxu0 0.0
      %6212 = vmatprep.subr.mxu0 0.0
      %6213 = vmatpush1.msra.mxu0 0.0
      %6214 = vmatprep.subr.mxu0 0.0
      %6215 = vmatpush1.msra.mxu0 0.0
      %6216 = vmatprep.subr.mxu0 0.0
      %6217 = vmatpush1.msra.mxu0 0.0
      %6218 = vmatprep.subr.mxu0 0.0
      %6219 = vmatpush1.msra.mxu0 0.0
      %6220 = vmatprep.subr.mxu0 0.0
      %6221 = vmatpush1.msra.mxu0 0.0
      %6222 = vmatprep.subr.mxu0 0.0
      %6223 = vmatpush1.msra.mxu0 0.0
      %6224 = vmatprep.subr.mxu0 0.0
      %6225 = vmatpush1.msra.mxu0 0.0
      %6226 = vmatprep.subr.mxu0 0.0
      %6227 = vmatpush1.msra.mxu0 0.0
      %6228 = vmatprep.subr.mxu0 0.0
      %6229 = vmatpush1.msra.mxu0 0.0
      %6230 = vmatprep.subr.mxu0 0.0
      %6231 = vmatpush1.msra.mxu0 0.0
      %6232 = vmatprep.subr.mxu0 0.0
      %6233 = vmatpush1.msra.mxu0 0.0
      %6234 = vmatprep.subr.mxu0 0.0
      %6235 = vmatpush1.msra.mxu0 0.0
      %6236 = vmatprep.subr.mxu0 0.0
      %6237 = vmatpush1.msra.mxu0 0.0
      %6238 = vmatprep.subr.mxu0 0.0
      %6239 = vmatpush1.msra.mxu0 0.0
      %6240 = vmatprep.subr.mxu0 0.0
      %6241 = vmatpush1.msra.mxu0 0.0
      %6242 = vmatprep.subr.mxu0 0.0
      %6243 = vmatpush1.msra.mxu0 0.0
      %6244 = vmatprep.subr.mxu0 0.0
      %6245 = vmatpush1.msra.mxu0 0.0
      %6246 = vmatprep.subr.mxu0 0.0
      %6247 = vmatpush1.msra.mxu0 0.0
      %6248 = vmatprep.subr.mxu0 0.0
      %6249 = vmatpush1.msra.mxu0 0.0
      %6250 = vmatprep.subr.mxu0 0.0
      %6251 = vmatpush1.msra.mxu0 0.0
      %6252 = vmatprep.subr.mxu0 0.0
      %6253 = vmatpush1.msra.mxu0 0.0
      %6254 = vmatprep.subr.mxu0 0.0
      %6255 = vmatpush1.msra.mxu0 0.0
      %6256 = vmatprep.mubr.f32.mxu0 0.0
      %v6257 = vand.u32 %v6174, 4294901760
      %v6258 = vsub.f32 %v6174, %v6257
      %v6259 = vand.u32 %v6258, 4294901760
      %v6260 = vsub.f32 %v6258, %v6259
      %v6261 = vand.u32 %v6260, 4294901760
      %6262 = vmatmul.mubr.f32.gmra.mrb[0].mxu0 %v6261
      %v6263 = vpop.f32.mrb[0].mxu0
      %v6264 = vadd.f32 %v6171, %v6263
      %v6265 = vpop.f32.mrb[0].mxu0
      %6266 = vmatprep.mubr.f32.mxu0 0.0
      %v6267 = vand.u32 %v6177, 4294901760
      %v6268 = vsub.f32 %v6177, %v6267
      %v6269 = vand.u32 %v6268, 4294901760
      %v6270 = vsub.f32 %v6268, %v6269
      %v6271 = vand.u32 %v6270, 4294901760
      %6272 = vmatmul.mubr.f32.gmra.mrb[0].mxu0 %v6271
      %v6273 = vpop.f32.mrb[0].mxu0
      %v6274 = vadd.f32 %v6171, %v6273
      %v6275 = vpop.f32.mrb[0].mxu0
      %6276 = vmatprep.mubr.f32.mxu0 0.0
      %v6277 = vand.u32 %v6180, 4294901760
      %v6278 = vsub.f32 %v6180, %v6277
      %v6279 = vand.u32 %v6278, 4294901760
      %v6280 = vsub.f32 %v6278, %v6279
      %v6281 = vand.u32 %v6280, 4294901760
      %6282 = vmatmul.mubr.f32.gmra.mrb[0].mxu0 %v6281
      %v6283 = vpop.f32.mrb[0].mxu0
      %v6284 = vadd.f32 %v6171, %v6283
      %v6285 = vpop.f32.mrb[0].mxu0
      %6286 = vmatprep.mubr.f32.mxu0 0.0
      %v6287 = vand.u32 %v6183, 4294901760
      %v6288 = vsub.f32 %v6183, %v6287
      %v6289 = vand.u32 %v6288, 4294901760
      %v6290 = vsub.f32 %v6288, %v6289
      %v6291 = vand.u32 %v6290, 4294901760
      %6292 = vmatmul.mubr.f32.gmra.mrb[0].mxu0 %v6291
      %v6293 = vpop.f32.mrb[0].mxu0
      %v6294 = vadd.f32 %v6171, %v6293
      %v6295 = vpop.f32.mrb[0].mxu0
      %6296 = vmatprep.mubr.f32.mxu0 0.0
      %v6297 = vand.u32 %v6186, 4294901760
      %v6298 = vsub.f32 %v6186, %v6297
      %v6299 = vand.u32 %v6298, 4294901760
      %v6300 = vsub.f32 %v6298, %v6299
      %v6301 = vand.u32 %v6300, 4294901760
      %6302 = vmatmul.mubr.f32.gmra.mrb[0].mxu0 %v6301
      %v6303 = vpop.f32.mrb[0].mxu0
      %v6304 = vadd.f32 %v6171, %v6303
      %v6305 = vpop.f32.mrb[0].mxu0
      %6306 = vdwg.mxu0
      %6307 = vmatprep.subr.mxu0 0.0
      %v6308 = vand.u32 %v6161, 4294901760
      %v6309 = vsub.f32 %v6161, %v6308
      %v6310 = vand.u32 %v6309, 4294901760
      %v6311 = vsub.f32 %v6309, %v6310
      %v6312 = vand.u32 %v6311, 4294901760
      %6313 = vmatpush1.msra.mxu0 %v6312
      %6314 = vmatprep.subr.mxu0 0.0
      %v6315 = vand.u32 %v6162, 4294901760
      %v6316 = vsub.f32 %v6162, %v6315
      %v6317 = vand.u32 %v6316, 4294901760
      %v6318 = vsub.f32 %v6316, %v6317
      %v6319 = vand.u32 %v6318, 4294901760
      %6320 = vmatpush1.msra.mxu0 %v6319
      %6321 = vmatprep.subr.mxu0 0.0
      %v6322 = vand.u32 %v6163, 4294901760
      %v6323 = vsub.f32 %v6163, %v6322
      %v6324 = vand.u32 %v6323, 4294901760
      %v6325 = vsub.f32 %v6323, %v6324
      %v6326 = vand.u32 %v6325, 4294901760
      %6327 = vmatpush1.msra.mxu0 %v6326
      %6328 = vmatprep.subr.mxu0 0.0
      %v6329 = vand.u32 %v6164, 4294901760
      %v6330 = vsub.f32 %v6164, %v6329
      %v6331 = vand.u32 %v6330, 4294901760
      %v6332 = vsub.f32 %v6330, %v6331
      %v6333 = vand.u32 %v6332, 4294901760
      %6334 = vmatpush1.msra.mxu0 %v6333
      %6335 = vmatprep.subr.mxu0 0.0
      %6336 = vmatpush1.msra.mxu0 0.0
      %6337 = vmatprep.subr.mxu0 0.0
      %6338 = vmatpush1.msra.mxu0 0.0
      %6339 = vmatprep.subr.mxu0 0.0
      %6340 = vmatpush1.msra.mxu0 0.0
      %6341 = vmatprep.subr.mxu0 0.0
      %6342 = vmatpush1.msra.mxu0 0.0
      %6343 = vmatprep.subr.mxu0 0.0
      %6344 = vmatpush1.msra.mxu0 0.0
      %6345 = vmatprep.subr.mxu0 0.0
      %6346 = vmatpush1.msra.mxu0 0.0
      %6347 = vmatprep.subr.mxu0 0.0
      %6348 = vmatpush1.msra.mxu0 0.0
      %6349 = vmatprep.subr.mxu0 0.0
      %6350 = vmatpush1.msra.mxu0 0.0
      %6351 = vmatprep.subr.mxu0 0.0
      %6352 = vmatpush1.msra.mxu0 0.0
      %6353 = vmatprep.subr.mxu0 0.0
      %6354 = vmatpush1.msra.mxu0 0.0
      %6355 = vmatprep.subr.mxu0 0.0
      %6356 = vmatpush1.msra.mxu0 0.0
      %6357 = vmatprep.subr.mxu0 0.0
      %6358 = vmatpush1.msra.mxu0 0.0
      %6359 = vmatprep.subr.mxu0 0.0
      %6360 = vmatpush1.msra.mxu0 0.0
      %6361 = vmatprep.subr.mxu0 0.0
      %6362 = vmatpush1.msra.mxu0 0.0
      %6363 = vmatprep.subr.mxu0 0.0
      %6364 = vmatpush1.msra.mxu0 0.0
      %6365 = vmatprep.subr.mxu0 0.0
      %6366 = vmatpush1.msra.mxu0 0.0
      %6367 = vmatprep.subr.mxu0 0.0
      %6368 = vmatpush1.msra.mxu0 0.0
      %6369 = vmatprep.subr.mxu0 0.0
      %6370 = vmatpush1.msra.mxu0 0.0
      %6371 = vmatprep.subr.mxu0 0.0
      %6372 = vmatpush1.msra.mxu0 0.0
      %6373 = vmatprep.subr.mxu0 0.0
      %6374 = vmatpush1.msra.mxu0 0.0
      %6375 = vmatprep.subr.mxu0 0.0
      %6376 = vmatpush1.msra.mxu0 0.0
      %6377 = vmatprep.subr.mxu0 0.0
      %6378 = vmatpush1.msra.mxu0 0.0
      %6379 = vmatprep.subr.mxu0 0.0
      %6380 = vmatpush1.msra.mxu0 0.0
      %6381 = vmatprep.subr.mxu0 0.0
      %6382 = vmatpush1.msra.mxu0 0.0
      %6383 = vmatprep.subr.mxu0 0.0
      %6384 = vmatpush1.msra.mxu0 0.0
      %6385 = vmatprep.subr.mxu0 0.0
      %6386 = vmatpush1.msra.mxu0 0.0
      %6387 = vmatprep.subr.mxu0 0.0
      %6388 = vmatpush1.msra.mxu0 0.0
      %6389 = vmatprep.subr.mxu0 0.0
      %6390 = vmatpush1.msra.mxu0 0.0
      %6391 = vmatprep.mubr.f32.mxu0 0.0
      %v6392 = vand.u32 %v6174, 4294901760
      %6393 = vmatmul.mubr.f32.gmra.mrb[0].mxu0 %v6392
      %v6394 = vpop.f32.mrb[0].mxu0
      %v6395 = vadd.f32 %v6264, %v6394
      %v6396 = vpop.f32.mrb[0].mxu0
      %6397 = vmatprep.mubr.f32.mxu0 0.0
      %v6398 = vand.u32 %v6177, 4294901760
      %6399 = vmatmul.mubr.f32.gmra.mrb[0].mxu0 %v6398
      %v6400 = vpop.f32.mrb[0].mxu0
      %v6401 = vadd.f32 %v6274, %v6400
      %v6402 = vpop.f32.mrb[0].mxu0
      %6403 = vmatprep.mubr.f32.mxu0 0.0
      %v6404 = vand.u32 %v6180, 4294901760
      %6405 = vmatmul.mubr.f32.gmra.mrb[0].mxu0 %v6404
      %v6406 = vpop.f32.mrb[0].mxu0
      %v6407 = vadd.f32 %v6284, %v6406
      %v6408 = vpop.f32.mrb[0].mxu0
      %6409 = vmatprep.mubr.f32.mxu0 0.0
      %v6410 = vand.u32 %v6183, 4294901760
      %6411 = vmatmul.mubr.f32.gmra.mrb[0].mxu0 %v6410
      %v6412 = vpop.f32.mrb[0].mxu0
      %v6413 = vadd.f32 %v6294, %v6412
      %v6414 = vpop.f32.mrb[0].mxu0
      %6415 = vmatprep.mubr.f32.mxu0 0.0
      %v6416 = vand.u32 %v6186, 4294901760
      %6417 = vmatmul.mubr.f32.gmra.mrb[0].mxu0 %v6416
      %v6418 = vpop.f32.mrb[0].mxu0
      %v6419 = vadd.f32 %v6304, %v6418
      %v6420 = vpop.f32.mrb[0].mxu0
      %6421 = vdwg.mxu0
      %6422 = vmatprep.subr.mxu0 0.0
      %v6423 = vand.u32 %v6161, 4294901760
      %v6424 = vsub.f32 %v6161, %v6423
      %6425 = vmatpush1.msra.mxu0 %v6424
      %6426 = vmatprep.subr.mxu0 0.0
      %v6427 = vand.u32 %v6162, 4294901760
      %v6428 = vsub.f32 %v6162, %v6427
      %6429 = vmatpush1.msra.mxu0 %v6428
      %6430 = vmatprep.subr.mxu0 0.0
      %v6431 = vand.u32 %v6163, 4294901760
      %v6432 = vsub.f32 %v6163, %v6431
      %6433 = vmatpush1.msra.mxu0 %v6432
      %6434 = vmatprep.subr.mxu0 0.0
      %v6435 = vand.u32 %v6164, 4294901760
      %v6436 = vsub.f32 %v6164, %v6435
      %6437 = vmatpush1.msra.mxu0 %v6436
      %6438 = vmatprep.subr.mxu0 0.0
      %6439 = vmatpush1.msra.mxu0 0.0
      %6440 = vmatprep.subr.mxu0 0.0
      %6441 = vmatpush1.msra.mxu0 0.0
      %6442 = vmatprep.subr.mxu0 0.0
      %6443 = vmatpush1.msra.mxu0 0.0
      %6444 = vmatprep.subr.mxu0 0.0
      %6445 = vmatpush1.msra.mxu0 0.0
      %6446 = vmatprep.subr.mxu0 0.0
      %6447 = vmatpush1.msra.mxu0 0.0
      %6448 = vmatprep.subr.mxu0 0.0
      %6449 = vmatpush1.msra.mxu0 0.0
      %6450 = vmatprep.subr.mxu0 0.0
      %6451 = vmatpush1.msra.mxu0 0.0
      %6452 = vmatprep.subr.mxu0 0.0
      %6453 = vmatpush1.msra.mxu0 0.0
      %6454 = vmatprep.subr.mxu0 0.0
      %6455 = vmatpush1.msra.mxu0 0.0
      %6456 = vmatprep.subr.mxu0 0.0
      %6457 = vmatpush1.msra.mxu0 0.0
      %6458 = vmatprep.subr.mxu0 0.0
      %6459 = vmatpush1.msra.mxu0 0.0
      %6460 = vmatprep.subr.mxu0 0.0
      %6461 = vmatpush1.msra.mxu0 0.0
      %6462 = vmatprep.subr.mxu0 0.0
      %6463 = vmatpush1.msra.mxu0 0.0
      %6464 = vmatprep.subr.mxu0 0.0
      %6465 = vmatpush1.msra.mxu0 0.0
      %6466 = vmatprep.subr.mxu0 0.0
      %6467 = vmatpush1.msra.mxu0 0.0
      %6468 = vmatprep.subr.mxu0 0.0
      %6469 = vmatpush1.msra.mxu0 0.0
      %6470 = vmatprep.subr.mxu0 0.0
      %6471 = vmatpush1.msra.mxu0 0.0
      %6472 = vmatprep.subr.mxu0 0.0
      %6473 = vmatpush1.msra.mxu0 0.0
      %6474 = vmatprep.subr.mxu0 0.0
      %6475 = vmatpush1.msra.mxu0 0.0
      %6476 = vmatprep.subr.mxu0 0.0
      %6477 = vmatpush1.msra.mxu0 0.0
      %6478 = vmatprep.subr.mxu0 0.0
      %6479 = vmatpush1.msra.mxu0 0.0
      %6480 = vmatprep.subr.mxu0 0.0
      %6481 = vmatpush1.msra.mxu0 0.0
      %6482 = vmatprep.subr.mxu0 0.0
      %6483 = vmatpush1.msra.mxu0 0.0
      %6484 = vmatprep.subr.mxu0 0.0
      %6485 = vmatpush1.msra.mxu0 0.0
      %6486 = vmatprep.subr.mxu0 0.0
      %6487 = vmatpush1.msra.mxu0 0.0
      %6488 = vmatprep.subr.mxu0 0.0
      %6489 = vmatpush1.msra.mxu0 0.0
      %6490 = vmatprep.subr.mxu0 0.0
      %6491 = vmatpush1.msra.mxu0 0.0
      %6492 = vmatprep.subr.mxu0 0.0
      %6493 = vmatpush1.msra.mxu0 0.0
      %6494 = vmatprep.mubr.f32.mxu0 0.0
      %v6495 = vand.u32 %v6174, 4294901760
      %v6496 = vsub.f32 %v6174, %v6495
      %6497 = vmatmul.mubr.f32.gmra.mrb[0].mxu0 %v6496
      %v6498 = vpop.f32.mrb[0].mxu0
      %v6499 = vadd.f32 %v6395, %v6498
      %v6500 = vpop.f32.mrb[0].mxu0
      %6501 = vmatprep.mubr.f32.mxu0 0.0
      %v6502 = vand.u32 %v6177, 4294901760
      %v6503 = vsub.f32 %v6177, %v6502
      %6504 = vmatmul.mubr.f32.gmra.mrb[0].mxu0 %v6503
      %v6505 = vpop.f32.mrb[0].mxu0
      %v6506 = vadd.f32 %v6401, %v6505
      %v6507 = vpop.f32.mrb[0].mxu0
      %6508 = vmatprep.mubr.f32.mxu0 0.0
      %v6509 = vand.u32 %v6180, 4294901760
      %v6510 = vsub.f32 %v6180, %v6509
      %6511 = vmatmul.mubr.f32.gmra.mrb[0].mxu0 %v6510
      %v6512 = vpop.f32.mrb[0].mxu0
      %v6513 = vadd.f32 %v6407, %v6512
      %v6514 = vpop.f32.mrb[0].mxu0
      %6515 = vmatprep.mubr.f32.mxu0 0.0
      %v6516 = vand.u32 %v6183, 4294901760
      %v6517 = vsub.f32 %v6183, %v6516
      %6518 = vmatmul.mubr.f32.gmra.mrb[0].mxu0 %v6517
      %v6519 = vpop.f32.mrb[0].mxu0
      %v6520 = vadd.f32 %v6413, %v6519
      %v6521 = vpop.f32.mrb[0].mxu0
      %6522 = vmatprep.mubr.f32.mxu0 0.0
      %v6523 = vand.u32 %v6186, 4294901760
      %v6524 = vsub.f32 %v6186, %v6523
      %6525 = vmatmul.mubr.f32.gmra.mrb[0].mxu0 %v6524
      %v6526 = vpop.f32.mrb[0].mxu0
      %v6527 = vadd.f32 %v6419, %v6526
      %v6528 = vpop.f32.mrb[0].mxu0
      %6529 = vdwg.mxu0
      %6530 = vmatprep.subr.mxu0 0.0
      %v6531 = vand.u32 %v6161, 4294901760
      %6532 = vmatpush1.msra.mxu0 %v6531
      %6533 = vmatprep.subr.mxu0 0.0
      %v6534 = vand.u32 %v6162, 4294901760
      %6535 = vmatpush1.msra.mxu0 %v6534
      %6536 = vmatprep.subr.mxu0 0.0
      %v6537 = vand.u32 %v6163, 4294901760
      %6538 = vmatpush1.msra.mxu0 %v6537
      %6539 = vmatprep.subr.mxu0 0.0
      %v6540 = vand.u32 %v6164, 4294901760
      %6541 = vmatpush1.msra.mxu0 %v6540
      %6542 = vmatprep.subr.mxu0 0.0
      %6543 = vmatpush1.msra.mxu0 0.0
      %6544 = vmatprep.subr.mxu0 0.0
      %6545 = vmatpush1.msra.mxu0 0.0
      %6546 = vmatprep.subr.mxu0 0.0
      %6547 = vmatpush1.msra.mxu0 0.0
      %6548 = vmatprep.subr.mxu0 0.0
      %6549 = vmatpush1.msra.mxu0 0.0
      %6550 = vmatprep.subr.mxu0 0.0
      %6551 = vmatpush1.msra.mxu0 0.0
      %6552 = vmatprep.subr.mxu0 0.0
      %6553 = vmatpush1.msra.mxu0 0.0
      %6554 = vmatprep.subr.mxu0 0.0
      %6555 = vmatpush1.msra.mxu0 0.0
      %6556 = vmatprep.subr.mxu0 0.0
      %6557 = vmatpush1.msra.mxu0 0.0
      %6558 = vmatprep.subr.mxu0 0.0
      %6559 = vmatpush1.msra.mxu0 0.0
      %6560 = vmatprep.subr.mxu0 0.0
      %6561 = vmatpush1.msra.mxu0 0.0
      %6562 = vmatprep.subr.mxu0 0.0
      %6563 = vmatpush1.msra.mxu0 0.0
      %6564 = vmatprep.subr.mxu0 0.0
      %6565 = vmatpush1.msra.mxu0 0.0
      %6566 = vmatprep.subr.mxu0 0.0
      %6567 = vmatpush1.msra.mxu0 0.0
      %6568 = vmatprep.subr.mxu0 0.0
      %6569 = vmatpush1.msra.mxu0 0.0
      %6570 = vmatprep.subr.mxu0 0.0
      %6571 = vmatpush1.msra.mxu0 0.0
      %6572 = vmatprep.subr.mxu0 0.0
      %6573 = vmatpush1.msra.mxu0 0.0
      %6574 = vmatprep.subr.mxu0 0.0
      %6575 = vmatpush1.msra.mxu0 0.0
      %6576 = vmatprep.subr.mxu0 0.0
      %6577 = vmatpush1.msra.mxu0 0.0
      %6578 = vmatprep.subr.mxu0 0.0
      %6579 = vmatpush1.msra.mxu0 0.0
      %6580 = vmatprep.subr.mxu0 0.0
      %6581 = vmatpush1.msra.mxu0 0.0
      %6582 = vmatprep.subr.mxu0 0.0
      %6583 = vmatpush1.msra.mxu0 0.0
      %6584 = vmatprep.subr.mxu0 0.0
      %6585 = vmatpush1.msra.mxu0 0.0
      %6586 = vmatprep.subr.mxu0 0.0
      %6587 = vmatpush1.msra.mxu0 0.0
      %6588 = vmatprep.subr.mxu0 0.0
      %6589 = vmatpush1.msra.mxu0 0.0
      %6590 = vmatprep.subr.mxu0 0.0
      %6591 = vmatpush1.msra.mxu0 0.0
      %6592 = vmatprep.subr.mxu0 0.0
      %6593 = vmatpush1.msra.mxu0 0.0
      %6594 = vmatprep.subr.mxu0 0.0
      %6595 = vmatpush1.msra.mxu0 0.0
      %6596 = vmatprep.subr.mxu0 0.0
      %6597 = vmatpush1.msra.mxu0 0.0
      %6598 = vmatprep.mubr.f32.mxu0 0.0
      %v6599 = vand.u32 %v6174, 4294901760
      %v6600 = vsub.f32 %v6174, %v6599
      %v6601 = vand.u32 %v6600, 4294901760
      %6602 = vmatmul.mubr.f32.gmra.mrb[0].mxu0 %v6601
      %v6603 = vpop.f32.mrb[0].mxu0
      %v6604 = vadd.f32 %v6499, %v6603
      %v6605 = vpop.f32.mrb[0].mxu0
      %6606 = vmatprep.mubr.f32.mxu0 0.0
      %v6607 = vand.u32 %v6177, 4294901760
      %v6608 = vsub.f32 %v6177, %v6607
      %v6609 = vand.u32 %v6608, 4294901760
      %6610 = vmatmul.mubr.f32.gmra.mrb[0].mxu0 %v6609
      %v6611 = vpop.f32.mrb[0].mxu0
      %v6612 = vadd.f32 %v6506, %v6611
      %v6613 = vpop.f32.mrb[0].mxu0
      %6614 = vmatprep.mubr.f32.mxu0 0.0
      %v6615 = vand.u32 %v6180, 4294901760
      %v6616 = vsub.f32 %v6180, %v6615
      %v6617 = vand.u32 %v6616, 4294901760
      %6618 = vmatmul.mubr.f32.gmra.mrb[0].mxu0 %v6617
      %v6619 = vpop.f32.mrb[0].mxu0
      %v6620 = vadd.f32 %v6513, %v6619
      %v6621 = vpop.f32.mrb[0].mxu0
      %6622 = vmatprep.mubr.f32.mxu0 0.0
      %v6623 = vand.u32 %v6183, 4294901760
      %v6624 = vsub.f32 %v6183, %v6623
      %v6625 = vand.u32 %v6624, 4294901760
      %6626 = vmatmul.mubr.f32.gmra.mrb[0].mxu0 %v6625
      %v6627 = vpop.f32.mrb[0].mxu0
      %v6628 = vadd.f32 %v6520, %v6627
      %v6629 = vpop.f32.mrb[0].mxu0
      %6630 = vmatprep.mubr.f32.mxu0 0.0
      %v6631 = vand.u32 %v6186, 4294901760
      %v6632 = vsub.f32 %v6186, %v6631
      %v6633 = vand.u32 %v6632, 4294901760
      %6634 = vmatmul.mubr.f32.gmra.mrb[0].mxu0 %v6633
      %v6635 = vpop.f32.mrb[0].mxu0
      %v6636 = vadd.f32 %v6527, %v6635
      %v6637 = vpop.f32.mrb[0].mxu0
      %6638 = vdwg.mxu0
      %6639 = vmatprep.subr.mxu0 0.0
      %v6640 = vand.u32 %v6161, 4294901760
      %v6641 = vsub.f32 %v6161, %v6640
      %v6642 = vand.u32 %v6641, 4294901760
      %6643 = vmatpush1.msra.mxu0 %v6642
      %6644 = vmatprep.subr.mxu0 0.0
      %v6645 = vand.u32 %v6162, 4294901760
      %v6646 = vsub.f32 %v6162, %v6645
      %v6647 = vand.u32 %v6646, 4294901760
      %6648 = vmatpush1.msra.mxu0 %v6647
      %6649 = vmatprep.subr.mxu0 0.0
      %v6650 = vand.u32 %v6163, 4294901760
      %v6651 = vsub.f32 %v6163, %v6650
      %v6652 = vand.u32 %v6651, 4294901760
      %6653 = vmatpush1.msra.mxu0 %v6652
      %6654 = vmatprep.subr.mxu0 0.0
      %v6655 = vand.u32 %v6164, 4294901760
      %v6656 = vsub.f32 %v6164, %v6655
      %v6657 = vand.u32 %v6656, 4294901760
      %6658 = vmatpush1.msra.mxu0 %v6657
      %6659 = vmatprep.subr.mxu0 0.0
      %6660 = vmatpush1.msra.mxu0 0.0
      %6661 = vmatprep.subr.mxu0 0.0
      %6662 = vmatpush1.msra.mxu0 0.0
      %6663 = vmatprep.subr.mxu0 0.0
      %6664 = vmatpush1.msra.mxu0 0.0
      %6665 = vmatprep.subr.mxu0 0.0
      %6666 = vmatpush1.msra.mxu0 0.0
      %6667 = vmatprep.subr.mxu0 0.0
      %6668 = vmatpush1.msra.mxu0 0.0
      %6669 = vmatprep.subr.mxu0 0.0
      %6670 = vmatpush1.msra.mxu0 0.0
      %6671 = vmatprep.subr.mxu0 0.0
      %6672 = vmatpush1.msra.mxu0 0.0
      %6673 = vmatprep.subr.mxu0 0.0
      %6674 = vmatpush1.msra.mxu0 0.0
      %6675 = vmatprep.subr.mxu0 0.0
      %6676 = vmatpush1.msra.mxu0 0.0
      %6677 = vmatprep.subr.mxu0 0.0
      %6678 = vmatpush1.msra.mxu0 0.0
      %6679 = vmatprep.subr.mxu0 0.0
      %6680 = vmatpush1.msra.mxu0 0.0
      %6681 = vmatprep.subr.mxu0 0.0
      %6682 = vmatpush1.msra.mxu0 0.0
      %6683 = vmatprep.subr.mxu0 0.0
      %6684 = vmatpush1.msra.mxu0 0.0
      %6685 = vmatprep.subr.mxu0 0.0
      %6686 = vmatpush1.msra.mxu0 0.0
      %6687 = vmatprep.subr.mxu0 0.0
      %6688 = vmatpush1.msra.mxu0 0.0
      %6689 = vmatprep.subr.mxu0 0.0
      %6690 = vmatpush1.msra.mxu0 0.0
      %6691 = vmatprep.subr.mxu0 0.0
      %6692 = vmatpush1.msra.mxu0 0.0
      %6693 = vmatprep.subr.mxu0 0.0
      %6694 = vmatpush1.msra.mxu0 0.0
      %6695 = vmatprep.subr.mxu0 0.0
      %6696 = vmatpush1.msra.mxu0 0.0
      %6697 = vmatprep.subr.mxu0 0.0
      %6698 = vmatpush1.msra.mxu0 0.0
      %6699 = vmatprep.subr.mxu0 0.0
      %6700 = vmatpush1.msra.mxu0 0.0
      %6701 = vmatprep.subr.mxu0 0.0
      %6702 = vmatpush1.msra.mxu0 0.0
      %6703 = vmatprep.subr.mxu0 0.0
      %6704 = vmatpush1.msra.mxu0 0.0
      %6705 = vmatprep.subr.mxu0 0.0
      %6706 = vmatpush1.msra.mxu0 0.0
      %6707 = vmatprep.subr.mxu0 0.0
      %6708 = vmatpush1.msra.mxu0 0.0
      %6709 = vmatprep.subr.mxu0 0.0
      %6710 = vmatpush1.msra.mxu0 0.0
      %6711 = vmatprep.subr.mxu0 0.0
      %6712 = vmatpush1.msra.mxu0 0.0
      %6713 = vmatprep.subr.mxu0 0.0
      %6714 = vmatpush1.msra.mxu0 0.0
      %6715 = vmatprep.mubr.f32.mxu0 0.0
      %v6716 = vand.u32 %v6174, 4294901760
      %6717 = vmatmul.mubr.f32.gmra.mrb[0].mxu0 %v6716
      %v6718 = vpop.f32.mrb[0].mxu0
      %v6719 = vadd.f32 %v6604, %v6718
      %v6720 = vpop.f32.mrb[0].mxu0
      %6721 = vmatprep.mubr.f32.mxu0 0.0
      %v6722 = vand.u32 %v6177, 4294901760
      %6723 = vmatmul.mubr.f32.gmra.mrb[0].mxu0 %v6722
      %v6724 = vpop.f32.mrb[0].mxu0
      %v6725 = vadd.f32 %v6612, %v6724
      %v6726 = vpop.f32.mrb[0].mxu0
      %6727 = vmatprep.mubr.f32.mxu0 0.0
      %v6728 = vand.u32 %v6180, 4294901760
      %6729 = vmatmul.mubr.f32.gmra.mrb[0].mxu0 %v6728
      %v6730 = vpop.f32.mrb[0].mxu0
      %v6731 = vadd.f32 %v6620, %v6730
      %v6732 = vpop.f32.mrb[0].mxu0
      %6733 = vmatprep.mubr.f32.mxu0 0.0
      %v6734 = vand.u32 %v6183, 4294901760
      %6735 = vmatmul.mubr.f32.gmra.mrb[0].mxu0 %v6734
      %v6736 = vpop.f32.mrb[0].mxu0
      %v6737 = vadd.f32 %v6628, %v6736
      %v6738 = vpop.f32.mrb[0].mxu0
      %6739 = vmatprep.mubr.f32.mxu0 0.0
      %v6740 = vand.u32 %v6186, 4294901760
      %6741 = vmatmul.mubr.f32.gmra.mrb[0].mxu0 %v6740
      %v6742 = vpop.f32.mrb[0].mxu0
      %v6743 = vadd.f32 %v6636, %v6742
      %v6744 = vpop.f32.mrb[0].mxu0
      %6745 = vdwg.mxu0
      %6746 = vmatprep.subr.mxu0 0.0
      %v6747 = vand.u32 %v6161, 4294901760
      %6748 = vmatpush1.msra.mxu0 %v6747
      %6749 = vmatprep.subr.mxu0 0.0
      %v6750 = vand.u32 %v6162, 4294901760
      %6751 = vmatpush1.msra.mxu0 %v6750
      %6752 = vmatprep.subr.mxu0 0.0
      %v6753 = vand.u32 %v6163, 4294901760
      %6754 = vmatpush1.msra.mxu0 %v6753
      %6755 = vmatprep.subr.mxu0 0.0
      %v6756 = vand.u32 %v6164, 4294901760
      %6757 = vmatpush1.msra.mxu0 %v6756
      %6758 = vmatprep.subr.mxu0 0.0
      %6759 = vmatpush1.msra.mxu0 0.0
      %6760 = vmatprep.subr.mxu0 0.0
      %6761 = vmatpush1.msra.mxu0 0.0
      %6762 = vmatprep.subr.mxu0 0.0
      %6763 = vmatpush1.msra.mxu0 0.0
      %6764 = vmatprep.subr.mxu0 0.0
      %6765 = vmatpush1.msra.mxu0 0.0
      %6766 = vmatprep.subr.mxu0 0.0
      %6767 = vmatpush1.msra.mxu0 0.0
      %6768 = vmatprep.subr.mxu0 0.0
      %6769 = vmatpush1.msra.mxu0 0.0
      %6770 = vmatprep.subr.mxu0 0.0
      %6771 = vmatpush1.msra.mxu0 0.0
      %6772 = vmatprep.subr.mxu0 0.0
      %6773 = vmatpush1.msra.mxu0 0.0
      %6774 = vmatprep.subr.mxu0 0.0
      %6775 = vmatpush1.msra.mxu0 0.0
      %6776 = vmatprep.subr.mxu0 0.0
      %6777 = vmatpush1.msra.mxu0 0.0
      %6778 = vmatprep.subr.mxu0 0.0
      %6779 = vmatpush1.msra.mxu0 0.0
      %6780 = vmatprep.subr.mxu0 0.0
      %6781 = vmatpush1.msra.mxu0 0.0
      %6782 = vmatprep.subr.mxu0 0.0
      %6783 = vmatpush1.msra.mxu0 0.0
      %6784 = vmatprep.subr.mxu0 0.0
      %6785 = vmatpush1.msra.mxu0 0.0
      %6786 = vmatprep.subr.mxu0 0.0
      %6787 = vmatpush1.msra.mxu0 0.0
      %6788 = vmatprep.subr.mxu0 0.0
      %6789 = vmatpush1.msra.mxu0 0.0
      %6790 = vmatprep.subr.mxu0 0.0
      %6791 = vmatpush1.msra.mxu0 0.0
      %6792 = vmatprep.subr.mxu0 0.0
      %6793 = vmatpush1.msra.mxu0 0.0
      %6794 = vmatprep.subr.mxu0 0.0
      %6795 = vmatpush1.msra.mxu0 0.0
      %6796 = vmatprep.subr.mxu0 0.0
      %6797 = vmatpush1.msra.mxu0 0.0
      %6798 = vmatprep.subr.mxu0 0.0
      %6799 = vmatpush1.msra.mxu0 0.0
      %6800 = vmatprep.subr.mxu0 0.0
      %6801 = vmatpush1.msra.mxu0 0.0
      %6802 = vmatprep.subr.mxu0 0.0
      %6803 = vmatpush1.msra.mxu0 0.0
      %6804 = vmatprep.subr.mxu0 0.0
      %6805 = vmatpush1.msra.mxu0 0.0
      %6806 = vmatprep.subr.mxu0 0.0
      %6807 = vmatpush1.msra.mxu0 0.0
      %6808 = vmatprep.subr.mxu0 0.0
      %6809 = vmatpush1.msra.mxu0 0.0
      %6810 = vmatprep.subr.mxu0 0.0
      %6811 = vmatpush1.msra.mxu0 0.0
      %6812 = vmatprep.subr.mxu0 0.0
      %6813 = vmatpush1.msra.mxu0 0.0
      %6814 = vmatprep.mubr.f32.mxu0 0.0
      %v6815 = vand.u32 %v6174, 4294901760
      %6816 = vmatmul.mubr.f32.gmra.mrb[0].mxu0 %v6815
      %v6817 = vpop.f32.mrb[0].mxu0
      %v6818 = vadd.f32 %v6719, %v6817
      %v6819 = vpop.f32.mrb[0].mxu0
      %6820 = vmatprep.mubr.f32.mxu0 0.0
      %v6821 = vand.u32 %v6177, 4294901760
      %6822 = vmatmul.mubr.f32.gmra.mrb[0].mxu0 %v6821
      %v6823 = vpop.f32.mrb[0].mxu0
      %v6824 = vadd.f32 %v6725, %v6823
      %v6825 = vpop.f32.mrb[0].mxu0
      %6826 = vmatprep.mubr.f32.mxu0 0.0
      %v6827 = vand.u32 %v6180, 4294901760
      %6828 = vmatmul.mubr.f32.gmra.mrb[0].mxu0 %v6827
      %v6829 = vpop.f32.mrb[0].mxu0
      %v6830 = vadd.f32 %v6731, %v6829
      %v6831 = vpop.f32.mrb[0].mxu0
      %6832 = vmatprep.mubr.f32.mxu0 0.0
      %v6833 = vand.u32 %v6183, 4294901760
      %6834 = vmatmul.mubr.f32.gmra.mrb[0].mxu0 %v6833
      %v6835 = vpop.f32.mrb[0].mxu0
      %v6836 = vadd.f32 %v6737, %v6835
      %v6837 = vpop.f32.mrb[0].mxu0
      %6838 = vmatprep.mubr.f32.mxu0 0.0
      %v6839 = vand.u32 %v6186, 4294901760
      %6840 = vmatmul.mubr.f32.gmra.mrb[0].mxu0 %v6839
      %v6841 = vpop.f32.mrb[0].mxu0
      %v6842 = vadd.f32 %v6743, %v6841
      %v6843 = vpop.f32.mrb[0].mxu0
      %6844 = vdwg.mxu0
      %v6845 = vadd.f32 %v5490, %v6818
      %v6846 = vadd.f32 %v5491, %v6824
      %v6847 = vadd.f32 %v5492, %v6830
      %v6848 = vadd.f32 %v5493, %v6836
      %v6849 = vadd.f32 %v5494, %v6842
      %s6850 = scalar_lea.vmem %s11, 1
      %v6851 = vld [vmem:[%s6850] sm:$0x1]
      %s6852 = scalar_lea.vmem %s12, 1
      %v6853 = vld [vmem:[%s6852] sm:$0x1]
      %v6854 = vsel %vm509, %v6845, 0.0
      %6855 = vadd.xlane.f32.xlu0 %v6854
      %v6856 = vpop.xlane.xlu0 %6855
      %v6857 = vsel %vm509, %v6846, 0.0
      %6858 = vadd.xlane.f32.xlu0 %v6857
      %v6859 = vpop.xlane.xlu0 %6858
      %v6860 = vsel %vm509, %v6847, 0.0
      %6861 = vadd.xlane.f32.xlu0 %v6860
      %v6862 = vpop.xlane.xlu0 %6861
      %v6863 = vsel %vm509, %v6848, 0.0
      %6864 = vadd.xlane.f32.xlu0 %v6863
      %v6865 = vpop.xlane.xlu0 %6864
      %v6866 = vsel %vm509, %v6849, 0.0
      %6867 = vadd.xlane.f32.xlu0 %v6866
      %v6868 = vpop.xlane.xlu0 %6867
      %v6869 = vmul.f32 %v6856, %v2205
      %v6870 = vmul.f32 %v6859, %v2205
      %v6871 = vmul.f32 %v6862, %v2205
      %v6872 = vmul.f32 %v6865, %v2205
      %v6873 = vmul.f32 %v6868, %v2205
      %v6874 = vsub.f32 %v6845, %v6869
      %v6875 = vsub.f32 %v6846, %v6870
      %v6876 = vsub.f32 %v6847, %v6871
      %v6877 = vsub.f32 %v6848, %v6872
      %v6878 = vsub.f32 %v6849, %v6873
      %v6879 = vmul.f32 %v6874, %v6874
      %v6880 = vmul.f32 %v6875, %v6875
      %v6881 = vmul.f32 %v6876, %v6876
      %v6882 = vmul.f32 %v6877, %v6877
      %v6883 = vmul.f32 %v6878, %v6878
      %v6884 = vsel %vm509, %v6879, 0.0
      %6885 = vadd.xlane.f32.xlu0 %v6884
      %v6886 = vpop.xlane.xlu0 %6885
      %v6887 = vsel %vm509, %v6880, 0.0
      %6888 = vadd.xlane.f32.xlu0 %v6887
      %v6889 = vpop.xlane.xlu0 %6888
      %v6890 = vsel %vm509, %v6881, 0.0
      %6891 = vadd.xlane.f32.xlu0 %v6890
      %v6892 = vpop.xlane.xlu0 %6891
      %v6893 = vsel %vm509, %v6882, 0.0
      %6894 = vadd.xlane.f32.xlu0 %v6893
      %v6895 = vpop.xlane.xlu0 %6894
      %v6896 = vsel %vm509, %v6883, 0.0
      %6897 = vadd.xlane.f32.xlu0 %v6896
      %v6898 = vpop.xlane.xlu0 %6897
      %v6899 = vmul.f32 %v6886, %v2205
      %v6900 = vmul.f32 %v6889, %v2205
      %v6901 = vmul.f32 %v6892, %v2205
      %v6902 = vmul.f32 %v6895, %v2205
      %v6903 = vmul.f32 %v6898, %v2205
      %v6904 = vadd.f32 %v6899, 1e-05
      %v6905 = vadd.f32 %v6900, 1e-05
      %v6906 = vadd.f32 %v6901, 1e-05
      %v6907 = vadd.f32 %v6902, 1e-05
      %v6908 = vadd.f32 %v6903, 1e-05
      %v6909 = vrsqrt.pop %v6904
      %v6910 = vrsqrt.pop %v6905
      %v6911 = vrsqrt.pop %v6906
      %v6912 = vrsqrt.pop %v6907
      %v6913 = vrsqrt.pop %v6908
      %v6914 = vmul.f32 %v6874, %v6909
      %v6915 = vmul.f32 %v6875, %v6910
      %v6916 = vmul.f32 %v6876, %v6911
      %v6917 = vmul.f32 %v6877, %v6912
      %v6918 = vmul.f32 %v6878, %v6913
      %v6920 = vlaneseq
      %v6921 = vshrl.u32 %v6920, 7
      %v6922 = vsub.s32 0, %v6921
      %v6923 = vrot.slane %v6851, %v6922
      %v6925 = vmul.f32 %v6914, %v6923
      %v6926 = vmul.f32 %v6915, %v6923
      %v6927 = vmul.f32 %v6916, %v6923
      %v6928 = vmul.f32 %v6917, %v6923
      %v6929 = vmul.f32 %v6918, %v6923
      %v6931 = vlaneseq
      %v6932 = vshrl.u32 %v6931, 7
      %v6933 = vsub.s32 0, %v6932
      %v6934 = vrot.slane %v6853, %v6933
      %v6936 = vadd.f32 %v6925, %v6934
      %v6937 = vadd.f32 %v6926, %v6934
      %v6938 = vadd.f32 %v6927, %v6934
      %v6939 = vadd.f32 %v6928, %v6934
      %v6940 = vadd.f32 %v6929, %v6934
      %v6941 = vld [vmem:[%s13] sm:$0xff]
      %v6942 = vld [vmem:[%s13 + $0x8] sm:$0x7]
      %s6943 = scalar_lea.vmem %s13, 16
      %v6944 = vld [vmem:[%s6943] sm:$0xff]
      %v6945 = vld [vmem:[%s6943 + $0x8] sm:$0x7]
      %v6947 = vsel %vm509, %v6937, 0
      %v6950 = vsel %vm525, %v6945, 0
      %6952 = vmatprep.subr.mxu0 0.0
      %v6953 = vand.u32 %v6944, 4294901760
      %6954 = vmatpush1.msra.mxu0 %v6953
      %6955 = vmatprep.subr.mxu0 0.0
      %v6956 = vand.u32 %v6950, 4294901760
      %6957 = vmatpush1.msra.mxu0 %v6956
      %6958 = vmatprep.subr.mxu0 0.0
      %6959 = vmatpush1.msra.mxu0 0.0
      %6960 = vmatprep.subr.mxu0 0.0
      %6961 = vmatpush1.msra.mxu0 0.0
      %6962 = vmatprep.subr.mxu0 0.0
      %6963 = vmatpush1.msra.mxu0 0.0
      %6964 = vmatprep.subr.mxu0 0.0
      %6965 = vmatpush1.msra.mxu0 0.0
      %6966 = vmatprep.subr.mxu0 0.0
      %6967 = vmatpush1.msra.mxu0 0.0
      %6968 = vmatprep.subr.mxu0 0.0
      %6969 = vmatpush1.msra.mxu0 0.0
      %6970 = vmatprep.subr.mxu0 0.0
      %6971 = vmatpush1.msra.mxu0 0.0
      %6972 = vmatprep.subr.mxu0 0.0
      %6973 = vmatpush1.msra.mxu0 0.0
      %6974 = vmatprep.subr.mxu0 0.0
      %6975 = vmatpush1.msra.mxu0 0.0
      %6976 = vmatprep.subr.mxu0 0.0
      %6977 = vmatpush1.msra.mxu0 0.0
      %6978 = vmatprep.subr.mxu0 0.0
      %6979 = vmatpush1.msra.mxu0 0.0
      %6980 = vmatprep.subr.mxu0 0.0
      %6981 = vmatpush1.msra.mxu0 0.0
      %6982 = vmatprep.subr.mxu0 0.0
      %6983 = vmatpush1.msra.mxu0 0.0
      %6984 = vmatprep.subr.mxu0 0.0
      %6985 = vmatpush1.msra.mxu0 0.0
      %6986 = vmatprep.subr.mxu0 0.0
      %6987 = vmatpush1.msra.mxu0 0.0
      %6988 = vmatprep.subr.mxu0 0.0
      %6989 = vmatpush1.msra.mxu0 0.0
      %6990 = vmatprep.subr.mxu0 0.0
      %6991 = vmatpush1.msra.mxu0 0.0
      %6992 = vmatprep.subr.mxu0 0.0
      %6993 = vmatpush1.msra.mxu0 0.0
      %6994 = vmatprep.subr.mxu0 0.0
      %6995 = vmatpush1.msra.mxu0 0.0
      %6996 = vmatprep.subr.mxu0 0.0
      %6997 = vmatpush1.msra.mxu0 0.0
      %6998 = vmatprep.subr.mxu0 0.0
      %6999 = vmatpush1.msra.mxu0 0.0
      %7000 = vmatprep.subr.mxu0 0.0
      %7001 = vmatpush1.msra.mxu0 0.0
      %7002 = vmatprep.subr.mxu0 0.0
      %7003 = vmatpush1.msra.mxu0 0.0
      %7004 = vmatprep.subr.mxu0 0.0
      %7005 = vmatpush1.msra.mxu0 0.0
      %7006 = vmatprep.subr.mxu0 0.0
      %7007 = vmatpush1.msra.mxu0 0.0
      %7008 = vmatprep.subr.mxu0 0.0
      %7009 = vmatpush1.msra.mxu0 0.0
      %7010 = vmatprep.subr.mxu0 0.0
      %7011 = vmatpush1.msra.mxu0 0.0
      %7012 = vmatprep.subr.mxu0 0.0
      %7013 = vmatpush1.msra.mxu0 0.0
      %7014 = vmatprep.subr.mxu0 0.0
      %7015 = vmatpush1.msra.mxu0 0.0
      %7016 = vmatprep.subr.mxu0 0.0
      %7017 = vmatpush1.msra.mxu0 0.0
      %7018 = vmatprep.mubr.f32.mxu0 0.0
      %v7019 = vand.u32 %v6947, 4294901760
      %v7020 = vsub.f32 %v6947, %v7019
      %v7021 = vand.u32 %v7020, 4294901760
      %v7022 = vsub.f32 %v7020, %v7021
      %v7023 = vand.u32 %v7022, 4294901760
      %7024 = vmatmul.mubr.f32.gmra.mrb[0].mxu0 %v7023
      %v7025 = vpop.f32.mrb[0].mxu0
      %v7026 = vadd.f32 0.0, %v7025
      %v7027 = vpop.f32.mrb[0].mxu0
      %7028 = vdwg.mxu0
      %7029 = vmatprep.subr.mxu0 0.0
      %v7030 = vand.u32 %v6944, 4294901760
      %v7031 = vsub.f32 %v6944, %v7030
      %v7032 = vand.u32 %v7031, 4294901760
      %v7033 = vsub.f32 %v7031, %v7032
      %v7034 = vand.u32 %v7033, 4294901760
      %7035 = vmatpush1.msra.mxu0 %v7034
      %7036 = vmatprep.subr.mxu0 0.0
      %v7037 = vand.u32 %v6950, 4294901760
      %v7038 = vsub.f32 %v6950, %v7037
      %v7039 = vand.u32 %v7038, 4294901760
      %v7040 = vsub.f32 %v7038, %v7039
      %v7041 = vand.u32 %v7040, 4294901760
      %7042 = vmatpush1.msra.mxu0 %v7041
      %7043 = vmatprep.subr.mxu0 0.0
      %7044 = vmatpush1.msra.mxu0 0.0
      %7045 = vmatprep.subr.mxu0 0.0
      %7046 = vmatpush1.msra.mxu0 0.0
      %7047 = vmatprep.subr.mxu0 0.0
      %7048 = vmatpush1.msra.mxu0 0.0
      %7049 = vmatprep.subr.mxu0 0.0
      %7050 = vmatpush1.msra.mxu0 0.0
      %7051 = vmatprep.subr.mxu0 0.0
      %7052 = vmatpush1.msra.mxu0 0.0
      %7053 = vmatprep.subr.mxu0 0.0
      %7054 = vmatpush1.msra.mxu0 0.0
      %7055 = vmatprep.subr.mxu0 0.0
      %7056 = vmatpush1.msra.mxu0 0.0
      %7057 = vmatprep.subr.mxu0 0.0
      %7058 = vmatpush1.msra.mxu0 0.0
      %7059 = vmatprep.subr.mxu0 0.0
      %7060 = vmatpush1.msra.mxu0 0.0
      %7061 = vmatprep.subr.mxu0 0.0
      %7062 = vmatpush1.msra.mxu0 0.0
      %7063 = vmatprep.subr.mxu0 0.0
      %7064 = vmatpush1.msra.mxu0 0.0
      %7065 = vmatprep.subr.mxu0 0.0
      %7066 = vmatpush1.msra.mxu0 0.0
      %7067 = vmatprep.subr.mxu0 0.0
      %7068 = vmatpush1.msra.mxu0 0.0
      %7069 = vmatprep.subr.mxu0 0.0
      %7070 = vmatpush1.msra.mxu0 0.0
      %7071 = vmatprep.subr.mxu0 0.0
      %7072 = vmatpush1.msra.mxu0 0.0
      %7073 = vmatprep.subr.mxu0 0.0
      %7074 = vmatpush1.msra.mxu0 0.0
      %7075 = vmatprep.subr.mxu0 0.0
      %7076 = vmatpush1.msra.mxu0 0.0
      %7077 = vmatprep.subr.mxu0 0.0
      %7078 = vmatpush1.msra.mxu0 0.0
      %7079 = vmatprep.subr.mxu0 0.0
      %7080 = vmatpush1.msra.mxu0 0.0
      %7081 = vmatprep.subr.mxu0 0.0
      %7082 = vmatpush1.msra.mxu0 0.0
      %7083 = vmatprep.subr.mxu0 0.0
      %7084 = vmatpush1.msra.mxu0 0.0
      %7085 = vmatprep.subr.mxu0 0.0
      %7086 = vmatpush1.msra.mxu0 0.0
      %7087 = vmatprep.subr.mxu0 0.0
      %7088 = vmatpush1.msra.mxu0 0.0
      %7089 = vmatprep.subr.mxu0 0.0
      %7090 = vmatpush1.msra.mxu0 0.0
      %7091 = vmatprep.subr.mxu0 0.0
      %7092 = vmatpush1.msra.mxu0 0.0
      %7093 = vmatprep.subr.mxu0 0.0
      %7094 = vmatpush1.msra.mxu0 0.0
      %7095 = vmatprep.subr.mxu0 0.0
      %7096 = vmatpush1.msra.mxu0 0.0
      %7097 = vmatprep.subr.mxu0 0.0
      %7098 = vmatpush1.msra.mxu0 0.0
      %7099 = vmatprep.subr.mxu0 0.0
      %7100 = vmatpush1.msra.mxu0 0.0
      %7101 = vmatprep.subr.mxu0 0.0
      %7102 = vmatpush1.msra.mxu0 0.0
      %7103 = vmatprep.mubr.f32.mxu0 0.0
      %v7104 = vand.u32 %v6947, 4294901760
      %7105 = vmatmul.mubr.f32.gmra.mrb[0].mxu0 %v7104
      %v7106 = vpop.f32.mrb[0].mxu0
      %v7107 = vadd.f32 %v7026, %v7106
      %v7108 = vpop.f32.mrb[0].mxu0
      %7109 = vdwg.mxu0
      %7110 = vmatprep.subr.mxu0 0.0
      %v7111 = vand.u32 %v6944, 4294901760
      %v7112 = vsub.f32 %v6944, %v7111
      %7113 = vmatpush1.msra.mxu0 %v7112
      %7114 = vmatprep.subr.mxu0 0.0
      %v7115 = vand.u32 %v6950, 4294901760
      %v7116 = vsub.f32 %v6950, %v7115
      %7117 = vmatpush1.msra.mxu0 %v7116
      %7118 = vmatprep.subr.mxu0 0.0
      %7119 = vmatpush1.msra.mxu0 0.0
      %7120 = vmatprep.subr.mxu0 0.0
      %7121 = vmatpush1.msra.mxu0 0.0
      %7122 = vmatprep.subr.mxu0 0.0
      %7123 = vmatpush1.msra.mxu0 0.0
      %7124 = vmatprep.subr.mxu0 0.0
      %7125 = vmatpush1.msra.mxu0 0.0
      %7126 = vmatprep.subr.mxu0 0.0
      %7127 = vmatpush1.msra.mxu0 0.0
      %7128 = vmatprep.subr.mxu0 0.0
      %7129 = vmatpush1.msra.mxu0 0.0
      %7130 = vmatprep.subr.mxu0 0.0
      %7131 = vmatpush1.msra.mxu0 0.0
      %7132 = vmatprep.subr.mxu0 0.0
      %7133 = vmatpush1.msra.mxu0 0.0
      %7134 = vmatprep.subr.mxu0 0.0
      %7135 = vmatpush1.msra.mxu0 0.0
      %7136 = vmatprep.subr.mxu0 0.0
      %7137 = vmatpush1.msra.mxu0 0.0
      %7138 = vmatprep.subr.mxu0 0.0
      %7139 = vmatpush1.msra.mxu0 0.0
      %7140 = vmatprep.subr.mxu0 0.0
      %7141 = vmatpush1.msra.mxu0 0.0
      %7142 = vmatprep.subr.mxu0 0.0
      %7143 = vmatpush1.msra.mxu0 0.0
      %7144 = vmatprep.subr.mxu0 0.0
      %7145 = vmatpush1.msra.mxu0 0.0
      %7146 = vmatprep.subr.mxu0 0.0
      %7147 = vmatpush1.msra.mxu0 0.0
      %7148 = vmatprep.subr.mxu0 0.0
      %7149 = vmatpush1.msra.mxu0 0.0
      %7150 = vmatprep.subr.mxu0 0.0
      %7151 = vmatpush1.msra.mxu0 0.0
      %7152 = vmatprep.subr.mxu0 0.0
      %7153 = vmatpush1.msra.mxu0 0.0
      %7154 = vmatprep.subr.mxu0 0.0
      %7155 = vmatpush1.msra.mxu0 0.0
      %7156 = vmatprep.subr.mxu0 0.0
      %7157 = vmatpush1.msra.mxu0 0.0
      %7158 = vmatprep.subr.mxu0 0.0
      %7159 = vmatpush1.msra.mxu0 0.0
      %7160 = vmatprep.subr.mxu0 0.0
      %7161 = vmatpush1.msra.mxu0 0.0
      %7162 = vmatprep.subr.mxu0 0.0
      %7163 = vmatpush1.msra.mxu0 0.0
      %7164 = vmatprep.subr.mxu0 0.0
      %7165 = vmatpush1.msra.mxu0 0.0
      %7166 = vmatprep.subr.mxu0 0.0
      %7167 = vmatpush1.msra.mxu0 0.0
      %7168 = vmatprep.subr.mxu0 0.0
      %7169 = vmatpush1.msra.mxu0 0.0
      %7170 = vmatprep.subr.mxu0 0.0
      %7171 = vmatpush1.msra.mxu0 0.0
      %7172 = vmatprep.subr.mxu0 0.0
      %7173 = vmatpush1.msra.mxu0 0.0
      %7174 = vmatprep.subr.mxu0 0.0
      %7175 = vmatpush1.msra.mxu0 0.0
      %7176 = vmatprep.subr.mxu0 0.0
      %7177 = vmatpush1.msra.mxu0 0.0
      %7178 = vmatprep.mubr.f32.mxu0 0.0
      %v7179 = vand.u32 %v6947, 4294901760
      %v7180 = vsub.f32 %v6947, %v7179
      %7181 = vmatmul.mubr.f32.gmra.mrb[0].mxu0 %v7180
      %v7182 = vpop.f32.mrb[0].mxu0
      %v7183 = vadd.f32 %v7107, %v7182
      %v7184 = vpop.f32.mrb[0].mxu0
      %7185 = vdwg.mxu0
      %7186 = vmatprep.subr.mxu0 0.0
      %v7187 = vand.u32 %v6944, 4294901760
      %7188 = vmatpush1.msra.mxu0 %v7187
      %7189 = vmatprep.subr.mxu0 0.0
      %v7190 = vand.u32 %v6950, 4294901760
      %7191 = vmatpush1.msra.mxu0 %v7190
      %7192 = vmatprep.subr.mxu0 0.0
      %7193 = vmatpush1.msra.mxu0 0.0
      %7194 = vmatprep.subr.mxu0 0.0
      %7195 = vmatpush1.msra.mxu0 0.0
      %7196 = vmatprep.subr.mxu0 0.0
      %7197 = vmatpush1.msra.mxu0 0.0
      %7198 = vmatprep.subr.mxu0 0.0
      %7199 = vmatpush1.msra.mxu0 0.0
      %7200 = vmatprep.subr.mxu0 0.0
      %7201 = vmatpush1.msra.mxu0 0.0
      %7202 = vmatprep.subr.mxu0 0.0
      %7203 = vmatpush1.msra.mxu0 0.0
      %7204 = vmatprep.subr.mxu0 0.0
      %7205 = vmatpush1.msra.mxu0 0.0
      %7206 = vmatprep.subr.mxu0 0.0
      %7207 = vmatpush1.msra.mxu0 0.0
      %7208 = vmatprep.subr.mxu0 0.0
      %7209 = vmatpush1.msra.mxu0 0.0
      %7210 = vmatprep.subr.mxu0 0.0
      %7211 = vmatpush1.msra.mxu0 0.0
      %7212 = vmatprep.subr.mxu0 0.0
      %7213 = vmatpush1.msra.mxu0 0.0
      %7214 = vmatprep.subr.mxu0 0.0
      %7215 = vmatpush1.msra.mxu0 0.0
      %7216 = vmatprep.subr.mxu0 0.0
      %7217 = vmatpush1.msra.mxu0 0.0
      %7218 = vmatprep.subr.mxu0 0.0
      %7219 = vmatpush1.msra.mxu0 0.0
      %7220 = vmatprep.subr.mxu0 0.0
      %7221 = vmatpush1.msra.mxu0 0.0
      %7222 = vmatprep.subr.mxu0 0.0
      %7223 = vmatpush1.msra.mxu0 0.0
      %7224 = vmatprep.subr.mxu0 0.0
      %7225 = vmatpush1.msra.mxu0 0.0
      %7226 = vmatprep.subr.mxu0 0.0
      %7227 = vmatpush1.msra.mxu0 0.0
      %7228 = vmatprep.subr.mxu0 0.0
      %7229 = vmatpush1.msra.mxu0 0.0
      %7230 = vmatprep.subr.mxu0 0.0
      %7231 = vmatpush1.msra.mxu0 0.0
      %7232 = vmatprep.subr.mxu0 0.0
      %7233 = vmatpush1.msra.mxu0 0.0
      %7234 = vmatprep.subr.mxu0 0.0
      %7235 = vmatpush1.msra.mxu0 0.0
      %7236 = vmatprep.subr.mxu0 0.0
      %7237 = vmatpush1.msra.mxu0 0.0
      %7238 = vmatprep.subr.mxu0 0.0
      %7239 = vmatpush1.msra.mxu0 0.0
      %7240 = vmatprep.subr.mxu0 0.0
      %7241 = vmatpush1.msra.mxu0 0.0
      %7242 = vmatprep.subr.mxu0 0.0
      %7243 = vmatpush1.msra.mxu0 0.0
      %7244 = vmatprep.subr.mxu0 0.0
      %7245 = vmatpush1.msra.mxu0 0.0
      %7246 = vmatprep.subr.mxu0 0.0
      %7247 = vmatpush1.msra.mxu0 0.0
      %7248 = vmatprep.subr.mxu0 0.0
      %7249 = vmatpush1.msra.mxu0 0.0
      %7250 = vmatprep.subr.mxu0 0.0
      %7251 = vmatpush1.msra.mxu0 0.0
      %7252 = vmatprep.mubr.f32.mxu0 0.0
      %v7253 = vand.u32 %v6947, 4294901760
      %v7254 = vsub.f32 %v6947, %v7253
      %v7255 = vand.u32 %v7254, 4294901760
      %7256 = vmatmul.mubr.f32.gmra.mrb[0].mxu0 %v7255
      %v7257 = vpop.f32.mrb[0].mxu0
      %v7258 = vadd.f32 %v7183, %v7257
      %v7259 = vpop.f32.mrb[0].mxu0
      %7260 = vdwg.mxu0
      %7261 = vmatprep.subr.mxu0 0.0
      %v7262 = vand.u32 %v6944, 4294901760
      %v7263 = vsub.f32 %v6944, %v7262
      %v7264 = vand.u32 %v7263, 4294901760
      %7265 = vmatpush1.msra.mxu0 %v7264
      %7266 = vmatprep.subr.mxu0 0.0
      %v7267 = vand.u32 %v6950, 4294901760
      %v7268 = vsub.f32 %v6950, %v7267
      %v7269 = vand.u32 %v7268, 4294901760
      %7270 = vmatpush1.msra.mxu0 %v7269
      %7271 = vmatprep.subr.mxu0 0.0
      %7272 = vmatpush1.msra.mxu0 0.0
      %7273 = vmatprep.subr.mxu0 0.0
      %7274 = vmatpush1.msra.mxu0 0.0
      %7275 = vmatprep.subr.mxu0 0.0
      %7276 = vmatpush1.msra.mxu0 0.0
      %7277 = vmatprep.subr.mxu0 0.0
      %7278 = vmatpush1.msra.mxu0 0.0
      %7279 = vmatprep.subr.mxu0 0.0
      %7280 = vmatpush1.msra.mxu0 0.0
      %7281 = vmatprep.subr.mxu0 0.0
      %7282 = vmatpush1.msra.mxu0 0.0
      %7283 = vmatprep.subr.mxu0 0.0
      %7284 = vmatpush1.msra.mxu0 0.0
      %7285 = vmatprep.subr.mxu0 0.0
      %7286 = vmatpush1.msra.mxu0 0.0
      %7287 = vmatprep.subr.mxu0 0.0
      %7288 = vmatpush1.msra.mxu0 0.0
      %7289 = vmatprep.subr.mxu0 0.0
      %7290 = vmatpush1.msra.mxu0 0.0
      %7291 = vmatprep.subr.mxu0 0.0
      %7292 = vmatpush1.msra.mxu0 0.0
      %7293 = vmatprep.subr.mxu0 0.0
      %7294 = vmatpush1.msra.mxu0 0.0
      %7295 = vmatprep.subr.mxu0 0.0
      %7296 = vmatpush1.msra.mxu0 0.0
      %7297 = vmatprep.subr.mxu0 0.0
      %7298 = vmatpush1.msra.mxu0 0.0
      %7299 = vmatprep.subr.mxu0 0.0
      %7300 = vmatpush1.msra.mxu0 0.0
      %7301 = vmatprep.subr.mxu0 0.0
      %7302 = vmatpush1.msra.mxu0 0.0
      %7303 = vmatprep.subr.mxu0 0.0
      %7304 = vmatpush1.msra.mxu0 0.0
      %7305 = vmatprep.subr.mxu0 0.0
      %7306 = vmatpush1.msra.mxu0 0.0
      %7307 = vmatprep.subr.mxu0 0.0
      %7308 = vmatpush1.msra.mxu0 0.0
      %7309 = vmatprep.subr.mxu0 0.0
      %7310 = vmatpush1.msra.mxu0 0.0
      %7311 = vmatprep.subr.mxu0 0.0
      %7312 = vmatpush1.msra.mxu0 0.0
      %7313 = vmatprep.subr.mxu0 0.0
      %7314 = vmatpush1.msra.mxu0 0.0
      %7315 = vmatprep.subr.mxu0 0.0
      %7316 = vmatpush1.msra.mxu0 0.0
      %7317 = vmatprep.subr.mxu0 0.0
      %7318 = vmatpush1.msra.mxu0 0.0
      %7319 = vmatprep.subr.mxu0 0.0
      %7320 = vmatpush1.msra.mxu0 0.0
      %7321 = vmatprep.subr.mxu0 0.0
      %7322 = vmatpush1.msra.mxu0 0.0
      %7323 = vmatprep.subr.mxu0 0.0
      %7324 = vmatpush1.msra.mxu0 0.0
      %7325 = vmatprep.subr.mxu0 0.0
      %7326 = vmatpush1.msra.mxu0 0.0
      %7327 = vmatprep.subr.mxu0 0.0
      %7328 = vmatpush1.msra.mxu0 0.0
      %7329 = vmatprep.subr.mxu0 0.0
      %7330 = vmatpush1.msra.mxu0 0.0
      %7331 = vmatprep.mubr.f32.mxu0 0.0
      %v7332 = vand.u32 %v6947, 4294901760
      %7333 = vmatmul.mubr.f32.gmra.mrb[0].mxu0 %v7332
      %v7334 = vpop.f32.mrb[0].mxu0
      %v7335 = vadd.f32 %v7258, %v7334
      %v7336 = vpop.f32.mrb[0].mxu0
      %7337 = vdwg.mxu0
      %7338 = vmatprep.subr.mxu0 0.0
      %v7339 = vand.u32 %v6944, 4294901760
      %7340 = vmatpush1.msra.mxu0 %v7339
      %7341 = vmatprep.subr.mxu0 0.0
      %v7342 = vand.u32 %v6950, 4294901760
      %7343 = vmatpush1.msra.mxu0 %v7342
      %7344 = vmatprep.subr.mxu0 0.0
      %7345 = vmatpush1.msra.mxu0 0.0
      %7346 = vmatprep.subr.mxu0 0.0
      %7347 = vmatpush1.msra.mxu0 0.0
      %7348 = vmatprep.subr.mxu0 0.0
      %7349 = vmatpush1.msra.mxu0 0.0
      %7350 = vmatprep.subr.mxu0 0.0
      %7351 = vmatpush1.msra.mxu0 0.0
      %7352 = vmatprep.subr.mxu0 0.0
      %7353 = vmatpush1.msra.mxu0 0.0
      %7354 = vmatprep.subr.mxu0 0.0
      %7355 = vmatpush1.msra.mxu0 0.0
      %7356 = vmatprep.subr.mxu0 0.0
      %7357 = vmatpush1.msra.mxu0 0.0
      %7358 = vmatprep.subr.mxu0 0.0
      %7359 = vmatpush1.msra.mxu0 0.0
      %7360 = vmatprep.subr.mxu0 0.0
      %7361 = vmatpush1.msra.mxu0 0.0
      %7362 = vmatprep.subr.mxu0 0.0
      %7363 = vmatpush1.msra.mxu0 0.0
      %7364 = vmatprep.subr.mxu0 0.0
      %7365 = vmatpush1.msra.mxu0 0.0
      %7366 = vmatprep.subr.mxu0 0.0
      %7367 = vmatpush1.msra.mxu0 0.0
      %7368 = vmatprep.subr.mxu0 0.0
      %7369 = vmatpush1.msra.mxu0 0.0
      %7370 = vmatprep.subr.mxu0 0.0
      %7371 = vmatpush1.msra.mxu0 0.0
      %7372 = vmatprep.subr.mxu0 0.0
      %7373 = vmatpush1.msra.mxu0 0.0
      %7374 = vmatprep.subr.mxu0 0.0
      %7375 = vmatpush1.msra.mxu0 0.0
      %7376 = vmatprep.subr.mxu0 0.0
      %7377 = vmatpush1.msra.mxu0 0.0
      %7378 = vmatprep.subr.mxu0 0.0
      %7379 = vmatpush1.msra.mxu0 0.0
      %7380 = vmatprep.subr.mxu0 0.0
      %7381 = vmatpush1.msra.mxu0 0.0
      %7382 = vmatprep.subr.mxu0 0.0
      %7383 = vmatpush1.msra.mxu0 0.0
      %7384 = vmatprep.subr.mxu0 0.0
      %7385 = vmatpush1.msra.mxu0 0.0
      %7386 = vmatprep.subr.mxu0 0.0
      %7387 = vmatpush1.msra.mxu0 0.0
      %7388 = vmatprep.subr.mxu0 0.0
      %7389 = vmatpush1.msra.mxu0 0.0
      %7390 = vmatprep.subr.mxu0 0.0
      %7391 = vmatpush1.msra.mxu0 0.0
      %7392 = vmatprep.subr.mxu0 0.0
      %7393 = vmatpush1.msra.mxu0 0.0
      %7394 = vmatprep.subr.mxu0 0.0
      %7395 = vmatpush1.msra.mxu0 0.0
      %7396 = vmatprep.subr.mxu0 0.0
      %7397 = vmatpush1.msra.mxu0 0.0
      %7398 = vmatprep.subr.mxu0 0.0
      %7399 = vmatpush1.msra.mxu0 0.0
      %7400 = vmatprep.subr.mxu0 0.0
      %7401 = vmatpush1.msra.mxu0 0.0
      %7402 = vmatprep.subr.mxu0 0.0
      %7403 = vmatpush1.msra.mxu0 0.0
      %7404 = vmatprep.mubr.f32.mxu0 0.0
      %v7405 = vand.u32 %v6947, 4294901760
      %7406 = vmatmul.mubr.f32.gmra.mrb[0].mxu0 %v7405
      %v7407 = vpop.f32.mrb[0].mxu0
      %v7408 = vadd.f32 %v7335, %v7407
      %v7409 = vpop.f32.mrb[0].mxu0
      %7410 = vdwg.mxu0
      %v7412 = vsel %vm509, %v6936, 0
      %v7415 = vsel %vm525, %v6942, 0
      %7417 = vmatprep.subr.mxu0 0.0
      %v7418 = vand.u32 %v6941, 4294901760
      %7419 = vmatpush1.msra.mxu0 %v7418
      %7420 = vmatprep.subr.mxu0 0.0
      %v7421 = vand.u32 %v7415, 4294901760
      %7422 = vmatpush1.msra.mxu0 %v7421
      %7423 = vmatprep.subr.mxu0 0.0
      %7424 = vmatpush1.msra.mxu0 0.0
      %7425 = vmatprep.subr.mxu0 0.0
      %7426 = vmatpush1.msra.mxu0 0.0
      %7427 = vmatprep.subr.mxu0 0.0
      %7428 = vmatpush1.msra.mxu0 0.0
      %7429 = vmatprep.subr.mxu0 0.0
      %7430 = vmatpush1.msra.mxu0 0.0
      %7431 = vmatprep.subr.mxu0 0.0
      %7432 = vmatpush1.msra.mxu0 0.0
      %7433 = vmatprep.subr.mxu0 0.0
      %7434 = vmatpush1.msra.mxu0 0.0
      %7435 = vmatprep.subr.mxu0 0.0
      %7436 = vmatpush1.msra.mxu0 0.0
      %7437 = vmatprep.subr.mxu0 0.0
      %7438 = vmatpush1.msra.mxu0 0.0
      %7439 = vmatprep.subr.mxu0 0.0
      %7440 = vmatpush1.msra.mxu0 0.0
      %7441 = vmatprep.subr.mxu0 0.0
      %7442 = vmatpush1.msra.mxu0 0.0
      %7443 = vmatprep.subr.mxu0 0.0
      %7444 = vmatpush1.msra.mxu0 0.0
      %7445 = vmatprep.subr.mxu0 0.0
      %7446 = vmatpush1.msra.mxu0 0.0
      %7447 = vmatprep.subr.mxu0 0.0
      %7448 = vmatpush1.msra.mxu0 0.0
      %7449 = vmatprep.subr.mxu0 0.0
      %7450 = vmatpush1.msra.mxu0 0.0
      %7451 = vmatprep.subr.mxu0 0.0
      %7452 = vmatpush1.msra.mxu0 0.0
      %7453 = vmatprep.subr.mxu0 0.0
      %7454 = vmatpush1.msra.mxu0 0.0
      %7455 = vmatprep.subr.mxu0 0.0
      %7456 = vmatpush1.msra.mxu0 0.0
      %7457 = vmatprep.subr.mxu0 0.0
      %7458 = vmatpush1.msra.mxu0 0.0
      %7459 = vmatprep.subr.mxu0 0.0
      %7460 = vmatpush1.msra.mxu0 0.0
      %7461 = vmatprep.subr.mxu0 0.0
      %7462 = vmatpush1.msra.mxu0 0.0
      %7463 = vmatprep.subr.mxu0 0.0
      %7464 = vmatpush1.msra.mxu0 0.0
      %7465 = vmatprep.subr.mxu0 0.0
      %7466 = vmatpush1.msra.mxu0 0.0
      %7467 = vmatprep.subr.mxu0 0.0
      %7468 = vmatpush1.msra.mxu0 0.0
      %7469 = vmatprep.subr.mxu0 0.0
      %7470 = vmatpush1.msra.mxu0 0.0
      %7471 = vmatprep.subr.mxu0 0.0
      %7472 = vmatpush1.msra.mxu0 0.0
      %7473 = vmatprep.subr.mxu0 0.0
      %7474 = vmatpush1.msra.mxu0 0.0
      %7475 = vmatprep.subr.mxu0 0.0
      %7476 = vmatpush1.msra.mxu0 0.0
      %7477 = vmatprep.subr.mxu0 0.0
      %7478 = vmatpush1.msra.mxu0 0.0
      %7479 = vmatprep.subr.mxu0 0.0
      %7480 = vmatpush1.msra.mxu0 0.0
      %7481 = vmatprep.subr.mxu0 0.0
      %7482 = vmatpush1.msra.mxu0 0.0
      %7483 = vmatprep.mubr.f32.mxu0 0.0
      %v7484 = vand.u32 %v7412, 4294901760
      %v7485 = vsub.f32 %v7412, %v7484
      %v7486 = vand.u32 %v7485, 4294901760
      %v7487 = vsub.f32 %v7485, %v7486
      %v7488 = vand.u32 %v7487, 4294901760
      %7489 = vmatmul.mubr.f32.gmra.mrb[0].mxu0 %v7488
      %v7490 = vpop.f32.mrb[0].mxu0
      %v7491 = vadd.f32 %v7408, %v7490
      %v7492 = vpop.f32.mrb[0].mxu0
      %7493 = vdwg.mxu0
      %7494 = vmatprep.subr.mxu0 0.0
      %v7495 = vand.u32 %v6941, 4294901760
      %v7496 = vsub.f32 %v6941, %v7495
      %v7497 = vand.u32 %v7496, 4294901760
      %v7498 = vsub.f32 %v7496, %v7497
      %v7499 = vand.u32 %v7498, 4294901760
      %7500 = vmatpush1.msra.mxu0 %v7499
      %7501 = vmatprep.subr.mxu0 0.0
      %v7502 = vand.u32 %v7415, 4294901760
      %v7503 = vsub.f32 %v7415, %v7502
      %v7504 = vand.u32 %v7503, 4294901760
      %v7505 = vsub.f32 %v7503, %v7504
      %v7506 = vand.u32 %v7505, 4294901760
      %7507 = vmatpush1.msra.mxu0 %v7506
      %7508 = vmatprep.subr.mxu0 0.0
      %7509 = vmatpush1.msra.mxu0 0.0
      %7510 = vmatprep.subr.mxu0 0.0
      %7511 = vmatpush1.msra.mxu0 0.0
      %7512 = vmatprep.subr.mxu0 0.0
      %7513 = vmatpush1.msra.mxu0 0.0
      %7514 = vmatprep.subr.mxu0 0.0
      %7515 = vmatpush1.msra.mxu0 0.0
      %7516 = vmatprep.subr.mxu0 0.0
      %7517 = vmatpush1.msra.mxu0 0.0
      %7518 = vmatprep.subr.mxu0 0.0
      %7519 = vmatpush1.msra.mxu0 0.0
      %7520 = vmatprep.subr.mxu0 0.0
      %7521 = vmatpush1.msra.mxu0 0.0
      %7522 = vmatprep.subr.mxu0 0.0
      %7523 = vmatpush1.msra.mxu0 0.0
      %7524 = vmatprep.subr.mxu0 0.0
      %7525 = vmatpush1.msra.mxu0 0.0
      %7526 = vmatprep.subr.mxu0 0.0
      %7527 = vmatpush1.msra.mxu0 0.0
      %7528 = vmatprep.subr.mxu0 0.0
      %7529 = vmatpush1.msra.mxu0 0.0
      %7530 = vmatprep.subr.mxu0 0.0
      %7531 = vmatpush1.msra.mxu0 0.0
      %7532 = vmatprep.subr.mxu0 0.0
      %7533 = vmatpush1.msra.mxu0 0.0
      %7534 = vmatprep.subr.mxu0 0.0
      %7535 = vmatpush1.msra.mxu0 0.0
      %7536 = vmatprep.subr.mxu0 0.0
      %7537 = vmatpush1.msra.mxu0 0.0
      %7538 = vmatprep.subr.mxu0 0.0
      %7539 = vmatpush1.msra.mxu0 0.0
      %7540 = vmatprep.subr.mxu0 0.0
      %7541 = vmatpush1.msra.mxu0 0.0
      %7542 = vmatprep.subr.mxu0 0.0
      %7543 = vmatpush1.msra.mxu0 0.0
      %7544 = vmatprep.subr.mxu0 0.0
      %7545 = vmatpush1.msra.mxu0 0.0
      %7546 = vmatprep.subr.mxu0 0.0
      %7547 = vmatpush1.msra.mxu0 0.0
      %7548 = vmatprep.subr.mxu0 0.0
      %7549 = vmatpush1.msra.mxu0 0.0
      %7550 = vmatprep.subr.mxu0 0.0
      %7551 = vmatpush1.msra.mxu0 0.0
      %7552 = vmatprep.subr.mxu0 0.0
      %7553 = vmatpush1.msra.mxu0 0.0
      %7554 = vmatprep.subr.mxu0 0.0
      %7555 = vmatpush1.msra.mxu0 0.0
      %7556 = vmatprep.subr.mxu0 0.0
      %7557 = vmatpush1.msra.mxu0 0.0
      %7558 = vmatprep.subr.mxu0 0.0
      %7559 = vmatpush1.msra.mxu0 0.0
      %7560 = vmatprep.subr.mxu0 0.0
      %7561 = vmatpush1.msra.mxu0 0.0
      %7562 = vmatprep.subr.mxu0 0.0
      %7563 = vmatpush1.msra.mxu0 0.0
      %7564 = vmatprep.subr.mxu0 0.0
      %7565 = vmatpush1.msra.mxu0 0.0
      %7566 = vmatprep.subr.mxu0 0.0
      %7567 = vmatpush1.msra.mxu0 0.0
      %7568 = vmatprep.mubr.f32.mxu0 0.0
      %v7569 = vand.u32 %v7412, 4294901760
      %7570 = vmatmul.mubr.f32.gmra.mrb[0].mxu0 %v7569
      %v7571 = vpop.f32.mrb[0].mxu0
      %v7572 = vadd.f32 %v7491, %v7571
      %v7573 = vpop.f32.mrb[0].mxu0
      %7574 = vdwg.mxu0
      %7575 = vmatprep.subr.mxu0 0.0
      %v7576 = vand.u32 %v6941, 4294901760
      %v7577 = vsub.f32 %v6941, %v7576
      %7578 = vmatpush1.msra.mxu0 %v7577
      %7579 = vmatprep.subr.mxu0 0.0
      %v7580 = vand.u32 %v7415, 4294901760
      %v7581 = vsub.f32 %v7415, %v7580
      %7582 = vmatpush1.msra.mxu0 %v7581
      %7583 = vmatprep.subr.mxu0 0.0
      %7584 = vmatpush1.msra.mxu0 0.0
      %7585 = vmatprep.subr.mxu0 0.0
      %7586 = vmatpush1.msra.mxu0 0.0
      %7587 = vmatprep.subr.mxu0 0.0
      %7588 = vmatpush1.msra.mxu0 0.0
      %7589 = vmatprep.subr.mxu0 0.0
      %7590 = vmatpush1.msra.mxu0 0.0
      %7591 = vmatprep.subr.mxu0 0.0
      %7592 = vmatpush1.msra.mxu0 0.0
      %7593 = vmatprep.subr.mxu0 0.0
      %7594 = vmatpush1.msra.mxu0 0.0
      %7595 = vmatprep.subr.mxu0 0.0
      %7596 = vmatpush1.msra.mxu0 0.0
      %7597 = vmatprep.subr.mxu0 0.0
      %7598 = vmatpush1.msra.mxu0 0.0
      %7599 = vmatprep.subr.mxu0 0.0
      %7600 = vmatpush1.msra.mxu0 0.0
      %7601 = vmatprep.subr.mxu0 0.0
      %7602 = vmatpush1.msra.mxu0 0.0
      %7603 = vmatprep.subr.mxu0 0.0
      %7604 = vmatpush1.msra.mxu0 0.0
      %7605 = vmatprep.subr.mxu0 0.0
      %7606 = vmatpush1.msra.mxu0 0.0
      %7607 = vmatprep.subr.mxu0 0.0
      %7608 = vmatpush1.msra.mxu0 0.0
      %7609 = vmatprep.subr.mxu0 0.0
      %7610 = vmatpush1.msra.mxu0 0.0
      %7611 = vmatprep.subr.mxu0 0.0
      %7612 = vmatpush1.msra.mxu0 0.0
      %7613 = vmatprep.subr.mxu0 0.0
      %7614 = vmatpush1.msra.mxu0 0.0
      %7615 = vmatprep.subr.mxu0 0.0
      %7616 = vmatpush1.msra.mxu0 0.0
      %7617 = vmatprep.subr.mxu0 0.0
      %7618 = vmatpush1.msra.mxu0 0.0
      %7619 = vmatprep.subr.mxu0 0.0
      %7620 = vmatpush1.msra.mxu0 0.0
      %7621 = vmatprep.subr.mxu0 0.0
      %7622 = vmatpush1.msra.mxu0 0.0
      %7623 = vmatprep.subr.mxu0 0.0
      %7624 = vmatpush1.msra.mxu0 0.0
      %7625 = vmatprep.subr.mxu0 0.0
      %7626 = vmatpush1.msra.mxu0 0.0
      %7627 = vmatprep.subr.mxu0 0.0
      %7628 = vmatpush1.msra.mxu0 0.0
      %7629 = vmatprep.subr.mxu0 0.0
      %7630 = vmatpush1.msra.mxu0 0.0
      %7631 = vmatprep.subr.mxu0 0.0
      %7632 = vmatpush1.msra.mxu0 0.0
      %7633 = vmatprep.subr.mxu0 0.0
      %7634 = vmatpush1.msra.mxu0 0.0
      %7635 = vmatprep.subr.mxu0 0.0
      %7636 = vmatpush1.msra.mxu0 0.0
      %7637 = vmatprep.subr.mxu0 0.0
      %7638 = vmatpush1.msra.mxu0 0.0
      %7639 = vmatprep.subr.mxu0 0.0
      %7640 = vmatpush1.msra.mxu0 0.0
      %7641 = vmatprep.subr.mxu0 0.0
      %7642 = vmatpush1.msra.mxu0 0.0
      %7643 = vmatprep.mubr.f32.mxu0 0.0
      %v7644 = vand.u32 %v7412, 4294901760
      %v7645 = vsub.f32 %v7412, %v7644
      %7646 = vmatmul.mubr.f32.gmra.mrb[0].mxu0 %v7645
      %v7647 = vpop.f32.mrb[0].mxu0
      %v7648 = vadd.f32 %v7572, %v7647
      %v7649 = vpop.f32.mrb[0].mxu0
      %7650 = vdwg.mxu0
      %7651 = vmatprep.subr.mxu0 0.0
      %v7652 = vand.u32 %v6941, 4294901760
      %7653 = vmatpush1.msra.mxu0 %v7652
      %7654 = vmatprep.subr.mxu0 0.0
      %v7655 = vand.u32 %v7415, 4294901760
      %7656 = vmatpush1.msra.mxu0 %v7655
      %7657 = vmatprep.subr.mxu0 0.0
      %7658 = vmatpush1.msra.mxu0 0.0
      %7659 = vmatprep.subr.mxu0 0.0
      %7660 = vmatpush1.msra.mxu0 0.0
      %7661 = vmatprep.subr.mxu0 0.0
      %7662 = vmatpush1.msra.mxu0 0.0
      %7663 = vmatprep.subr.mxu0 0.0
      %7664 = vmatpush1.msra.mxu0 0.0
      %7665 = vmatprep.subr.mxu0 0.0
      %7666 = vmatpush1.msra.mxu0 0.0
      %7667 = vmatprep.subr.mxu0 0.0
      %7668 = vmatpush1.msra.mxu0 0.0
      %7669 = vmatprep.subr.mxu0 0.0
      %7670 = vmatpush1.msra.mxu0 0.0
      %7671 = vmatprep.subr.mxu0 0.0
      %7672 = vmatpush1.msra.mxu0 0.0
      %7673 = vmatprep.subr.mxu0 0.0
      %7674 = vmatpush1.msra.mxu0 0.0
      %7675 = vmatprep.subr.mxu0 0.0
      %7676 = vmatpush1.msra.mxu0 0.0
      %7677 = vmatprep.subr.mxu0 0.0
      %7678 = vmatpush1.msra.mxu0 0.0
      %7679 = vmatprep.subr.mxu0 0.0
      %7680 = vmatpush1.msra.mxu0 0.0
      %7681 = vmatprep.subr.mxu0 0.0
      %7682 = vmatpush1.msra.mxu0 0.0
      %7683 = vmatprep.subr.mxu0 0.0
      %7684 = vmatpush1.msra.mxu0 0.0
      %7685 = vmatprep.subr.mxu0 0.0
      %7686 = vmatpush1.msra.mxu0 0.0
      %7687 = vmatprep.subr.mxu0 0.0
      %7688 = vmatpush1.msra.mxu0 0.0
      %7689 = vmatprep.subr.mxu0 0.0
      %7690 = vmatpush1.msra.mxu0 0.0
      %7691 = vmatprep.subr.mxu0 0.0
      %7692 = vmatpush1.msra.mxu0 0.0
      %7693 = vmatprep.subr.mxu0 0.0
      %7694 = vmatpush1.msra.mxu0 0.0
      %7695 = vmatprep.subr.mxu0 0.0
      %7696 = vmatpush1.msra.mxu0 0.0
      %7697 = vmatprep.subr.mxu0 0.0
      %7698 = vmatpush1.msra.mxu0 0.0
      %7699 = vmatprep.subr.mxu0 0.0
      %7700 = vmatpush1.msra.mxu0 0.0
      %7701 = vmatprep.subr.mxu0 0.0
      %7702 = vmatpush1.msra.mxu0 0.0
      %7703 = vmatprep.subr.mxu0 0.0
      %7704 = vmatpush1.msra.mxu0 0.0
      %7705 = vmatprep.subr.mxu0 0.0
      %7706 = vmatpush1.msra.mxu0 0.0
      %7707 = vmatprep.subr.mxu0 0.0
      %7708 = vmatpush1.msra.mxu0 0.0
      %7709 = vmatprep.subr.mxu0 0.0
      %7710 = vmatpush1.msra.mxu0 0.0
      %7711 = vmatprep.subr.mxu0 0.0
      %7712 = vmatpush1.msra.mxu0 0.0
      %7713 = vmatprep.subr.mxu0 0.0
      %7714 = vmatpush1.msra.mxu0 0.0
      %7715 = vmatprep.subr.mxu0 0.0
      %7716 = vmatpush1.msra.mxu0 0.0
      %7717 = vmatprep.mubr.f32.mxu0 0.0
      %v7718 = vand.u32 %v7412, 4294901760
      %v7719 = vsub.f32 %v7412, %v7718
      %v7720 = vand.u32 %v7719, 4294901760
      %7721 = vmatmul.mubr.f32.gmra.mrb[0].mxu0 %v7720
      %v7722 = vpop.f32.mrb[0].mxu0
      %v7723 = vadd.f32 %v7648, %v7722
      %v7724 = vpop.f32.mrb[0].mxu0
      %7725 = vdwg.mxu0
      %7726 = vmatprep.subr.mxu0 0.0
      %v7727 = vand.u32 %v6941, 4294901760
      %v7728 = vsub.f32 %v6941, %v7727
      %v7729 = vand.u32 %v7728, 4294901760
      %7730 = vmatpush1.msra.mxu0 %v7729
      %7731 = vmatprep.subr.mxu0 0.0
      %v7732 = vand.u32 %v7415, 4294901760
      %v7733 = vsub.f32 %v7415, %v7732
      %v7734 = vand.u32 %v7733, 4294901760
      %7735 = vmatpush1.msra.mxu0 %v7734
      %7736 = vmatprep.subr.mxu0 0.0
      %7737 = vmatpush1.msra.mxu0 0.0
      %7738 = vmatprep.subr.mxu0 0.0
      %7739 = vmatpush1.msra.mxu0 0.0
      %7740 = vmatprep.subr.mxu0 0.0
      %7741 = vmatpush1.msra.mxu0 0.0
      %7742 = vmatprep.subr.mxu0 0.0
      %7743 = vmatpush1.msra.mxu0 0.0
      %7744 = vmatprep.subr.mxu0 0.0
      %7745 = vmatpush1.msra.mxu0 0.0
      %7746 = vmatprep.subr.mxu0 0.0
      %7747 = vmatpush1.msra.mxu0 0.0
      %7748 = vmatprep.subr.mxu0 0.0
      %7749 = vmatpush1.msra.mxu0 0.0
      %7750 = vmatprep.subr.mxu0 0.0
      %7751 = vmatpush1.msra.mxu0 0.0
      %7752 = vmatprep.subr.mxu0 0.0
      %7753 = vmatpush1.msra.mxu0 0.0
      %7754 = vmatprep.subr.mxu0 0.0
      %7755 = vmatpush1.msra.mxu0 0.0
      %7756 = vmatprep.subr.mxu0 0.0
      %7757 = vmatpush1.msra.mxu0 0.0
      %7758 = vmatprep.subr.mxu0 0.0
      %7759 = vmatpush1.msra.mxu0 0.0
      %7760 = vmatprep.subr.mxu0 0.0
      %7761 = vmatpush1.msra.mxu0 0.0
      %7762 = vmatprep.subr.mxu0 0.0
      %7763 = vmatpush1.msra.mxu0 0.0
      %7764 = vmatprep.subr.mxu0 0.0
      %7765 = vmatpush1.msra.mxu0 0.0
      %7766 = vmatprep.subr.mxu0 0.0
      %7767 = vmatpush1.msra.mxu0 0.0
      %7768 = vmatprep.subr.mxu0 0.0
      %7769 = vmatpush1.msra.mxu0 0.0
      %7770 = vmatprep.subr.mxu0 0.0
      %7771 = vmatpush1.msra.mxu0 0.0
      %7772 = vmatprep.subr.mxu0 0.0
      %7773 = vmatpush1.msra.mxu0 0.0
      %7774 = vmatprep.subr.mxu0 0.0
      %7775 = vmatpush1.msra.mxu0 0.0
      %7776 = vmatprep.subr.mxu0 0.0
      %7777 = vmatpush1.msra.mxu0 0.0
      %7778 = vmatprep.subr.mxu0 0.0
      %7779 = vmatpush1.msra.mxu0 0.0
      %7780 = vmatprep.subr.mxu0 0.0
      %7781 = vmatpush1.msra.mxu0 0.0
      %7782 = vmatprep.subr.mxu0 0.0
      %7783 = vmatpush1.msra.mxu0 0.0
      %7784 = vmatprep.subr.mxu0 0.0
      %7785 = vmatpush1.msra.mxu0 0.0
      %7786 = vmatprep.subr.mxu0 0.0
      %7787 = vmatpush1.msra.mxu0 0.0
      %7788 = vmatprep.subr.mxu0 0.0
      %7789 = vmatpush1.msra.mxu0 0.0
      %7790 = vmatprep.subr.mxu0 0.0
      %7791 = vmatpush1.msra.mxu0 0.0
      %7792 = vmatprep.subr.mxu0 0.0
      %7793 = vmatpush1.msra.mxu0 0.0
      %7794 = vmatprep.subr.mxu0 0.0
      %7795 = vmatpush1.msra.mxu0 0.0
      %7796 = vmatprep.mubr.f32.mxu0 0.0
      %v7797 = vand.u32 %v7412, 4294901760
      %7798 = vmatmul.mubr.f32.gmra.mrb[0].mxu0 %v7797
      %v7799 = vpop.f32.mrb[0].mxu0
      %v7800 = vadd.f32 %v7723, %v7799
      %v7801 = vpop.f32.mrb[0].mxu0
      %7802 = vdwg.mxu0
      %7803 = vmatprep.subr.mxu0 0.0
      %v7804 = vand.u32 %v6941, 4294901760
      %7805 = vmatpush1.msra.mxu0 %v7804
      %7806 = vmatprep.subr.mxu0 0.0
      %v7807 = vand.u32 %v7415, 4294901760
      %7808 = vmatpush1.msra.mxu0 %v7807
      %7809 = vmatprep.subr.mxu0 0.0
      %7810 = vmatpush1.msra.mxu0 0.0
      %7811 = vmatprep.subr.mxu0 0.0
      %7812 = vmatpush1.msra.mxu0 0.0
      %7813 = vmatprep.subr.mxu0 0.0
      %7814 = vmatpush1.msra.mxu0 0.0
      %7815 = vmatprep.subr.mxu0 0.0
      %7816 = vmatpush1.msra.mxu0 0.0
      %7817 = vmatprep.subr.mxu0 0.0
      %7818 = vmatpush1.msra.mxu0 0.0
      %7819 = vmatprep.subr.mxu0 0.0
      %7820 = vmatpush1.msra.mxu0 0.0
      %7821 = vmatprep.subr.mxu0 0.0
      %7822 = vmatpush1.msra.mxu0 0.0
      %7823 = vmatprep.subr.mxu0 0.0
      %7824 = vmatpush1.msra.mxu0 0.0
      %7825 = vmatprep.subr.mxu0 0.0
      %7826 = vmatpush1.msra.mxu0 0.0
      %7827 = vmatprep.subr.mxu0 0.0
      %7828 = vmatpush1.msra.mxu0 0.0
      %7829 = vmatprep.subr.mxu0 0.0
      %7830 = vmatpush1.msra.mxu0 0.0
      %7831 = vmatprep.subr.mxu0 0.0
      %7832 = vmatpush1.msra.mxu0 0.0
      %7833 = vmatprep.subr.mxu0 0.0
      %7834 = vmatpush1.msra.mxu0 0.0
      %7835 = vmatprep.subr.mxu0 0.0
      %7836 = vmatpush1.msra.mxu0 0.0
      %7837 = vmatprep.subr.mxu0 0.0
      %7838 = vmatpush1.msra.mxu0 0.0
      %7839 = vmatprep.subr.mxu0 0.0
      %7840 = vmatpush1.msra.mxu0 0.0
      %7841 = vmatprep.subr.mxu0 0.0
      %7842 = vmatpush1.msra.mxu0 0.0
      %7843 = vmatprep.subr.mxu0 0.0
      %7844 = vmatpush1.msra.mxu0 0.0
      %7845 = vmatprep.subr.mxu0 0.0
      %7846 = vmatpush1.msra.mxu0 0.0
      %7847 = vmatprep.subr.mxu0 0.0
      %7848 = vmatpush1.msra.mxu0 0.0
      %7849 = vmatprep.subr.mxu0 0.0
      %7850 = vmatpush1.msra.mxu0 0.0
      %7851 = vmatprep.subr.mxu0 0.0
      %7852 = vmatpush1.msra.mxu0 0.0
      %7853 = vmatprep.subr.mxu0 0.0
      %7854 = vmatpush1.msra.mxu0 0.0
      %7855 = vmatprep.subr.mxu0 0.0
      %7856 = vmatpush1.msra.mxu0 0.0
      %7857 = vmatprep.subr.mxu0 0.0
      %7858 = vmatpush1.msra.mxu0 0.0
      %7859 = vmatprep.subr.mxu0 0.0
      %7860 = vmatpush1.msra.mxu0 0.0
      %7861 = vmatprep.subr.mxu0 0.0
      %7862 = vmatpush1.msra.mxu0 0.0
      %7863 = vmatprep.subr.mxu0 0.0
      %7864 = vmatpush1.msra.mxu0 0.0
      %7865 = vmatprep.subr.mxu0 0.0
      %7866 = vmatpush1.msra.mxu0 0.0
      %7867 = vmatprep.subr.mxu0 0.0
      %7868 = vmatpush1.msra.mxu0 0.0
      %7869 = vmatprep.mubr.f32.mxu0 0.0
      %v7870 = vand.u32 %v7412, 4294901760
      %7871 = vmatmul.mubr.f32.gmra.mrb[0].mxu0 %v7870
      %v7872 = vpop.f32.mrb[0].mxu0
      %v7873 = vadd.f32 %v7800, %v7872
      %v7874 = vpop.f32.mrb[0].mxu0
      %7875 = vdwg.mxu0
      %s7876 = scalar_lea.vmem %s13, 32
      %v7877 = vld [vmem:[%s7876] sm:$0xff]
      %v7878 = vld [vmem:[%s7876 + $0x8] sm:$0x7]
      %v7880 = vsel %vm509, %v6938, 0
      %v7883 = vsel %vm525, %v7878, 0
      %7885 = vmatprep.subr.mxu0 0.0
      %v7886 = vand.u32 %v7877, 4294901760
      %7887 = vmatpush1.msra.mxu0 %v7886
      %7888 = vmatprep.subr.mxu0 0.0
      %v7889 = vand.u32 %v7883, 4294901760
      %7890 = vmatpush1.msra.mxu0 %v7889
      %7891 = vmatprep.subr.mxu0 0.0
      %7892 = vmatpush1.msra.mxu0 0.0
      %7893 = vmatprep.subr.mxu0 0.0
      %7894 = vmatpush1.msra.mxu0 0.0
      %7895 = vmatprep.subr.mxu0 0.0
      %7896 = vmatpush1.msra.mxu0 0.0
      %7897 = vmatprep.subr.mxu0 0.0
      %7898 = vmatpush1.msra.mxu0 0.0
      %7899 = vmatprep.subr.mxu0 0.0
      %7900 = vmatpush1.msra.mxu0 0.0
      %7901 = vmatprep.subr.mxu0 0.0
      %7902 = vmatpush1.msra.mxu0 0.0
      %7903 = vmatprep.subr.mxu0 0.0
      %7904 = vmatpush1.msra.mxu0 0.0
      %7905 = vmatprep.subr.mxu0 0.0
      %7906 = vmatpush1.msra.mxu0 0.0
      %7907 = vmatprep.subr.mxu0 0.0
      %7908 = vmatpush1.msra.mxu0 0.0
      %7909 = vmatprep.subr.mxu0 0.0
      %7910 = vmatpush1.msra.mxu0 0.0
      %7911 = vmatprep.subr.mxu0 0.0
      %7912 = vmatpush1.msra.mxu0 0.0
      %7913 = vmatprep.subr.mxu0 0.0
      %7914 = vmatpush1.msra.mxu0 0.0
      %7915 = vmatprep.subr.mxu0 0.0
      %7916 = vmatpush1.msra.mxu0 0.0
      %7917 = vmatprep.subr.mxu0 0.0
      %7918 = vmatpush1.msra.mxu0 0.0
      %7919 = vmatprep.subr.mxu0 0.0
      %7920 = vmatpush1.msra.mxu0 0.0
      %7921 = vmatprep.subr.mxu0 0.0
      %7922 = vmatpush1.msra.mxu0 0.0
      %7923 = vmatprep.subr.mxu0 0.0
      %7924 = vmatpush1.msra.mxu0 0.0
      %7925 = vmatprep.subr.mxu0 0.0
      %7926 = vmatpush1.msra.mxu0 0.0
      %7927 = vmatprep.subr.mxu0 0.0
      %7928 = vmatpush1.msra.mxu0 0.0
      %7929 = vmatprep.subr.mxu0 0.0
      %7930 = vmatpush1.msra.mxu0 0.0
      %7931 = vmatprep.subr.mxu0 0.0
      %7932 = vmatpush1.msra.mxu0 0.0
      %7933 = vmatprep.subr.mxu0 0.0
      %7934 = vmatpush1.msra.mxu0 0.0
      %7935 = vmatprep.subr.mxu0 0.0
      %7936 = vmatpush1.msra.mxu0 0.0
      %7937 = vmatprep.subr.mxu0 0.0
      %7938 = vmatpush1.msra.mxu0 0.0
      %7939 = vmatprep.subr.mxu0 0.0
      %7940 = vmatpush1.msra.mxu0 0.0
      %7941 = vmatprep.subr.mxu0 0.0
      %7942 = vmatpush1.msra.mxu0 0.0
      %7943 = vmatprep.subr.mxu0 0.0
      %7944 = vmatpush1.msra.mxu0 0.0
      %7945 = vmatprep.subr.mxu0 0.0
      %7946 = vmatpush1.msra.mxu0 0.0
      %7947 = vmatprep.subr.mxu0 0.0
      %7948 = vmatpush1.msra.mxu0 0.0
      %7949 = vmatprep.subr.mxu0 0.0
      %7950 = vmatpush1.msra.mxu0 0.0
      %7951 = vmatprep.mubr.f32.mxu0 0.0
      %v7952 = vand.u32 %v7880, 4294901760
      %v7953 = vsub.f32 %v7880, %v7952
      %v7954 = vand.u32 %v7953, 4294901760
      %v7955 = vsub.f32 %v7953, %v7954
      %v7956 = vand.u32 %v7955, 4294901760
      %7957 = vmatmul.mubr.f32.gmra.mrb[0].mxu0 %v7956
      %v7958 = vpop.f32.mrb[0].mxu0
      %v7959 = vadd.f32 0.0, %v7958
      %v7960 = vpop.f32.mrb[0].mxu0
      %7961 = vdwg.mxu0
      %7962 = vmatprep.subr.mxu0 0.0
      %v7963 = vand.u32 %v7877, 4294901760
      %v7964 = vsub.f32 %v7877, %v7963
      %v7965 = vand.u32 %v7964, 4294901760
      %v7966 = vsub.f32 %v7964, %v7965
      %v7967 = vand.u32 %v7966, 4294901760
      %7968 = vmatpush1.msra.mxu0 %v7967
      %7969 = vmatprep.subr.mxu0 0.0
      %v7970 = vand.u32 %v7883, 4294901760
      %v7971 = vsub.f32 %v7883, %v7970
      %v7972 = vand.u32 %v7971, 4294901760
      %v7973 = vsub.f32 %v7971, %v7972
      %v7974 = vand.u32 %v7973, 4294901760
      %7975 = vmatpush1.msra.mxu0 %v7974
      %7976 = vmatprep.subr.mxu0 0.0
      %7977 = vmatpush1.msra.mxu0 0.0
      %7978 = vmatprep.subr.mxu0 0.0
      %7979 = vmatpush1.msra.mxu0 0.0
      %7980 = vmatprep.subr.mxu0 0.0
      %7981 = vmatpush1.msra.mxu0 0.0
      %7982 = vmatprep.subr.mxu0 0.0
      %7983 = vmatpush1.msra.mxu0 0.0
      %7984 = vmatprep.subr.mxu0 0.0
      %7985 = vmatpush1.msra.mxu0 0.0
      %7986 = vmatprep.subr.mxu0 0.0
      %7987 = vmatpush1.msra.mxu0 0.0
      %7988 = vmatprep.subr.mxu0 0.0
      %7989 = vmatpush1.msra.mxu0 0.0
      %7990 = vmatprep.subr.mxu0 0.0
      %7991 = vmatpush1.msra.mxu0 0.0
      %7992 = vmatprep.subr.mxu0 0.0
      %7993 = vmatpush1.msra.mxu0 0.0
      %7994 = vmatprep.subr.mxu0 0.0
      %7995 = vmatpush1.msra.mxu0 0.0
      %7996 = vmatprep.subr.mxu0 0.0
      %7997 = vmatpush1.msra.mxu0 0.0
      %7998 = vmatprep.subr.mxu0 0.0
      %7999 = vmatpush1.msra.mxu0 0.0
      %8000 = vmatprep.subr.mxu0 0.0
      %8001 = vmatpush1.msra.mxu0 0.0
      %8002 = vmatprep.subr.mxu0 0.0
      %8003 = vmatpush1.msra.mxu0 0.0
      %8004 = vmatprep.subr.mxu0 0.0
      %8005 = vmatpush1.msra.mxu0 0.0
      %8006 = vmatprep.subr.mxu0 0.0
      %8007 = vmatpush1.msra.mxu0 0.0
      %8008 = vmatprep.subr.mxu0 0.0
      %8009 = vmatpush1.msra.mxu0 0.0
      %8010 = vmatprep.subr.mxu0 0.0
      %8011 = vmatpush1.msra.mxu0 0.0
      %8012 = vmatprep.subr.mxu0 0.0
      %8013 = vmatpush1.msra.mxu0 0.0
      %8014 = vmatprep.subr.mxu0 0.0
      %8015 = vmatpush1.msra.mxu0 0.0
      %8016 = vmatprep.subr.mxu0 0.0
      %8017 = vmatpush1.msra.mxu0 0.0
      %8018 = vmatprep.subr.mxu0 0.0
      %8019 = vmatpush1.msra.mxu0 0.0
      %8020 = vmatprep.subr.mxu0 0.0
      %8021 = vmatpush1.msra.mxu0 0.0
      %8022 = vmatprep.subr.mxu0 0.0
      %8023 = vmatpush1.msra.mxu0 0.0
      %8024 = vmatprep.subr.mxu0 0.0
      %8025 = vmatpush1.msra.mxu0 0.0
      %8026 = vmatprep.subr.mxu0 0.0
      %8027 = vmatpush1.msra.mxu0 0.0
      %8028 = vmatprep.subr.mxu0 0.0
      %8029 = vmatpush1.msra.mxu0 0.0
      %8030 = vmatprep.subr.mxu0 0.0
      %8031 = vmatpush1.msra.mxu0 0.0
      %8032 = vmatprep.subr.mxu0 0.0
      %8033 = vmatpush1.msra.mxu0 0.0
      %8034 = vmatprep.subr.mxu0 0.0
      %8035 = vmatpush1.msra.mxu0 0.0
      %8036 = vmatprep.mubr.f32.mxu0 0.0
      %v8037 = vand.u32 %v7880, 4294901760
      %8038 = vmatmul.mubr.f32.gmra.mrb[0].mxu0 %v8037
      %v8039 = vpop.f32.mrb[0].mxu0
      %v8040 = vadd.f32 %v7959, %v8039
      %v8041 = vpop.f32.mrb[0].mxu0
      %8042 = vdwg.mxu0
      %8043 = vmatprep.subr.mxu0 0.0
      %v8044 = vand.u32 %v7877, 4294901760
      %v8045 = vsub.f32 %v7877, %v8044
      %8046 = vmatpush1.msra.mxu0 %v8045
      %8047 = vmatprep.subr.mxu0 0.0
      %v8048 = vand.u32 %v7883, 4294901760
      %v8049 = vsub.f32 %v7883, %v8048
      %8050 = vmatpush1.msra.mxu0 %v8049
      %8051 = vmatprep.subr.mxu0 0.0
      %8052 = vmatpush1.msra.mxu0 0.0
      %8053 = vmatprep.subr.mxu0 0.0
      %8054 = vmatpush1.msra.mxu0 0.0
      %8055 = vmatprep.subr.mxu0 0.0
      %8056 = vmatpush1.msra.mxu0 0.0
      %8057 = vmatprep.subr.mxu0 0.0
      %8058 = vmatpush1.msra.mxu0 0.0
      %8059 = vmatprep.subr.mxu0 0.0
      %8060 = vmatpush1.msra.mxu0 0.0
      %8061 = vmatprep.subr.mxu0 0.0
      %8062 = vmatpush1.msra.mxu0 0.0
      %8063 = vmatprep.subr.mxu0 0.0
      %8064 = vmatpush1.msra.mxu0 0.0
      %8065 = vmatprep.subr.mxu0 0.0
      %8066 = vmatpush1.msra.mxu0 0.0
      %8067 = vmatprep.subr.mxu0 0.0
      %8068 = vmatpush1.msra.mxu0 0.0
      %8069 = vmatprep.subr.mxu0 0.0
      %8070 = vmatpush1.msra.mxu0 0.0
      %8071 = vmatprep.subr.mxu0 0.0
      %8072 = vmatpush1.msra.mxu0 0.0
      %8073 = vmatprep.subr.mxu0 0.0
      %8074 = vmatpush1.msra.mxu0 0.0
      %8075 = vmatprep.subr.mxu0 0.0
      %8076 = vmatpush1.msra.mxu0 0.0
      %8077 = vmatprep.subr.mxu0 0.0
      %8078 = vmatpush1.msra.mxu0 0.0
      %8079 = vmatprep.subr.mxu0 0.0
      %8080 = vmatpush1.msra.mxu0 0.0
      %8081 = vmatprep.subr.mxu0 0.0
      %8082 = vmatpush1.msra.mxu0 0.0
      %8083 = vmatprep.subr.mxu0 0.0
      %8084 = vmatpush1.msra.mxu0 0.0
      %8085 = vmatprep.subr.mxu0 0.0
      %8086 = vmatpush1.msra.mxu0 0.0
      %8087 = vmatprep.subr.mxu0 0.0
      %8088 = vmatpush1.msra.mxu0 0.0
      %8089 = vmatprep.subr.mxu0 0.0
      %8090 = vmatpush1.msra.mxu0 0.0
      %8091 = vmatprep.subr.mxu0 0.0
      %8092 = vmatpush1.msra.mxu0 0.0
      %8093 = vmatprep.subr.mxu0 0.0
      %8094 = vmatpush1.msra.mxu0 0.0
      %8095 = vmatprep.subr.mxu0 0.0
      %8096 = vmatpush1.msra.mxu0 0.0
      %8097 = vmatprep.subr.mxu0 0.0
      %8098 = vmatpush1.msra.mxu0 0.0
      %8099 = vmatprep.subr.mxu0 0.0
      %8100 = vmatpush1.msra.mxu0 0.0
      %8101 = vmatprep.subr.mxu0 0.0
      %8102 = vmatpush1.msra.mxu0 0.0
      %8103 = vmatprep.subr.mxu0 0.0
      %8104 = vmatpush1.msra.mxu0 0.0
      %8105 = vmatprep.subr.mxu0 0.0
      %8106 = vmatpush1.msra.mxu0 0.0
      %8107 = vmatprep.subr.mxu0 0.0
      %8108 = vmatpush1.msra.mxu0 0.0
      %8109 = vmatprep.subr.mxu0 0.0
      %8110 = vmatpush1.msra.mxu0 0.0
      %8111 = vmatprep.mubr.f32.mxu0 0.0
      %v8112 = vand.u32 %v7880, 4294901760
      %v8113 = vsub.f32 %v7880, %v8112
      %8114 = vmatmul.mubr.f32.gmra.mrb[0].mxu0 %v8113
      %v8115 = vpop.f32.mrb[0].mxu0
      %v8116 = vadd.f32 %v8040, %v8115
      %v8117 = vpop.f32.mrb[0].mxu0
      %8118 = vdwg.mxu0
      %8119 = vmatprep.subr.mxu0 0.0
      %v8120 = vand.u32 %v7877, 4294901760
      %8121 = vmatpush1.msra.mxu0 %v8120
      %8122 = vmatprep.subr.mxu0 0.0
      %v8123 = vand.u32 %v7883, 4294901760
      %8124 = vmatpush1.msra.mxu0 %v8123
      %8125 = vmatprep.subr.mxu0 0.0
      %8126 = vmatpush1.msra.mxu0 0.0
      %8127 = vmatprep.subr.mxu0 0.0
      %8128 = vmatpush1.msra.mxu0 0.0
      %8129 = vmatprep.subr.mxu0 0.0
      %8130 = vmatpush1.msra.mxu0 0.0
      %8131 = vmatprep.subr.mxu0 0.0
      %8132 = vmatpush1.msra.mxu0 0.0
      %8133 = vmatprep.subr.mxu0 0.0
      %8134 = vmatpush1.msra.mxu0 0.0
      %8135 = vmatprep.subr.mxu0 0.0
      %8136 = vmatpush1.msra.mxu0 0.0
      %8137 = vmatprep.subr.mxu0 0.0
      %8138 = vmatpush1.msra.mxu0 0.0
      %8139 = vmatprep.subr.mxu0 0.0
      %8140 = vmatpush1.msra.mxu0 0.0
      %8141 = vmatprep.subr.mxu0 0.0
      %8142 = vmatpush1.msra.mxu0 0.0
      %8143 = vmatprep.subr.mxu0 0.0
      %8144 = vmatpush1.msra.mxu0 0.0
      %8145 = vmatprep.subr.mxu0 0.0
      %8146 = vmatpush1.msra.mxu0 0.0
      %8147 = vmatprep.subr.mxu0 0.0
      %8148 = vmatpush1.msra.mxu0 0.0
      %8149 = vmatprep.subr.mxu0 0.0
      %8150 = vmatpush1.msra.mxu0 0.0
      %8151 = vmatprep.subr.mxu0 0.0
      %8152 = vmatpush1.msra.mxu0 0.0
      %8153 = vmatprep.subr.mxu0 0.0
      %8154 = vmatpush1.msra.mxu0 0.0
      %8155 = vmatprep.subr.mxu0 0.0
      %8156 = vmatpush1.msra.mxu0 0.0
      %8157 = vmatprep.subr.mxu0 0.0
      %8158 = vmatpush1.msra.mxu0 0.0
      %8159 = vmatprep.subr.mxu0 0.0
      %8160 = vmatpush1.msra.mxu0 0.0
      %8161 = vmatprep.subr.mxu0 0.0
      %8162 = vmatpush1.msra.mxu0 0.0
      %8163 = vmatprep.subr.mxu0 0.0
      %8164 = vmatpush1.msra.mxu0 0.0
      %8165 = vmatprep.subr.mxu0 0.0
      %8166 = vmatpush1.msra.mxu0 0.0
      %8167 = vmatprep.subr.mxu0 0.0
      %8168 = vmatpush1.msra.mxu0 0.0
      %8169 = vmatprep.subr.mxu0 0.0
      %8170 = vmatpush1.msra.mxu0 0.0
      %8171 = vmatprep.subr.mxu0 0.0
      %8172 = vmatpush1.msra.mxu0 0.0
      %8173 = vmatprep.subr.mxu0 0.0
      %8174 = vmatpush1.msra.mxu0 0.0
      %8175 = vmatprep.subr.mxu0 0.0
      %8176 = vmatpush1.msra.mxu0 0.0
      %8177 = vmatprep.subr.mxu0 0.0
      %8178 = vmatpush1.msra.mxu0 0.0
      %8179 = vmatprep.subr.mxu0 0.0
      %8180 = vmatpush1.msra.mxu0 0.0
      %8181 = vmatprep.subr.mxu0 0.0
      %8182 = vmatpush1.msra.mxu0 0.0
      %8183 = vmatprep.subr.mxu0 0.0
      %8184 = vmatpush1.msra.mxu0 0.0
      %8185 = vmatprep.mubr.f32.mxu0 0.0
      %v8186 = vand.u32 %v7880, 4294901760
      %v8187 = vsub.f32 %v7880, %v8186
      %v8188 = vand.u32 %v8187, 4294901760
      %8189 = vmatmul.mubr.f32.gmra.mrb[0].mxu0 %v8188
      %v8190 = vpop.f32.mrb[0].mxu0
      %v8191 = vadd.f32 %v8116, %v8190
      %v8192 = vpop.f32.mrb[0].mxu0
      %8193 = vdwg.mxu0
      %8194 = vmatprep.subr.mxu0 0.0
      %v8195 = vand.u32 %v7877, 4294901760
      %v8196 = vsub.f32 %v7877, %v8195
      %v8197 = vand.u32 %v8196, 4294901760
      %8198 = vmatpush1.msra.mxu0 %v8197
      %8199 = vmatprep.subr.mxu0 0.0
      %v8200 = vand.u32 %v7883, 4294901760
      %v8201 = vsub.f32 %v7883, %v8200
      %v8202 = vand.u32 %v8201, 4294901760
      %8203 = vmatpush1.msra.mxu0 %v8202
      %8204 = vmatprep.subr.mxu0 0.0
      %8205 = vmatpush1.msra.mxu0 0.0
      %8206 = vmatprep.subr.mxu0 0.0
      %8207 = vmatpush1.msra.mxu0 0.0
      %8208 = vmatprep.subr.mxu0 0.0
      %8209 = vmatpush1.msra.mxu0 0.0
      %8210 = vmatprep.subr.mxu0 0.0
      %8211 = vmatpush1.msra.mxu0 0.0
      %8212 = vmatprep.subr.mxu0 0.0
      %8213 = vmatpush1.msra.mxu0 0.0
      %8214 = vmatprep.subr.mxu0 0.0
      %8215 = vmatpush1.msra.mxu0 0.0
      %8216 = vmatprep.subr.mxu0 0.0
      %8217 = vmatpush1.msra.mxu0 0.0
      %8218 = vmatprep.subr.mxu0 0.0
      %8219 = vmatpush1.msra.mxu0 0.0
      %8220 = vmatprep.subr.mxu0 0.0
      %8221 = vmatpush1.msra.mxu0 0.0
      %8222 = vmatprep.subr.mxu0 0.0
      %8223 = vmatpush1.msra.mxu0 0.0
      %8224 = vmatprep.subr.mxu0 0.0
      %8225 = vmatpush1.msra.mxu0 0.0
      %8226 = vmatprep.subr.mxu0 0.0
      %8227 = vmatpush1.msra.mxu0 0.0
      %8228 = vmatprep.subr.mxu0 0.0
      %8229 = vmatpush1.msra.mxu0 0.0
      %8230 = vmatprep.subr.mxu0 0.0
      %8231 = vmatpush1.msra.mxu0 0.0
      %8232 = vmatprep.subr.mxu0 0.0
      %8233 = vmatpush1.msra.mxu0 0.0
      %8234 = vmatprep.subr.mxu0 0.0
      %8235 = vmatpush1.msra.mxu0 0.0
      %8236 = vmatprep.subr.mxu0 0.0
      %8237 = vmatpush1.msra.mxu0 0.0
      %8238 = vmatprep.subr.mxu0 0.0
      %8239 = vmatpush1.msra.mxu0 0.0
      %8240 = vmatprep.subr.mxu0 0.0
      %8241 = vmatpush1.msra.mxu0 0.0
      %8242 = vmatprep.subr.mxu0 0.0
      %8243 = vmatpush1.msra.mxu0 0.0
      %8244 = vmatprep.subr.mxu0 0.0
      %8245 = vmatpush1.msra.mxu0 0.0
      %8246 = vmatprep.subr.mxu0 0.0
      %8247 = vmatpush1.msra.mxu0 0.0
      %8248 = vmatprep.subr.mxu0 0.0
      %8249 = vmatpush1.msra.mxu0 0.0
      %8250 = vmatprep.subr.mxu0 0.0
      %8251 = vmatpush1.msra.mxu0 0.0
      %8252 = vmatprep.subr.mxu0 0.0
      %8253 = vmatpush1.msra.mxu0 0.0
      %8254 = vmatprep.subr.mxu0 0.0
      %8255 = vmatpush1.msra.mxu0 0.0
      %8256 = vmatprep.subr.mxu0 0.0
      %8257 = vmatpush1.msra.mxu0 0.0
      %8258 = vmatprep.subr.mxu0 0.0
      %8259 = vmatpush1.msra.mxu0 0.0
      %8260 = vmatprep.subr.mxu0 0.0
      %8261 = vmatpush1.msra.mxu0 0.0
      %8262 = vmatprep.subr.mxu0 0.0
      %8263 = vmatpush1.msra.mxu0 0.0
      %8264 = vmatprep.mubr.f32.mxu0 0.0
      %v8265 = vand.u32 %v7880, 4294901760
      %8266 = vmatmul.mubr.f32.gmra.mrb[0].mxu0 %v8265
      %v8267 = vpop.f32.mrb[0].mxu0
      %v8268 = vadd.f32 %v8191, %v8267
      %v8269 = vpop.f32.mrb[0].mxu0
      %8270 = vdwg.mxu0
      %8271 = vmatprep.subr.mxu0 0.0
      %v8272 = vand.u32 %v7877, 4294901760
      %8273 = vmatpush1.msra.mxu0 %v8272
      %8274 = vmatprep.subr.mxu0 0.0
      %v8275 = vand.u32 %v7883, 4294901760
      %8276 = vmatpush1.msra.mxu0 %v8275
      %8277 = vmatprep.subr.mxu0 0.0
      %8278 = vmatpush1.msra.mxu0 0.0
      %8279 = vmatprep.subr.mxu0 0.0
      %8280 = vmatpush1.msra.mxu0 0.0
      %8281 = vmatprep.subr.mxu0 0.0
      %8282 = vmatpush1.msra.mxu0 0.0
      %8283 = vmatprep.subr.mxu0 0.0
      %8284 = vmatpush1.msra.mxu0 0.0
      %8285 = vmatprep.subr.mxu0 0.0
      %8286 = vmatpush1.msra.mxu0 0.0
      %8287 = vmatprep.subr.mxu0 0.0
      %8288 = vmatpush1.msra.mxu0 0.0
      %8289 = vmatprep.subr.mxu0 0.0
      %8290 = vmatpush1.msra.mxu0 0.0
      %8291 = vmatprep.subr.mxu0 0.0
      %8292 = vmatpush1.msra.mxu0 0.0
      %8293 = vmatprep.subr.mxu0 0.0
      %8294 = vmatpush1.msra.mxu0 0.0
      %8295 = vmatprep.subr.mxu0 0.0
      %8296 = vmatpush1.msra.mxu0 0.0
      %8297 = vmatprep.subr.mxu0 0.0
      %8298 = vmatpush1.msra.mxu0 0.0
      %8299 = vmatprep.subr.mxu0 0.0
      %8300 = vmatpush1.msra.mxu0 0.0
      %8301 = vmatprep.subr.mxu0 0.0
      %8302 = vmatpush1.msra.mxu0 0.0
      %8303 = vmatprep.subr.mxu0 0.0
      %8304 = vmatpush1.msra.mxu0 0.0
      %8305 = vmatprep.subr.mxu0 0.0
      %8306 = vmatpush1.msra.mxu0 0.0
      %8307 = vmatprep.subr.mxu0 0.0
      %8308 = vmatpush1.msra.mxu0 0.0
      %8309 = vmatprep.subr.mxu0 0.0
      %8310 = vmatpush1.msra.mxu0 0.0
      %8311 = vmatprep.subr.mxu0 0.0
      %8312 = vmatpush1.msra.mxu0 0.0
      %8313 = vmatprep.subr.mxu0 0.0
      %8314 = vmatpush1.msra.mxu0 0.0
      %8315 = vmatprep.subr.mxu0 0.0
      %8316 = vmatpush1.msra.mxu0 0.0
      %8317 = vmatprep.subr.mxu0 0.0
      %8318 = vmatpush1.msra.mxu0 0.0
      %8319 = vmatprep.subr.mxu0 0.0
      %8320 = vmatpush1.msra.mxu0 0.0
      %8321 = vmatprep.subr.mxu0 0.0
      %8322 = vmatpush1.msra.mxu0 0.0
      %8323 = vmatprep.subr.mxu0 0.0
      %8324 = vmatpush1.msra.mxu0 0.0
      %8325 = vmatprep.subr.mxu0 0.0
      %8326 = vmatpush1.msra.mxu0 0.0
      %8327 = vmatprep.subr.mxu0 0.0
      %8328 = vmatpush1.msra.mxu0 0.0
      %8329 = vmatprep.subr.mxu0 0.0
      %8330 = vmatpush1.msra.mxu0 0.0
      %8331 = vmatprep.subr.mxu0 0.0
      %8332 = vmatpush1.msra.mxu0 0.0
      %8333 = vmatprep.subr.mxu0 0.0
      %8334 = vmatpush1.msra.mxu0 0.0
      %8335 = vmatprep.subr.mxu0 0.0
      %8336 = vmatpush1.msra.mxu0 0.0
      %8337 = vmatprep.mubr.f32.mxu0 0.0
      %v8338 = vand.u32 %v7880, 4294901760
      %8339 = vmatmul.mubr.f32.gmra.mrb[0].mxu0 %v8338
      %v8340 = vpop.f32.mrb[0].mxu0
      %v8341 = vadd.f32 %v8268, %v8340
      %v8342 = vpop.f32.mrb[0].mxu0
      %8343 = vdwg.mxu0
      %v8344 = vadd.f32 %v7873, %v8341
      %s8345 = scalar_lea.vmem %s13, 48
      %v8346 = vld [vmem:[%s8345] sm:$0xff]
      %v8347 = vld [vmem:[%s8345 + $0x8] sm:$0x7]
      %v8349 = vsel %vm509, %v6939, 0
      %v8352 = vsel %vm525, %v8347, 0
      %8354 = vmatprep.subr.mxu0 0.0
      %v8355 = vand.u32 %v8346, 4294901760
      %8356 = vmatpush1.msra.mxu0 %v8355
      %8357 = vmatprep.subr.mxu0 0.0
      %v8358 = vand.u32 %v8352, 4294901760
      %8359 = vmatpush1.msra.mxu0 %v8358
      %8360 = vmatprep.subr.mxu0 0.0
      %8361 = vmatpush1.msra.mxu0 0.0
      %8362 = vmatprep.subr.mxu0 0.0
      %8363 = vmatpush1.msra.mxu0 0.0
      %8364 = vmatprep.subr.mxu0 0.0
      %8365 = vmatpush1.msra.mxu0 0.0
      %8366 = vmatprep.subr.mxu0 0.0
      %8367 = vmatpush1.msra.mxu0 0.0
      %8368 = vmatprep.subr.mxu0 0.0
      %8369 = vmatpush1.msra.mxu0 0.0
      %8370 = vmatprep.subr.mxu0 0.0
      %8371 = vmatpush1.msra.mxu0 0.0
      %8372 = vmatprep.subr.mxu0 0.0
      %8373 = vmatpush1.msra.mxu0 0.0
      %8374 = vmatprep.subr.mxu0 0.0
      %8375 = vmatpush1.msra.mxu0 0.0
      %8376 = vmatprep.subr.mxu0 0.0
      %8377 = vmatpush1.msra.mxu0 0.0
      %8378 = vmatprep.subr.mxu0 0.0
      %8379 = vmatpush1.msra.mxu0 0.0
      %8380 = vmatprep.subr.mxu0 0.0
      %8381 = vmatpush1.msra.mxu0 0.0
      %8382 = vmatprep.subr.mxu0 0.0
      %8383 = vmatpush1.msra.mxu0 0.0
      %8384 = vmatprep.subr.mxu0 0.0
      %8385 = vmatpush1.msra.mxu0 0.0
      %8386 = vmatprep.subr.mxu0 0.0
      %8387 = vmatpush1.msra.mxu0 0.0
      %8388 = vmatprep.subr.mxu0 0.0
      %8389 = vmatpush1.msra.mxu0 0.0
      %8390 = vmatprep.subr.mxu0 0.0
      %8391 = vmatpush1.msra.mxu0 0.0
      %8392 = vmatprep.subr.mxu0 0.0
      %8393 = vmatpush1.msra.mxu0 0.0
      %8394 = vmatprep.subr.mxu0 0.0
      %8395 = vmatpush1.msra.mxu0 0.0
      %8396 = vmatprep.subr.mxu0 0.0
      %8397 = vmatpush1.msra.mxu0 0.0
      %8398 = vmatprep.subr.mxu0 0.0
      %8399 = vmatpush1.msra.mxu0 0.0
      %8400 = vmatprep.subr.mxu0 0.0
      %8401 = vmatpush1.msra.mxu0 0.0
      %8402 = vmatprep.subr.mxu0 0.0
      %8403 = vmatpush1.msra.mxu0 0.0
      %8404 = vmatprep.subr.mxu0 0.0
      %8405 = vmatpush1.msra.mxu0 0.0
      %8406 = vmatprep.subr.mxu0 0.0
      %8407 = vmatpush1.msra.mxu0 0.0
      %8408 = vmatprep.subr.mxu0 0.0
      %8409 = vmatpush1.msra.mxu0 0.0
      %8410 = vmatprep.subr.mxu0 0.0
      %8411 = vmatpush1.msra.mxu0 0.0
      %8412 = vmatprep.subr.mxu0 0.0
      %8413 = vmatpush1.msra.mxu0 0.0
      %8414 = vmatprep.subr.mxu0 0.0
      %8415 = vmatpush1.msra.mxu0 0.0
      %8416 = vmatprep.subr.mxu0 0.0
      %8417 = vmatpush1.msra.mxu0 0.0
      %8418 = vmatprep.subr.mxu0 0.0
      %8419 = vmatpush1.msra.mxu0 0.0
      %8420 = vmatprep.mubr.f32.mxu0 0.0
      %v8421 = vand.u32 %v8349, 4294901760
      %v8422 = vsub.f32 %v8349, %v8421
      %v8423 = vand.u32 %v8422, 4294901760
      %v8424 = vsub.f32 %v8422, %v8423
      %v8425 = vand.u32 %v8424, 4294901760
      %8426 = vmatmul.mubr.f32.gmra.mrb[0].mxu0 %v8425
      %v8427 = vpop.f32.mrb[0].mxu0
      %v8428 = vadd.f32 0.0, %v8427
      %v8429 = vpop.f32.mrb[0].mxu0
      %8430 = vdwg.mxu0
      %8431 = vmatprep.subr.mxu0 0.0
      %v8432 = vand.u32 %v8346, 4294901760
      %v8433 = vsub.f32 %v8346, %v8432
      %v8434 = vand.u32 %v8433, 4294901760
      %v8435 = vsub.f32 %v8433, %v8434
      %v8436 = vand.u32 %v8435, 4294901760
      %8437 = vmatpush1.msra.mxu0 %v8436
      %8438 = vmatprep.subr.mxu0 0.0
      %v8439 = vand.u32 %v8352, 4294901760
      %v8440 = vsub.f32 %v8352, %v8439
      %v8441 = vand.u32 %v8440, 4294901760
      %v8442 = vsub.f32 %v8440, %v8441
      %v8443 = vand.u32 %v8442, 4294901760
      %8444 = vmatpush1.msra.mxu0 %v8443
      %8445 = vmatprep.subr.mxu0 0.0
      %8446 = vmatpush1.msra.mxu0 0.0
      %8447 = vmatprep.subr.mxu0 0.0
      %8448 = vmatpush1.msra.mxu0 0.0
      %8449 = vmatprep.subr.mxu0 0.0
      %8450 = vmatpush1.msra.mxu0 0.0
      %8451 = vmatprep.subr.mxu0 0.0
      %8452 = vmatpush1.msra.mxu0 0.0
      %8453 = vmatprep.subr.mxu0 0.0
      %8454 = vmatpush1.msra.mxu0 0.0
      %8455 = vmatprep.subr.mxu0 0.0
      %8456 = vmatpush1.msra.mxu0 0.0
      %8457 = vmatprep.subr.mxu0 0.0
      %8458 = vmatpush1.msra.mxu0 0.0
      %8459 = vmatprep.subr.mxu0 0.0
      %8460 = vmatpush1.msra.mxu0 0.0
      %8461 = vmatprep.subr.mxu0 0.0
      %8462 = vmatpush1.msra.mxu0 0.0
      %8463 = vmatprep.subr.mxu0 0.0
      %8464 = vmatpush1.msra.mxu0 0.0
      %8465 = vmatprep.subr.mxu0 0.0
      %8466 = vmatpush1.msra.mxu0 0.0
      %8467 = vmatprep.subr.mxu0 0.0
      %8468 = vmatpush1.msra.mxu0 0.0
      %8469 = vmatprep.subr.mxu0 0.0
      %8470 = vmatpush1.msra.mxu0 0.0
      %8471 = vmatprep.subr.mxu0 0.0
      %8472 = vmatpush1.msra.mxu0 0.0
      %8473 = vmatprep.subr.mxu0 0.0
      %8474 = vmatpush1.msra.mxu0 0.0
      %8475 = vmatprep.subr.mxu0 0.0
      %8476 = vmatpush1.msra.mxu0 0.0
      %8477 = vmatprep.subr.mxu0 0.0
      %8478 = vmatpush1.msra.mxu0 0.0
      %8479 = vmatprep.subr.mxu0 0.0
      %8480 = vmatpush1.msra.mxu0 0.0
      %8481 = vmatprep.subr.mxu0 0.0
      %8482 = vmatpush1.msra.mxu0 0.0
      %8483 = vmatprep.subr.mxu0 0.0
      %8484 = vmatpush1.msra.mxu0 0.0
      %8485 = vmatprep.subr.mxu0 0.0
      %8486 = vmatpush1.msra.mxu0 0.0
      %8487 = vmatprep.subr.mxu0 0.0
      %8488 = vmatpush1.msra.mxu0 0.0
      %8489 = vmatprep.subr.mxu0 0.0
      %8490 = vmatpush1.msra.mxu0 0.0
      %8491 = vmatprep.subr.mxu0 0.0
      %8492 = vmatpush1.msra.mxu0 0.0
      %8493 = vmatprep.subr.mxu0 0.0
      %8494 = vmatpush1.msra.mxu0 0.0
      %8495 = vmatprep.subr.mxu0 0.0
      %8496 = vmatpush1.msra.mxu0 0.0
      %8497 = vmatprep.subr.mxu0 0.0
      %8498 = vmatpush1.msra.mxu0 0.0
      %8499 = vmatprep.subr.mxu0 0.0
      %8500 = vmatpush1.msra.mxu0 0.0
      %8501 = vmatprep.subr.mxu0 0.0
      %8502 = vmatpush1.msra.mxu0 0.0
      %8503 = vmatprep.subr.mxu0 0.0
      %8504 = vmatpush1.msra.mxu0 0.0
      %8505 = vmatprep.mubr.f32.mxu0 0.0
      %v8506 = vand.u32 %v8349, 4294901760
      %8507 = vmatmul.mubr.f32.gmra.mrb[0].mxu0 %v8506
      %v8508 = vpop.f32.mrb[0].mxu0
      %v8509 = vadd.f32 %v8428, %v8508
      %v8510 = vpop.f32.mrb[0].mxu0
      %8511 = vdwg.mxu0
      %8512 = vmatprep.subr.mxu0 0.0
      %v8513 = vand.u32 %v8346, 4294901760
      %v8514 = vsub.f32 %v8346, %v8513
      %8515 = vmatpush1.msra.mxu0 %v8514
      %8516 = vmatprep.subr.mxu0 0.0
      %v8517 = vand.u32 %v8352, 4294901760
      %v8518 = vsub.f32 %v8352, %v8517
      %8519 = vmatpush1.msra.mxu0 %v8518
      %8520 = vmatprep.subr.mxu0 0.0
      %8521 = vmatpush1.msra.mxu0 0.0
      %8522 = vmatprep.subr.mxu0 0.0
      %8523 = vmatpush1.msra.mxu0 0.0
      %8524 = vmatprep.subr.mxu0 0.0
      %8525 = vmatpush1.msra.mxu0 0.0
      %8526 = vmatprep.subr.mxu0 0.0
      %8527 = vmatpush1.msra.mxu0 0.0
      %8528 = vmatprep.subr.mxu0 0.0
      %8529 = vmatpush1.msra.mxu0 0.0
      %8530 = vmatprep.subr.mxu0 0.0
      %8531 = vmatpush1.msra.mxu0 0.0
      %8532 = vmatprep.subr.mxu0 0.0
      %8533 = vmatpush1.msra.mxu0 0.0
      %8534 = vmatprep.subr.mxu0 0.0
      %8535 = vmatpush1.msra.mxu0 0.0
      %8536 = vmatprep.subr.mxu0 0.0
      %8537 = vmatpush1.msra.mxu0 0.0
      %8538 = vmatprep.subr.mxu0 0.0
      %8539 = vmatpush1.msra.mxu0 0.0
      %8540 = vmatprep.subr.mxu0 0.0
      %8541 = vmatpush1.msra.mxu0 0.0
      %8542 = vmatprep.subr.mxu0 0.0
      %8543 = vmatpush1.msra.mxu0 0.0
      %8544 = vmatprep.subr.mxu0 0.0
      %8545 = vmatpush1.msra.mxu0 0.0
      %8546 = vmatprep.subr.mxu0 0.0
      %8547 = vmatpush1.msra.mxu0 0.0
      %8548 = vmatprep.subr.mxu0 0.0
      %8549 = vmatpush1.msra.mxu0 0.0
      %8550 = vmatprep.subr.mxu0 0.0
      %8551 = vmatpush1.msra.mxu0 0.0
      %8552 = vmatprep.subr.mxu0 0.0
      %8553 = vmatpush1.msra.mxu0 0.0
      %8554 = vmatprep.subr.mxu0 0.0
      %8555 = vmatpush1.msra.mxu0 0.0
      %8556 = vmatprep.subr.mxu0 0.0
      %8557 = vmatpush1.msra.mxu0 0.0
      %8558 = vmatprep.subr.mxu0 0.0
      %8559 = vmatpush1.msra.mxu0 0.0
      %8560 = vmatprep.subr.mxu0 0.0
      %8561 = vmatpush1.msra.mxu0 0.0
      %8562 = vmatprep.subr.mxu0 0.0
      %8563 = vmatpush1.msra.mxu0 0.0
      %8564 = vmatprep.subr.mxu0 0.0
      %8565 = vmatpush1.msra.mxu0 0.0
      %8566 = vmatprep.subr.mxu0 0.0
      %8567 = vmatpush1.msra.mxu0 0.0
      %8568 = vmatprep.subr.mxu0 0.0
      %8569 = vmatpush1.msra.mxu0 0.0
      %8570 = vmatprep.subr.mxu0 0.0
      %8571 = vmatpush1.msra.mxu0 0.0
      %8572 = vmatprep.subr.mxu0 0.0
      %8573 = vmatpush1.msra.mxu0 0.0
      %8574 = vmatprep.subr.mxu0 0.0
      %8575 = vmatpush1.msra.mxu0 0.0
      %8576 = vmatprep.subr.mxu0 0.0
      %8577 = vmatpush1.msra.mxu0 0.0
      %8578 = vmatprep.subr.mxu0 0.0
      %8579 = vmatpush1.msra.mxu0 0.0
      %8580 = vmatprep.mubr.f32.mxu0 0.0
      %v8581 = vand.u32 %v8349, 4294901760
      %v8582 = vsub.f32 %v8349, %v8581
      %8583 = vmatmul.mubr.f32.gmra.mrb[0].mxu0 %v8582
      %v8584 = vpop.f32.mrb[0].mxu0
      %v8585 = vadd.f32 %v8509, %v8584
      %v8586 = vpop.f32.mrb[0].mxu0
      %8587 = vdwg.mxu0
      %8588 = vmatprep.subr.mxu0 0.0
      %v8589 = vand.u32 %v8346, 4294901760
      %8590 = vmatpush1.msra.mxu0 %v8589
      %8591 = vmatprep.subr.mxu0 0.0
      %v8592 = vand.u32 %v8352, 4294901760
      %8593 = vmatpush1.msra.mxu0 %v8592
      %8594 = vmatprep.subr.mxu0 0.0
      %8595 = vmatpush1.msra.mxu0 0.0
      %8596 = vmatprep.subr.mxu0 0.0
      %8597 = vmatpush1.msra.mxu0 0.0
      %8598 = vmatprep.subr.mxu0 0.0
      %8599 = vmatpush1.msra.mxu0 0.0
      %8600 = vmatprep.subr.mxu0 0.0
      %8601 = vmatpush1.msra.mxu0 0.0
      %8602 = vmatprep.subr.mxu0 0.0
      %8603 = vmatpush1.msra.mxu0 0.0
      %8604 = vmatprep.subr.mxu0 0.0
      %8605 = vmatpush1.msra.mxu0 0.0
      %8606 = vmatprep.subr.mxu0 0.0
      %8607 = vmatpush1.msra.mxu0 0.0
      %8608 = vmatprep.subr.mxu0 0.0
      %8609 = vmatpush1.msra.mxu0 0.0
      %8610 = vmatprep.subr.mxu0 0.0
      %8611 = vmatpush1.msra.mxu0 0.0
      %8612 = vmatprep.subr.mxu0 0.0
      %8613 = vmatpush1.msra.mxu0 0.0
      %8614 = vmatprep.subr.mxu0 0.0
      %8615 = vmatpush1.msra.mxu0 0.0
      %8616 = vmatprep.subr.mxu0 0.0
      %8617 = vmatpush1.msra.mxu0 0.0
      %8618 = vmatprep.subr.mxu0 0.0
      %8619 = vmatpush1.msra.mxu0 0.0
      %8620 = vmatprep.subr.mxu0 0.0
      %8621 = vmatpush1.msra.mxu0 0.0
      %8622 = vmatprep.subr.mxu0 0.0
      %8623 = vmatpush1.msra.mxu0 0.0
      %8624 = vmatprep.subr.mxu0 0.0
      %8625 = vmatpush1.msra.mxu0 0.0
      %8626 = vmatprep.subr.mxu0 0.0
      %8627 = vmatpush1.msra.mxu0 0.0
      %8628 = vmatprep.subr.mxu0 0.0
      %8629 = vmatpush1.msra.mxu0 0.0
      %8630 = vmatprep.subr.mxu0 0.0
      %8631 = vmatpush1.msra.mxu0 0.0
      %8632 = vmatprep.subr.mxu0 0.0
      %8633 = vmatpush1.msra.mxu0 0.0
      %8634 = vmatprep.subr.mxu0 0.0
      %8635 = vmatpush1.msra.mxu0 0.0
      %8636 = vmatprep.subr.mxu0 0.0
      %8637 = vmatpush1.msra.mxu0 0.0
      %8638 = vmatprep.subr.mxu0 0.0
      %8639 = vmatpush1.msra.mxu0 0.0
      %8640 = vmatprep.subr.mxu0 0.0
      %8641 = vmatpush1.msra.mxu0 0.0
      %8642 = vmatprep.subr.mxu0 0.0
      %8643 = vmatpush1.msra.mxu0 0.0
      %8644 = vmatprep.subr.mxu0 0.0
      %8645 = vmatpush1.msra.mxu0 0.0
      %8646 = vmatprep.subr.mxu0 0.0
      %8647 = vmatpush1.msra.mxu0 0.0
      %8648 = vmatprep.subr.mxu0 0.0
      %8649 = vmatpush1.msra.mxu0 0.0
      %8650 = vmatprep.subr.mxu0 0.0
      %8651 = vmatpush1.msra.mxu0 0.0
      %8652 = vmatprep.subr.mxu0 0.0
      %8653 = vmatpush1.msra.mxu0 0.0
      %8654 = vmatprep.mubr.f32.mxu0 0.0
      %v8655 = vand.u32 %v8349, 4294901760
      %v8656 = vsub.f32 %v8349, %v8655
      %v8657 = vand.u32 %v8656, 4294901760
      %8658 = vmatmul.mubr.f32.gmra.mrb[0].mxu0 %v8657
      %v8659 = vpop.f32.mrb[0].mxu0
      %v8660 = vadd.f32 %v8585, %v8659
      %v8661 = vpop.f32.mrb[0].mxu0
      %8662 = vdwg.mxu0
      %8663 = vmatprep.subr.mxu0 0.0
      %v8664 = vand.u32 %v8346, 4294901760
      %v8665 = vsub.f32 %v8346, %v8664
      %v8666 = vand.u32 %v8665, 4294901760
      %8667 = vmatpush1.msra.mxu0 %v8666
      %8668 = vmatprep.subr.mxu0 0.0
      %v8669 = vand.u32 %v8352, 4294901760
      %v8670 = vsub.f32 %v8352, %v8669
      %v8671 = vand.u32 %v8670, 4294901760
      %8672 = vmatpush1.msra.mxu0 %v8671
      %8673 = vmatprep.subr.mxu0 0.0
      %8674 = vmatpush1.msra.mxu0 0.0
      %8675 = vmatprep.subr.mxu0 0.0
      %8676 = vmatpush1.msra.mxu0 0.0
      %8677 = vmatprep.subr.mxu0 0.0
      %8678 = vmatpush1.msra.mxu0 0.0
      %8679 = vmatprep.subr.mxu0 0.0
      %8680 = vmatpush1.msra.mxu0 0.0
      %8681 = vmatprep.subr.mxu0 0.0
      %8682 = vmatpush1.msra.mxu0 0.0
      %8683 = vmatprep.subr.mxu0 0.0
      %8684 = vmatpush1.msra.mxu0 0.0
      %8685 = vmatprep.subr.mxu0 0.0
      %8686 = vmatpush1.msra.mxu0 0.0
      %8687 = vmatprep.subr.mxu0 0.0
      %8688 = vmatpush1.msra.mxu0 0.0
      %8689 = vmatprep.subr.mxu0 0.0
      %8690 = vmatpush1.msra.mxu0 0.0
      %8691 = vmatprep.subr.mxu0 0.0
      %8692 = vmatpush1.msra.mxu0 0.0
      %8693 = vmatprep.subr.mxu0 0.0
      %8694 = vmatpush1.msra.mxu0 0.0
      %8695 = vmatprep.subr.mxu0 0.0
      %8696 = vmatpush1.msra.mxu0 0.0
      %8697 = vmatprep.subr.mxu0 0.0
      %8698 = vmatpush1.msra.mxu0 0.0
      %8699 = vmatprep.subr.mxu0 0.0
      %8700 = vmatpush1.msra.mxu0 0.0
      %8701 = vmatprep.subr.mxu0 0.0
      %8702 = vmatpush1.msra.mxu0 0.0
      %8703 = vmatprep.subr.mxu0 0.0
      %8704 = vmatpush1.msra.mxu0 0.0
      %8705 = vmatprep.subr.mxu0 0.0
      %8706 = vmatpush1.msra.mxu0 0.0
      %8707 = vmatprep.subr.mxu0 0.0
      %8708 = vmatpush1.msra.mxu0 0.0
      %8709 = vmatprep.subr.mxu0 0.0
      %8710 = vmatpush1.msra.mxu0 0.0
      %8711 = vmatprep.subr.mxu0 0.0
      %8712 = vmatpush1.msra.mxu0 0.0
      %8713 = vmatprep.subr.mxu0 0.0
      %8714 = vmatpush1.msra.mxu0 0.0
      %8715 = vmatprep.subr.mxu0 0.0
      %8716 = vmatpush1.msra.mxu0 0.0
      %8717 = vmatprep.subr.mxu0 0.0
      %8718 = vmatpush1.msra.mxu0 0.0
      %8719 = vmatprep.subr.mxu0 0.0
      %8720 = vmatpush1.msra.mxu0 0.0
      %8721 = vmatprep.subr.mxu0 0.0
      %8722 = vmatpush1.msra.mxu0 0.0
      %8723 = vmatprep.subr.mxu0 0.0
      %8724 = vmatpush1.msra.mxu0 0.0
      %8725 = vmatprep.subr.mxu0 0.0
      %8726 = vmatpush1.msra.mxu0 0.0
      %8727 = vmatprep.subr.mxu0 0.0
      %8728 = vmatpush1.msra.mxu0 0.0
      %8729 = vmatprep.subr.mxu0 0.0
      %8730 = vmatpush1.msra.mxu0 0.0
      %8731 = vmatprep.subr.mxu0 0.0
      %8732 = vmatpush1.msra.mxu0 0.0
      %8733 = vmatprep.mubr.f32.mxu0 0.0
      %v8734 = vand.u32 %v8349, 4294901760
      %8735 = vmatmul.mubr.f32.gmra.mrb[0].mxu0 %v8734
      %v8736 = vpop.f32.mrb[0].mxu0
      %v8737 = vadd.f32 %v8660, %v8736
      %v8738 = vpop.f32.mrb[0].mxu0
      %8739 = vdwg.mxu0
      %8740 = vmatprep.subr.mxu0 0.0
      %v8741 = vand.u32 %v8346, 4294901760
      %8742 = vmatpush1.msra.mxu0 %v8741
      %8743 = vmatprep.subr.mxu0 0.0
      %v8744 = vand.u32 %v8352, 4294901760
      %8745 = vmatpush1.msra.mxu0 %v8744
      %8746 = vmatprep.subr.mxu0 0.0
      %8747 = vmatpush1.msra.mxu0 0.0
      %8748 = vmatprep.subr.mxu0 0.0
      %8749 = vmatpush1.msra.mxu0 0.0
      %8750 = vmatprep.subr.mxu0 0.0
      %8751 = vmatpush1.msra.mxu0 0.0
      %8752 = vmatprep.subr.mxu0 0.0
      %8753 = vmatpush1.msra.mxu0 0.0
      %8754 = vmatprep.subr.mxu0 0.0
      %8755 = vmatpush1.msra.mxu0 0.0
      %8756 = vmatprep.subr.mxu0 0.0
      %8757 = vmatpush1.msra.mxu0 0.0
      %8758 = vmatprep.subr.mxu0 0.0
      %8759 = vmatpush1.msra.mxu0 0.0
      %8760 = vmatprep.subr.mxu0 0.0
      %8761 = vmatpush1.msra.mxu0 0.0
      %8762 = vmatprep.subr.mxu0 0.0
      %8763 = vmatpush1.msra.mxu0 0.0
      %8764 = vmatprep.subr.mxu0 0.0
      %8765 = vmatpush1.msra.mxu0 0.0
      %8766 = vmatprep.subr.mxu0 0.0
      %8767 = vmatpush1.msra.mxu0 0.0
      %8768 = vmatprep.subr.mxu0 0.0
      %8769 = vmatpush1.msra.mxu0 0.0
      %8770 = vmatprep.subr.mxu0 0.0
      %8771 = vmatpush1.msra.mxu0 0.0
      %8772 = vmatprep.subr.mxu0 0.0
      %8773 = vmatpush1.msra.mxu0 0.0
      %8774 = vmatprep.subr.mxu0 0.0
      %8775 = vmatpush1.msra.mxu0 0.0
      %8776 = vmatprep.subr.mxu0 0.0
      %8777 = vmatpush1.msra.mxu0 0.0
      %8778 = vmatprep.subr.mxu0 0.0
      %8779 = vmatpush1.msra.mxu0 0.0
      %8780 = vmatprep.subr.mxu0 0.0
      %8781 = vmatpush1.msra.mxu0 0.0
      %8782 = vmatprep.subr.mxu0 0.0
      %8783 = vmatpush1.msra.mxu0 0.0
      %8784 = vmatprep.subr.mxu0 0.0
      %8785 = vmatpush1.msra.mxu0 0.0
      %8786 = vmatprep.subr.mxu0 0.0
      %8787 = vmatpush1.msra.mxu0 0.0
      %8788 = vmatprep.subr.mxu0 0.0
      %8789 = vmatpush1.msra.mxu0 0.0
      %8790 = vmatprep.subr.mxu0 0.0
      %8791 = vmatpush1.msra.mxu0 0.0
      %8792 = vmatprep.subr.mxu0 0.0
      %8793 = vmatpush1.msra.mxu0 0.0
      %8794 = vmatprep.subr.mxu0 0.0
      %8795 = vmatpush1.msra.mxu0 0.0
      %8796 = vmatprep.subr.mxu0 0.0
      %8797 = vmatpush1.msra.mxu0 0.0
      %8798 = vmatprep.subr.mxu0 0.0
      %8799 = vmatpush1.msra.mxu0 0.0
      %8800 = vmatprep.subr.mxu0 0.0
      %8801 = vmatpush1.msra.mxu0 0.0
      %8802 = vmatprep.subr.mxu0 0.0
      %8803 = vmatpush1.msra.mxu0 0.0
      %8804 = vmatprep.subr.mxu0 0.0
      %8805 = vmatpush1.msra.mxu0 0.0
      %8806 = vmatprep.mubr.f32.mxu0 0.0
      %v8807 = vand.u32 %v8349, 4294901760
      %8808 = vmatmul.mubr.f32.gmra.mrb[0].mxu0 %v8807
      %v8809 = vpop.f32.mrb[0].mxu0
      %v8810 = vadd.f32 %v8737, %v8809
      %v8811 = vpop.f32.mrb[0].mxu0
      %8812 = vdwg.mxu0
      %v8813 = vadd.f32 %v8344, %v8810
      %s8814 = scalar_lea.vmem %s13, 64
      %v8815 = vld [vmem:[%s8814] sm:$0xff]
      %v8816 = vld [vmem:[%s8814 + $0x8] sm:$0x7]
      %v8818 = vsel %vm509, %v6940, 0
      %v8821 = vsel %vm525, %v8816, 0
      %8823 = vmatprep.subr.mxu0 0.0
      %v8824 = vand.u32 %v8815, 4294901760
      %8825 = vmatpush1.msra.mxu0 %v8824
      %8826 = vmatprep.subr.mxu0 0.0
      %v8827 = vand.u32 %v8821, 4294901760
      %8828 = vmatpush1.msra.mxu0 %v8827
      %8829 = vmatprep.subr.mxu0 0.0
      %8830 = vmatpush1.msra.mxu0 0.0
      %8831 = vmatprep.subr.mxu0 0.0
      %8832 = vmatpush1.msra.mxu0 0.0
      %8833 = vmatprep.subr.mxu0 0.0
      %8834 = vmatpush1.msra.mxu0 0.0
      %8835 = vmatprep.subr.mxu0 0.0
      %8836 = vmatpush1.msra.mxu0 0.0
      %8837 = vmatprep.subr.mxu0 0.0
      %8838 = vmatpush1.msra.mxu0 0.0
      %8839 = vmatprep.subr.mxu0 0.0
      %8840 = vmatpush1.msra.mxu0 0.0
      %8841 = vmatprep.subr.mxu0 0.0
      %8842 = vmatpush1.msra.mxu0 0.0
      %8843 = vmatprep.subr.mxu0 0.0
      %8844 = vmatpush1.msra.mxu0 0.0
      %8845 = vmatprep.subr.mxu0 0.0
      %8846 = vmatpush1.msra.mxu0 0.0
      %8847 = vmatprep.subr.mxu0 0.0
      %8848 = vmatpush1.msra.mxu0 0.0
      %8849 = vmatprep.subr.mxu0 0.0
      %8850 = vmatpush1.msra.mxu0 0.0
      %8851 = vmatprep.subr.mxu0 0.0
      %8852 = vmatpush1.msra.mxu0 0.0
      %8853 = vmatprep.subr.mxu0 0.0
      %8854 = vmatpush1.msra.mxu0 0.0
      %8855 = vmatprep.subr.mxu0 0.0
      %8856 = vmatpush1.msra.mxu0 0.0
      %8857 = vmatprep.subr.mxu0 0.0
      %8858 = vmatpush1.msra.mxu0 0.0
      %8859 = vmatprep.subr.mxu0 0.0
      %8860 = vmatpush1.msra.mxu0 0.0
      %8861 = vmatprep.subr.mxu0 0.0
      %8862 = vmatpush1.msra.mxu0 0.0
      %8863 = vmatprep.subr.mxu0 0.0
      %8864 = vmatpush1.msra.mxu0 0.0
      %8865 = vmatprep.subr.mxu0 0.0
      %8866 = vmatpush1.msra.mxu0 0.0
      %8867 = vmatprep.subr.mxu0 0.0
      %8868 = vmatpush1.msra.mxu0 0.0
      %8869 = vmatprep.subr.mxu0 0.0
      %8870 = vmatpush1.msra.mxu0 0.0
      %8871 = vmatprep.subr.mxu0 0.0
      %8872 = vmatpush1.msra.mxu0 0.0
      %8873 = vmatprep.subr.mxu0 0.0
      %8874 = vmatpush1.msra.mxu0 0.0
      %8875 = vmatprep.subr.mxu0 0.0
      %8876 = vmatpush1.msra.mxu0 0.0
      %8877 = vmatprep.subr.mxu0 0.0
      %8878 = vmatpush1.msra.mxu0 0.0
      %8879 = vmatprep.subr.mxu0 0.0
      %8880 = vmatpush1.msra.mxu0 0.0
      %8881 = vmatprep.subr.mxu0 0.0
      %8882 = vmatpush1.msra.mxu0 0.0
      %8883 = vmatprep.subr.mxu0 0.0
      %8884 = vmatpush1.msra.mxu0 0.0
      %8885 = vmatprep.subr.mxu0 0.0
      %8886 = vmatpush1.msra.mxu0 0.0
      %8887 = vmatprep.subr.mxu0 0.0
      %8888 = vmatpush1.msra.mxu0 0.0
      %8889 = vmatprep.mubr.f32.mxu0 0.0
      %v8890 = vand.u32 %v8818, 4294901760
      %v8891 = vsub.f32 %v8818, %v8890
      %v8892 = vand.u32 %v8891, 4294901760
      %v8893 = vsub.f32 %v8891, %v8892
      %v8894 = vand.u32 %v8893, 4294901760
      %8895 = vmatmul.mubr.f32.gmra.mrb[0].mxu0 %v8894
      %v8896 = vpop.f32.mrb[0].mxu0
      %v8897 = vadd.f32 0.0, %v8896
      %v8898 = vpop.f32.mrb[0].mxu0
      %8899 = vdwg.mxu0
      %8900 = vmatprep.subr.mxu0 0.0
      %v8901 = vand.u32 %v8815, 4294901760
      %v8902 = vsub.f32 %v8815, %v8901
      %v8903 = vand.u32 %v8902, 4294901760
      %v8904 = vsub.f32 %v8902, %v8903
      %v8905 = vand.u32 %v8904, 4294901760
      %8906 = vmatpush1.msra.mxu0 %v8905
      %8907 = vmatprep.subr.mxu0 0.0
      %v8908 = vand.u32 %v8821, 4294901760
      %v8909 = vsub.f32 %v8821, %v8908
      %v8910 = vand.u32 %v8909, 4294901760
      %v8911 = vsub.f32 %v8909, %v8910
      %v8912 = vand.u32 %v8911, 4294901760
      %8913 = vmatpush1.msra.mxu0 %v8912
      %8914 = vmatprep.subr.mxu0 0.0
      %8915 = vmatpush1.msra.mxu0 0.0
      %8916 = vmatprep.subr.mxu0 0.0
      %8917 = vmatpush1.msra.mxu0 0.0
      %8918 = vmatprep.subr.mxu0 0.0
      %8919 = vmatpush1.msra.mxu0 0.0
      %8920 = vmatprep.subr.mxu0 0.0
      %8921 = vmatpush1.msra.mxu0 0.0
      %8922 = vmatprep.subr.mxu0 0.0
      %8923 = vmatpush1.msra.mxu0 0.0
      %8924 = vmatprep.subr.mxu0 0.0
      %8925 = vmatpush1.msra.mxu0 0.0
      %8926 = vmatprep.subr.mxu0 0.0
      %8927 = vmatpush1.msra.mxu0 0.0
      %8928 = vmatprep.subr.mxu0 0.0
      %8929 = vmatpush1.msra.mxu0 0.0
      %8930 = vmatprep.subr.mxu0 0.0
      %8931 = vmatpush1.msra.mxu0 0.0
      %8932 = vmatprep.subr.mxu0 0.0
      %8933 = vmatpush1.msra.mxu0 0.0
      %8934 = vmatprep.subr.mxu0 0.0
      %8935 = vmatpush1.msra.mxu0 0.0
      %8936 = vmatprep.subr.mxu0 0.0
      %8937 = vmatpush1.msra.mxu0 0.0
      %8938 = vmatprep.subr.mxu0 0.0
      %8939 = vmatpush1.msra.mxu0 0.0
      %8940 = vmatprep.subr.mxu0 0.0
      %8941 = vmatpush1.msra.mxu0 0.0
      %8942 = vmatprep.subr.mxu0 0.0
      %8943 = vmatpush1.msra.mxu0 0.0
      %8944 = vmatprep.subr.mxu0 0.0
      %8945 = vmatpush1.msra.mxu0 0.0
      %8946 = vmatprep.subr.mxu0 0.0
      %8947 = vmatpush1.msra.mxu0 0.0
      %8948 = vmatprep.subr.mxu0 0.0
      %8949 = vmatpush1.msra.mxu0 0.0
      %8950 = vmatprep.subr.mxu0 0.0
      %8951 = vmatpush1.msra.mxu0 0.0
      %8952 = vmatprep.subr.mxu0 0.0
      %8953 = vmatpush1.msra.mxu0 0.0
      %8954 = vmatprep.subr.mxu0 0.0
      %8955 = vmatpush1.msra.mxu0 0.0
      %8956 = vmatprep.subr.mxu0 0.0
      %8957 = vmatpush1.msra.mxu0 0.0
      %8958 = vmatprep.subr.mxu0 0.0
      %8959 = vmatpush1.msra.mxu0 0.0
      %8960 = vmatprep.subr.mxu0 0.0
      %8961 = vmatpush1.msra.mxu0 0.0
      %8962 = vmatprep.subr.mxu0 0.0
      %8963 = vmatpush1.msra.mxu0 0.0
      %8964 = vmatprep.subr.mxu0 0.0
      %8965 = vmatpush1.msra.mxu0 0.0
      %8966 = vmatprep.subr.mxu0 0.0
      %8967 = vmatpush1.msra.mxu0 0.0
      %8968 = vmatprep.subr.mxu0 0.0
      %8969 = vmatpush1.msra.mxu0 0.0
      %8970 = vmatprep.subr.mxu0 0.0
      %8971 = vmatpush1.msra.mxu0 0.0
      %8972 = vmatprep.subr.mxu0 0.0
      %8973 = vmatpush1.msra.mxu0 0.0
      %8974 = vmatprep.mubr.f32.mxu0 0.0
      %v8975 = vand.u32 %v8818, 4294901760
      %8976 = vmatmul.mubr.f32.gmra.mrb[0].mxu0 %v8975
      %v8977 = vpop.f32.mrb[0].mxu0
      %v8978 = vadd.f32 %v8897, %v8977
      %v8979 = vpop.f32.mrb[0].mxu0
      %8980 = vdwg.mxu0
      %8981 = vmatprep.subr.mxu0 0.0
      %v8982 = vand.u32 %v8815, 4294901760
      %v8983 = vsub.f32 %v8815, %v8982
      %8984 = vmatpush1.msra.mxu0 %v8983
      %8985 = vmatprep.subr.mxu0 0.0
      %v8986 = vand.u32 %v8821, 4294901760
      %v8987 = vsub.f32 %v8821, %v8986
      %8988 = vmatpush1.msra.mxu0 %v8987
      %8989 = vmatprep.subr.mxu0 0.0
      %8990 = vmatpush1.msra.mxu0 0.0
      %8991 = vmatprep.subr.mxu0 0.0
      %8992 = vmatpush1.msra.mxu0 0.0
      %8993 = vmatprep.subr.mxu0 0.0
      %8994 = vmatpush1.msra.mxu0 0.0
      %8995 = vmatprep.subr.mxu0 0.0
      %8996 = vmatpush1.msra.mxu0 0.0
      %8997 = vmatprep.subr.mxu0 0.0
      %8998 = vmatpush1.msra.mxu0 0.0
      %8999 = vmatprep.subr.mxu0 0.0
      %9000 = vmatpush1.msra.mxu0 0.0
      %9001 = vmatprep.subr.mxu0 0.0
      %9002 = vmatpush1.msra.mxu0 0.0
      %9003 = vmatprep.subr.mxu0 0.0
      %9004 = vmatpush1.msra.mxu0 0.0
      %9005 = vmatprep.subr.mxu0 0.0
      %9006 = vmatpush1.msra.mxu0 0.0
      %9007 = vmatprep.subr.mxu0 0.0
      %9008 = vmatpush1.msra.mxu0 0.0
      %9009 = vmatprep.subr.mxu0 0.0
      %9010 = vmatpush1.msra.mxu0 0.0
      %9011 = vmatprep.subr.mxu0 0.0
      %9012 = vmatpush1.msra.mxu0 0.0
      %9013 = vmatprep.subr.mxu0 0.0
      %9014 = vmatpush1.msra.mxu0 0.0
      %9015 = vmatprep.subr.mxu0 0.0
      %9016 = vmatpush1.msra.mxu0 0.0
      %9017 = vmatprep.subr.mxu0 0.0
      %9018 = vmatpush1.msra.mxu0 0.0
      %9019 = vmatprep.subr.mxu0 0.0
      %9020 = vmatpush1.msra.mxu0 0.0
      %9021 = vmatprep.subr.mxu0 0.0
      %9022 = vmatpush1.msra.mxu0 0.0
      %9023 = vmatprep.subr.mxu0 0.0
      %9024 = vmatpush1.msra.mxu0 0.0
      %9025 = vmatprep.subr.mxu0 0.0
      %9026 = vmatpush1.msra.mxu0 0.0
      %9027 = vmatprep.subr.mxu0 0.0
      %9028 = vmatpush1.msra.mxu0 0.0
      %9029 = vmatprep.subr.mxu0 0.0
      %9030 = vmatpush1.msra.mxu0 0.0
      %9031 = vmatprep.subr.mxu0 0.0
      %9032 = vmatpush1.msra.mxu0 0.0
      %9033 = vmatprep.subr.mxu0 0.0
      %9034 = vmatpush1.msra.mxu0 0.0
      %9035 = vmatprep.subr.mxu0 0.0
      %9036 = vmatpush1.msra.mxu0 0.0
      %9037 = vmatprep.subr.mxu0 0.0
      %9038 = vmatpush1.msra.mxu0 0.0
      %9039 = vmatprep.subr.mxu0 0.0
      %9040 = vmatpush1.msra.mxu0 0.0
      %9041 = vmatprep.subr.mxu0 0.0
      %9042 = vmatpush1.msra.mxu0 0.0
      %9043 = vmatprep.subr.mxu0 0.0
      %9044 = vmatpush1.msra.mxu0 0.0
      %9045 = vmatprep.subr.mxu0 0.0
      %9046 = vmatpush1.msra.mxu0 0.0
      %9047 = vmatprep.subr.mxu0 0.0
      %9048 = vmatpush1.msra.mxu0 0.0
      %9049 = vmatprep.mubr.f32.mxu0 0.0
      %v9050 = vand.u32 %v8818, 4294901760
      %v9051 = vsub.f32 %v8818, %v9050
      %9052 = vmatmul.mubr.f32.gmra.mrb[0].mxu0 %v9051
      %v9053 = vpop.f32.mrb[0].mxu0
      %v9054 = vadd.f32 %v8978, %v9053
      %v9055 = vpop.f32.mrb[0].mxu0
      %9056 = vdwg.mxu0
      %9057 = vmatprep.subr.mxu0 0.0
      %v9058 = vand.u32 %v8815, 4294901760
      %9059 = vmatpush1.msra.mxu0 %v9058
      %9060 = vmatprep.subr.mxu0 0.0
      %v9061 = vand.u32 %v8821, 4294901760
      %9062 = vmatpush1.msra.mxu0 %v9061
      %9063 = vmatprep.subr.mxu0 0.0
      %9064 = vmatpush1.msra.mxu0 0.0
      %9065 = vmatprep.subr.mxu0 0.0
      %9066 = vmatpush1.msra.mxu0 0.0
      %9067 = vmatprep.subr.mxu0 0.0
      %9068 = vmatpush1.msra.mxu0 0.0
      %9069 = vmatprep.subr.mxu0 0.0
      %9070 = vmatpush1.msra.mxu0 0.0
      %9071 = vmatprep.subr.mxu0 0.0
      %9072 = vmatpush1.msra.mxu0 0.0
      %9073 = vmatprep.subr.mxu0 0.0
      %9074 = vmatpush1.msra.mxu0 0.0
      %9075 = vmatprep.subr.mxu0 0.0
      %9076 = vmatpush1.msra.mxu0 0.0
      %9077 = vmatprep.subr.mxu0 0.0
      %9078 = vmatpush1.msra.mxu0 0.0
      %9079 = vmatprep.subr.mxu0 0.0
      %9080 = vmatpush1.msra.mxu0 0.0
      %9081 = vmatprep.subr.mxu0 0.0
      %9082 = vmatpush1.msra.mxu0 0.0
      %9083 = vmatprep.subr.mxu0 0.0
      %9084 = vmatpush1.msra.mxu0 0.0
      %9085 = vmatprep.subr.mxu0 0.0
      %9086 = vmatpush1.msra.mxu0 0.0
      %9087 = vmatprep.subr.mxu0 0.0
      %9088 = vmatpush1.msra.mxu0 0.0
      %9089 = vmatprep.subr.mxu0 0.0
      %9090 = vmatpush1.msra.mxu0 0.0
      %9091 = vmatprep.subr.mxu0 0.0
      %9092 = vmatpush1.msra.mxu0 0.0
      %9093 = vmatprep.subr.mxu0 0.0
      %9094 = vmatpush1.msra.mxu0 0.0
      %9095 = vmatprep.subr.mxu0 0.0
      %9096 = vmatpush1.msra.mxu0 0.0
      %9097 = vmatprep.subr.mxu0 0.0
      %9098 = vmatpush1.msra.mxu0 0.0
      %9099 = vmatprep.subr.mxu0 0.0
      %9100 = vmatpush1.msra.mxu0 0.0
      %9101 = vmatprep.subr.mxu0 0.0
      %9102 = vmatpush1.msra.mxu0 0.0
      %9103 = vmatprep.subr.mxu0 0.0
      %9104 = vmatpush1.msra.mxu0 0.0
      %9105 = vmatprep.subr.mxu0 0.0
      %9106 = vmatpush1.msra.mxu0 0.0
      %9107 = vmatprep.subr.mxu0 0.0
      %9108 = vmatpush1.msra.mxu0 0.0
      %9109 = vmatprep.subr.mxu0 0.0
      %9110 = vmatpush1.msra.mxu0 0.0
      %9111 = vmatprep.subr.mxu0 0.0
      %9112 = vmatpush1.msra.mxu0 0.0
      %9113 = vmatprep.subr.mxu0 0.0
      %9114 = vmatpush1.msra.mxu0 0.0
      %9115 = vmatprep.subr.mxu0 0.0
      %9116 = vmatpush1.msra.mxu0 0.0
      %9117 = vmatprep.subr.mxu0 0.0
      %9118 = vmatpush1.msra.mxu0 0.0
      %9119 = vmatprep.subr.mxu0 0.0
      %9120 = vmatpush1.msra.mxu0 0.0
      %9121 = vmatprep.subr.mxu0 0.0
      %9122 = vmatpush1.msra.mxu0 0.0
      %9123 = vmatprep.mubr.f32.mxu0 0.0
      %v9124 = vand.u32 %v8818, 4294901760
      %v9125 = vsub.f32 %v8818, %v9124
      %v9126 = vand.u32 %v9125, 4294901760
      %9127 = vmatmul.mubr.f32.gmra.mrb[0].mxu0 %v9126
      %v9128 = vpop.f32.mrb[0].mxu0
      %v9129 = vadd.f32 %v9054, %v9128
      %v9130 = vpop.f32.mrb[0].mxu0
      %9131 = vdwg.mxu0
      %9132 = vmatprep.subr.mxu0 0.0
      %v9133 = vand.u32 %v8815, 4294901760
      %v9134 = vsub.f32 %v8815, %v9133
      %v9135 = vand.u32 %v9134, 4294901760
      %9136 = vmatpush1.msra.mxu0 %v9135
      %9137 = vmatprep.subr.mxu0 0.0
      %v9138 = vand.u32 %v8821, 4294901760
      %v9139 = vsub.f32 %v8821, %v9138
      %v9140 = vand.u32 %v9139, 4294901760
      %9141 = vmatpush1.msra.mxu0 %v9140
      %9142 = vmatprep.subr.mxu0 0.0
      %9143 = vmatpush1.msra.mxu0 0.0
      %9144 = vmatprep.subr.mxu0 0.0
      %9145 = vmatpush1.msra.mxu0 0.0
      %9146 = vmatprep.subr.mxu0 0.0
      %9147 = vmatpush1.msra.mxu0 0.0
      %9148 = vmatprep.subr.mxu0 0.0
      %9149 = vmatpush1.msra.mxu0 0.0
      %9150 = vmatprep.subr.mxu0 0.0
      %9151 = vmatpush1.msra.mxu0 0.0
      %9152 = vmatprep.subr.mxu0 0.0
      %9153 = vmatpush1.msra.mxu0 0.0
      %9154 = vmatprep.subr.mxu0 0.0
      %9155 = vmatpush1.msra.mxu0 0.0
      %9156 = vmatprep.subr.mxu0 0.0
      %9157 = vmatpush1.msra.mxu0 0.0
      %9158 = vmatprep.subr.mxu0 0.0
      %9159 = vmatpush1.msra.mxu0 0.0
      %9160 = vmatprep.subr.mxu0 0.0
      %9161 = vmatpush1.msra.mxu0 0.0
      %9162 = vmatprep.subr.mxu0 0.0
      %9163 = vmatpush1.msra.mxu0 0.0
      %9164 = vmatprep.subr.mxu0 0.0
      %9165 = vmatpush1.msra.mxu0 0.0
      %9166 = vmatprep.subr.mxu0 0.0
      %9167 = vmatpush1.msra.mxu0 0.0
      %9168 = vmatprep.subr.mxu0 0.0
      %9169 = vmatpush1.msra.mxu0 0.0
      %9170 = vmatprep.subr.mxu0 0.0
      %9171 = vmatpush1.msra.mxu0 0.0
      %9172 = vmatprep.subr.mxu0 0.0
      %9173 = vmatpush1.msra.mxu0 0.0
      %9174 = vmatprep.subr.mxu0 0.0
      %9175 = vmatpush1.msra.mxu0 0.0
      %9176 = vmatprep.subr.mxu0 0.0
      %9177 = vmatpush1.msra.mxu0 0.0
      %9178 = vmatprep.subr.mxu0 0.0
      %9179 = vmatpush1.msra.mxu0 0.0
      %9180 = vmatprep.subr.mxu0 0.0
      %9181 = vmatpush1.msra.mxu0 0.0
      %9182 = vmatprep.subr.mxu0 0.0
      %9183 = vmatpush1.msra.mxu0 0.0
      %9184 = vmatprep.subr.mxu0 0.0
      %9185 = vmatpush1.msra.mxu0 0.0
      %9186 = vmatprep.subr.mxu0 0.0
      %9187 = vmatpush1.msra.mxu0 0.0
      %9188 = vmatprep.subr.mxu0 0.0
      %9189 = vmatpush1.msra.mxu0 0.0
      %9190 = vmatprep.subr.mxu0 0.0
      %9191 = vmatpush1.msra.mxu0 0.0
      %9192 = vmatprep.subr.mxu0 0.0
      %9193 = vmatpush1.msra.mxu0 0.0
      %9194 = vmatprep.subr.mxu0 0.0
      %9195 = vmatpush1.msra.mxu0 0.0
      %9196 = vmatprep.subr.mxu0 0.0
      %9197 = vmatpush1.msra.mxu0 0.0
      %9198 = vmatprep.subr.mxu0 0.0
      %9199 = vmatpush1.msra.mxu0 0.0
      %9200 = vmatprep.subr.mxu0 0.0
      %9201 = vmatpush1.msra.mxu0 0.0
      %9202 = vmatprep.mubr.f32.mxu0 0.0
      %v9203 = vand.u32 %v8818, 4294901760
      %9204 = vmatmul.mubr.f32.gmra.mrb[0].mxu0 %v9203
      %v9205 = vpop.f32.mrb[0].mxu0
      %v9206 = vadd.f32 %v9129, %v9205
      %v9207 = vpop.f32.mrb[0].mxu0
      %9208 = vdwg.mxu0
      %9209 = vmatprep.subr.mxu0 0.0
      %v9210 = vand.u32 %v8815, 4294901760
      %9211 = vmatpush1.msra.mxu0 %v9210
      %9212 = vmatprep.subr.mxu0 0.0
      %v9213 = vand.u32 %v8821, 4294901760
      %9214 = vmatpush1.msra.mxu0 %v9213
      %9215 = vmatprep.subr.mxu0 0.0
      %9216 = vmatpush1.msra.mxu0 0.0
      %9217 = vmatprep.subr.mxu0 0.0
      %9218 = vmatpush1.msra.mxu0 0.0
      %9219 = vmatprep.subr.mxu0 0.0
      %9220 = vmatpush1.msra.mxu0 0.0
      %9221 = vmatprep.subr.mxu0 0.0
      %9222 = vmatpush1.msra.mxu0 0.0
      %9223 = vmatprep.subr.mxu0 0.0
      %9224 = vmatpush1.msra.mxu0 0.0
      %9225 = vmatprep.subr.mxu0 0.0
      %9226 = vmatpush1.msra.mxu0 0.0
      %9227 = vmatprep.subr.mxu0 0.0
      %9228 = vmatpush1.msra.mxu0 0.0
      %9229 = vmatprep.subr.mxu0 0.0
      %9230 = vmatpush1.msra.mxu0 0.0
      %9231 = vmatprep.subr.mxu0 0.0
      %9232 = vmatpush1.msra.mxu0 0.0
      %9233 = vmatprep.subr.mxu0 0.0
      %9234 = vmatpush1.msra.mxu0 0.0
      %9235 = vmatprep.subr.mxu0 0.0
      %9236 = vmatpush1.msra.mxu0 0.0
      %9237 = vmatprep.subr.mxu0 0.0
      %9238 = vmatpush1.msra.mxu0 0.0
      %9239 = vmatprep.subr.mxu0 0.0
      %9240 = vmatpush1.msra.mxu0 0.0
      %9241 = vmatprep.subr.mxu0 0.0
      %9242 = vmatpush1.msra.mxu0 0.0
      %9243 = vmatprep.subr.mxu0 0.0
      %9244 = vmatpush1.msra.mxu0 0.0
      %9245 = vmatprep.subr.mxu0 0.0
      %9246 = vmatpush1.msra.mxu0 0.0
      %9247 = vmatprep.subr.mxu0 0.0
      %9248 = vmatpush1.msra.mxu0 0.0
      %9249 = vmatprep.subr.mxu0 0.0
      %9250 = vmatpush1.msra.mxu0 0.0
      %9251 = vmatprep.subr.mxu0 0.0
      %9252 = vmatpush1.msra.mxu0 0.0
      %9253 = vmatprep.subr.mxu0 0.0
      %9254 = vmatpush1.msra.mxu0 0.0
      %9255 = vmatprep.subr.mxu0 0.0
      %9256 = vmatpush1.msra.mxu0 0.0
      %9257 = vmatprep.subr.mxu0 0.0
      %9258 = vmatpush1.msra.mxu0 0.0
      %9259 = vmatprep.subr.mxu0 0.0
      %9260 = vmatpush1.msra.mxu0 0.0
      %9261 = vmatprep.subr.mxu0 0.0
      %9262 = vmatpush1.msra.mxu0 0.0
      %9263 = vmatprep.subr.mxu0 0.0
      %9264 = vmatpush1.msra.mxu0 0.0
      %9265 = vmatprep.subr.mxu0 0.0
      %9266 = vmatpush1.msra.mxu0 0.0
      %9267 = vmatprep.subr.mxu0 0.0
      %9268 = vmatpush1.msra.mxu0 0.0
      %9269 = vmatprep.subr.mxu0 0.0
      %9270 = vmatpush1.msra.mxu0 0.0
      %9271 = vmatprep.subr.mxu0 0.0
      %9272 = vmatpush1.msra.mxu0 0.0
      %9273 = vmatprep.subr.mxu0 0.0
      %9274 = vmatpush1.msra.mxu0 0.0
      %9275 = vmatprep.mubr.f32.mxu0 0.0
      %v9276 = vand.u32 %v8818, 4294901760
      %9277 = vmatmul.mubr.f32.gmra.mrb[0].mxu0 %v9276
      %v9278 = vpop.f32.mrb[0].mxu0
      %v9279 = vadd.f32 %v9206, %v9278
      %v9280 = vpop.f32.mrb[0].mxu0
      %9281 = vdwg.mxu0
      %v9282 = vadd.f32 %v8813, %v9279
      %v9283 = vld [vmem:[%s14] sm:$0x1]
      %v9285 = vlaneseq
      %v9286 = vshrl.u32 %v9285, 7
      %v9287 = vsub.s32 0, %v9286
      %v9288 = vrot.slane %v9283, %v9287
      %v9290 = vadd.f32 %v9282, %v9288
      %9291 = vst.msk [vmem:[%s494] sm:$0xff] %vm1206, %v9290
      %p9292 = scmp.lt.s32.totalorder %s26, 1
      %s9293 = scalar_select %p9292, %s26, 1
      %s9294 = smul.addr %s9293, 8
      %s9295 = scalar_lea.vmem %s15, %s9294
      // Predicated region
      $region81: #{tpu_custom_call.1} parent=79 // pred_check
        %p9296 = pneg %p364
      $region82: #{tpu_custom_call.1} parent=79 // pred_check_branch
        %9298 = sbr.rel (%p9296) target = $region84
      $region83: #{tpu_custom_call.1} parent=79 // pred_region
        _
      $region84: #{tpu_custom_call.1} parent=79 // pred_fallthru
        _
    $region80: #{tpu_custom_call.1} parent=5 // pred_fallthru
      _
    %p9299 = scmp.le.s32.totalorder 2, %s21
    // Predicated region
    $region85: #{tpu_custom_call.1} parent=5 // pred_check
      %p9300 = pneg %p9299
    $region86: #{tpu_custom_call.1} parent=5 // pred_check_branch
      %9302 = sbr.rel (%p9300) target = $region88
    $region87: #{tpu_custom_call.1} parent=5 // pred_region
      %s9303 = ssub.s32 %s21, 2
      // Predicated region
      $region89: #{tpu_custom_call.1} parent=87 // pred_check
        %p9304 = pneg %p370
      $region90: #{tpu_custom_call.1} parent=87 // pred_check_branch
        %9306 = sbr.rel (%p9304) target = $region92
      $region91: #{tpu_custom_call.1} parent=87 // pred_region
        %p9307 = scmp.lt.s32.totalorder %s27, 1
        %s9308 = scalar_select %p9307, %s27, 1
        %s9309 = smul.addr %s9308, 8
        %s9310 = scalar_lea.vmem %s15, %s9309
      $region92: #{tpu_custom_call.1} parent=87 // pred_fallthru
        _
    $region88: #{tpu_custom_call.1} parent=5 // pred_fallthru
      _
  $region6: #{tpu_custom_call.1} parent=0 // loop_footer
    %s25 = sadd.s32 1, %s21
  $region7: #{tpu_custom_call.1} parent=0 // loop_footer_branch
    %20 = sbr.rel target = $region3
  $region8: #{tpu_custom_call.1} parent=0 // loop_exit
    _

</llo_original>
